<compile_context>
chip_gen: v7x
topology: tpu7x:2x2x1
jax: 0.10.0
libtpu: 0.0.40
codegen_flags: <defaults>
</compile_context>

<pallas_src>
import math
import functools

import numpy as np
import jax
import jax.numpy as jnp
from jax import lax
from jax.experimental import pallas as pl
from jax.experimental.pallas import tpu as pltpu

# ---------------------------------------------------------------------------
# Module configuration (scaled down; hashmap chosen so the finest level
# exercises the xor-hash branch and the coarse levels the one2one branch).
# ---------------------------------------------------------------------------
IMG_SIZE = (16, 16)            # (H, W)
N_LEVELS = 4
N_FEATURES = 2                 # n_features_per_level
LOG2_HASHMAP_SIZE = 7          # hashmap size = 128
BASE_RESOLUTION = 4
FINEST_RESOLUTION = 16

HASHMAP_SIZE = 1 << LOG2_HASHMAP_SIZE
HASH_MASK = HASHMAP_SIZE - 1
# The spatial-hash prime multiply is done in int32 with wraparound; masking the
# low LOG2_HASHMAP_SIZE bits gives results identical to the uint32/int64
# reference semantics as long as we keep < 32 low bits.
assert LOG2_HASHMAP_SIZE <= 31, "int32-wraparound hash requires <= 31 mask bits"
# prime[0] == 1 -> the dim-0 multiply is elided.  2654435761 wrapped to int32:
PRIME1 = np.int32(2654435761 - (1 << 32))


def level_configs():
    b = math.exp((math.log(FINEST_RESOLUTION) - math.log(BASE_RESOLUTION))
                 / (N_LEVELS - 1))
    cfgs = []
    for i in range(N_LEVELS):
        res = math.floor(BASE_RESOLUTION * (b ** i))
        use_hash = not (res * res < HASHMAP_SIZE)
        table_size = HASHMAP_SIZE if use_hash else (res + 1) ** 2
        t_pad = ((table_size + 15) // 16) * 16        # bf16 sublane tile (16)
        gsy = float(np.float32(IMG_SIZE[0]) / np.float32(res))   # y grid size
        gsx = float(np.float32(IMG_SIZE[1]) / np.float32(res))   # x grid size
        cfgs.append(dict(res=res, use_hash=use_hash, table_size=table_size,
                         t_pad=t_pad, gsy=gsy, gsx=gsx,
                         inv_gsy=float(np.float32(1.0) / np.float32(gsy)),
                         inv_gsx=float(np.float32(1.0) / np.float32(gsx))))
    return cfgs


def pick_compare_dtype(cfgs):
    """bf16 compares/selects on chips with a native bf16 VPU (v6e/v7x); f32 on
    v5e/older.  bf16 is only used when every table index / iota value is < 256
    (exactly representable in bf16)."""
    exact = all(c["t_pad"] <= 256 for c in cfgs) and HASHMAP_SIZE <= 256
    if not exact:
        return jnp.float32
    try:
        kind = jax.devices()[0].device_kind.lower()
    except Exception:
        return jnp.float32
    if any(g in kind for g in ("v2", "v3", "v4", "v5")):
        return jnp.float32     # no native bf16 VALU -> f32 build, cast sw once
    return jnp.bfloat16        # v6e / v7x


# ---------------------------------------------------------------------------
# Pallas kernel
# ---------------------------------------------------------------------------
def hash_embed_kernel(x_ref, lhs_ref, out_ref, *, cfgs, cmp_dtype):
    # x_ref   : (2, bB)                f32
    # lhs_ref : (n_levels*F, K_total)  bf16  (block-diagonal tables)
    # out_ref : (n_levels*F, bB)       f32
    x0 = x_ref[0:1, :]        # (1, B)  dim-0 ("y") coordinate
    x1 = x_ref[1:2, :]        # (1, B)  dim-1 ("x") coordinate

    sw_blocks = []
    for cfg in cfgs:                              # static unroll over levels
        t_pad = cfg["t_pad"]

        # floor(x * 1/gs) and fractional-part weights: no divides, no min/max
        # vertices, shorter dependency chain before the hot (T, B) section.
        t0 = x0 * jnp.float32(cfg["inv_gsy"])
        t1 = x1 * jnp.float32(cfg["inv_gsx"])
        bl0f = jnp.floor(t0)
        bl1f = jnp.floor(t1)
        w0 = t0 - bl0f                            # (1, B) in [0, 1)
        w1 = t1 - bl1f
        bl0 = bl0f.astype(jnp.int32)
        bl1 = bl1f.astype(jnp.int32)

        w0c = 1.0 - w0
        w1c = 1.0 - w1
        # grid_offset order [[0,0],[0,1],[1,0],[1,1]] with bilinear weights.
        corner_weights = (((0, 0), w0c * w1c), ((0, 1), w0c * w1),
                          ((1, 0), w0 * w1c), ((1, 1), w0 * w1))

        # (T_lvl, 1) iota column, restricted to this level's padded table size
        # (32/64/128/128 instead of a uniform T_max).
        iota_t = lax.broadcasted_iota(jnp.int32, (t_pad, 1), 0).astype(cmp_dtype)

        # Weighted 4-hot scatter matrix S (T_lvl, B).  Additive accumulation so
        # corners that hash-collide onto the same row sum their weights.
        sw = None
        for (o0, o1), wc in corner_weights:
            c0i = bl0 + o0
            c1i = bl1 + o1
            if cfg["use_hash"]:
                # prime for dim 0 is 1 -> no multiply on c0i; low-bit mask makes
                # int32 wraparound equivalent to the uint32/int64 reference.
                idx = (c0i ^ (c1i * PRIME1)) & jnp.int32(HASH_MASK)
            else:
                idx = c0i * jnp.int32(cfg["res"]) + c1i            # one2one
            # NOTE: in-range coords (< IMG_SIZE) always give idx < table_size
            # (asserted host-side); out-of-range coords would gather zeros here
            # whereas the reference would index OOB -- enforce host-side.
            contrib = jnp.where(iota_t == idx.astype(cmp_dtype),
                                wc.astype(cmp_dtype), 0)
            sw = contrib if sw is None else sw + contrib
        sw_blocks.append(sw.astype(jnp.bfloat16))

    # Per-level blocks are 16-aligned on the sublane axis -> concat is pure
    # vreg placement, no relayout.
    sw_all = jnp.concatenate(sw_blocks, axis=0)          # (K_total, B) bf16

    # Single fused gather + bilinear interp + level concat on the MXU:
    # (n_levels*F, K_total) bf16 @ (K_total, B) bf16 -> (8, B) f32, written as
    # one lane/sublane-dense slab (full unmasked vst).
    out_ref[...] = lax.dot_general(
        lhs_ref[...], sw_all,
        dimension_numbers=(((1,), (0,)), ((), ())),
        preferred_element_type=jnp.float32)


def hash_embed(xy, lhs_blockdiag, cfgs, *, block_b=512, cmp_dtype=jnp.bfloat16):
    """xy: (B, 2) f32 pixel coords -> (B, n_levels * F) f32 encoding.

    block_b: points per grid step.  Sweep 512-1024 for large batches (the
    kernel is VALU-bound, so bigger blocks mostly amortize the ~0.35us/step
    overhead); keep B // block_b a multiple of 2 so both v7x TensorCores get
    work via the "parallel" grid axis, and re-check the (K_total, block_b)
    bf16 `sw` intermediate against VMEM on v5e (single vst slot).
    """
    B = xy.shape[0]
    n_out, k_total = lhs_blockdiag.shape
    assert B % block_b == 0
    x_t = xy.T                                # (2, B)

    kernel = functools.partial(hash_embed_kernel, cfgs=cfgs, cmp_dtype=cmp_dtype)

    def build(table_pipeline_mode):
        tbl_kwargs = ({} if table_pipeline_mode is None
                      else dict(pipeline_mode=table_pipeline_mode))
        return pl.pallas_call(
            kernel,
            out_shape=jax.ShapeDtypeStruct((n_out, B), jnp.float32),
            grid=(B // block_b,),
            in_specs=[
                pl.BlockSpec((2, block_b), lambda i: (0, i)),          # coords
                # Constant index_map: the tiny bf16 block-diagonal table is held
                # resident; Buffered(1) drops the pointless second VMEM buffer.
                pl.BlockSpec((n_out, k_total), lambda i: (0, 0), **tbl_kwargs),
            ],
            out_specs=pl.BlockSpec((n_out, block_b), lambda i: (0, i)),
            compiler_params=pltpu.CompilerParams(
                dimension_semantics=("parallel",)),
        )

    try:
        out = build(pl.Buffered(1))(x_t, lhs_blockdiag)
    except Exception:
        # Fallback for jax versions that reject buffer_count=1 on a pallas_call
        # BlockSpec; only costs one redundant ~5.5 KiB VMEM buffer here.
        out = build(None)(x_t, lhs_blockdiag)
    # Rows are [lvl0 f0, lvl0 f1, lvl1 f0, ...], so a plain transpose matches
    # torch.cat(x_embedded_all, dim=-1).
    return out.T


# ---------------------------------------------------------------------------
# Pure-JAX reference (mirrors the PyTorch forward exactly, f32) for verification.
# ---------------------------------------------------------------------------
def hash_embed_reference(xy, tables_list, cfgs):
    outs = []
    for cfg, table in zip(cfgs, tables_list):
        gs = jnp.array([cfg["gsy"], cfg["gsx"]], jnp.float32)
        bl = jnp.floor(xy / gs).astype(jnp.int32)             # (B,2)
        gmin = bl.astype(jnp.float32) * gs
        gmax = gmin + gs
        w = (xy - gmin) / (gmax - gmin)                       # (B,2)
        offs = jnp.array([[0, 0], [0, 1], [1, 0], [1, 1]], jnp.int32)
        gi = bl[:, None, :] + offs[None, :, :]                # (B,4,2)
        if cfg["use_hash"]:
            idx = (gi[..., 0] ^ (gi[..., 1] * PRIME1)) & HASH_MASK
        else:
            idx = gi[..., 0] * cfg["res"] + gi[..., 1]
        e = table[idx]                                        # (B,4,F)
        w0 = w[:, 0:1]
        w1 = w[:, 1:2]
        c_lo = e[:, 0] * (1 - w1) + e[:, 1] * w1
        c_hi = e[:, 2] * (1 - w1) + e[:, 3] * w1
        outs.append(c_lo * (1 - w0) + c_hi * w0)
    return jnp.concatenate(outs, axis=-1)


if __name__ == "__main__":
    cfgs = level_configs()
    K_TOTAL = sum(c["t_pad"] for c in cfgs)

    # Static bound checks: for coords in [0, IMG_SIZE) every corner index is
    # strictly < table_size (one2one max index = res*(res+1) < (res+1)**2).
    for c in cfgs:
        if not c["use_hash"]:
            assert c["res"] * (c["res"] + 1) < c["table_size"]
        assert c["table_size"] <= c["t_pad"]

    key = jax.random.PRNGKey(0)
    keys = jax.random.split(key, 1 + N_LEVELS)
    k_x, k_tabs = keys[0], keys[1:]

    B = 1024                                   # 2 grid steps at block_b=512
    xy = (jax.random.uniform(k_x, (B, 2), dtype=jnp.float32)
          * jnp.array([IMG_SIZE[0], IMG_SIZE[1]], jnp.float32))
    # Host-side contract check: OOB coords would gather zeros in the kernel
    # while the reference / PyTorch module would index OOB.
    assert bool(jnp.all((xy >= 0) & (xy < jnp.array(IMG_SIZE, jnp.float32))))

    # Deterministic embedding init: uniform(-1e-4, 1e-4), as in nn.init.uniform_.
    tables_list = []                                          # f32, for reference
    lhs_np = np.zeros((N_LEVELS * N_FEATURES, K_TOTAL), np.float32)
    off = 0
    for lvl, (cfg, kt) in enumerate(zip(cfgs, k_tabs)):
        w = jax.random.uniform(kt, (cfg["table_size"], N_FEATURES),
                               minval=-1e-4, maxval=1e-4, dtype=jnp.float32)
        tables_list.append(w)
        lhs_np[lvl * N_FEATURES:(lvl + 1) * N_FEATURES,
               off:off + cfg["table_size"]] = np.asarray(w).T
        off += cfg["t_pad"]
    # Block-diagonal, feature-major, bf16 (MXU-native) table operand.
    lhs_blockdiag = jnp.asarray(lhs_np).astype(jnp.bfloat16)  # (8, K_TOTAL)

    cmp_dtype = pick_compare_dtype(cfgs)

    out = hash_embed(xy, lhs_blockdiag, cfgs, block_b=512, cmp_dtype=cmp_dtype)
    out = jax.block_until_ready(out)

    ref = hash_embed_reference(xy, tables_list, cfgs)
    np.testing.assert_allclose(np.asarray(out), np.asarray(ref),
                               rtol=2e-2, atol=2e-6)
    print("KERNEL_OK")
</pallas_src>

<mosaic_0001>
module attributes {stable_mosaic.version = 11 : i64} {
  func.func @hash_embed_kernel(%arg0: i32, %arg1: memref<2x512xf32, #tpu.memory_space<vmem>>, %arg2: memref<8x352xbf16, #tpu.memory_space<vmem>>, %arg3: memref<8x512xf32, #tpu.memory_space<vmem>>) attributes {dimension_semantics = [#tpu.dimension_semantics<parallel>], iteration_bounds = array<i64: 2>, scalar_prefetch = 0 : i64, scratch_operands = 0 : i64, tpu.core_type = #tpu.core_type<tc>, window_params = [{transform_indices = @transform_0, window_bounds = array<i64: 2, 512>}, {pipeline_mode = #tpu.pipeline_mode<synchronous>, transform_indices = @transform_1, window_bounds = array<i64: 8, 352>}, {transform_indices = @transform_2, window_bounds = array<i64: 8, 512>}]} {
    %c0 = arith.constant 0 : index
    %c0_0 = arith.constant 0 : index
    %0 = vector.load %arg1[%c0, %c0_0] : memref<2x512xf32, #tpu.memory_space<vmem>>, vector<1x512xf32>
    %c1 = arith.constant 1 : index
    %c0_1 = arith.constant 0 : index
    %1 = vector.load %arg1[%c1, %c0_1] : memref<2x512xf32, #tpu.memory_space<vmem>>, vector<1x512xf32>
    %cst = arith.constant 2.500000e-01 : f32
    %2 = vector.broadcast %cst : f32 to vector<1x512xf32>
    %3 = arith.mulf %0, %2 : vector<1x512xf32>
    %cst_2 = arith.constant 2.500000e-01 : f32
    %4 = vector.broadcast %cst_2 : f32 to vector<1x512xf32>
    %5 = arith.mulf %1, %4 : vector<1x512xf32>
    %6 = math.floor %3 : vector<1x512xf32>
    %7 = math.floor %5 : vector<1x512xf32>
    %8 = arith.subf %3, %6 : vector<1x512xf32>
    %9 = arith.subf %5, %7 : vector<1x512xf32>
    %10 = arith.fptosi %6 : vector<1x512xf32> to vector<1x512xi32>
    %11 = arith.fptosi %7 : vector<1x512xf32> to vector<1x512xi32>
    %cst_3 = arith.constant 1.000000e+00 : f32
    %12 = vector.broadcast %cst_3 : f32 to vector<1x512xf32>
    %13 = arith.subf %12, %8 : vector<1x512xf32>
    %cst_4 = arith.constant 1.000000e+00 : f32
    %14 = vector.broadcast %cst_4 : f32 to vector<1x512xf32>
    %15 = arith.subf %14, %9 : vector<1x512xf32>
    %16 = arith.mulf %13, %15 : vector<1x512xf32>
    %17 = arith.mulf %13, %9 : vector<1x512xf32>
    %18 = arith.mulf %8, %15 : vector<1x512xf32>
    %19 = arith.mulf %8, %9 : vector<1x512xf32>
    %20 = tpu.iota {dimensions = array<i32: 0>} : vector<32x1xi32>
    %21 = arith.sitofp %20 : vector<32x1xi32> to vector<32x1xbf16>
    %c0_i32 = arith.constant 0 : i32
    %22 = vector.broadcast %c0_i32 : i32 to vector<1x512xi32>
    %23 = arith.addi %10, %22 : vector<1x512xi32>
    %c0_i32_5 = arith.constant 0 : i32
    %24 = vector.broadcast %c0_i32_5 : i32 to vector<1x512xi32>
    %25 = arith.addi %11, %24 : vector<1x512xi32>
    %c4_i32 = arith.constant 4 : i32
    %26 = vector.broadcast %c4_i32 : i32 to vector<1x512xi32>
    %27 = arith.muli %23, %26 : vector<1x512xi32>
    %28 = arith.addi %27, %25 : vector<1x512xi32>
    %29 = arith.sitofp %28 : vector<1x512xi32> to vector<1x512xbf16>
    %30 = vector.broadcast %21 : vector<32x1xbf16> to vector<32x512xbf16>
    %31 = vector.broadcast %29 : vector<1x512xbf16> to vector<32x512xbf16>
    %32 = arith.cmpf oeq, %30, %31 : vector<32x512xbf16>
    %33 = arith.truncf %16 : vector<1x512xf32> to vector<1x512xbf16>
    %c0_i32_6 = arith.constant 0 : i32
    %34 = arith.sitofp %c0_i32_6 : i32 to bf16
    %35 = vector.shape_cast %33 : vector<1x512xbf16> to vector<1x512xbf16>
    %36 = vector.broadcast %35 : vector<1x512xbf16> to vector<32x512xbf16>
    %37 = vector.broadcast %34 : bf16 to vector<32x512xbf16>
    %38 = arith.select %32, %36, %37 : vector<32x512xi1>, vector<32x512xbf16>
    %c0_i32_7 = arith.constant 0 : i32
    %39 = vector.broadcast %c0_i32_7 : i32 to vector<1x512xi32>
    %40 = arith.addi %10, %39 : vector<1x512xi32>
    %c1_i32 = arith.constant 1 : i32
    %41 = vector.broadcast %c1_i32 : i32 to vector<1x512xi32>
    %42 = arith.addi %11, %41 : vector<1x512xi32>
    %c4_i32_8 = arith.constant 4 : i32
    %43 = vector.broadcast %c4_i32_8 : i32 to vector<1x512xi32>
    %44 = arith.muli %40, %43 : vector<1x512xi32>
    %45 = arith.addi %44, %42 : vector<1x512xi32>
    %46 = arith.sitofp %45 : vector<1x512xi32> to vector<1x512xbf16>
    %47 = vector.broadcast %21 : vector<32x1xbf16> to vector<32x512xbf16>
    %48 = vector.broadcast %46 : vector<1x512xbf16> to vector<32x512xbf16>
    %49 = arith.cmpf oeq, %47, %48 : vector<32x512xbf16>
    %50 = arith.truncf %17 : vector<1x512xf32> to vector<1x512xbf16>
    %c0_i32_9 = arith.constant 0 : i32
    %51 = arith.sitofp %c0_i32_9 : i32 to bf16
    %52 = vector.shape_cast %50 : vector<1x512xbf16> to vector<1x512xbf16>
    %53 = vector.broadcast %52 : vector<1x512xbf16> to vector<32x512xbf16>
    %54 = vector.broadcast %51 : bf16 to vector<32x512xbf16>
    %55 = arith.select %49, %53, %54 : vector<32x512xi1>, vector<32x512xbf16>
    %56 = arith.addf %38, %55 : vector<32x512xbf16>
    %c1_i32_10 = arith.constant 1 : i32
    %57 = vector.broadcast %c1_i32_10 : i32 to vector<1x512xi32>
    %58 = arith.addi %10, %57 : vector<1x512xi32>
    %c0_i32_11 = arith.constant 0 : i32
    %59 = vector.broadcast %c0_i32_11 : i32 to vector<1x512xi32>
    %60 = arith.addi %11, %59 : vector<1x512xi32>
    %c4_i32_12 = arith.constant 4 : i32
    %61 = vector.broadcast %c4_i32_12 : i32 to vector<1x512xi32>
    %62 = arith.muli %58, %61 : vector<1x512xi32>
    %63 = arith.addi %62, %60 : vector<1x512xi32>
    %64 = arith.sitofp %63 : vector<1x512xi32> to vector<1x512xbf16>
    %65 = vector.broadcast %21 : vector<32x1xbf16> to vector<32x512xbf16>
    %66 = vector.broadcast %64 : vector<1x512xbf16> to vector<32x512xbf16>
    %67 = arith.cmpf oeq, %65, %66 : vector<32x512xbf16>
    %68 = arith.truncf %18 : vector<1x512xf32> to vector<1x512xbf16>
    %c0_i32_13 = arith.constant 0 : i32
    %69 = arith.sitofp %c0_i32_13 : i32 to bf16
    %70 = vector.shape_cast %68 : vector<1x512xbf16> to vector<1x512xbf16>
    %71 = vector.broadcast %70 : vector<1x512xbf16> to vector<32x512xbf16>
    %72 = vector.broadcast %69 : bf16 to vector<32x512xbf16>
    %73 = arith.select %67, %71, %72 : vector<32x512xi1>, vector<32x512xbf16>
    %74 = arith.addf %56, %73 : vector<32x512xbf16>
    %c1_i32_14 = arith.constant 1 : i32
    %75 = vector.broadcast %c1_i32_14 : i32 to vector<1x512xi32>
    %76 = arith.addi %10, %75 : vector<1x512xi32>
    %c1_i32_15 = arith.constant 1 : i32
    %77 = vector.broadcast %c1_i32_15 : i32 to vector<1x512xi32>
    %78 = arith.addi %11, %77 : vector<1x512xi32>
    %c4_i32_16 = arith.constant 4 : i32
    %79 = vector.broadcast %c4_i32_16 : i32 to vector<1x512xi32>
    %80 = arith.muli %76, %79 : vector<1x512xi32>
    %81 = arith.addi %80, %78 : vector<1x512xi32>
    %82 = arith.sitofp %81 : vector<1x512xi32> to vector<1x512xbf16>
    %83 = vector.broadcast %21 : vector<32x1xbf16> to vector<32x512xbf16>
    %84 = vector.broadcast %82 : vector<1x512xbf16> to vector<32x512xbf16>
    %85 = arith.cmpf oeq, %83, %84 : vector<32x512xbf16>
    %86 = arith.truncf %19 : vector<1x512xf32> to vector<1x512xbf16>
    %c0_i32_17 = arith.constant 0 : i32
    %87 = arith.sitofp %c0_i32_17 : i32 to bf16
    %88 = vector.shape_cast %86 : vector<1x512xbf16> to vector<1x512xbf16>
    %89 = vector.broadcast %88 : vector<1x512xbf16> to vector<32x512xbf16>
    %90 = vector.broadcast %87 : bf16 to vector<32x512xbf16>
    %91 = arith.select %85, %89, %90 : vector<32x512xi1>, vector<32x512xbf16>
    %92 = arith.addf %74, %91 : vector<32x512xbf16>
    %cst_18 = arith.constant 3.750000e-01 : f32
    %93 = vector.broadcast %cst_18 : f32 to vector<1x512xf32>
    %94 = arith.mulf %0, %93 : vector<1x512xf32>
    %cst_19 = arith.constant 3.750000e-01 : f32
    %95 = vector.broadcast %cst_19 : f32 to vector<1x512xf32>
    %96 = arith.mulf %1, %95 : vector<1x512xf32>
    %97 = math.floor %94 : vector<1x512xf32>
    %98 = math.floor %96 : vector<1x512xf32>
    %99 = arith.subf %94, %97 : vector<1x512xf32>
    %100 = arith.subf %96, %98 : vector<1x512xf32>
    %101 = arith.fptosi %97 : vector<1x512xf32> to vector<1x512xi32>
    %102 = arith.fptosi %98 : vector<1x512xf32> to vector<1x512xi32>
    %cst_20 = arith.constant 1.000000e+00 : f32
    %103 = vector.broadcast %cst_20 : f32 to vector<1x512xf32>
    %104 = arith.subf %103, %99 : vector<1x512xf32>
    %cst_21 = arith.constant 1.000000e+00 : f32
    %105 = vector.broadcast %cst_21 : f32 to vector<1x512xf32>
    %106 = arith.subf %105, %100 : vector<1x512xf32>
    %107 = arith.mulf %104, %106 : vector<1x512xf32>
    %108 = arith.mulf %104, %100 : vector<1x512xf32>
    %109 = arith.mulf %99, %106 : vector<1x512xf32>
    %110 = arith.mulf %99, %100 : vector<1x512xf32>
    %111 = tpu.iota {dimensions = array<i32: 0>} : vector<64x1xi32>
    %112 = arith.sitofp %111 : vector<64x1xi32> to vector<64x1xbf16>
    %c0_i32_22 = arith.constant 0 : i32
    %113 = vector.broadcast %c0_i32_22 : i32 to vector<1x512xi32>
    %114 = arith.addi %101, %113 : vector<1x512xi32>
    %c0_i32_23 = arith.constant 0 : i32
    %115 = vector.broadcast %c0_i32_23 : i32 to vector<1x512xi32>
    %116 = arith.addi %102, %115 : vector<1x512xi32>
    %c6_i32 = arith.constant 6 : i32
    %117 = vector.broadcast %c6_i32 : i32 to vector<1x512xi32>
    %118 = arith.muli %114, %117 : vector<1x512xi32>
    %119 = arith.addi %118, %116 : vector<1x512xi32>
    %120 = arith.sitofp %119 : vector<1x512xi32> to vector<1x512xbf16>
    %121 = vector.broadcast %112 : vector<64x1xbf16> to vector<64x512xbf16>
    %122 = vector.broadcast %120 : vector<1x512xbf16> to vector<64x512xbf16>
    %123 = arith.cmpf oeq, %121, %122 : vector<64x512xbf16>
    %124 = arith.truncf %107 : vector<1x512xf32> to vector<1x512xbf16>
    %c0_i32_24 = arith.constant 0 : i32
    %125 = arith.sitofp %c0_i32_24 : i32 to bf16
    %126 = vector.shape_cast %124 : vector<1x512xbf16> to vector<1x512xbf16>
    %127 = vector.broadcast %126 : vector<1x512xbf16> to vector<64x512xbf16>
    %128 = vector.broadcast %125 : bf16 to vector<64x512xbf16>
    %129 = arith.select %123, %127, %128 : vector<64x512xi1>, vector<64x512xbf16>
    %c0_i32_25 = arith.constant 0 : i32
    %130 = vector.broadcast %c0_i32_25 : i32 to vector<1x512xi32>
    %131 = arith.addi %101, %130 : vector<1x512xi32>
    %c1_i32_26 = arith.constant 1 : i32
    %132 = vector.broadcast %c1_i32_26 : i32 to vector<1x512xi32>
    %133 = arith.addi %102, %132 : vector<1x512xi32>
    %c6_i32_27 = arith.constant 6 : i32
    %134 = vector.broadcast %c6_i32_27 : i32 to vector<1x512xi32>
    %135 = arith.muli %131, %134 : vector<1x512xi32>
    %136 = arith.addi %135, %133 : vector<1x512xi32>
    %137 = arith.sitofp %136 : vector<1x512xi32> to vector<1x512xbf16>
    %138 = vector.broadcast %112 : vector<64x1xbf16> to vector<64x512xbf16>
    %139 = vector.broadcast %137 : vector<1x512xbf16> to vector<64x512xbf16>
    %140 = arith.cmpf oeq, %138, %139 : vector<64x512xbf16>
    %141 = arith.truncf %108 : vector<1x512xf32> to vector<1x512xbf16>
    %c0_i32_28 = arith.constant 0 : i32
    %142 = arith.sitofp %c0_i32_28 : i32 to bf16
    %143 = vector.shape_cast %141 : vector<1x512xbf16> to vector<1x512xbf16>
    %144 = vector.broadcast %143 : vector<1x512xbf16> to vector<64x512xbf16>
    %145 = vector.broadcast %142 : bf16 to vector<64x512xbf16>
    %146 = arith.select %140, %144, %145 : vector<64x512xi1>, vector<64x512xbf16>
    %147 = arith.addf %129, %146 : vector<64x512xbf16>
    %c1_i32_29 = arith.constant 1 : i32
    %148 = vector.broadcast %c1_i32_29 : i32 to vector<1x512xi32>
    %149 = arith.addi %101, %148 : vector<1x512xi32>
    %c0_i32_30 = arith.constant 0 : i32
    %150 = vector.broadcast %c0_i32_30 : i32 to vector<1x512xi32>
    %151 = arith.addi %102, %150 : vector<1x512xi32>
    %c6_i32_31 = arith.constant 6 : i32
    %152 = vector.broadcast %c6_i32_31 : i32 to vector<1x512xi32>
    %153 = arith.muli %149, %152 : vector<1x512xi32>
    %154 = arith.addi %153, %151 : vector<1x512xi32>
    %155 = arith.sitofp %154 : vector<1x512xi32> to vector<1x512xbf16>
    %156 = vector.broadcast %112 : vector<64x1xbf16> to vector<64x512xbf16>
    %157 = vector.broadcast %155 : vector<1x512xbf16> to vector<64x512xbf16>
    %158 = arith.cmpf oeq, %156, %157 : vector<64x512xbf16>
    %159 = arith.truncf %109 : vector<1x512xf32> to vector<1x512xbf16>
    %c0_i32_32 = arith.constant 0 : i32
    %160 = arith.sitofp %c0_i32_32 : i32 to bf16
    %161 = vector.shape_cast %159 : vector<1x512xbf16> to vector<1x512xbf16>
    %162 = vector.broadcast %161 : vector<1x512xbf16> to vector<64x512xbf16>
    %163 = vector.broadcast %160 : bf16 to vector<64x512xbf16>
    %164 = arith.select %158, %162, %163 : vector<64x512xi1>, vector<64x512xbf16>
    %165 = arith.addf %147, %164 : vector<64x512xbf16>
    %c1_i32_33 = arith.constant 1 : i32
    %166 = vector.broadcast %c1_i32_33 : i32 to vector<1x512xi32>
    %167 = arith.addi %101, %166 : vector<1x512xi32>
    %c1_i32_34 = arith.constant 1 : i32
    %168 = vector.broadcast %c1_i32_34 : i32 to vector<1x512xi32>
    %169 = arith.addi %102, %168 : vector<1x512xi32>
    %c6_i32_35 = arith.constant 6 : i32
    %170 = vector.broadcast %c6_i32_35 : i32 to vector<1x512xi32>
    %171 = arith.muli %167, %170 : vector<1x512xi32>
    %172 = arith.addi %171, %169 : vector<1x512xi32>
    %173 = arith.sitofp %172 : vector<1x512xi32> to vector<1x512xbf16>
    %174 = vector.broadcast %112 : vector<64x1xbf16> to vector<64x512xbf16>
    %175 = vector.broadcast %173 : vector<1x512xbf16> to vector<64x512xbf16>
    %176 = arith.cmpf oeq, %174, %175 : vector<64x512xbf16>
    %177 = arith.truncf %110 : vector<1x512xf32> to vector<1x512xbf16>
    %c0_i32_36 = arith.constant 0 : i32
    %178 = arith.sitofp %c0_i32_36 : i32 to bf16
    %179 = vector.shape_cast %177 : vector<1x512xbf16> to vector<1x512xbf16>
    %180 = vector.broadcast %179 : vector<1x512xbf16> to vector<64x512xbf16>
    %181 = vector.broadcast %178 : bf16 to vector<64x512xbf16>
    %182 = arith.select %176, %180, %181 : vector<64x512xi1>, vector<64x512xbf16>
    %183 = arith.addf %165, %182 : vector<64x512xbf16>
    %cst_37 = arith.constant 6.250000e-01 : f32
    %184 = vector.broadcast %cst_37 : f32 to vector<1x512xf32>
    %185 = arith.mulf %0, %184 : vector<1x512xf32>
    %cst_38 = arith.constant 6.250000e-01 : f32
    %186 = vector.broadcast %cst_38 : f32 to vector<1x512xf32>
    %187 = arith.mulf %1, %186 : vector<1x512xf32>
    %188 = math.floor %185 : vector<1x512xf32>
    %189 = math.floor %187 : vector<1x512xf32>
    %190 = arith.subf %185, %188 : vector<1x512xf32>
    %191 = arith.subf %187, %189 : vector<1x512xf32>
    %192 = arith.fptosi %188 : vector<1x512xf32> to vector<1x512xi32>
    %193 = arith.fptosi %189 : vector<1x512xf32> to vector<1x512xi32>
    %cst_39 = arith.constant 1.000000e+00 : f32
    %194 = vector.broadcast %cst_39 : f32 to vector<1x512xf32>
    %195 = arith.subf %194, %190 : vector<1x512xf32>
    %cst_40 = arith.constant 1.000000e+00 : f32
    %196 = vector.broadcast %cst_40 : f32 to vector<1x512xf32>
    %197 = arith.subf %196, %191 : vector<1x512xf32>
    %198 = arith.mulf %195, %197 : vector<1x512xf32>
    %199 = arith.mulf %195, %191 : vector<1x512xf32>
    %200 = arith.mulf %190, %197 : vector<1x512xf32>
    %201 = arith.mulf %190, %191 : vector<1x512xf32>
    %202 = tpu.iota {dimensions = array<i32: 0>} : vector<128x1xi32>
    %203 = arith.sitofp %202 : vector<128x1xi32> to vector<128x1xbf16>
    %c0_i32_41 = arith.constant 0 : i32
    %204 = vector.broadcast %c0_i32_41 : i32 to vector<1x512xi32>
    %205 = arith.addi %192, %204 : vector<1x512xi32>
    %c0_i32_42 = arith.constant 0 : i32
    %206 = vector.broadcast %c0_i32_42 : i32 to vector<1x512xi32>
    %207 = arith.addi %193, %206 : vector<1x512xi32>
    %c10_i32 = arith.constant 10 : i32
    %208 = vector.broadcast %c10_i32 : i32 to vector<1x512xi32>
    %209 = arith.muli %205, %208 : vector<1x512xi32>
    %210 = arith.addi %209, %207 : vector<1x512xi32>
    %211 = arith.sitofp %210 : vector<1x512xi32> to vector<1x512xbf16>
    %212 = vector.broadcast %203 : vector<128x1xbf16> to vector<128x512xbf16>
    %213 = vector.broadcast %211 : vector<1x512xbf16> to vector<128x512xbf16>
    %214 = arith.cmpf oeq, %212, %213 : vector<128x512xbf16>
    %215 = arith.truncf %198 : vector<1x512xf32> to vector<1x512xbf16>
    %c0_i32_43 = arith.constant 0 : i32
    %216 = arith.sitofp %c0_i32_43 : i32 to bf16
    %217 = vector.shape_cast %215 : vector<1x512xbf16> to vector<1x512xbf16>
    %218 = vector.broadcast %217 : vector<1x512xbf16> to vector<128x512xbf16>
    %219 = vector.broadcast %216 : bf16 to vector<128x512xbf16>
    %220 = arith.select %214, %218, %219 : vector<128x512xi1>, vector<128x512xbf16>
    %c0_i32_44 = arith.constant 0 : i32
    %221 = vector.broadcast %c0_i32_44 : i32 to vector<1x512xi32>
    %222 = arith.addi %192, %221 : vector<1x512xi32>
    %c1_i32_45 = arith.constant 1 : i32
    %223 = vector.broadcast %c1_i32_45 : i32 to vector<1x512xi32>
    %224 = arith.addi %193, %223 : vector<1x512xi32>
    %c10_i32_46 = arith.constant 10 : i32
    %225 = vector.broadcast %c10_i32_46 : i32 to vector<1x512xi32>
    %226 = arith.muli %222, %225 : vector<1x512xi32>
    %227 = arith.addi %226, %224 : vector<1x512xi32>
    %228 = arith.sitofp %227 : vector<1x512xi32> to vector<1x512xbf16>
    %229 = vector.broadcast %203 : vector<128x1xbf16> to vector<128x512xbf16>
    %230 = vector.broadcast %228 : vector<1x512xbf16> to vector<128x512xbf16>
    %231 = arith.cmpf oeq, %229, %230 : vector<128x512xbf16>
    %232 = arith.truncf %199 : vector<1x512xf32> to vector<1x512xbf16>
    %c0_i32_47 = arith.constant 0 : i32
    %233 = arith.sitofp %c0_i32_47 : i32 to bf16
    %234 = vector.shape_cast %232 : vector<1x512xbf16> to vector<1x512xbf16>
    %235 = vector.broadcast %234 : vector<1x512xbf16> to vector<128x512xbf16>
    %236 = vector.broadcast %233 : bf16 to vector<128x512xbf16>
    %237 = arith.select %231, %235, %236 : vector<128x512xi1>, vector<128x512xbf16>
    %238 = arith.addf %220, %237 : vector<128x512xbf16>
    %c1_i32_48 = arith.constant 1 : i32
    %239 = vector.broadcast %c1_i32_48 : i32 to vector<1x512xi32>
    %240 = arith.addi %192, %239 : vector<1x512xi32>
    %c0_i32_49 = arith.constant 0 : i32
    %241 = vector.broadcast %c0_i32_49 : i32 to vector<1x512xi32>
    %242 = arith.addi %193, %241 : vector<1x512xi32>
    %c10_i32_50 = arith.constant 10 : i32
    %243 = vector.broadcast %c10_i32_50 : i32 to vector<1x512xi32>
    %244 = arith.muli %240, %243 : vector<1x512xi32>
    %245 = arith.addi %244, %242 : vector<1x512xi32>
    %246 = arith.sitofp %245 : vector<1x512xi32> to vector<1x512xbf16>
    %247 = vector.broadcast %203 : vector<128x1xbf16> to vector<128x512xbf16>
    %248 = vector.broadcast %246 : vector<1x512xbf16> to vector<128x512xbf16>
    %249 = arith.cmpf oeq, %247, %248 : vector<128x512xbf16>
    %250 = arith.truncf %200 : vector<1x512xf32> to vector<1x512xbf16>
    %c0_i32_51 = arith.constant 0 : i32
    %251 = arith.sitofp %c0_i32_51 : i32 to bf16
    %252 = vector.shape_cast %250 : vector<1x512xbf16> to vector<1x512xbf16>
    %253 = vector.broadcast %252 : vector<1x512xbf16> to vector<128x512xbf16>
    %254 = vector.broadcast %251 : bf16 to vector<128x512xbf16>
    %255 = arith.select %249, %253, %254 : vector<128x512xi1>, vector<128x512xbf16>
    %256 = arith.addf %238, %255 : vector<128x512xbf16>
    %c1_i32_52 = arith.constant 1 : i32
    %257 = vector.broadcast %c1_i32_52 : i32 to vector<1x512xi32>
    %258 = arith.addi %192, %257 : vector<1x512xi32>
    %c1_i32_53 = arith.constant 1 : i32
    %259 = vector.broadcast %c1_i32_53 : i32 to vector<1x512xi32>
    %260 = arith.addi %193, %259 : vector<1x512xi32>
    %c10_i32_54 = arith.constant 10 : i32
    %261 = vector.broadcast %c10_i32_54 : i32 to vector<1x512xi32>
    %262 = arith.muli %258, %261 : vector<1x512xi32>
    %263 = arith.addi %262, %260 : vector<1x512xi32>
    %264 = arith.sitofp %263 : vector<1x512xi32> to vector<1x512xbf16>
    %265 = vector.broadcast %203 : vector<128x1xbf16> to vector<128x512xbf16>
    %266 = vector.broadcast %264 : vector<1x512xbf16> to vector<128x512xbf16>
    %267 = arith.cmpf oeq, %265, %266 : vector<128x512xbf16>
    %268 = arith.truncf %201 : vector<1x512xf32> to vector<1x512xbf16>
    %c0_i32_55 = arith.constant 0 : i32
    %269 = arith.sitofp %c0_i32_55 : i32 to bf16
    %270 = vector.shape_cast %268 : vector<1x512xbf16> to vector<1x512xbf16>
    %271 = vector.broadcast %270 : vector<1x512xbf16> to vector<128x512xbf16>
    %272 = vector.broadcast %269 : bf16 to vector<128x512xbf16>
    %273 = arith.select %267, %271, %272 : vector<128x512xi1>, vector<128x512xbf16>
    %274 = arith.addf %256, %273 : vector<128x512xbf16>
    %cst_56 = arith.constant 0.93749994 : f32
    %275 = vector.broadcast %cst_56 : f32 to vector<1x512xf32>
    %276 = arith.mulf %0, %275 : vector<1x512xf32>
    %cst_57 = arith.constant 0.93749994 : f32
    %277 = vector.broadcast %cst_57 : f32 to vector<1x512xf32>
    %278 = arith.mulf %1, %277 : vector<1x512xf32>
    %279 = math.floor %276 : vector<1x512xf32>
    %280 = math.floor %278 : vector<1x512xf32>
    %281 = arith.subf %276, %279 : vector<1x512xf32>
    %282 = arith.subf %278, %280 : vector<1x512xf32>
    %283 = arith.fptosi %279 : vector<1x512xf32> to vector<1x512xi32>
    %284 = arith.fptosi %280 : vector<1x512xf32> to vector<1x512xi32>
    %cst_58 = arith.constant 1.000000e+00 : f32
    %285 = vector.broadcast %cst_58 : f32 to vector<1x512xf32>
    %286 = arith.subf %285, %281 : vector<1x512xf32>
    %cst_59 = arith.constant 1.000000e+00 : f32
    %287 = vector.broadcast %cst_59 : f32 to vector<1x512xf32>
    %288 = arith.subf %287, %282 : vector<1x512xf32>
    %289 = arith.mulf %286, %288 : vector<1x512xf32>
    %290 = arith.mulf %286, %282 : vector<1x512xf32>
    %291 = arith.mulf %281, %288 : vector<1x512xf32>
    %292 = arith.mulf %281, %282 : vector<1x512xf32>
    %293 = tpu.iota {dimensions = array<i32: 0>} : vector<128x1xi32>
    %294 = arith.sitofp %293 : vector<128x1xi32> to vector<128x1xbf16>
    %c0_i32_60 = arith.constant 0 : i32
    %295 = vector.broadcast %c0_i32_60 : i32 to vector<1x512xi32>
    %296 = arith.addi %283, %295 : vector<1x512xi32>
    %c0_i32_61 = arith.constant 0 : i32
    %297 = vector.broadcast %c0_i32_61 : i32 to vector<1x512xi32>
    %298 = arith.addi %284, %297 : vector<1x512xi32>
    %c-1640531535_i32 = arith.constant -1640531535 : i32
    %299 = vector.broadcast %c-1640531535_i32 : i32 to vector<1x512xi32>
    %300 = arith.muli %298, %299 : vector<1x512xi32>
    %301 = arith.xori %296, %300 : vector<1x512xi32>
    %c127_i32 = arith.constant 127 : i32
    %302 = vector.broadcast %c127_i32 : i32 to vector<1x512xi32>
    %303 = arith.andi %301, %302 : vector<1x512xi32>
    %304 = arith.sitofp %303 : vector<1x512xi32> to vector<1x512xbf16>
    %305 = vector.broadcast %294 : vector<128x1xbf16> to vector<128x512xbf16>
    %306 = vector.broadcast %304 : vector<1x512xbf16> to vector<128x512xbf16>
    %307 = arith.cmpf oeq, %305, %306 : vector<128x512xbf16>
    %308 = arith.truncf %289 : vector<1x512xf32> to vector<1x512xbf16>
    %c0_i32_62 = arith.constant 0 : i32
    %309 = arith.sitofp %c0_i32_62 : i32 to bf16
    %310 = vector.shape_cast %308 : vector<1x512xbf16> to vector<1x512xbf16>
    %311 = vector.broadcast %310 : vector<1x512xbf16> to vector<128x512xbf16>
    %312 = vector.broadcast %309 : bf16 to vector<128x512xbf16>
    %313 = arith.select %307, %311, %312 : vector<128x512xi1>, vector<128x512xbf16>
    %c0_i32_63 = arith.constant 0 : i32
    %314 = vector.broadcast %c0_i32_63 : i32 to vector<1x512xi32>
    %315 = arith.addi %283, %314 : vector<1x512xi32>
    %c1_i32_64 = arith.constant 1 : i32
    %316 = vector.broadcast %c1_i32_64 : i32 to vector<1x512xi32>
    %317 = arith.addi %284, %316 : vector<1x512xi32>
    %c-1640531535_i32_65 = arith.constant -1640531535 : i32
    %318 = vector.broadcast %c-1640531535_i32_65 : i32 to vector<1x512xi32>
    %319 = arith.muli %317, %318 : vector<1x512xi32>
    %320 = arith.xori %315, %319 : vector<1x512xi32>
    %c127_i32_66 = arith.constant 127 : i32
    %321 = vector.broadcast %c127_i32_66 : i32 to vector<1x512xi32>
    %322 = arith.andi %320, %321 : vector<1x512xi32>
    %323 = arith.sitofp %322 : vector<1x512xi32> to vector<1x512xbf16>
    %324 = vector.broadcast %294 : vector<128x1xbf16> to vector<128x512xbf16>
    %325 = vector.broadcast %323 : vector<1x512xbf16> to vector<128x512xbf16>
    %326 = arith.cmpf oeq, %324, %325 : vector<128x512xbf16>
    %327 = arith.truncf %290 : vector<1x512xf32> to vector<1x512xbf16>
    %c0_i32_67 = arith.constant 0 : i32
    %328 = arith.sitofp %c0_i32_67 : i32 to bf16
    %329 = vector.shape_cast %327 : vector<1x512xbf16> to vector<1x512xbf16>
    %330 = vector.broadcast %329 : vector<1x512xbf16> to vector<128x512xbf16>
    %331 = vector.broadcast %328 : bf16 to vector<128x512xbf16>
    %332 = arith.select %326, %330, %331 : vector<128x512xi1>, vector<128x512xbf16>
    %333 = arith.addf %313, %332 : vector<128x512xbf16>
    %c1_i32_68 = arith.constant 1 : i32
    %334 = vector.broadcast %c1_i32_68 : i32 to vector<1x512xi32>
    %335 = arith.addi %283, %334 : vector<1x512xi32>
    %c0_i32_69 = arith.constant 0 : i32
    %336 = vector.broadcast %c0_i32_69 : i32 to vector<1x512xi32>
    %337 = arith.addi %284, %336 : vector<1x512xi32>
    %c-1640531535_i32_70 = arith.constant -1640531535 : i32
    %338 = vector.broadcast %c-1640531535_i32_70 : i32 to vector<1x512xi32>
    %339 = arith.muli %337, %338 : vector<1x512xi32>
    %340 = arith.xori %335, %339 : vector<1x512xi32>
    %c127_i32_71 = arith.constant 127 : i32
    %341 = vector.broadcast %c127_i32_71 : i32 to vector<1x512xi32>
    %342 = arith.andi %340, %341 : vector<1x512xi32>
    %343 = arith.sitofp %342 : vector<1x512xi32> to vector<1x512xbf16>
    %344 = vector.broadcast %294 : vector<128x1xbf16> to vector<128x512xbf16>
    %345 = vector.broadcast %343 : vector<1x512xbf16> to vector<128x512xbf16>
    %346 = arith.cmpf oeq, %344, %345 : vector<128x512xbf16>
    %347 = arith.truncf %291 : vector<1x512xf32> to vector<1x512xbf16>
    %c0_i32_72 = arith.constant 0 : i32
    %348 = arith.sitofp %c0_i32_72 : i32 to bf16
    %349 = vector.shape_cast %347 : vector<1x512xbf16> to vector<1x512xbf16>
    %350 = vector.broadcast %349 : vector<1x512xbf16> to vector<128x512xbf16>
    %351 = vector.broadcast %348 : bf16 to vector<128x512xbf16>
    %352 = arith.select %346, %350, %351 : vector<128x512xi1>, vector<128x512xbf16>
    %353 = arith.addf %333, %352 : vector<128x512xbf16>
    %c1_i32_73 = arith.constant 1 : i32
    %354 = vector.broadcast %c1_i32_73 : i32 to vector<1x512xi32>
    %355 = arith.addi %283, %354 : vector<1x512xi32>
    %c1_i32_74 = arith.constant 1 : i32
    %356 = vector.broadcast %c1_i32_74 : i32 to vector<1x512xi32>
    %357 = arith.addi %284, %356 : vector<1x512xi32>
    %c-1640531535_i32_75 = arith.constant -1640531535 : i32
    %358 = vector.broadcast %c-1640531535_i32_75 : i32 to vector<1x512xi32>
    %359 = arith.muli %357, %358 : vector<1x512xi32>
    %360 = arith.xori %355, %359 : vector<1x512xi32>
    %c127_i32_76 = arith.constant 127 : i32
    %361 = vector.broadcast %c127_i32_76 : i32 to vector<1x512xi32>
    %362 = arith.andi %360, %361 : vector<1x512xi32>
    %363 = arith.sitofp %362 : vector<1x512xi32> to vector<1x512xbf16>
    %364 = vector.broadcast %294 : vector<128x1xbf16> to vector<128x512xbf16>
    %365 = vector.broadcast %363 : vector<1x512xbf16> to vector<128x512xbf16>
    %366 = arith.cmpf oeq, %364, %365 : vector<128x512xbf16>
    %367 = arith.truncf %292 : vector<1x512xf32> to vector<1x512xbf16>
    %c0_i32_77 = arith.constant 0 : i32
    %368 = arith.sitofp %c0_i32_77 : i32 to bf16
    %369 = vector.shape_cast %367 : vector<1x512xbf16> to vector<1x512xbf16>
    %370 = vector.broadcast %369 : vector<1x512xbf16> to vector<128x512xbf16>
    %371 = vector.broadcast %368 : bf16 to vector<128x512xbf16>
    %372 = arith.select %366, %370, %371 : vector<128x512xi1>, vector<128x512xbf16>
    %373 = arith.addf %353, %372 : vector<128x512xbf16>
    %374 = tpu.concatenate %92, %183, %274, %373 in 0 : vector<32x512xbf16>, vector<64x512xbf16>, vector<128x512xbf16>, vector<128x512xbf16> -> vector<352x512xbf16>
    %c0_78 = arith.constant 0 : index
    %c0_79 = arith.constant 0 : index
    %375 = vector.load %arg2[%c0_78, %c0_79] : memref<8x352xbf16, #tpu.memory_space<vmem>>, vector<8x352xbf16>
    %cst_80 = arith.constant dense<0.000000e+00> : vector<8x512xf32>
    %376 = tpu.matmul %375, %374, %cst_80 {dimension_numbers = #tpu.dot_dimension_numbers<[1], [0], [0], [1], [0, 0, 1, 1], [], []>} : vector<8x352xbf16>, vector<352x512xbf16>, vector<8x512xf32> -> vector<8x512xf32>
    %c0_81 = arith.constant 0 : index
    %c0_82 = arith.constant 0 : index
    %377 = vector.load %arg3[%c0_81, %c0_82] : memref<8x512xf32, #tpu.memory_space<vmem>>, vector<8x512xf32>
    tpu.vector_store %arg3[%c0_81, %c0_82], %376 {strides = array<i32>} : memref<8x512xf32, #tpu.memory_space<vmem>>, vector<8x512xf32>,
    return
  }
  func.func @transform_0(%arg0: i32) -> (i32, i32) {
    %c0_i32 = arith.constant 0 : i32
    %c0_i32_0 = arith.constant 0 : i32
    return %c0_i32, %arg0 : i32, i32
  }
  func.func @transform_1(%arg0: i32) -> (i32, i32) {
    %c0_i32 = arith.constant 0 : i32
    %c0_i32_0 = arith.constant 0 : i32
    %c0_i32_1 = arith.constant 0 : i32
    return %c0_i32, %c0_i32_0 : i32, i32
  }
  func.func @transform_2(%arg0: i32) -> (i32, i32) {
    %c0_i32 = arith.constant 0 : i32
    %c0_i32_0 = arith.constant 0 : i32
    return %c0_i32, %arg0 : i32, i32
  }
}

module attributes {stable_mosaic.version = 11 : i64} {
  func.func @hash_embed_kernel(%arg0: i32, %arg1: memref<2x512xf32, #tpu.memory_space<vmem>>, %arg2: memref<8x352xbf16, #tpu.memory_space<vmem>>, %arg3: memref<8x512xf32, #tpu.memory_space<vmem>>) attributes {dimension_semantics = [#tpu.dimension_semantics<parallel>], iteration_bounds = array<i64: 2>, scalar_prefetch = 0 : i64, scratch_operands = 0 : i64, tpu.core_type = #tpu.core_type<tc>, window_params = [{transform_indices = @transform_0, window_bounds = array<i64: 2, 512>}, {pipeline_mode = #tpu.pipeline_mode<synchronous>, transform_indices = @transform_1, window_bounds = array<i64: 8, 352>}, {transform_indices = @transform_2, window_bounds = array<i64: 8, 512>}]} {
    %c0 = arith.constant 0 : index
    %c0_0 = arith.constant 0 : index
    %0 = vector.load %arg1[%c0, %c0_0] : memref<2x512xf32, #tpu.memory_space<vmem>>, vector<1x512xf32>
    %c1 = arith.constant 1 : index
    %c0_1 = arith.constant 0 : index
    %1 = vector.load %arg1[%c1, %c0_1] : memref<2x512xf32, #tpu.memory_space<vmem>>, vector<1x512xf32>
    %cst = arith.constant 2.500000e-01 : f32
    %2 = vector.broadcast %cst : f32 to vector<1x512xf32>
    %3 = arith.mulf %0, %2 : vector<1x512xf32>
    %cst_2 = arith.constant 2.500000e-01 : f32
    %4 = vector.broadcast %cst_2 : f32 to vector<1x512xf32>
    %5 = arith.mulf %1, %4 : vector<1x512xf32>
    %6 = math.floor %3 : vector<1x512xf32>
    %7 = math.floor %5 : vector<1x512xf32>
    %8 = arith.subf %3, %6 : vector<1x512xf32>
    %9 = arith.subf %5, %7 : vector<1x512xf32>
    %10 = arith.fptosi %6 : vector<1x512xf32> to vector<1x512xi32>
    %11 = arith.fptosi %7 : vector<1x512xf32> to vector<1x512xi32>
    %cst_3 = arith.constant 1.000000e+00 : f32
    %12 = vector.broadcast %cst_3 : f32 to vector<1x512xf32>
    %13 = arith.subf %12, %8 : vector<1x512xf32>
    %cst_4 = arith.constant 1.000000e+00 : f32
    %14 = vector.broadcast %cst_4 : f32 to vector<1x512xf32>
    %15 = arith.subf %14, %9 : vector<1x512xf32>
    %16 = arith.mulf %13, %15 : vector<1x512xf32>
    %17 = arith.mulf %13, %9 : vector<1x512xf32>
    %18 = arith.mulf %8, %15 : vector<1x512xf32>
    %19 = arith.mulf %8, %9 : vector<1x512xf32>
    %20 = tpu.iota {dimensions = array<i32: 0>} : vector<32x1xi32>
    %21 = arith.sitofp %20 : vector<32x1xi32> to vector<32x1xbf16>
    %c0_i32 = arith.constant 0 : i32
    %22 = vector.broadcast %c0_i32 : i32 to vector<1x512xi32>
    %23 = arith.addi %10, %22 : vector<1x512xi32>
    %c0_i32_5 = arith.constant 0 : i32
    %24 = vector.broadcast %c0_i32_5 : i32 to vector<1x512xi32>
    %25 = arith.addi %11, %24 : vector<1x512xi32>
    %c4_i32 = arith.constant 4 : i32
    %26 = vector.broadcast %c4_i32 : i32 to vector<1x512xi32>
    %27 = arith.muli %23, %26 : vector<1x512xi32>
    %28 = arith.addi %27, %25 : vector<1x512xi32>
    %29 = arith.sitofp %28 : vector<1x512xi32> to vector<1x512xbf16>
    %30 = vector.broadcast %21 : vector<32x1xbf16> to vector<32x512xbf16>
    %31 = vector.broadcast %29 : vector<1x512xbf16> to vector<32x512xbf16>
    %32 = arith.cmpf oeq, %30, %31 : vector<32x512xbf16>
    %33 = arith.truncf %16 : vector<1x512xf32> to vector<1x512xbf16>
    %c0_i32_6 = arith.constant 0 : i32
    %34 = arith.sitofp %c0_i32_6 : i32 to bf16
    %35 = vector.shape_cast %33 : vector<1x512xbf16> to vector<1x512xbf16>
    %36 = vector.broadcast %35 : vector<1x512xbf16> to vector<32x512xbf16>
    %37 = vector.broadcast %34 : bf16 to vector<32x512xbf16>
    %38 = arith.select %32, %36, %37 : vector<32x512xi1>, vector<32x512xbf16>
    %c0_i32_7 = arith.constant 0 : i32
    %39 = vector.broadcast %c0_i32_7 : i32 to vector<1x512xi32>
    %40 = arith.addi %10, %39 : vector<1x512xi32>
    %c1_i32 = arith.constant 1 : i32
    %41 = vector.broadcast %c1_i32 : i32 to vector<1x512xi32>
    %42 = arith.addi %11, %41 : vector<1x512xi32>
    %c4_i32_8 = arith.constant 4 : i32
    %43 = vector.broadcast %c4_i32_8 : i32 to vector<1x512xi32>
    %44 = arith.muli %40, %43 : vector<1x512xi32>
    %45 = arith.addi %44, %42 : vector<1x512xi32>
    %46 = arith.sitofp %45 : vector<1x512xi32> to vector<1x512xbf16>
    %47 = vector.broadcast %21 : vector<32x1xbf16> to vector<32x512xbf16>
    %48 = vector.broadcast %46 : vector<1x512xbf16> to vector<32x512xbf16>
    %49 = arith.cmpf oeq, %47, %48 : vector<32x512xbf16>
    %50 = arith.truncf %17 : vector<1x512xf32> to vector<1x512xbf16>
    %c0_i32_9 = arith.constant 0 : i32
    %51 = arith.sitofp %c0_i32_9 : i32 to bf16
    %52 = vector.shape_cast %50 : vector<1x512xbf16> to vector<1x512xbf16>
    %53 = vector.broadcast %52 : vector<1x512xbf16> to vector<32x512xbf16>
    %54 = vector.broadcast %51 : bf16 to vector<32x512xbf16>
    %55 = arith.select %49, %53, %54 : vector<32x512xi1>, vector<32x512xbf16>
    %56 = arith.addf %38, %55 : vector<32x512xbf16>
    %c1_i32_10 = arith.constant 1 : i32
    %57 = vector.broadcast %c1_i32_10 : i32 to vector<1x512xi32>
    %58 = arith.addi %10, %57 : vector<1x512xi32>
    %c0_i32_11 = arith.constant 0 : i32
    %59 = vector.broadcast %c0_i32_11 : i32 to vector<1x512xi32>
    %60 = arith.addi %11, %59 : vector<1x512xi32>
    %c4_i32_12 = arith.constant 4 : i32
    %61 = vector.broadcast %c4_i32_12 : i32 to vector<1x512xi32>
    %62 = arith.muli %58, %61 : vector<1x512xi32>
    %63 = arith.addi %62, %60 : vector<1x512xi32>
    %64 = arith.sitofp %63 : vector<1x512xi32> to vector<1x512xbf16>
    %65 = vector.broadcast %21 : vector<32x1xbf16> to vector<32x512xbf16>
    %66 = vector.broadcast %64 : vector<1x512xbf16> to vector<32x512xbf16>
    %67 = arith.cmpf oeq, %65, %66 : vector<32x512xbf16>
    %68 = arith.truncf %18 : vector<1x512xf32> to vector<1x512xbf16>
    %c0_i32_13 = arith.constant 0 : i32
    %69 = arith.sitofp %c0_i32_13 : i32 to bf16
    %70 = vector.shape_cast %68 : vector<1x512xbf16> to vector<1x512xbf16>
    %71 = vector.broadcast %70 : vector<1x512xbf16> to vector<32x512xbf16>
    %72 = vector.broadcast %69 : bf16 to vector<32x512xbf16>
    %73 = arith.select %67, %71, %72 : vector<32x512xi1>, vector<32x512xbf16>
    %74 = arith.addf %56, %73 : vector<32x512xbf16>
    %c1_i32_14 = arith.constant 1 : i32
    %75 = vector.broadcast %c1_i32_14 : i32 to vector<1x512xi32>
    %76 = arith.addi %10, %75 : vector<1x512xi32>
    %c1_i32_15 = arith.constant 1 : i32
    %77 = vector.broadcast %c1_i32_15 : i32 to vector<1x512xi32>
    %78 = arith.addi %11, %77 : vector<1x512xi32>
    %c4_i32_16 = arith.constant 4 : i32
    %79 = vector.broadcast %c4_i32_16 : i32 to vector<1x512xi32>
    %80 = arith.muli %76, %79 : vector<1x512xi32>
    %81 = arith.addi %80, %78 : vector<1x512xi32>
    %82 = arith.sitofp %81 : vector<1x512xi32> to vector<1x512xbf16>
    %83 = vector.broadcast %21 : vector<32x1xbf16> to vector<32x512xbf16>
    %84 = vector.broadcast %82 : vector<1x512xbf16> to vector<32x512xbf16>
    %85 = arith.cmpf oeq, %83, %84 : vector<32x512xbf16>
    %86 = arith.truncf %19 : vector<1x512xf32> to vector<1x512xbf16>
    %c0_i32_17 = arith.constant 0 : i32
    %87 = arith.sitofp %c0_i32_17 : i32 to bf16
    %88 = vector.shape_cast %86 : vector<1x512xbf16> to vector<1x512xbf16>
    %89 = vector.broadcast %88 : vector<1x512xbf16> to vector<32x512xbf16>
    %90 = vector.broadcast %87 : bf16 to vector<32x512xbf16>
    %91 = arith.select %85, %89, %90 : vector<32x512xi1>, vector<32x512xbf16>
    %92 = arith.addf %74, %91 : vector<32x512xbf16>
    %cst_18 = arith.constant 3.750000e-01 : f32
    %93 = vector.broadcast %cst_18 : f32 to vector<1x512xf32>
    %94 = arith.mulf %0, %93 : vector<1x512xf32>
    %cst_19 = arith.constant 3.750000e-01 : f32
    %95 = vector.broadcast %cst_19 : f32 to vector<1x512xf32>
    %96 = arith.mulf %1, %95 : vector<1x512xf32>
    %97 = math.floor %94 : vector<1x512xf32>
    %98 = math.floor %96 : vector<1x512xf32>
    %99 = arith.subf %94, %97 : vector<1x512xf32>
    %100 = arith.subf %96, %98 : vector<1x512xf32>
    %101 = arith.fptosi %97 : vector<1x512xf32> to vector<1x512xi32>
    %102 = arith.fptosi %98 : vector<1x512xf32> to vector<1x512xi32>
    %cst_20 = arith.constant 1.000000e+00 : f32
    %103 = vector.broadcast %cst_20 : f32 to vector<1x512xf32>
    %104 = arith.subf %103, %99 : vector<1x512xf32>
    %cst_21 = arith.constant 1.000000e+00 : f32
    %105 = vector.broadcast %cst_21 : f32 to vector<1x512xf32>
    %106 = arith.subf %105, %100 : vector<1x512xf32>
    %107 = arith.mulf %104, %106 : vector<1x512xf32>
    %108 = arith.mulf %104, %100 : vector<1x512xf32>
    %109 = arith.mulf %99, %106 : vector<1x512xf32>
    %110 = arith.mulf %99, %100 : vector<1x512xf32>
    %111 = tpu.iota {dimensions = array<i32: 0>} : vector<64x1xi32>
    %112 = arith.sitofp %111 : vector<64x1xi32> to vector<64x1xbf16>
    %c0_i32_22 = arith.constant 0 : i32
    %113 = vector.broadcast %c0_i32_22 : i32 to vector<1x512xi32>
    %114 = arith.addi %101, %113 : vector<1x512xi32>
    %c0_i32_23 = arith.constant 0 : i32
    %115 = vector.broadcast %c0_i32_23 : i32 to vector<1x512xi32>
    %116 = arith.addi %102, %115 : vector<1x512xi32>
    %c6_i32 = arith.constant 6 : i32
    %117 = vector.broadcast %c6_i32 : i32 to vector<1x512xi32>
    %118 = arith.muli %114, %117 : vector<1x512xi32>
    %119 = arith.addi %118, %116 : vector<1x512xi32>
    %120 = arith.sitofp %119 : vector<1x512xi32> to vector<1x512xbf16>
    %121 = vector.broadcast %112 : vector<64x1xbf16> to vector<64x512xbf16>
    %122 = vector.broadcast %120 : vector<1x512xbf16> to vector<64x512xbf16>
    %123 = arith.cmpf oeq, %121, %122 : vector<64x512xbf16>
    %124 = arith.truncf %107 : vector<1x512xf32> to vector<1x512xbf16>
    %c0_i32_24 = arith.constant 0 : i32
    %125 = arith.sitofp %c0_i32_24 : i32 to bf16
    %126 = vector.shape_cast %124 : vector<1x512xbf16> to vector<1x512xbf16>
    %127 = vector.broadcast %126 : vector<1x512xbf16> to vector<64x512xbf16>
    %128 = vector.broadcast %125 : bf16 to vector<64x512xbf16>
    %129 = arith.select %123, %127, %128 : vector<64x512xi1>, vector<64x512xbf16>
    %c0_i32_25 = arith.constant 0 : i32
    %130 = vector.broadcast %c0_i32_25 : i32 to vector<1x512xi32>
    %131 = arith.addi %101, %130 : vector<1x512xi32>
    %c1_i32_26 = arith.constant 1 : i32
    %132 = vector.broadcast %c1_i32_26 : i32 to vector<1x512xi32>
    %133 = arith.addi %102, %132 : vector<1x512xi32>
    %c6_i32_27 = arith.constant 6 : i32
    %134 = vector.broadcast %c6_i32_27 : i32 to vector<1x512xi32>
    %135 = arith.muli %131, %134 : vector<1x512xi32>
    %136 = arith.addi %135, %133 : vector<1x512xi32>
    %137 = arith.sitofp %136 : vector<1x512xi32> to vector<1x512xbf16>
    %138 = vector.broadcast %112 : vector<64x1xbf16> to vector<64x512xbf16>
    %139 = vector.broadcast %137 : vector<1x512xbf16> to vector<64x512xbf16>
    %140 = arith.cmpf oeq, %138, %139 : vector<64x512xbf16>
    %141 = arith.truncf %108 : vector<1x512xf32> to vector<1x512xbf16>
    %c0_i32_28 = arith.constant 0 : i32
    %142 = arith.sitofp %c0_i32_28 : i32 to bf16
    %143 = vector.shape_cast %141 : vector<1x512xbf16> to vector<1x512xbf16>
    %144 = vector.broadcast %143 : vector<1x512xbf16> to vector<64x512xbf16>
    %145 = vector.broadcast %142 : bf16 to vector<64x512xbf16>
    %146 = arith.select %140, %144, %145 : vector<64x512xi1>, vector<64x512xbf16>
    %147 = arith.addf %129, %146 : vector<64x512xbf16>
    %c1_i32_29 = arith.constant 1 : i32
    %148 = vector.broadcast %c1_i32_29 : i32 to vector<1x512xi32>
    %149 = arith.addi %101, %148 : vector<1x512xi32>
    %c0_i32_30 = arith.constant 0 : i32
    %150 = vector.broadcast %c0_i32_30 : i32 to vector<1x512xi32>
    %151 = arith.addi %102, %150 : vector<1x512xi32>
    %c6_i32_31 = arith.constant 6 : i32
    %152 = vector.broadcast %c6_i32_31 : i32 to vector<1x512xi32>
    %153 = arith.muli %149, %152 : vector<1x512xi32>
    %154 = arith.addi %153, %151 : vector<1x512xi32>
    %155 = arith.sitofp %154 : vector<1x512xi32> to vector<1x512xbf16>
    %156 = vector.broadcast %112 : vector<64x1xbf16> to vector<64x512xbf16>
    %157 = vector.broadcast %155 : vector<1x512xbf16> to vector<64x512xbf16>
    %158 = arith.cmpf oeq, %156, %157 : vector<64x512xbf16>
    %159 = arith.truncf %109 : vector<1x512xf32> to vector<1x512xbf16>
    %c0_i32_32 = arith.constant 0 : i32
    %160 = arith.sitofp %c0_i32_32 : i32 to bf16
    %161 = vector.shape_cast %159 : vector<1x512xbf16> to vector<1x512xbf16>
    %162 = vector.broadcast %161 : vector<1x512xbf16> to vector<64x512xbf16>
    %163 = vector.broadcast %160 : bf16 to vector<64x512xbf16>
    %164 = arith.select %158, %162, %163 : vector<64x512xi1>, vector<64x512xbf16>
    %165 = arith.addf %147, %164 : vector<64x512xbf16>
    %c1_i32_33 = arith.constant 1 : i32
    %166 = vector.broadcast %c1_i32_33 : i32 to vector<1x512xi32>
    %167 = arith.addi %101, %166 : vector<1x512xi32>
    %c1_i32_34 = arith.constant 1 : i32
    %168 = vector.broadcast %c1_i32_34 : i32 to vector<1x512xi32>
    %169 = arith.addi %102, %168 : vector<1x512xi32>
    %c6_i32_35 = arith.constant 6 : i32
    %170 = vector.broadcast %c6_i32_35 : i32 to vector<1x512xi32>
    %171 = arith.muli %167, %170 : vector<1x512xi32>
    %172 = arith.addi %171, %169 : vector<1x512xi32>
    %173 = arith.sitofp %172 : vector<1x512xi32> to vector<1x512xbf16>
    %174 = vector.broadcast %112 : vector<64x1xbf16> to vector<64x512xbf16>
    %175 = vector.broadcast %173 : vector<1x512xbf16> to vector<64x512xbf16>
    %176 = arith.cmpf oeq, %174, %175 : vector<64x512xbf16>
    %177 = arith.truncf %110 : vector<1x512xf32> to vector<1x512xbf16>
    %c0_i32_36 = arith.constant 0 : i32
    %178 = arith.sitofp %c0_i32_36 : i32 to bf16
    %179 = vector.shape_cast %177 : vector<1x512xbf16> to vector<1x512xbf16>
    %180 = vector.broadcast %179 : vector<1x512xbf16> to vector<64x512xbf16>
    %181 = vector.broadcast %178 : bf16 to vector<64x512xbf16>
    %182 = arith.select %176, %180, %181 : vector<64x512xi1>, vector<64x512xbf16>
    %183 = arith.addf %165, %182 : vector<64x512xbf16>
    %cst_37 = arith.constant 6.250000e-01 : f32
    %184 = vector.broadcast %cst_37 : f32 to vector<1x512xf32>
    %185 = arith.mulf %0, %184 : vector<1x512xf32>
    %cst_38 = arith.constant 6.250000e-01 : f32
    %186 = vector.broadcast %cst_38 : f32 to vector<1x512xf32>
    %187 = arith.mulf %1, %186 : vector<1x512xf32>
    %188 = math.floor %185 : vector<1x512xf32>
    %189 = math.floor %187 : vector<1x512xf32>
    %190 = arith.subf %185, %188 : vector<1x512xf32>
    %191 = arith.subf %187, %189 : vector<1x512xf32>
    %192 = arith.fptosi %188 : vector<1x512xf32> to vector<1x512xi32>
    %193 = arith.fptosi %189 : vector<1x512xf32> to vector<1x512xi32>
    %cst_39 = arith.constant 1.000000e+00 : f32
    %194 = vector.broadcast %cst_39 : f32 to vector<1x512xf32>
    %195 = arith.subf %194, %190 : vector<1x512xf32>
    %cst_40 = arith.constant 1.000000e+00 : f32
    %196 = vector.broadcast %cst_40 : f32 to vector<1x512xf32>
    %197 = arith.subf %196, %191 : vector<1x512xf32>
    %198 = arith.mulf %195, %197 : vector<1x512xf32>
    %199 = arith.mulf %195, %191 : vector<1x512xf32>
    %200 = arith.mulf %190, %197 : vector<1x512xf32>
    %201 = arith.mulf %190, %191 : vector<1x512xf32>
    %202 = tpu.iota {dimensions = array<i32: 0>} : vector<128x1xi32>
    %203 = arith.sitofp %202 : vector<128x1xi32> to vector<128x1xbf16>
    %c0_i32_41 = arith.constant 0 : i32
    %204 = vector.broadcast %c0_i32_41 : i32 to vector<1x512xi32>
    %205 = arith.addi %192, %204 : vector<1x512xi32>
    %c0_i32_42 = arith.constant 0 : i32
    %206 = vector.broadcast %c0_i32_42 : i32 to vector<1x512xi32>
    %207 = arith.addi %193, %206 : vector<1x512xi32>
    %c10_i32 = arith.constant 10 : i32
    %208 = vector.broadcast %c10_i32 : i32 to vector<1x512xi32>
    %209 = arith.muli %205, %208 : vector<1x512xi32>
    %210 = arith.addi %209, %207 : vector<1x512xi32>
    %211 = arith.sitofp %210 : vector<1x512xi32> to vector<1x512xbf16>
    %212 = vector.broadcast %203 : vector<128x1xbf16> to vector<128x512xbf16>
    %213 = vector.broadcast %211 : vector<1x512xbf16> to vector<128x512xbf16>
    %214 = arith.cmpf oeq, %212, %213 : vector<128x512xbf16>
    %215 = arith.truncf %198 : vector<1x512xf32> to vector<1x512xbf16>
    %c0_i32_43 = arith.constant 0 : i32
    %216 = arith.sitofp %c0_i32_43 : i32 to bf16
    %217 = vector.shape_cast %215 : vector<1x512xbf16> to vector<1x512xbf16>
    %218 = vector.broadcast %217 : vector<1x512xbf16> to vector<128x512xbf16>
    %219 = vector.broadcast %216 : bf16 to vector<128x512xbf16>
    %220 = arith.select %214, %218, %219 : vector<128x512xi1>, vector<128x512xbf16>
    %c0_i32_44 = arith.constant 0 : i32
    %221 = vector.broadcast %c0_i32_44 : i32 to vector<1x512xi32>
    %222 = arith.addi %192, %221 : vector<1x512xi32>
    %c1_i32_45 = arith.constant 1 : i32
    %223 = vector.broadcast %c1_i32_45 : i32 to vector<1x512xi32>
    %224 = arith.addi %193, %223 : vector<1x512xi32>
    %c10_i32_46 = arith.constant 10 : i32
    %225 = vector.broadcast %c10_i32_46 : i32 to vector<1x512xi32>
    %226 = arith.muli %222, %225 : vector<1x512xi32>
    %227 = arith.addi %226, %224 : vector<1x512xi32>
    %228 = arith.sitofp %227 : vector<1x512xi32> to vector<1x512xbf16>
    %229 = vector.broadcast %203 : vector<128x1xbf16> to vector<128x512xbf16>
    %230 = vector.broadcast %228 : vector<1x512xbf16> to vector<128x512xbf16>
    %231 = arith.cmpf oeq, %229, %230 : vector<128x512xbf16>
    %232 = arith.truncf %199 : vector<1x512xf32> to vector<1x512xbf16>
    %c0_i32_47 = arith.constant 0 : i32
    %233 = arith.sitofp %c0_i32_47 : i32 to bf16
    %234 = vector.shape_cast %232 : vector<1x512xbf16> to vector<1x512xbf16>
    %235 = vector.broadcast %234 : vector<1x512xbf16> to vector<128x512xbf16>
    %236 = vector.broadcast %233 : bf16 to vector<128x512xbf16>
    %237 = arith.select %231, %235, %236 : vector<128x512xi1>, vector<128x512xbf16>
    %238 = arith.addf %220, %237 : vector<128x512xbf16>
    %c1_i32_48 = arith.constant 1 : i32
    %239 = vector.broadcast %c1_i32_48 : i32 to vector<1x512xi32>
    %240 = arith.addi %192, %239 : vector<1x512xi32>
    %c0_i32_49 = arith.constant 0 : i32
    %241 = vector.broadcast %c0_i32_49 : i32 to vector<1x512xi32>
    %242 = arith.addi %193, %241 : vector<1x512xi32>
    %c10_i32_50 = arith.constant 10 : i32
    %243 = vector.broadcast %c10_i32_50 : i32 to vector<1x512xi32>
    %244 = arith.muli %240, %243 : vector<1x512xi32>
    %245 = arith.addi %244, %242 : vector<1x512xi32>
    %246 = arith.sitofp %245 : vector<1x512xi32> to vector<1x512xbf16>
    %247 = vector.broadcast %203 : vector<128x1xbf16> to vector<128x512xbf16>
    %248 = vector.broadcast %246 : vector<1x512xbf16> to vector<128x512xbf16>
    %249 = arith.cmpf oeq, %247, %248 : vector<128x512xbf16>
    %250 = arith.truncf %200 : vector<1x512xf32> to vector<1x512xbf16>
    %c0_i32_51 = arith.constant 0 : i32
    %251 = arith.sitofp %c0_i32_51 : i32 to bf16
    %252 = vector.shape_cast %250 : vector<1x512xbf16> to vector<1x512xbf16>
    %253 = vector.broadcast %252 : vector<1x512xbf16> to vector<128x512xbf16>
    %254 = vector.broadcast %251 : bf16 to vector<128x512xbf16>
    %255 = arith.select %249, %253, %254 : vector<128x512xi1>, vector<128x512xbf16>
    %256 = arith.addf %238, %255 : vector<128x512xbf16>
    %c1_i32_52 = arith.constant 1 : i32
    %257 = vector.broadcast %c1_i32_52 : i32 to vector<1x512xi32>
    %258 = arith.addi %192, %257 : vector<1x512xi32>
    %c1_i32_53 = arith.constant 1 : i32
    %259 = vector.broadcast %c1_i32_53 : i32 to vector<1x512xi32>
    %260 = arith.addi %193, %259 : vector<1x512xi32>
    %c10_i32_54 = arith.constant 10 : i32
    %261 = vector.broadcast %c10_i32_54 : i32 to vector<1x512xi32>
    %262 = arith.muli %258, %261 : vector<1x512xi32>
    %263 = arith.addi %262, %260 : vector<1x512xi32>
    %264 = arith.sitofp %263 : vector<1x512xi32> to vector<1x512xbf16>
    %265 = vector.broadcast %203 : vector<128x1xbf16> to vector<128x512xbf16>
    %266 = vector.broadcast %264 : vector<1x512xbf16> to vector<128x512xbf16>
    %267 = arith.cmpf oeq, %265, %266 : vector<128x512xbf16>
    %268 = arith.truncf %201 : vector<1x512xf32> to vector<1x512xbf16>
    %c0_i32_55 = arith.constant 0 : i32
    %269 = arith.sitofp %c0_i32_55 : i32 to bf16
    %270 = vector.shape_cast %268 : vector<1x512xbf16> to vector<1x512xbf16>
    %271 = vector.broadcast %270 : vector<1x512xbf16> to vector<128x512xbf16>
    %272 = vector.broadcast %269 : bf16 to vector<128x512xbf16>
    %273 = arith.select %267, %271, %272 : vector<128x512xi1>, vector<128x512xbf16>
    %274 = arith.addf %256, %273 : vector<128x512xbf16>
    %cst_56 = arith.constant 0.93749994 : f32
    %275 = vector.broadcast %cst_56 : f32 to vector<1x512xf32>
    %276 = arith.mulf %0, %275 : vector<1x512xf32>
    %cst_57 = arith.constant 0.93749994 : f32
    %277 = vector.broadcast %cst_57 : f32 to vector<1x512xf32>
    %278 = arith.mulf %1, %277 : vector<1x512xf32>
    %279 = math.floor %276 : vector<1x512xf32>
    %280 = math.floor %278 : vector<1x512xf32>
    %281 = arith.subf %276, %279 : vector<1x512xf32>
    %282 = arith.subf %278, %280 : vector<1x512xf32>
    %283 = arith.fptosi %279 : vector<1x512xf32> to vector<1x512xi32>
    %284 = arith.fptosi %280 : vector<1x512xf32> to vector<1x512xi32>
    %cst_58 = arith.constant 1.000000e+00 : f32
    %285 = vector.broadcast %cst_58 : f32 to vector<1x512xf32>
    %286 = arith.subf %285, %281 : vector<1x512xf32>
    %cst_59 = arith.constant 1.000000e+00 : f32
    %287 = vector.broadcast %cst_59 : f32 to vector<1x512xf32>
    %288 = arith.subf %287, %282 : vector<1x512xf32>
    %289 = arith.mulf %286, %288 : vector<1x512xf32>
    %290 = arith.mulf %286, %282 : vector<1x512xf32>
    %291 = arith.mulf %281, %288 : vector<1x512xf32>
    %292 = arith.mulf %281, %282 : vector<1x512xf32>
    %293 = tpu.iota {dimensions = array<i32: 0>} : vector<128x1xi32>
    %294 = arith.sitofp %293 : vector<128x1xi32> to vector<128x1xbf16>
    %c0_i32_60 = arith.constant 0 : i32
    %295 = vector.broadcast %c0_i32_60 : i32 to vector<1x512xi32>
    %296 = arith.addi %283, %295 : vector<1x512xi32>
    %c0_i32_61 = arith.constant 0 : i32
    %297 = vector.broadcast %c0_i32_61 : i32 to vector<1x512xi32>
    %298 = arith.addi %284, %297 : vector<1x512xi32>
    %c-1640531535_i32 = arith.constant -1640531535 : i32
    %299 = vector.broadcast %c-1640531535_i32 : i32 to vector<1x512xi32>
    %300 = arith.muli %298, %299 : vector<1x512xi32>
    %301 = arith.xori %296, %300 : vector<1x512xi32>
    %c127_i32 = arith.constant 127 : i32
    %302 = vector.broadcast %c127_i32 : i32 to vector<1x512xi32>
    %303 = arith.andi %301, %302 : vector<1x512xi32>
    %304 = arith.sitofp %303 : vector<1x512xi32> to vector<1x512xbf16>
    %305 = vector.broadcast %294 : vector<128x1xbf16> to vector<128x512xbf16>
    %306 = vector.broadcast %304 : vector<1x512xbf16> to vector<128x512xbf16>
    %307 = arith.cmpf oeq, %305, %306 : vector<128x512xbf16>
    %308 = arith.truncf %289 : vector<1x512xf32> to vector<1x512xbf16>
    %c0_i32_62 = arith.constant 0 : i32
    %309 = arith.sitofp %c0_i32_62 : i32 to bf16
    %310 = vector.shape_cast %308 : vector<1x512xbf16> to vector<1x512xbf16>
    %311 = vector.broadcast %310 : vector<1x512xbf16> to vector<128x512xbf16>
    %312 = vector.broadcast %309 : bf16 to vector<128x512xbf16>
    %313 = arith.select %307, %311, %312 : vector<128x512xi1>, vector<128x512xbf16>
    %c0_i32_63 = arith.constant 0 : i32
    %314 = vector.broadcast %c0_i32_63 : i32 to vector<1x512xi32>
    %315 = arith.addi %283, %314 : vector<1x512xi32>
    %c1_i32_64 = arith.constant 1 : i32
    %316 = vector.broadcast %c1_i32_64 : i32 to vector<1x512xi32>
    %317 = arith.addi %284, %316 : vector<1x512xi32>
    %c-1640531535_i32_65 = arith.constant -1640531535 : i32
    %318 = vector.broadcast %c-1640531535_i32_65 : i32 to vector<1x512xi32>
    %319 = arith.muli %317, %318 : vector<1x512xi32>
    %320 = arith.xori %315, %319 : vector<1x512xi32>
    %c127_i32_66 = arith.constant 127 : i32
    %321 = vector.broadcast %c127_i32_66 : i32 to vector<1x512xi32>
    %322 = arith.andi %320, %321 : vector<1x512xi32>
    %323 = arith.sitofp %322 : vector<1x512xi32> to vector<1x512xbf16>
    %324 = vector.broadcast %294 : vector<128x1xbf16> to vector<128x512xbf16>
    %325 = vector.broadcast %323 : vector<1x512xbf16> to vector<128x512xbf16>
    %326 = arith.cmpf oeq, %324, %325 : vector<128x512xbf16>
    %327 = arith.truncf %290 : vector<1x512xf32> to vector<1x512xbf16>
    %c0_i32_67 = arith.constant 0 : i32
    %328 = arith.sitofp %c0_i32_67 : i32 to bf16
    %329 = vector.shape_cast %327 : vector<1x512xbf16> to vector<1x512xbf16>
    %330 = vector.broadcast %329 : vector<1x512xbf16> to vector<128x512xbf16>
    %331 = vector.broadcast %328 : bf16 to vector<128x512xbf16>
    %332 = arith.select %326, %330, %331 : vector<128x512xi1>, vector<128x512xbf16>
    %333 = arith.addf %313, %332 : vector<128x512xbf16>
    %c1_i32_68 = arith.constant 1 : i32
    %334 = vector.broadcast %c1_i32_68 : i32 to vector<1x512xi32>
    %335 = arith.addi %283, %334 : vector<1x512xi32>
    %c0_i32_69 = arith.constant 0 : i32
    %336 = vector.broadcast %c0_i32_69 : i32 to vector<1x512xi32>
    %337 = arith.addi %284, %336 : vector<1x512xi32>
    %c-1640531535_i32_70 = arith.constant -1640531535 : i32
    %338 = vector.broadcast %c-1640531535_i32_70 : i32 to vector<1x512xi32>
    %339 = arith.muli %337, %338 : vector<1x512xi32>
    %340 = arith.xori %335, %339 : vector<1x512xi32>
    %c127_i32_71 = arith.constant 127 : i32
    %341 = vector.broadcast %c127_i32_71 : i32 to vector<1x512xi32>
    %342 = arith.andi %340, %341 : vector<1x512xi32>
    %343 = arith.sitofp %342 : vector<1x512xi32> to vector<1x512xbf16>
    %344 = vector.broadcast %294 : vector<128x1xbf16> to vector<128x512xbf16>
    %345 = vector.broadcast %343 : vector<1x512xbf16> to vector<128x512xbf16>
    %346 = arith.cmpf oeq, %344, %345 : vector<128x512xbf16>
    %347 = arith.truncf %291 : vector<1x512xf32> to vector<1x512xbf16>
    %c0_i32_72 = arith.constant 0 : i32
    %348 = arith.sitofp %c0_i32_72 : i32 to bf16
    %349 = vector.shape_cast %347 : vector<1x512xbf16> to vector<1x512xbf16>
    %350 = vector.broadcast %349 : vector<1x512xbf16> to vector<128x512xbf16>
    %351 = vector.broadcast %348 : bf16 to vector<128x512xbf16>
    %352 = arith.select %346, %350, %351 : vector<128x512xi1>, vector<128x512xbf16>
    %353 = arith.addf %333, %352 : vector<128x512xbf16>
    %c1_i32_73 = arith.constant 1 : i32
    %354 = vector.broadcast %c1_i32_73 : i32 to vector<1x512xi32>
    %355 = arith.addi %283, %354 : vector<1x512xi32>
    %c1_i32_74 = arith.constant 1 : i32
    %356 = vector.broadcast %c1_i32_74 : i32 to vector<1x512xi32>
    %357 = arith.addi %284, %356 : vector<1x512xi32>
    %c-1640531535_i32_75 = arith.constant -1640531535 : i32
    %358 = vector.broadcast %c-1640531535_i32_75 : i32 to vector<1x512xi32>
    %359 = arith.muli %357, %358 : vector<1x512xi32>
    %360 = arith.xori %355, %359 : vector<1x512xi32>
    %c127_i32_76 = arith.constant 127 : i32
    %361 = vector.broadcast %c127_i32_76 : i32 to vector<1x512xi32>
    %362 = arith.andi %360, %361 : vector<1x512xi32>
    %363 = arith.sitofp %362 : vector<1x512xi32> to vector<1x512xbf16>
    %364 = vector.broadcast %294 : vector<128x1xbf16> to vector<128x512xbf16>
    %365 = vector.broadcast %363 : vector<1x512xbf16> to vector<128x512xbf16>
    %366 = arith.cmpf oeq, %364, %365 : vector<128x512xbf16>
    %367 = arith.truncf %292 : vector<1x512xf32> to vector<1x512xbf16>
    %c0_i32_77 = arith.constant 0 : i32
    %368 = arith.sitofp %c0_i32_77 : i32 to bf16
    %369 = vector.shape_cast %367 : vector<1x512xbf16> to vector<1x512xbf16>
    %370 = vector.broadcast %369 : vector<1x512xbf16> to vector<128x512xbf16>
    %371 = vector.broadcast %368 : bf16 to vector<128x512xbf16>
    %372 = arith.select %366, %370, %371 : vector<128x512xi1>, vector<128x512xbf16>
    %373 = arith.addf %353, %372 : vector<128x512xbf16>
    %374 = tpu.concatenate %92, %183, %274, %373 in 0 : vector<32x512xbf16>, vector<64x512xbf16>, vector<128x512xbf16>, vector<128x512xbf16> -> vector<352x512xbf16>
    %c0_78 = arith.constant 0 : index
    %c0_79 = arith.constant 0 : index
    %375 = vector.load %arg2[%c0_78, %c0_79] : memref<8x352xbf16, #tpu.memory_space<vmem>>, vector<8x352xbf16>
    %cst_80 = arith.constant dense<0.000000e+00> : vector<8x512xf32>
    %376 = tpu.matmul %375, %374, %cst_80 {dimension_numbers = #tpu.dot_dimension_numbers<[1], [0], [0], [1], [0, 0, 1, 1], [], []>} : vector<8x352xbf16>, vector<352x512xbf16>, vector<8x512xf32> -> vector<8x512xf32>
    %c0_81 = arith.constant 0 : index
    %c0_82 = arith.constant 0 : index
    %377 = vector.load %arg3[%c0_81, %c0_82] : memref<8x512xf32, #tpu.memory_space<vmem>>, vector<8x512xf32>
    tpu.vector_store %arg3[%c0_81, %c0_82], %376 {strides = array<i32>} : memref<8x512xf32, #tpu.memory_space<vmem>>, vector<8x512xf32>,
    return
  }
  func.func @transform_0(%arg0: i32) -> (i32, i32) {
    %c0_i32 = arith.constant 0 : i32
    %c0_i32_0 = arith.constant 0 : i32
    return %c0_i32, %arg0 : i32, i32
  }
  func.func @transform_1(%arg0: i32) -> (i32, i32) {
    %c0_i32 = arith.constant 0 : i32
    %c0_i32_0 = arith.constant 0 : i32
    %c0_i32_1 = arith.constant 0 : i32
    return %c0_i32, %c0_i32_0 : i32, i32
  }
  func.func @transform_2(%arg0: i32) -> (i32, i32) {
    %c0_i32 = arith.constant 0 : i32
    %c0_i32_0 = arith.constant 0 : i32
    return %c0_i32, %arg0 : i32, i32
  }
}

</mosaic_0001>

<llo_original>
// kernel: tpu_custom_call.1
$region0: #{tpu_custom_call.1}
  #allocation0 [shape = 'u32[]', space=smem, size = 0x4, offset = 0x4, fixed_abs, tag = 'smem constant byte address 0x4 - core index']
  #allocation1 [shape = 'u32[144,128]{1,0:T(1,128)}', space=vmem, size = 0x12000, scoped, tag = 'internal scratch']
  %s0 = inlined_call_operand.hbm [shape: f32[2,1024], index: 0, kind: input, shape index: {}]
  %s1 = inlined_call_operand.hbm [shape: bf16[8,352], index: 1, kind: input, shape index: {}]
  %s2 = inlined_call_operand.hbm [shape: f32[8,1024], index: 2, kind: output, shape index: {}]
  %s3 = sld [smem:[#allocation0]]
  $region49: #{tpu_custom_call.1} parent=0
    _
  %s5 = ssub.s32 1, %s3
  %s6 = scalar_select 0, %s5, %s3
  $region1: #{tpu_custom_call.1} parent=0
    #allocation2 [shape = 'u8[8192]{0}', space=vmem, size = 0x2000, scoped, tag = 'input window, operand 0']
    #allocation3 [shape = 's32[2]{0}', space=sflag, size = 0x8, scoped, tag = 'scoped memory for tpu_custom_call.1']
    #allocation4 [shape = 's32[2]{0}', space=sflag, size = 0x8, scoped, tag = 'scoped memory for tpu_custom_call.1']
    #allocation5 [shape = 'u8[6144]{0}', space=vmem, size = 0x1800, scoped, tag = 'input window, operand 1, single buffered']
    #allocation6 [shape = 's32[1]{0}', space=sflag, size = 0x4, scoped, tag = 'scoped memory for tpu_custom_call.1']
    #allocation7 [shape = 'u8[32768]{0}', space=vmem, size = 0x8000, scoped, tag = 'output window, operand 0']
    %7 = vsyncpa [#allocation3], 0
    %s8 = scalar_lea.sflag [#allocation3], 1
    %9 = vsyncpa %s8, 0
    %10 = vsyncpa [#allocation6], 0
    %11 = vsyncpa [#allocation4], 0
    %s12 = scalar_lea.sflag [#allocation4], 1
    %13 = vsyncpa %s12, 0
    loop: start=0, step=1, limit=4
    $region2: #{tpu_custom_call.1} parent=1 // loop_pre_header
      _
    $region3: #{tpu_custom_call.1} parent=1 // loop_header
      %s15 = sphi 0, %s19
      %p16 = scmp.ge.s32.totalorder %s15, 4
      %s25 = sphi 0, %s27
      %s28 = sphi 0, %s25
      %s29 = sphi 0, %s28
      %s45 = sphi 0, %s29
      %s49 = sphi 0, %s49
      %s51 = sphi 0, %s49
      %s52 = sphi 0, %s51
      %s66 = sphi 0, %s52
      %s72 = sphi 0, %s74
      %s75 = sphi 0, %s72
      %s76 = sphi 0, %s75
      %s92 = sphi 0, %s76
    $region4: #{tpu_custom_call.1} parent=1 // loop_header_branch
      %18 = sbr.rel (%p16) target = $region8
    $region5: #{tpu_custom_call.1} parent=1 // loop_body
      %s20 = ssub.s32 %s15, 1
      %s21 = ssub.s32 %s15, 2
      %s22 = sadd.s32 %s15, 1
      %s23 = ssub.s32 %s15, %s22
      %p24 = scmp.eq.s32.totalorder %s23, 0
      %s26 = sadd.s32 %s25, 1
      %s27 = scalar_select %p24, %s25, %s26
      %p30 = pneg %p24
      %p31 = scmp.eq.s32.totalorder %s15, 1
      %p32 = por %p30, %p31
      %p33 = scmp.ne.s32.totalorder %s25, %s28
      %p34 = scmp.eq.s32.totalorder %s15, 0
      %p35 = por %p33, %p34
      %p36 = scmp.ne.s32.totalorder %s25, %s28
      %p37 = scmp.eq.s32.totalorder %s20, 1
      %p38 = por %p36, %p37
      %p39 = scmp.ne.s32.totalorder %s28, %s29
      %p40 = scmp.eq.s32.totalorder %s20, 0
      %p41 = por %p39, %p40
      %p42 = scmp.ne.s32.totalorder %s28, %s29
      %p43 = scmp.eq.s32.totalorder %s21, 1
      %p44 = por %p42, %p43
      %p46 = scmp.ne.s32.totalorder %s29, %s45
      %p47 = scmp.eq.s32.totalorder %s21, 0
      %p48 = por %p46, %p47
      %s50 = sadd.s32 %s49, 1
      %p53 = scmp.eq.s32.totalorder %s15, 1
      %p54 = scmp.ne.s32.totalorder %s49, %s51
      %p55 = scmp.eq.s32.totalorder %s15, 0
      %p56 = por %p54, %p55
      %p57 = scmp.ne.s32.totalorder %s49, %s51
      %p58 = scmp.eq.s32.totalorder %s20, 1
      %p59 = por %p57, %p58
      %p60 = scmp.ne.s32.totalorder %s51, %s52
      %p61 = scmp.eq.s32.totalorder %s20, 0
      %p62 = por %p60, %p61
      %p63 = scmp.ne.s32.totalorder %s51, %s52
      %p64 = scmp.eq.s32.totalorder %s21, 1
      %p65 = por %p63, %p64
      %p67 = scmp.ne.s32.totalorder %s52, %s66
      %p68 = scmp.eq.s32.totalorder %s21, 0
      %p69 = por %p67, %p68
      %s70 = ssub.s32 %s15, %s22
      %p71 = scmp.eq.s32.totalorder %s70, 0
      %s73 = sadd.s32 %s72, 1
      %s74 = scalar_select %p71, %s72, %s73
      %p77 = pneg %p71
      %p78 = scmp.eq.s32.totalorder %s15, 1
      %p79 = por %p77, %p78
      %p80 = scmp.ne.s32.totalorder %s72, %s75
      %p81 = scmp.eq.s32.totalorder %s15, 0
      %p82 = por %p80, %p81
      %p83 = scmp.ne.s32.totalorder %s72, %s75
      %p84 = scmp.eq.s32.totalorder %s20, 1
      %p85 = por %p83, %p84
      %p86 = scmp.ne.s32.totalorder %s75, %s76
      %p87 = scmp.eq.s32.totalorder %s20, 0
      %p88 = por %p86, %p87
      %p89 = scmp.ne.s32.totalorder %s75, %s76
      %p90 = scmp.eq.s32.totalorder %s21, 1
      %p91 = por %p89, %p90
      %p93 = scmp.ne.s32.totalorder %s76, %s92
      %p94 = scmp.eq.s32.totalorder %s21, 0
      %p95 = por %p93, %p94
      %p96 = scmp.le.s32.totalorder 1, %s15
      %p97 = scmp.lt.s32.totalorder %s15, 3
      %p98 = pnand %p96, %p97
      %p99 = pneg %p98
      // Predicated region
      $region9: #{tpu_custom_call.1} parent=5 // pred_check
        _
      $region10: #{tpu_custom_call.1} parent=5 // pred_check_branch
        %101 = sbr.rel (%p98) target = $region12
      $region11: #{tpu_custom_call.1} parent=5 // pred_region
        %s102 = ssub.s32 %s15, 1
        // Predicated region
        $region13: #{tpu_custom_call.1} parent=11 // pred_check
          %p103 = pneg %p62
        $region14: #{tpu_custom_call.1} parent=11 // pred_check_branch
          %105 = sbr.rel (%p103) target = $region16
        $region15: #{tpu_custom_call.1} parent=11 // pred_region
          %s107 = ssub.s32 192, 192
          %108 = vsyncadd [#allocation6], %s107
          %s110 = sshll.u32 [#allocation5], 4
          %s111 = int_to_ptr.vmem [resolvable:$true] %s110
          %113 = dma.hbm_to_vmem [thread:$0]  %s1, 192, %s111, [#allocation6]
        $region16: #{tpu_custom_call.1} parent=11 // pred_fallthru
          _
      $region12: #{tpu_custom_call.1} parent=5 // pred_fallthru
        _
      %p114 = scmp.lt.s32.totalorder %s15, 2
      // Predicated region
      $region17: #{tpu_custom_call.1} parent=5 // pred_check
        %p115 = pneg %p114
      $region18: #{tpu_custom_call.1} parent=5 // pred_check_branch
        %117 = sbr.rel (%p115) target = $region20
      $region19: #{tpu_custom_call.1} parent=5 // pred_region
        // Predicated region
        $region21: #{tpu_custom_call.1} parent=19 // pred_check
          %p118 = pneg %p35
        $region22: #{tpu_custom_call.1} parent=19 // pred_check_branch
          %120 = sbr.rel (%p118) target = $region24
        $region23: #{tpu_custom_call.1} parent=19 // pred_region
          %s121 = sand.u32 %s25, 1
          %s122 = scalar_lea.sflag [#allocation3], %s121
          %s123 = sand.u32 %s25, 1
          %s124 = smul.addr %s123, 8
          %s125 = scalar_lea.vmem [#allocation2], %s124
          %s126 = smul.u32 4, %s15
          %s128 = ssub.s32 128, 128
          %129 = vsyncadd %s122, %s128
          %s130 = smul.addr %s126, 32
          %s131 = scalar_lea.hbm %s0, %s130
          %s133 = sshll.u32 %s125, 4
          %s134 = int_to_ptr.vmem [resolvable:$true] %s133
          %136 = dma.hbm_to_vmem [thread:$0]  %s131, 128, %s134, %s122
        $region24: #{tpu_custom_call.1} parent=19 // pred_fallthru
          _
      $region20: #{tpu_custom_call.1} parent=5 // pred_fallthru
        _
      %p137 = scmp.le.s32.totalorder 1, %s15
      %p138 = scmp.lt.s32.totalorder %s15, 3
      %p139 = pnand %p137, %p138
      %p140 = pneg %p139
      // Predicated region
      $region25: #{tpu_custom_call.1} parent=5 // pred_check
        _
      $region26: #{tpu_custom_call.1} parent=5 // pred_check_branch
        %142 = sbr.rel (%p139) target = $region28
      $region27: #{tpu_custom_call.1} parent=5 // pred_region
        %s143 = ssub.s32 %s15, 1
        %s144 = sand.u32 %s28, 1
        %s145 = scalar_lea.sflag [#allocation3], %s144
        %s146 = sand.u32 %s28, 1
        %s147 = smul.addr %s146, 8
        %s148 = scalar_lea.vmem [#allocation2], %s147
        // Predicated region
        $region29: #{tpu_custom_call.1} parent=27 // pred_check
          %p149 = pneg %p41
        $region30: #{tpu_custom_call.1} parent=27 // pred_check_branch
          %151 = sbr.rel (%p149) target = $region32
        $region31: #{tpu_custom_call.1} parent=27 // pred_region
          %152 = dma.done %s145, 128
        $region32: #{tpu_custom_call.1} parent=27 // pred_fallthru
          _
        // Predicated region
        $region33: #{tpu_custom_call.1} parent=27 // pred_check
          %p153 = pneg %p62
        $region34: #{tpu_custom_call.1} parent=27 // pred_check_branch
          %155 = sbr.rel (%p153) target = $region36
        $region35: #{tpu_custom_call.1} parent=27 // pred_region
          %156 = dma.done [#allocation6], 192
        $region36: #{tpu_custom_call.1} parent=27 // pred_fallthru
          _
        %s157 = sand.u32 %s28, 1
        %s158 = scalar_lea.sflag [#allocation3], %s157
        %s159 = sand.u32 %s28, 1
        %s160 = smul.addr %s159, 8
        %s161 = scalar_lea.vmem [#allocation2], %s160
        %p162 = pneg %p41
        %p163 = pneg %p38
        %p164 = pneg %p62
        %p165 = pneg %p59
        %p166 = pneg %p88
        %p167 = pneg %p85
        %s168 = sand.u32 %s75, 1
        %s169 = scalar_lea.sflag [#allocation4], %s168
        %s170 = sand.u32 %s75, 1
        %s171 = smul.addr %s170, 32
        %s172 = scalar_lea.vmem [#allocation7], %s171
        %s173 = smul.u32 4, %s20
        %s174 = smul.u32 4, %s20
        %v176 = vld [vmem:[%s148] ss:$2 sm:$0xf]
        %s177 = scalar_lea.vmem %s148, 1 [#allocation2]
        %v178 = vld [vmem:[%s177] ss:$2 sm:$0xf]
        %v179 = vmul.f32 %v176, 0.25
        %v180 = vmul.f32 %v178, 0.25
        %v181 = vfloor.f32 %v179
        %v182 = vfloor.f32 %v180
        %v183 = vsub.f32 %v179, %v181
        %v184 = vsub.f32 %v180, %v182
        %v185 = vcvt.f32.s32.to.zero.pseudo %v181
        %v186 = vcvt.f32.s32.to.zero.pseudo %v182
        %v187 = vsub.f32 1.0, %v183
        %v188 = vsub.f32 1.0, %v184
        %v189 = vmul.f32 %v187, %v188
        %v190 = vmul.f32 %v187, %v184
        %v191 = vmul.f32 %v183, %v188
        %v192 = vmul.f32 %v183, %v184
        %v193 = vlaneseq
        %v194 = vshrl.u32 %v193, 7
        %v195 = vadd.s32 %v194, 8
        %v196 = vadd.s32 %v194, 16
        %v197 = vadd.s32 %v194, 24
        %v198 = vcvt.s32.f32 %v194
        %v199 = vcvt.s32.f32 %v195
        %v200 = vcvt.s32.f32 %v196
        %v201 = vcvt.s32.f32 %v197
        %v202 = vpack.c.bf16 %v199, %v198
        %v203 = vpack.c.bf16 %v201, %v200
        %v204 = vmul.u32 %v185, 4
        %v205 = vadd.s32 %v204, %v186
        %v206 = vcvt.s32.f32 %v205
        %v208 = vlaneseq
        %v209 = vshrl.u32 %v208, 7
        %v210 = vsub.s32 0, %v209
        %v211 = vrot.slane %v206, %v210
        %v212 = vlaneseq
        %v213 = vshrl.u32 %v212, 7
        %v214 = vsub.s32 1, %v213
        %v215 = vrot.slane %v206, %v214
        %v216 = vlaneseq
        %v217 = vshrl.u32 %v216, 7
        %v218 = vsub.s32 2, %v217
        %v219 = vrot.slane %v206, %v218
        %v220 = vlaneseq
        %v221 = vshrl.u32 %v220, 7
        %v222 = vsub.s32 3, %v221
        %v223 = vrot.slane %v206, %v222
        %v228 = vpack.c.bf16 %v211, %v211
        %v229 = vpack.c.bf16 %v215, %v215
        %v230 = vpack.c.bf16 %v219, %v219
        %v231 = vpack.c.bf16 %v223, %v223
        %v233 = vpack.i.b16 %v228, %v228
        %v235 = vlaneseq
        %v236 = vshrl.u32 %v235, 7
        %v237 = vsub.s32 0, %v236
        %v238 = vrot.slane %v233, %v237
        %v240 = vpack.i.b16 %v229, %v229
        %v242 = vlaneseq
        %v243 = vshrl.u32 %v242, 7
        %v244 = vsub.s32 0, %v243
        %v245 = vrot.slane %v240, %v244
        %v247 = vpack.i.b16 %v230, %v230
        %v249 = vlaneseq
        %v250 = vshrl.u32 %v249, 7
        %v251 = vsub.s32 0, %v250
        %v252 = vrot.slane %v247, %v251
        %v254 = vpack.i.b16 %v231, %v231
        %v256 = vlaneseq
        %v257 = vshrl.u32 %v256, 7
        %v258 = vsub.s32 0, %v257
        %v259 = vrot.slane %v254, %v258
        %vm260 = vcmp.eq.bf16.partialorder %v202, %v238
        %vm261 = vcmp.eq.bf16.partialorder %v202, %v245
        %vm262 = vcmp.eq.bf16.partialorder %v202, %v252
        %vm263 = vcmp.eq.bf16.partialorder %v202, %v259
        %vm264 = vcmp.eq.bf16.partialorder %v203, %v238
        %vm265 = vcmp.eq.bf16.partialorder %v203, %v245
        %vm266 = vcmp.eq.bf16.partialorder %v203, %v252
        %vm267 = vcmp.eq.bf16.partialorder %v203, %v259
        %v269 = vlaneseq
        %v270 = vshrl.u32 %v269, 7
        %v271 = vsub.s32 0, %v270
        %v272 = vrot.slane %v189, %v271
        %v273 = vlaneseq
        %v274 = vshrl.u32 %v273, 7
        %v275 = vsub.s32 1, %v274
        %v276 = vrot.slane %v189, %v275
        %v277 = vlaneseq
        %v278 = vshrl.u32 %v277, 7
        %v279 = vsub.s32 2, %v278
        %v280 = vrot.slane %v189, %v279
        %v281 = vlaneseq
        %v282 = vshrl.u32 %v281, 7
        %v283 = vsub.s32 3, %v282
        %v284 = vrot.slane %v189, %v283
        %v289 = vpack.c.bf16 %v272, %v272
        %v290 = vpack.c.bf16 %v276, %v276
        %v291 = vpack.c.bf16 %v280, %v280
        %v292 = vpack.c.bf16 %v284, %v284
        %v294 = vpack.i.b16 %v289, %v289
        %v296 = vlaneseq
        %v297 = vshrl.u32 %v296, 7
        %v298 = vsub.s32 0, %v297
        %v299 = vrot.slane %v294, %v298
        %v301 = vpack.i.b16 %v290, %v290
        %v303 = vlaneseq
        %v304 = vshrl.u32 %v303, 7
        %v305 = vsub.s32 0, %v304
        %v306 = vrot.slane %v301, %v305
        %v308 = vpack.i.b16 %v291, %v291
        %v310 = vlaneseq
        %v311 = vshrl.u32 %v310, 7
        %v312 = vsub.s32 0, %v311
        %v313 = vrot.slane %v308, %v312
        %v315 = vpack.i.b16 %v292, %v292
        %v317 = vlaneseq
        %v318 = vshrl.u32 %v317, 7
        %v319 = vsub.s32 0, %v318
        %v320 = vrot.slane %v315, %v319
        %v321 = vsel %vm260, %v299, 0
        %v322 = vsel %vm261, %v306, 0
        %v323 = vsel %vm262, %v313, 0
        %v324 = vsel %vm263, %v320, 0
        %v325 = vsel %vm264, %v299, 0
        %v326 = vsel %vm265, %v306, 0
        %v327 = vsel %vm266, %v313, 0
        %v328 = vsel %vm267, %v320, 0
        %v329 = vadd.s32 %v186, 1
        %v330 = vadd.s32 %v204, %v329
        %v331 = vcvt.s32.f32 %v330
        %v333 = vlaneseq
        %v334 = vshrl.u32 %v333, 7
        %v335 = vsub.s32 0, %v334
        %v336 = vrot.slane %v331, %v335
        %v337 = vlaneseq
        %v338 = vshrl.u32 %v337, 7
        %v339 = vsub.s32 1, %v338
        %v340 = vrot.slane %v331, %v339
        %v341 = vlaneseq
        %v342 = vshrl.u32 %v341, 7
        %v343 = vsub.s32 2, %v342
        %v344 = vrot.slane %v331, %v343
        %v345 = vlaneseq
        %v346 = vshrl.u32 %v345, 7
        %v347 = vsub.s32 3, %v346
        %v348 = vrot.slane %v331, %v347
        %v353 = vpack.c.bf16 %v336, %v336
        %v354 = vpack.c.bf16 %v340, %v340
        %v355 = vpack.c.bf16 %v344, %v344
        %v356 = vpack.c.bf16 %v348, %v348
        %v358 = vpack.i.b16 %v353, %v353
        %v360 = vlaneseq
        %v361 = vshrl.u32 %v360, 7
        %v362 = vsub.s32 0, %v361
        %v363 = vrot.slane %v358, %v362
        %v365 = vpack.i.b16 %v354, %v354
        %v367 = vlaneseq
        %v368 = vshrl.u32 %v367, 7
        %v369 = vsub.s32 0, %v368
        %v370 = vrot.slane %v365, %v369
        %v372 = vpack.i.b16 %v355, %v355
        %v374 = vlaneseq
        %v375 = vshrl.u32 %v374, 7
        %v376 = vsub.s32 0, %v375
        %v377 = vrot.slane %v372, %v376
        %v379 = vpack.i.b16 %v356, %v356
        %v381 = vlaneseq
        %v382 = vshrl.u32 %v381, 7
        %v383 = vsub.s32 0, %v382
        %v384 = vrot.slane %v379, %v383
        %vm385 = vcmp.eq.bf16.partialorder %v202, %v363
        %vm386 = vcmp.eq.bf16.partialorder %v202, %v370
        %vm387 = vcmp.eq.bf16.partialorder %v202, %v377
        %vm388 = vcmp.eq.bf16.partialorder %v202, %v384
        %vm389 = vcmp.eq.bf16.partialorder %v203, %v363
        %vm390 = vcmp.eq.bf16.partialorder %v203, %v370
        %vm391 = vcmp.eq.bf16.partialorder %v203, %v377
        %vm392 = vcmp.eq.bf16.partialorder %v203, %v384
        %v394 = vlaneseq
        %v395 = vshrl.u32 %v394, 7
        %v396 = vsub.s32 0, %v395
        %v397 = vrot.slane %v190, %v396
        %v398 = vlaneseq
        %v399 = vshrl.u32 %v398, 7
        %v400 = vsub.s32 1, %v399
        %v401 = vrot.slane %v190, %v400
        %v402 = vlaneseq
        %v403 = vshrl.u32 %v402, 7
        %v404 = vsub.s32 2, %v403
        %v405 = vrot.slane %v190, %v404
        %v406 = vlaneseq
        %v407 = vshrl.u32 %v406, 7
        %v408 = vsub.s32 3, %v407
        %v409 = vrot.slane %v190, %v408
        %v414 = vpack.c.bf16 %v397, %v397
        %v415 = vpack.c.bf16 %v401, %v401
        %v416 = vpack.c.bf16 %v405, %v405
        %v417 = vpack.c.bf16 %v409, %v409
        %v419 = vpack.i.b16 %v414, %v414
        %v421 = vlaneseq
        %v422 = vshrl.u32 %v421, 7
        %v423 = vsub.s32 0, %v422
        %v424 = vrot.slane %v419, %v423
        %v426 = vpack.i.b16 %v415, %v415
        %v428 = vlaneseq
        %v429 = vshrl.u32 %v428, 7
        %v430 = vsub.s32 0, %v429
        %v431 = vrot.slane %v426, %v430
        %v433 = vpack.i.b16 %v416, %v416
        %v435 = vlaneseq
        %v436 = vshrl.u32 %v435, 7
        %v437 = vsub.s32 0, %v436
        %v438 = vrot.slane %v433, %v437
        %v440 = vpack.i.b16 %v417, %v417
        %v442 = vlaneseq
        %v443 = vshrl.u32 %v442, 7
        %v444 = vsub.s32 0, %v443
        %v445 = vrot.slane %v440, %v444
        %v446 = vsel %vm385, %v424, 0
        %v447 = vsel %vm386, %v431, 0
        %v448 = vsel %vm387, %v438, 0
        %v449 = vsel %vm388, %v445, 0
        %v450 = vsel %vm389, %v424, 0
        %v451 = vsel %vm390, %v431, 0
        %v452 = vsel %vm391, %v438, 0
        %v453 = vsel %vm392, %v445, 0
        %v454 = vadd.bf16 %v321, %v446
        %v455 = vadd.bf16 %v322, %v447
        %v456 = vadd.bf16 %v323, %v448
        %v457 = vadd.bf16 %v324, %v449
        %v458 = vadd.bf16 %v325, %v450
        %v459 = vadd.bf16 %v326, %v451
        %v460 = vadd.bf16 %v327, %v452
        %v461 = vadd.bf16 %v328, %v453
        %v462 = vadd.s32 %v185, 1
        %v463 = vmul.u32 %v462, 4
        %v464 = vadd.s32 %v463, %v186
        %v465 = vcvt.s32.f32 %v464
        %v467 = vlaneseq
        %v468 = vshrl.u32 %v467, 7
        %v469 = vsub.s32 0, %v468
        %v470 = vrot.slane %v465, %v469
        %v471 = vlaneseq
        %v472 = vshrl.u32 %v471, 7
        %v473 = vsub.s32 1, %v472
        %v474 = vrot.slane %v465, %v473
        %v475 = vlaneseq
        %v476 = vshrl.u32 %v475, 7
        %v477 = vsub.s32 2, %v476
        %v478 = vrot.slane %v465, %v477
        %v479 = vlaneseq
        %v480 = vshrl.u32 %v479, 7
        %v481 = vsub.s32 3, %v480
        %v482 = vrot.slane %v465, %v481
        %v487 = vpack.c.bf16 %v470, %v470
        %v488 = vpack.c.bf16 %v474, %v474
        %v489 = vpack.c.bf16 %v478, %v478
        %v490 = vpack.c.bf16 %v482, %v482
        %v492 = vpack.i.b16 %v487, %v487
        %v494 = vlaneseq
        %v495 = vshrl.u32 %v494, 7
        %v496 = vsub.s32 0, %v495
        %v497 = vrot.slane %v492, %v496
        %v499 = vpack.i.b16 %v488, %v488
        %v501 = vlaneseq
        %v502 = vshrl.u32 %v501, 7
        %v503 = vsub.s32 0, %v502
        %v504 = vrot.slane %v499, %v503
        %v506 = vpack.i.b16 %v489, %v489
        %v508 = vlaneseq
        %v509 = vshrl.u32 %v508, 7
        %v510 = vsub.s32 0, %v509
        %v511 = vrot.slane %v506, %v510
        %v513 = vpack.i.b16 %v490, %v490
        %v515 = vlaneseq
        %v516 = vshrl.u32 %v515, 7
        %v517 = vsub.s32 0, %v516
        %v518 = vrot.slane %v513, %v517
        %vm519 = vcmp.eq.bf16.partialorder %v202, %v497
        %vm520 = vcmp.eq.bf16.partialorder %v202, %v504
        %vm521 = vcmp.eq.bf16.partialorder %v202, %v511
        %vm522 = vcmp.eq.bf16.partialorder %v202, %v518
        %vm523 = vcmp.eq.bf16.partialorder %v203, %v497
        %vm524 = vcmp.eq.bf16.partialorder %v203, %v504
        %vm525 = vcmp.eq.bf16.partialorder %v203, %v511
        %vm526 = vcmp.eq.bf16.partialorder %v203, %v518
        %v528 = vlaneseq
        %v529 = vshrl.u32 %v528, 7
        %v530 = vsub.s32 0, %v529
        %v531 = vrot.slane %v191, %v530
        %v532 = vlaneseq
        %v533 = vshrl.u32 %v532, 7
        %v534 = vsub.s32 1, %v533
        %v535 = vrot.slane %v191, %v534
        %v536 = vlaneseq
        %v537 = vshrl.u32 %v536, 7
        %v538 = vsub.s32 2, %v537
        %v539 = vrot.slane %v191, %v538
        %v540 = vlaneseq
        %v541 = vshrl.u32 %v540, 7
        %v542 = vsub.s32 3, %v541
        %v543 = vrot.slane %v191, %v542
        %v548 = vpack.c.bf16 %v531, %v531
        %v549 = vpack.c.bf16 %v535, %v535
        %v550 = vpack.c.bf16 %v539, %v539
        %v551 = vpack.c.bf16 %v543, %v543
        %v553 = vpack.i.b16 %v548, %v548
        %v555 = vlaneseq
        %v556 = vshrl.u32 %v555, 7
        %v557 = vsub.s32 0, %v556
        %v558 = vrot.slane %v553, %v557
        %v560 = vpack.i.b16 %v549, %v549
        %v562 = vlaneseq
        %v563 = vshrl.u32 %v562, 7
        %v564 = vsub.s32 0, %v563
        %v565 = vrot.slane %v560, %v564
        %v567 = vpack.i.b16 %v550, %v550
        %v569 = vlaneseq
        %v570 = vshrl.u32 %v569, 7
        %v571 = vsub.s32 0, %v570
        %v572 = vrot.slane %v567, %v571
        %v574 = vpack.i.b16 %v551, %v551
        %v576 = vlaneseq
        %v577 = vshrl.u32 %v576, 7
        %v578 = vsub.s32 0, %v577
        %v579 = vrot.slane %v574, %v578
        %v580 = vsel %vm519, %v558, 0
        %v581 = vsel %vm520, %v565, 0
        %v582 = vsel %vm521, %v572, 0
        %v583 = vsel %vm522, %v579, 0
        %v584 = vsel %vm523, %v558, 0
        %v585 = vsel %vm524, %v565, 0
        %v586 = vsel %vm525, %v572, 0
        %v587 = vsel %vm526, %v579, 0
        %v588 = vadd.bf16 %v454, %v580
        %v589 = vadd.bf16 %v455, %v581
        %v590 = vadd.bf16 %v456, %v582
        %v591 = vadd.bf16 %v457, %v583
        %v592 = vadd.bf16 %v458, %v584
        %v593 = vadd.bf16 %v459, %v585
        %v594 = vadd.bf16 %v460, %v586
        %v595 = vadd.bf16 %v461, %v587
        %v596 = vadd.s32 %v463, %v329
        %v597 = vcvt.s32.f32 %v596
        %v599 = vlaneseq
        %v600 = vshrl.u32 %v599, 7
        %v601 = vsub.s32 0, %v600
        %v602 = vrot.slane %v597, %v601
        %v603 = vlaneseq
        %v604 = vshrl.u32 %v603, 7
        %v605 = vsub.s32 1, %v604
        %v606 = vrot.slane %v597, %v605
        %v607 = vlaneseq
        %v608 = vshrl.u32 %v607, 7
        %v609 = vsub.s32 2, %v608
        %v610 = vrot.slane %v597, %v609
        %v611 = vlaneseq
        %v612 = vshrl.u32 %v611, 7
        %v613 = vsub.s32 3, %v612
        %v614 = vrot.slane %v597, %v613
        %v619 = vpack.c.bf16 %v602, %v602
        %v620 = vpack.c.bf16 %v606, %v606
        %v621 = vpack.c.bf16 %v610, %v610
        %v622 = vpack.c.bf16 %v614, %v614
        %v624 = vpack.i.b16 %v619, %v619
        %v626 = vlaneseq
        %v627 = vshrl.u32 %v626, 7
        %v628 = vsub.s32 0, %v627
        %v629 = vrot.slane %v624, %v628
        %v631 = vpack.i.b16 %v620, %v620
        %v633 = vlaneseq
        %v634 = vshrl.u32 %v633, 7
        %v635 = vsub.s32 0, %v634
        %v636 = vrot.slane %v631, %v635
        %v638 = vpack.i.b16 %v621, %v621
        %v640 = vlaneseq
        %v641 = vshrl.u32 %v640, 7
        %v642 = vsub.s32 0, %v641
        %v643 = vrot.slane %v638, %v642
        %v645 = vpack.i.b16 %v622, %v622
        %v647 = vlaneseq
        %v648 = vshrl.u32 %v647, 7
        %v649 = vsub.s32 0, %v648
        %v650 = vrot.slane %v645, %v649
        %vm651 = vcmp.eq.bf16.partialorder %v202, %v629
        %vm652 = vcmp.eq.bf16.partialorder %v202, %v636
        %vm653 = vcmp.eq.bf16.partialorder %v202, %v643
        %vm654 = vcmp.eq.bf16.partialorder %v202, %v650
        %vm655 = vcmp.eq.bf16.partialorder %v203, %v629
        %vm656 = vcmp.eq.bf16.partialorder %v203, %v636
        %vm657 = vcmp.eq.bf16.partialorder %v203, %v643
        %vm658 = vcmp.eq.bf16.partialorder %v203, %v650
        %v660 = vlaneseq
        %v661 = vshrl.u32 %v660, 7
        %v662 = vsub.s32 0, %v661
        %v663 = vrot.slane %v192, %v662
        %v664 = vlaneseq
        %v665 = vshrl.u32 %v664, 7
        %v666 = vsub.s32 1, %v665
        %v667 = vrot.slane %v192, %v666
        %v668 = vlaneseq
        %v669 = vshrl.u32 %v668, 7
        %v670 = vsub.s32 2, %v669
        %v671 = vrot.slane %v192, %v670
        %v672 = vlaneseq
        %v673 = vshrl.u32 %v672, 7
        %v674 = vsub.s32 3, %v673
        %v675 = vrot.slane %v192, %v674
        %v680 = vpack.c.bf16 %v663, %v663
        %v681 = vpack.c.bf16 %v667, %v667
        %v682 = vpack.c.bf16 %v671, %v671
        %v683 = vpack.c.bf16 %v675, %v675
        %v685 = vpack.i.b16 %v680, %v680
        %v687 = vlaneseq
        %v688 = vshrl.u32 %v687, 7
        %v689 = vsub.s32 0, %v688
        %v690 = vrot.slane %v685, %v689
        %v692 = vpack.i.b16 %v681, %v681
        %v694 = vlaneseq
        %v695 = vshrl.u32 %v694, 7
        %v696 = vsub.s32 0, %v695
        %v697 = vrot.slane %v692, %v696
        %v699 = vpack.i.b16 %v682, %v682
        %v701 = vlaneseq
        %v702 = vshrl.u32 %v701, 7
        %v703 = vsub.s32 0, %v702
        %v704 = vrot.slane %v699, %v703
        %v706 = vpack.i.b16 %v683, %v683
        %v708 = vlaneseq
        %v709 = vshrl.u32 %v708, 7
        %v710 = vsub.s32 0, %v709
        %v711 = vrot.slane %v706, %v710
        %v712 = vsel %vm651, %v690, 0
        %v713 = vsel %vm652, %v697, 0
        %v714 = vsel %vm653, %v704, 0
        %v715 = vsel %vm654, %v711, 0
        %v716 = vsel %vm655, %v690, 0
        %v717 = vsel %vm656, %v697, 0
        %v718 = vsel %vm657, %v704, 0
        %v719 = vsel %vm658, %v711, 0
        %v720 = vadd.bf16 %v588, %v712
        %v721 = vadd.bf16 %v589, %v713
        %v722 = vadd.bf16 %v590, %v714
        %v723 = vadd.bf16 %v591, %v715
        %v724 = vadd.bf16 %v592, %v716
        %v725 = vadd.bf16 %v593, %v717
        %v726 = vadd.bf16 %v594, %v718
        %v727 = vadd.bf16 %v595, %v719
        %v728 = vmul.f32 %v176, 0.375
        %v729 = vmul.f32 %v178, 0.375
        %v730 = vfloor.f32 %v728
        %v731 = vfloor.f32 %v729
        %v732 = vsub.f32 %v728, %v730
        %v733 = vsub.f32 %v729, %v731
        %v734 = vcvt.f32.s32.to.zero.pseudo %v730
        %v735 = vcvt.f32.s32.to.zero.pseudo %v731
        %v736 = vsub.f32 1.0, %v732
        %v737 = vsub.f32 1.0, %v733
        %v738 = vmul.f32 %v736, %v737
        %v739 = vmul.f32 %v736, %v733
        %v740 = vmul.f32 %v732, %v737
        %v741 = vmul.f32 %v732, %v733
        %v742 = vadd.s32 %v194, 32
        %v743 = vadd.s32 %v194, 40
        %v744 = vadd.s32 %v194, 48
        %v745 = vadd.s32 %v194, 56
        %v746 = vcvt.s32.f32 %v742
        %v747 = vcvt.s32.f32 %v743
        %v748 = vcvt.s32.f32 %v744
        %v749 = vcvt.s32.f32 %v745
        %v750 = vpack.c.bf16 %v747, %v746
        %v751 = vpack.c.bf16 %v749, %v748
        %v752 = vmul.u32 %v734, 6
        %v753 = vadd.s32 %v752, %v735
        %v754 = vcvt.s32.f32 %v753
        %v756 = vlaneseq
        %v757 = vshrl.u32 %v756, 7
        %v758 = vsub.s32 0, %v757
        %v759 = vrot.slane %v754, %v758
        %v760 = vlaneseq
        %v761 = vshrl.u32 %v760, 7
        %v762 = vsub.s32 1, %v761
        %v763 = vrot.slane %v754, %v762
        %v764 = vlaneseq
        %v765 = vshrl.u32 %v764, 7
        %v766 = vsub.s32 2, %v765
        %v767 = vrot.slane %v754, %v766
        %v768 = vlaneseq
        %v769 = vshrl.u32 %v768, 7
        %v770 = vsub.s32 3, %v769
        %v771 = vrot.slane %v754, %v770
        %v776 = vpack.c.bf16 %v759, %v759
        %v777 = vpack.c.bf16 %v763, %v763
        %v778 = vpack.c.bf16 %v767, %v767
        %v779 = vpack.c.bf16 %v771, %v771
        %v781 = vpack.i.b16 %v776, %v776
        %v783 = vlaneseq
        %v784 = vshrl.u32 %v783, 7
        %v785 = vsub.s32 0, %v784
        %v786 = vrot.slane %v781, %v785
        %v788 = vpack.i.b16 %v777, %v777
        %v790 = vlaneseq
        %v791 = vshrl.u32 %v790, 7
        %v792 = vsub.s32 0, %v791
        %v793 = vrot.slane %v788, %v792
        %v795 = vpack.i.b16 %v778, %v778
        %v797 = vlaneseq
        %v798 = vshrl.u32 %v797, 7
        %v799 = vsub.s32 0, %v798
        %v800 = vrot.slane %v795, %v799
        %v802 = vpack.i.b16 %v779, %v779
        %v804 = vlaneseq
        %v805 = vshrl.u32 %v804, 7
        %v806 = vsub.s32 0, %v805
        %v807 = vrot.slane %v802, %v806
        %vm808 = vcmp.eq.bf16.partialorder %v202, %v786
        %vm809 = vcmp.eq.bf16.partialorder %v202, %v793
        %vm810 = vcmp.eq.bf16.partialorder %v202, %v800
        %vm811 = vcmp.eq.bf16.partialorder %v202, %v807
        %vm812 = vcmp.eq.bf16.partialorder %v203, %v786
        %vm813 = vcmp.eq.bf16.partialorder %v203, %v793
        %vm814 = vcmp.eq.bf16.partialorder %v203, %v800
        %vm815 = vcmp.eq.bf16.partialorder %v203, %v807
        %vm816 = vcmp.eq.bf16.partialorder %v750, %v786
        %vm817 = vcmp.eq.bf16.partialorder %v750, %v793
        %vm818 = vcmp.eq.bf16.partialorder %v750, %v800
        %vm819 = vcmp.eq.bf16.partialorder %v750, %v807
        %vm820 = vcmp.eq.bf16.partialorder %v751, %v786
        %vm821 = vcmp.eq.bf16.partialorder %v751, %v793
        %vm822 = vcmp.eq.bf16.partialorder %v751, %v800
        %vm823 = vcmp.eq.bf16.partialorder %v751, %v807
        %v825 = vlaneseq
        %v826 = vshrl.u32 %v825, 7
        %v827 = vsub.s32 0, %v826
        %v828 = vrot.slane %v738, %v827
        %v829 = vlaneseq
        %v830 = vshrl.u32 %v829, 7
        %v831 = vsub.s32 1, %v830
        %v832 = vrot.slane %v738, %v831
        %v833 = vlaneseq
        %v834 = vshrl.u32 %v833, 7
        %v835 = vsub.s32 2, %v834
        %v836 = vrot.slane %v738, %v835
        %v837 = vlaneseq
        %v838 = vshrl.u32 %v837, 7
        %v839 = vsub.s32 3, %v838
        %v840 = vrot.slane %v738, %v839
        %v845 = vpack.c.bf16 %v828, %v828
        %v846 = vpack.c.bf16 %v832, %v832
        %v847 = vpack.c.bf16 %v836, %v836
        %v848 = vpack.c.bf16 %v840, %v840
        %v850 = vpack.i.b16 %v845, %v845
        %v852 = vlaneseq
        %v853 = vshrl.u32 %v852, 7
        %v854 = vsub.s32 0, %v853
        %v855 = vrot.slane %v850, %v854
        %v857 = vpack.i.b16 %v846, %v846
        %v859 = vlaneseq
        %v860 = vshrl.u32 %v859, 7
        %v861 = vsub.s32 0, %v860
        %v862 = vrot.slane %v857, %v861
        %v864 = vpack.i.b16 %v847, %v847
        %v866 = vlaneseq
        %v867 = vshrl.u32 %v866, 7
        %v868 = vsub.s32 0, %v867
        %v869 = vrot.slane %v864, %v868
        %v871 = vpack.i.b16 %v848, %v848
        %v873 = vlaneseq
        %v874 = vshrl.u32 %v873, 7
        %v875 = vsub.s32 0, %v874
        %v876 = vrot.slane %v871, %v875
        %v877 = vsel %vm808, %v855, 0
        %v878 = vsel %vm809, %v862, 0
        %v879 = vsel %vm810, %v869, 0
        %v880 = vsel %vm811, %v876, 0
        %v881 = vsel %vm812, %v855, 0
        %v882 = vsel %vm813, %v862, 0
        %v883 = vsel %vm814, %v869, 0
        %v884 = vsel %vm815, %v876, 0
        %v885 = vsel %vm816, %v855, 0
        %v886 = vsel %vm817, %v862, 0
        %v887 = vsel %vm818, %v869, 0
        %v888 = vsel %vm819, %v876, 0
        %v889 = vsel %vm820, %v855, 0
        %v890 = vsel %vm821, %v862, 0
        %v891 = vsel %vm822, %v869, 0
        %v892 = vsel %vm823, %v876, 0
        %v893 = vadd.s32 %v735, 1
        %v894 = vadd.s32 %v752, %v893
        %v895 = vcvt.s32.f32 %v894
        %v897 = vlaneseq
        %v898 = vshrl.u32 %v897, 7
        %v899 = vsub.s32 0, %v898
        %v900 = vrot.slane %v895, %v899
        %v901 = vlaneseq
        %v902 = vshrl.u32 %v901, 7
        %v903 = vsub.s32 1, %v902
        %v904 = vrot.slane %v895, %v903
        %v905 = vlaneseq
        %v906 = vshrl.u32 %v905, 7
        %v907 = vsub.s32 2, %v906
        %v908 = vrot.slane %v895, %v907
        %v909 = vlaneseq
        %v910 = vshrl.u32 %v909, 7
        %v911 = vsub.s32 3, %v910
        %v912 = vrot.slane %v895, %v911
        %v917 = vpack.c.bf16 %v900, %v900
        %v918 = vpack.c.bf16 %v904, %v904
        %v919 = vpack.c.bf16 %v908, %v908
        %v920 = vpack.c.bf16 %v912, %v912
        %v922 = vpack.i.b16 %v917, %v917
        %v924 = vlaneseq
        %v925 = vshrl.u32 %v924, 7
        %v926 = vsub.s32 0, %v925
        %v927 = vrot.slane %v922, %v926
        %v929 = vpack.i.b16 %v918, %v918
        %v931 = vlaneseq
        %v932 = vshrl.u32 %v931, 7
        %v933 = vsub.s32 0, %v932
        %v934 = vrot.slane %v929, %v933
        %v936 = vpack.i.b16 %v919, %v919
        %v938 = vlaneseq
        %v939 = vshrl.u32 %v938, 7
        %v940 = vsub.s32 0, %v939
        %v941 = vrot.slane %v936, %v940
        %v943 = vpack.i.b16 %v920, %v920
        %v945 = vlaneseq
        %v946 = vshrl.u32 %v945, 7
        %v947 = vsub.s32 0, %v946
        %v948 = vrot.slane %v943, %v947
        %vm949 = vcmp.eq.bf16.partialorder %v202, %v927
        %vm950 = vcmp.eq.bf16.partialorder %v202, %v934
        %vm951 = vcmp.eq.bf16.partialorder %v202, %v941
        %vm952 = vcmp.eq.bf16.partialorder %v202, %v948
        %vm953 = vcmp.eq.bf16.partialorder %v203, %v927
        %vm954 = vcmp.eq.bf16.partialorder %v203, %v934
        %vm955 = vcmp.eq.bf16.partialorder %v203, %v941
        %vm956 = vcmp.eq.bf16.partialorder %v203, %v948
        %vm957 = vcmp.eq.bf16.partialorder %v750, %v927
        %vm958 = vcmp.eq.bf16.partialorder %v750, %v934
        %vm959 = vcmp.eq.bf16.partialorder %v750, %v941
        %vm960 = vcmp.eq.bf16.partialorder %v750, %v948
        %vm961 = vcmp.eq.bf16.partialorder %v751, %v927
        %vm962 = vcmp.eq.bf16.partialorder %v751, %v934
        %vm963 = vcmp.eq.bf16.partialorder %v751, %v941
        %vm964 = vcmp.eq.bf16.partialorder %v751, %v948
        %v966 = vlaneseq
        %v967 = vshrl.u32 %v966, 7
        %v968 = vsub.s32 0, %v967
        %v969 = vrot.slane %v739, %v968
        %v970 = vlaneseq
        %v971 = vshrl.u32 %v970, 7
        %v972 = vsub.s32 1, %v971
        %v973 = vrot.slane %v739, %v972
        %v974 = vlaneseq
        %v975 = vshrl.u32 %v974, 7
        %v976 = vsub.s32 2, %v975
        %v977 = vrot.slane %v739, %v976
        %v978 = vlaneseq
        %v979 = vshrl.u32 %v978, 7
        %v980 = vsub.s32 3, %v979
        %v981 = vrot.slane %v739, %v980
        %v986 = vpack.c.bf16 %v969, %v969
        %v987 = vpack.c.bf16 %v973, %v973
        %v988 = vpack.c.bf16 %v977, %v977
        %v989 = vpack.c.bf16 %v981, %v981
        %v991 = vpack.i.b16 %v986, %v986
        %v993 = vlaneseq
        %v994 = vshrl.u32 %v993, 7
        %v995 = vsub.s32 0, %v994
        %v996 = vrot.slane %v991, %v995
        %v998 = vpack.i.b16 %v987, %v987
        %v1000 = vlaneseq
        %v1001 = vshrl.u32 %v1000, 7
        %v1002 = vsub.s32 0, %v1001
        %v1003 = vrot.slane %v998, %v1002
        %v1005 = vpack.i.b16 %v988, %v988
        %v1007 = vlaneseq
        %v1008 = vshrl.u32 %v1007, 7
        %v1009 = vsub.s32 0, %v1008
        %v1010 = vrot.slane %v1005, %v1009
        %v1012 = vpack.i.b16 %v989, %v989
        %v1014 = vlaneseq
        %v1015 = vshrl.u32 %v1014, 7
        %v1016 = vsub.s32 0, %v1015
        %v1017 = vrot.slane %v1012, %v1016
        %v1018 = vsel %vm949, %v996, 0
        %v1019 = vsel %vm950, %v1003, 0
        %v1020 = vsel %vm951, %v1010, 0
        %v1021 = vsel %vm952, %v1017, 0
        %v1022 = vsel %vm953, %v996, 0
        %v1023 = vsel %vm954, %v1003, 0
        %v1024 = vsel %vm955, %v1010, 0
        %v1025 = vsel %vm956, %v1017, 0
        %v1026 = vsel %vm957, %v996, 0
        %v1027 = vsel %vm958, %v1003, 0
        %v1028 = vsel %vm959, %v1010, 0
        %v1029 = vsel %vm960, %v1017, 0
        %v1030 = vsel %vm961, %v996, 0
        %v1031 = vsel %vm962, %v1003, 0
        %v1032 = vsel %vm963, %v1010, 0
        %v1033 = vsel %vm964, %v1017, 0
        %v1034 = vadd.bf16 %v877, %v1018
        %v1035 = vadd.bf16 %v878, %v1019
        %v1036 = vadd.bf16 %v879, %v1020
        %v1037 = vadd.bf16 %v880, %v1021
        %v1038 = vadd.bf16 %v881, %v1022
        %v1039 = vadd.bf16 %v882, %v1023
        %v1040 = vadd.bf16 %v883, %v1024
        %v1041 = vadd.bf16 %v884, %v1025
        %v1042 = vadd.bf16 %v885, %v1026
        %v1043 = vadd.bf16 %v886, %v1027
        %v1044 = vadd.bf16 %v887, %v1028
        %v1045 = vadd.bf16 %v888, %v1029
        %v1046 = vadd.bf16 %v889, %v1030
        %v1047 = vadd.bf16 %v890, %v1031
        %v1048 = vadd.bf16 %v891, %v1032
        %v1049 = vadd.bf16 %v892, %v1033
        %v1050 = vadd.s32 %v734, 1
        %v1051 = vmul.u32 %v1050, 6
        %v1052 = vadd.s32 %v1051, %v735
        %v1053 = vcvt.s32.f32 %v1052
        %v1055 = vlaneseq
        %v1056 = vshrl.u32 %v1055, 7
        %v1057 = vsub.s32 0, %v1056
        %v1058 = vrot.slane %v1053, %v1057
        %v1059 = vlaneseq
        %v1060 = vshrl.u32 %v1059, 7
        %v1061 = vsub.s32 1, %v1060
        %v1062 = vrot.slane %v1053, %v1061
        %v1063 = vlaneseq
        %v1064 = vshrl.u32 %v1063, 7
        %v1065 = vsub.s32 2, %v1064
        %v1066 = vrot.slane %v1053, %v1065
        %v1067 = vlaneseq
        %v1068 = vshrl.u32 %v1067, 7
        %v1069 = vsub.s32 3, %v1068
        %v1070 = vrot.slane %v1053, %v1069
        %v1075 = vpack.c.bf16 %v1058, %v1058
        %v1076 = vpack.c.bf16 %v1062, %v1062
        %v1077 = vpack.c.bf16 %v1066, %v1066
        %v1078 = vpack.c.bf16 %v1070, %v1070
        %v1080 = vpack.i.b16 %v1075, %v1075
        %v1082 = vlaneseq
        %v1083 = vshrl.u32 %v1082, 7
        %v1084 = vsub.s32 0, %v1083
        %v1085 = vrot.slane %v1080, %v1084
        %v1087 = vpack.i.b16 %v1076, %v1076
        %v1089 = vlaneseq
        %v1090 = vshrl.u32 %v1089, 7
        %v1091 = vsub.s32 0, %v1090
        %v1092 = vrot.slane %v1087, %v1091
        %v1094 = vpack.i.b16 %v1077, %v1077
        %v1096 = vlaneseq
        %v1097 = vshrl.u32 %v1096, 7
        %v1098 = vsub.s32 0, %v1097
        %v1099 = vrot.slane %v1094, %v1098
        %v1101 = vpack.i.b16 %v1078, %v1078
        %v1103 = vlaneseq
        %v1104 = vshrl.u32 %v1103, 7
        %v1105 = vsub.s32 0, %v1104
        %v1106 = vrot.slane %v1101, %v1105
        %vm1107 = vcmp.eq.bf16.partialorder %v202, %v1085
        %vm1108 = vcmp.eq.bf16.partialorder %v202, %v1092
        %vm1109 = vcmp.eq.bf16.partialorder %v202, %v1099
        %vm1110 = vcmp.eq.bf16.partialorder %v202, %v1106
        %vm1111 = vcmp.eq.bf16.partialorder %v203, %v1085
        %vm1112 = vcmp.eq.bf16.partialorder %v203, %v1092
        %vm1113 = vcmp.eq.bf16.partialorder %v203, %v1099
        %vm1114 = vcmp.eq.bf16.partialorder %v203, %v1106
        %vm1115 = vcmp.eq.bf16.partialorder %v750, %v1085
        %vm1116 = vcmp.eq.bf16.partialorder %v750, %v1092
        %vm1117 = vcmp.eq.bf16.partialorder %v750, %v1099
        %vm1118 = vcmp.eq.bf16.partialorder %v750, %v1106
        %vm1119 = vcmp.eq.bf16.partialorder %v751, %v1085
        %vm1120 = vcmp.eq.bf16.partialorder %v751, %v1092
        %vm1121 = vcmp.eq.bf16.partialorder %v751, %v1099
        %vm1122 = vcmp.eq.bf16.partialorder %v751, %v1106
        %v1124 = vlaneseq
        %v1125 = vshrl.u32 %v1124, 7
        %v1126 = vsub.s32 0, %v1125
        %v1127 = vrot.slane %v740, %v1126
        %v1128 = vlaneseq
        %v1129 = vshrl.u32 %v1128, 7
        %v1130 = vsub.s32 1, %v1129
        %v1131 = vrot.slane %v740, %v1130
        %v1132 = vlaneseq
        %v1133 = vshrl.u32 %v1132, 7
        %v1134 = vsub.s32 2, %v1133
        %v1135 = vrot.slane %v740, %v1134
        %v1136 = vlaneseq
        %v1137 = vshrl.u32 %v1136, 7
        %v1138 = vsub.s32 3, %v1137
        %v1139 = vrot.slane %v740, %v1138
        %v1144 = vpack.c.bf16 %v1127, %v1127
        %v1145 = vpack.c.bf16 %v1131, %v1131
        %v1146 = vpack.c.bf16 %v1135, %v1135
        %v1147 = vpack.c.bf16 %v1139, %v1139
        %v1149 = vpack.i.b16 %v1144, %v1144
        %v1151 = vlaneseq
        %v1152 = vshrl.u32 %v1151, 7
        %v1153 = vsub.s32 0, %v1152
        %v1154 = vrot.slane %v1149, %v1153
        %v1156 = vpack.i.b16 %v1145, %v1145
        %v1158 = vlaneseq
        %v1159 = vshrl.u32 %v1158, 7
        %v1160 = vsub.s32 0, %v1159
        %v1161 = vrot.slane %v1156, %v1160
        %v1163 = vpack.i.b16 %v1146, %v1146
        %v1165 = vlaneseq
        %v1166 = vshrl.u32 %v1165, 7
        %v1167 = vsub.s32 0, %v1166
        %v1168 = vrot.slane %v1163, %v1167
        %v1170 = vpack.i.b16 %v1147, %v1147
        %v1172 = vlaneseq
        %v1173 = vshrl.u32 %v1172, 7
        %v1174 = vsub.s32 0, %v1173
        %v1175 = vrot.slane %v1170, %v1174
        %v1176 = vsel %vm1107, %v1154, 0
        %v1177 = vsel %vm1108, %v1161, 0
        %v1178 = vsel %vm1109, %v1168, 0
        %v1179 = vsel %vm1110, %v1175, 0
        %v1180 = vsel %vm1111, %v1154, 0
        %v1181 = vsel %vm1112, %v1161, 0
        %v1182 = vsel %vm1113, %v1168, 0
        %v1183 = vsel %vm1114, %v1175, 0
        %v1184 = vsel %vm1115, %v1154, 0
        %v1185 = vsel %vm1116, %v1161, 0
        %v1186 = vsel %vm1117, %v1168, 0
        %v1187 = vsel %vm1118, %v1175, 0
        %v1188 = vsel %vm1119, %v1154, 0
        %v1189 = vsel %vm1120, %v1161, 0
        %v1190 = vsel %vm1121, %v1168, 0
        %v1191 = vsel %vm1122, %v1175, 0
        %v1192 = vadd.bf16 %v1034, %v1176
        %v1193 = vadd.bf16 %v1035, %v1177
        %v1194 = vadd.bf16 %v1036, %v1178
        %v1195 = vadd.bf16 %v1037, %v1179
        %v1196 = vadd.bf16 %v1038, %v1180
        %v1197 = vadd.bf16 %v1039, %v1181
        %v1198 = vadd.bf16 %v1040, %v1182
        %v1199 = vadd.bf16 %v1041, %v1183
        %v1200 = vadd.bf16 %v1042, %v1184
        %v1201 = vadd.bf16 %v1043, %v1185
        %v1202 = vadd.bf16 %v1044, %v1186
        %v1203 = vadd.bf16 %v1045, %v1187
        %v1204 = vadd.bf16 %v1046, %v1188
        %v1205 = vadd.bf16 %v1047, %v1189
        %v1206 = vadd.bf16 %v1048, %v1190
        %v1207 = vadd.bf16 %v1049, %v1191
        %v1208 = vadd.s32 %v1051, %v893
        %v1209 = vcvt.s32.f32 %v1208
        %v1211 = vlaneseq
        %v1212 = vshrl.u32 %v1211, 7
        %v1213 = vsub.s32 0, %v1212
        %v1214 = vrot.slane %v1209, %v1213
        %v1215 = vlaneseq
        %v1216 = vshrl.u32 %v1215, 7
        %v1217 = vsub.s32 1, %v1216
        %v1218 = vrot.slane %v1209, %v1217
        %v1219 = vlaneseq
        %v1220 = vshrl.u32 %v1219, 7
        %v1221 = vsub.s32 2, %v1220
        %v1222 = vrot.slane %v1209, %v1221
        %v1223 = vlaneseq
        %v1224 = vshrl.u32 %v1223, 7
        %v1225 = vsub.s32 3, %v1224
        %v1226 = vrot.slane %v1209, %v1225
        %v1231 = vpack.c.bf16 %v1214, %v1214
        %v1232 = vpack.c.bf16 %v1218, %v1218
        %v1233 = vpack.c.bf16 %v1222, %v1222
        %v1234 = vpack.c.bf16 %v1226, %v1226
        %v1236 = vpack.i.b16 %v1231, %v1231
        %v1238 = vlaneseq
        %v1239 = vshrl.u32 %v1238, 7
        %v1240 = vsub.s32 0, %v1239
        %v1241 = vrot.slane %v1236, %v1240
        %v1243 = vpack.i.b16 %v1232, %v1232
        %v1245 = vlaneseq
        %v1246 = vshrl.u32 %v1245, 7
        %v1247 = vsub.s32 0, %v1246
        %v1248 = vrot.slane %v1243, %v1247
        %v1250 = vpack.i.b16 %v1233, %v1233
        %v1252 = vlaneseq
        %v1253 = vshrl.u32 %v1252, 7
        %v1254 = vsub.s32 0, %v1253
        %v1255 = vrot.slane %v1250, %v1254
        %v1257 = vpack.i.b16 %v1234, %v1234
        %v1259 = vlaneseq
        %v1260 = vshrl.u32 %v1259, 7
        %v1261 = vsub.s32 0, %v1260
        %v1262 = vrot.slane %v1257, %v1261
        %vm1263 = vcmp.eq.bf16.partialorder %v202, %v1241
        %vm1264 = vcmp.eq.bf16.partialorder %v202, %v1248
        %vm1265 = vcmp.eq.bf16.partialorder %v202, %v1255
        %vm1266 = vcmp.eq.bf16.partialorder %v202, %v1262
        %vm1267 = vcmp.eq.bf16.partialorder %v203, %v1241
        %vm1268 = vcmp.eq.bf16.partialorder %v203, %v1248
        %vm1269 = vcmp.eq.bf16.partialorder %v203, %v1255
        %vm1270 = vcmp.eq.bf16.partialorder %v203, %v1262
        %vm1271 = vcmp.eq.bf16.partialorder %v750, %v1241
        %vm1272 = vcmp.eq.bf16.partialorder %v750, %v1248
        %vm1273 = vcmp.eq.bf16.partialorder %v750, %v1255
        %vm1274 = vcmp.eq.bf16.partialorder %v750, %v1262
        %vm1275 = vcmp.eq.bf16.partialorder %v751, %v1241
        %vm1276 = vcmp.eq.bf16.partialorder %v751, %v1248
        %vm1277 = vcmp.eq.bf16.partialorder %v751, %v1255
        %vm1278 = vcmp.eq.bf16.partialorder %v751, %v1262
        %v1280 = vlaneseq
        %v1281 = vshrl.u32 %v1280, 7
        %v1282 = vsub.s32 0, %v1281
        %v1283 = vrot.slane %v741, %v1282
        %v1284 = vlaneseq
        %v1285 = vshrl.u32 %v1284, 7
        %v1286 = vsub.s32 1, %v1285
        %v1287 = vrot.slane %v741, %v1286
        %v1288 = vlaneseq
        %v1289 = vshrl.u32 %v1288, 7
        %v1290 = vsub.s32 2, %v1289
        %v1291 = vrot.slane %v741, %v1290
        %v1292 = vlaneseq
        %v1293 = vshrl.u32 %v1292, 7
        %v1294 = vsub.s32 3, %v1293
        %v1295 = vrot.slane %v741, %v1294
        %v1300 = vpack.c.bf16 %v1283, %v1283
        %v1301 = vpack.c.bf16 %v1287, %v1287
        %v1302 = vpack.c.bf16 %v1291, %v1291
        %v1303 = vpack.c.bf16 %v1295, %v1295
        %v1305 = vpack.i.b16 %v1300, %v1300
        %v1307 = vlaneseq
        %v1308 = vshrl.u32 %v1307, 7
        %v1309 = vsub.s32 0, %v1308
        %v1310 = vrot.slane %v1305, %v1309
        %v1312 = vpack.i.b16 %v1301, %v1301
        %v1314 = vlaneseq
        %v1315 = vshrl.u32 %v1314, 7
        %v1316 = vsub.s32 0, %v1315
        %v1317 = vrot.slane %v1312, %v1316
        %v1319 = vpack.i.b16 %v1302, %v1302
        %v1321 = vlaneseq
        %v1322 = vshrl.u32 %v1321, 7
        %v1323 = vsub.s32 0, %v1322
        %v1324 = vrot.slane %v1319, %v1323
        %v1326 = vpack.i.b16 %v1303, %v1303
        %v1328 = vlaneseq
        %v1329 = vshrl.u32 %v1328, 7
        %v1330 = vsub.s32 0, %v1329
        %v1331 = vrot.slane %v1326, %v1330
        %v1332 = vsel %vm1263, %v1310, 0
        %v1333 = vsel %vm1264, %v1317, 0
        %v1334 = vsel %vm1265, %v1324, 0
        %v1335 = vsel %vm1266, %v1331, 0
        %v1336 = vsel %vm1267, %v1310, 0
        %v1337 = vsel %vm1268, %v1317, 0
        %v1338 = vsel %vm1269, %v1324, 0
        %v1339 = vsel %vm1270, %v1331, 0
        %v1340 = vsel %vm1271, %v1310, 0
        %v1341 = vsel %vm1272, %v1317, 0
        %v1342 = vsel %vm1273, %v1324, 0
        %v1343 = vsel %vm1274, %v1331, 0
        %v1344 = vsel %vm1275, %v1310, 0
        %v1345 = vsel %vm1276, %v1317, 0
        %v1346 = vsel %vm1277, %v1324, 0
        %v1347 = vsel %vm1278, %v1331, 0
        %v1348 = vadd.bf16 %v1192, %v1332
        %v1349 = vadd.bf16 %v1193, %v1333
        %v1350 = vadd.bf16 %v1194, %v1334
        %v1351 = vadd.bf16 %v1195, %v1335
        %v1352 = vadd.bf16 %v1196, %v1336
        %v1353 = vadd.bf16 %v1197, %v1337
        %v1354 = vadd.bf16 %v1198, %v1338
        %v1355 = vadd.bf16 %v1199, %v1339
        %v1356 = vadd.bf16 %v1200, %v1340
        %v1357 = vadd.bf16 %v1201, %v1341
        %v1358 = vadd.bf16 %v1202, %v1342
        %v1359 = vadd.bf16 %v1203, %v1343
        %v1360 = vadd.bf16 %v1204, %v1344
        %v1361 = vadd.bf16 %v1205, %v1345
        %v1362 = vadd.bf16 %v1206, %v1346
        %v1363 = vadd.bf16 %v1207, %v1347
        %v1364 = vmul.f32 %v176, 0.625
        %v1365 = vmul.f32 %v178, 0.625
        %v1366 = vfloor.f32 %v1364
        %v1367 = vfloor.f32 %v1365
        %v1368 = vsub.f32 %v1364, %v1366
        %v1369 = vsub.f32 %v1365, %v1367
        %v1370 = vcvt.f32.s32.to.zero.pseudo %v1366
        %v1371 = vcvt.f32.s32.to.zero.pseudo %v1367
        %v1372 = vsub.f32 1.0, %v1368
        %v1373 = vsub.f32 1.0, %v1369
        %v1374 = vmul.f32 %v1372, %v1373
        %v1375 = vmul.f32 %v1372, %v1369
        %v1376 = vmul.f32 %v1368, %v1373
        %v1377 = vmul.f32 %v1368, %v1369
        %v1378 = vadd.s32 %v194, 64
        %v1379 = vadd.s32 %v194, 72
        %v1380 = vadd.s32 %v194, 80
        %v1381 = vadd.s32 %v194, 88
        %v1382 = vadd.s32 %v194, 96
        %v1383 = vadd.s32 %v194, 104
        %v1384 = vadd.s32 %v194, 112
        %v1385 = vadd.s32 %v194, 120
        %v1386 = vcvt.s32.f32 %v1378
        %v1387 = vcvt.s32.f32 %v1379
        %v1388 = vcvt.s32.f32 %v1380
        %v1389 = vcvt.s32.f32 %v1381
        %v1390 = vcvt.s32.f32 %v1382
        %v1391 = vcvt.s32.f32 %v1383
        %v1392 = vcvt.s32.f32 %v1384
        %v1393 = vcvt.s32.f32 %v1385
        %v1394 = vpack.c.bf16 %v1387, %v1386
        %v1395 = vpack.c.bf16 %v1389, %v1388
        %v1396 = vpack.c.bf16 %v1391, %v1390
        %v1397 = vpack.c.bf16 %v1393, %v1392
        %v1398 = vmul.u32 %v1370, 10
        %v1399 = vadd.s32 %v1398, %v1371
        %v1400 = vcvt.s32.f32 %v1399
        %v1402 = vlaneseq
        %v1403 = vshrl.u32 %v1402, 7
        %v1404 = vsub.s32 0, %v1403
        %v1405 = vrot.slane %v1400, %v1404
        %v1406 = vlaneseq
        %v1407 = vshrl.u32 %v1406, 7
        %v1408 = vsub.s32 1, %v1407
        %v1409 = vrot.slane %v1400, %v1408
        %v1410 = vlaneseq
        %v1411 = vshrl.u32 %v1410, 7
        %v1412 = vsub.s32 2, %v1411
        %v1413 = vrot.slane %v1400, %v1412
        %v1414 = vlaneseq
        %v1415 = vshrl.u32 %v1414, 7
        %v1416 = vsub.s32 3, %v1415
        %v1417 = vrot.slane %v1400, %v1416
        %v1422 = vpack.c.bf16 %v1405, %v1405
        %v1423 = vpack.c.bf16 %v1409, %v1409
        %v1424 = vpack.c.bf16 %v1413, %v1413
        %v1425 = vpack.c.bf16 %v1417, %v1417
        %v1427 = vpack.i.b16 %v1422, %v1422
        %v1429 = vlaneseq
        %v1430 = vshrl.u32 %v1429, 7
        %v1431 = vsub.s32 0, %v1430
        %v1432 = vrot.slane %v1427, %v1431
        %v1434 = vpack.i.b16 %v1423, %v1423
        %v1436 = vlaneseq
        %v1437 = vshrl.u32 %v1436, 7
        %v1438 = vsub.s32 0, %v1437
        %v1439 = vrot.slane %v1434, %v1438
        %v1441 = vpack.i.b16 %v1424, %v1424
        %v1443 = vlaneseq
        %v1444 = vshrl.u32 %v1443, 7
        %v1445 = vsub.s32 0, %v1444
        %v1446 = vrot.slane %v1441, %v1445
        %v1448 = vpack.i.b16 %v1425, %v1425
        %v1450 = vlaneseq
        %v1451 = vshrl.u32 %v1450, 7
        %v1452 = vsub.s32 0, %v1451
        %v1453 = vrot.slane %v1448, %v1452
        %vm1454 = vcmp.eq.bf16.partialorder %v202, %v1432
        %vm1455 = vcmp.eq.bf16.partialorder %v202, %v1439
        %vm1456 = vcmp.eq.bf16.partialorder %v202, %v1446
        %vm1457 = vcmp.eq.bf16.partialorder %v202, %v1453
        %vm1458 = vcmp.eq.bf16.partialorder %v203, %v1432
        %vm1459 = vcmp.eq.bf16.partialorder %v203, %v1439
        %vm1460 = vcmp.eq.bf16.partialorder %v203, %v1446
        %vm1461 = vcmp.eq.bf16.partialorder %v203, %v1453
        %vm1462 = vcmp.eq.bf16.partialorder %v750, %v1432
        %vm1463 = vcmp.eq.bf16.partialorder %v750, %v1439
        %vm1464 = vcmp.eq.bf16.partialorder %v750, %v1446
        %vm1465 = vcmp.eq.bf16.partialorder %v750, %v1453
        %vm1466 = vcmp.eq.bf16.partialorder %v751, %v1432
        %vm1467 = vcmp.eq.bf16.partialorder %v751, %v1439
        %vm1468 = vcmp.eq.bf16.partialorder %v751, %v1446
        %vm1469 = vcmp.eq.bf16.partialorder %v751, %v1453
        %vm1470 = vcmp.eq.bf16.partialorder %v1394, %v1432
        %vm1471 = vcmp.eq.bf16.partialorder %v1394, %v1439
        %vm1472 = vcmp.eq.bf16.partialorder %v1394, %v1446
        %vm1473 = vcmp.eq.bf16.partialorder %v1394, %v1453
        %vm1474 = vcmp.eq.bf16.partialorder %v1395, %v1432
        %vm1475 = vcmp.eq.bf16.partialorder %v1395, %v1439
        %vm1476 = vcmp.eq.bf16.partialorder %v1395, %v1446
        %vm1477 = vcmp.eq.bf16.partialorder %v1395, %v1453
        %vm1478 = vcmp.eq.bf16.partialorder %v1396, %v1432
        %vm1479 = vcmp.eq.bf16.partialorder %v1396, %v1439
        %vm1480 = vcmp.eq.bf16.partialorder %v1396, %v1446
        %vm1481 = vcmp.eq.bf16.partialorder %v1396, %v1453
        %vm1482 = vcmp.eq.bf16.partialorder %v1397, %v1432
        %vm1483 = vcmp.eq.bf16.partialorder %v1397, %v1439
        %vm1484 = vcmp.eq.bf16.partialorder %v1397, %v1446
        %vm1485 = vcmp.eq.bf16.partialorder %v1397, %v1453
        %v1487 = vlaneseq
        %v1488 = vshrl.u32 %v1487, 7
        %v1489 = vsub.s32 0, %v1488
        %v1490 = vrot.slane %v1374, %v1489
        %v1491 = vlaneseq
        %v1492 = vshrl.u32 %v1491, 7
        %v1493 = vsub.s32 1, %v1492
        %v1494 = vrot.slane %v1374, %v1493
        %v1495 = vlaneseq
        %v1496 = vshrl.u32 %v1495, 7
        %v1497 = vsub.s32 2, %v1496
        %v1498 = vrot.slane %v1374, %v1497
        %v1499 = vlaneseq
        %v1500 = vshrl.u32 %v1499, 7
        %v1501 = vsub.s32 3, %v1500
        %v1502 = vrot.slane %v1374, %v1501
        %v1507 = vpack.c.bf16 %v1490, %v1490
        %v1508 = vpack.c.bf16 %v1494, %v1494
        %v1509 = vpack.c.bf16 %v1498, %v1498
        %v1510 = vpack.c.bf16 %v1502, %v1502
        %v1512 = vpack.i.b16 %v1507, %v1507
        %v1514 = vlaneseq
        %v1515 = vshrl.u32 %v1514, 7
        %v1516 = vsub.s32 0, %v1515
        %v1517 = vrot.slane %v1512, %v1516
        %v1519 = vpack.i.b16 %v1508, %v1508
        %v1521 = vlaneseq
        %v1522 = vshrl.u32 %v1521, 7
        %v1523 = vsub.s32 0, %v1522
        %v1524 = vrot.slane %v1519, %v1523
        %v1526 = vpack.i.b16 %v1509, %v1509
        %v1528 = vlaneseq
        %v1529 = vshrl.u32 %v1528, 7
        %v1530 = vsub.s32 0, %v1529
        %v1531 = vrot.slane %v1526, %v1530
        %v1533 = vpack.i.b16 %v1510, %v1510
        %v1535 = vlaneseq
        %v1536 = vshrl.u32 %v1535, 7
        %v1537 = vsub.s32 0, %v1536
        %v1538 = vrot.slane %v1533, %v1537
        %v1539 = vsel %vm1454, %v1517, 0
        %v1540 = vsel %vm1455, %v1524, 0
        %v1541 = vsel %vm1456, %v1531, 0
        %v1542 = vsel %vm1457, %v1538, 0
        %v1543 = vsel %vm1458, %v1517, 0
        %v1544 = vsel %vm1459, %v1524, 0
        %v1545 = vsel %vm1460, %v1531, 0
        %v1546 = vsel %vm1461, %v1538, 0
        %v1547 = vsel %vm1462, %v1517, 0
        %v1548 = vsel %vm1463, %v1524, 0
        %v1549 = vsel %vm1464, %v1531, 0
        %v1550 = vsel %vm1465, %v1538, 0
        %v1551 = vsel %vm1466, %v1517, 0
        %v1552 = vsel %vm1467, %v1524, 0
        %v1553 = vsel %vm1468, %v1531, 0
        %v1554 = vsel %vm1469, %v1538, 0
        %v1555 = vsel %vm1470, %v1517, 0
        %v1556 = vsel %vm1471, %v1524, 0
        %v1557 = vsel %vm1472, %v1531, 0
        %v1558 = vsel %vm1473, %v1538, 0
        %v1559 = vsel %vm1474, %v1517, 0
        %v1560 = vsel %vm1475, %v1524, 0
        %v1561 = vsel %vm1476, %v1531, 0
        %v1562 = vsel %vm1477, %v1538, 0
        %v1563 = vsel %vm1478, %v1517, 0
        %v1564 = vsel %vm1479, %v1524, 0
        %v1565 = vsel %vm1480, %v1531, 0
        %v1566 = vsel %vm1481, %v1538, 0
        %v1567 = vsel %vm1482, %v1517, 0
        %v1568 = vsel %vm1483, %v1524, 0
        %v1569 = vsel %vm1484, %v1531, 0
        %v1570 = vsel %vm1485, %v1538, 0
        %v1571 = vadd.s32 %v1371, 1
        %v1572 = vadd.s32 %v1398, %v1571
        %v1573 = vcvt.s32.f32 %v1572
        %v1575 = vlaneseq
        %v1576 = vshrl.u32 %v1575, 7
        %v1577 = vsub.s32 0, %v1576
        %v1578 = vrot.slane %v1573, %v1577
        %v1579 = vlaneseq
        %v1580 = vshrl.u32 %v1579, 7
        %v1581 = vsub.s32 1, %v1580
        %v1582 = vrot.slane %v1573, %v1581
        %v1583 = vlaneseq
        %v1584 = vshrl.u32 %v1583, 7
        %v1585 = vsub.s32 2, %v1584
        %v1586 = vrot.slane %v1573, %v1585
        %v1587 = vlaneseq
        %v1588 = vshrl.u32 %v1587, 7
        %v1589 = vsub.s32 3, %v1588
        %v1590 = vrot.slane %v1573, %v1589
        %v1595 = vpack.c.bf16 %v1578, %v1578
        %v1596 = vpack.c.bf16 %v1582, %v1582
        %v1597 = vpack.c.bf16 %v1586, %v1586
        %v1598 = vpack.c.bf16 %v1590, %v1590
        %v1600 = vpack.i.b16 %v1595, %v1595
        %v1602 = vlaneseq
        %v1603 = vshrl.u32 %v1602, 7
        %v1604 = vsub.s32 0, %v1603
        %v1605 = vrot.slane %v1600, %v1604
        %v1607 = vpack.i.b16 %v1596, %v1596
        %v1609 = vlaneseq
        %v1610 = vshrl.u32 %v1609, 7
        %v1611 = vsub.s32 0, %v1610
        %v1612 = vrot.slane %v1607, %v1611
        %v1614 = vpack.i.b16 %v1597, %v1597
        %v1616 = vlaneseq
        %v1617 = vshrl.u32 %v1616, 7
        %v1618 = vsub.s32 0, %v1617
        %v1619 = vrot.slane %v1614, %v1618
        %v1621 = vpack.i.b16 %v1598, %v1598
        %v1623 = vlaneseq
        %v1624 = vshrl.u32 %v1623, 7
        %v1625 = vsub.s32 0, %v1624
        %v1626 = vrot.slane %v1621, %v1625
        %vm1627 = vcmp.eq.bf16.partialorder %v202, %v1605
        %vm1628 = vcmp.eq.bf16.partialorder %v202, %v1612
        %vm1629 = vcmp.eq.bf16.partialorder %v202, %v1619
        %vm1630 = vcmp.eq.bf16.partialorder %v202, %v1626
        %vm1631 = vcmp.eq.bf16.partialorder %v203, %v1605
        %vm1632 = vcmp.eq.bf16.partialorder %v203, %v1612
        %vm1633 = vcmp.eq.bf16.partialorder %v203, %v1619
        %vm1634 = vcmp.eq.bf16.partialorder %v203, %v1626
        %vm1635 = vcmp.eq.bf16.partialorder %v750, %v1605
        %vm1636 = vcmp.eq.bf16.partialorder %v750, %v1612
        %vm1637 = vcmp.eq.bf16.partialorder %v750, %v1619
        %vm1638 = vcmp.eq.bf16.partialorder %v750, %v1626
        %vm1639 = vcmp.eq.bf16.partialorder %v751, %v1605
        %vm1640 = vcmp.eq.bf16.partialorder %v751, %v1612
        %vm1641 = vcmp.eq.bf16.partialorder %v751, %v1619
        %vm1642 = vcmp.eq.bf16.partialorder %v751, %v1626
        %vm1643 = vcmp.eq.bf16.partialorder %v1394, %v1605
        %vm1644 = vcmp.eq.bf16.partialorder %v1394, %v1612
        %vm1645 = vcmp.eq.bf16.partialorder %v1394, %v1619
        %vm1646 = vcmp.eq.bf16.partialorder %v1394, %v1626
        %vm1647 = vcmp.eq.bf16.partialorder %v1395, %v1605
        %vm1648 = vcmp.eq.bf16.partialorder %v1395, %v1612
        %vm1649 = vcmp.eq.bf16.partialorder %v1395, %v1619
        %vm1650 = vcmp.eq.bf16.partialorder %v1395, %v1626
        %vm1651 = vcmp.eq.bf16.partialorder %v1396, %v1605
        %vm1652 = vcmp.eq.bf16.partialorder %v1396, %v1612
        %vm1653 = vcmp.eq.bf16.partialorder %v1396, %v1619
        %vm1654 = vcmp.eq.bf16.partialorder %v1396, %v1626
        %vm1655 = vcmp.eq.bf16.partialorder %v1397, %v1605
        %vm1656 = vcmp.eq.bf16.partialorder %v1397, %v1612
        %vm1657 = vcmp.eq.bf16.partialorder %v1397, %v1619
        %vm1658 = vcmp.eq.bf16.partialorder %v1397, %v1626
        %v1660 = vlaneseq
        %v1661 = vshrl.u32 %v1660, 7
        %v1662 = vsub.s32 0, %v1661
        %v1663 = vrot.slane %v1375, %v1662
        %v1664 = vlaneseq
        %v1665 = vshrl.u32 %v1664, 7
        %v1666 = vsub.s32 1, %v1665
        %v1667 = vrot.slane %v1375, %v1666
        %v1668 = vlaneseq
        %v1669 = vshrl.u32 %v1668, 7
        %v1670 = vsub.s32 2, %v1669
        %v1671 = vrot.slane %v1375, %v1670
        %v1672 = vlaneseq
        %v1673 = vshrl.u32 %v1672, 7
        %v1674 = vsub.s32 3, %v1673
        %v1675 = vrot.slane %v1375, %v1674
        %v1680 = vpack.c.bf16 %v1663, %v1663
        %v1681 = vpack.c.bf16 %v1667, %v1667
        %v1682 = vpack.c.bf16 %v1671, %v1671
        %v1683 = vpack.c.bf16 %v1675, %v1675
        %v1685 = vpack.i.b16 %v1680, %v1680
        %v1687 = vlaneseq
        %v1688 = vshrl.u32 %v1687, 7
        %v1689 = vsub.s32 0, %v1688
        %v1690 = vrot.slane %v1685, %v1689
        %v1692 = vpack.i.b16 %v1681, %v1681
        %v1694 = vlaneseq
        %v1695 = vshrl.u32 %v1694, 7
        %v1696 = vsub.s32 0, %v1695
        %v1697 = vrot.slane %v1692, %v1696
        %v1699 = vpack.i.b16 %v1682, %v1682
        %v1701 = vlaneseq
        %v1702 = vshrl.u32 %v1701, 7
        %v1703 = vsub.s32 0, %v1702
        %v1704 = vrot.slane %v1699, %v1703
        %v1706 = vpack.i.b16 %v1683, %v1683
        %v1708 = vlaneseq
        %v1709 = vshrl.u32 %v1708, 7
        %v1710 = vsub.s32 0, %v1709
        %v1711 = vrot.slane %v1706, %v1710
        %v1712 = vsel %vm1627, %v1690, 0
        %v1713 = vsel %vm1628, %v1697, 0
        %v1714 = vsel %vm1629, %v1704, 0
        %v1715 = vsel %vm1630, %v1711, 0
        %v1716 = vsel %vm1631, %v1690, 0
        %v1717 = vsel %vm1632, %v1697, 0
        %v1718 = vsel %vm1633, %v1704, 0
        %v1719 = vsel %vm1634, %v1711, 0
        %v1720 = vsel %vm1635, %v1690, 0
        %v1721 = vsel %vm1636, %v1697, 0
        %v1722 = vsel %vm1637, %v1704, 0
        %v1723 = vsel %vm1638, %v1711, 0
        %v1724 = vsel %vm1639, %v1690, 0
        %v1725 = vsel %vm1640, %v1697, 0
        %v1726 = vsel %vm1641, %v1704, 0
        %v1727 = vsel %vm1642, %v1711, 0
        %v1728 = vsel %vm1643, %v1690, 0
        %v1729 = vsel %vm1644, %v1697, 0
        %v1730 = vsel %vm1645, %v1704, 0
        %v1731 = vsel %vm1646, %v1711, 0
        %v1732 = vsel %vm1647, %v1690, 0
        %v1733 = vsel %vm1648, %v1697, 0
        %v1734 = vsel %vm1649, %v1704, 0
        %v1735 = vsel %vm1650, %v1711, 0
        %v1736 = vsel %vm1651, %v1690, 0
        %v1737 = vsel %vm1652, %v1697, 0
        %v1738 = vsel %vm1653, %v1704, 0
        %v1739 = vsel %vm1654, %v1711, 0
        %v1740 = vsel %vm1655, %v1690, 0
        %v1741 = vsel %vm1656, %v1697, 0
        %v1742 = vsel %vm1657, %v1704, 0
        %v1743 = vsel %vm1658, %v1711, 0
        %v1744 = vadd.bf16 %v1539, %v1712
        %v1745 = vadd.bf16 %v1540, %v1713
        %v1746 = vadd.bf16 %v1541, %v1714
        %v1747 = vadd.bf16 %v1542, %v1715
        %v1748 = vadd.bf16 %v1543, %v1716
        %v1749 = vadd.bf16 %v1544, %v1717
        %v1750 = vadd.bf16 %v1545, %v1718
        %v1751 = vadd.bf16 %v1546, %v1719
        %v1752 = vadd.bf16 %v1547, %v1720
        %v1753 = vadd.bf16 %v1548, %v1721
        %v1754 = vadd.bf16 %v1549, %v1722
        %v1755 = vadd.bf16 %v1550, %v1723
        %v1756 = vadd.bf16 %v1551, %v1724
        %v1757 = vadd.bf16 %v1552, %v1725
        %v1758 = vadd.bf16 %v1553, %v1726
        %v1759 = vadd.bf16 %v1554, %v1727
        %v1760 = vadd.bf16 %v1555, %v1728
        %v1761 = vadd.bf16 %v1556, %v1729
        %v1762 = vadd.bf16 %v1557, %v1730
        %v1763 = vadd.bf16 %v1558, %v1731
        %v1764 = vadd.bf16 %v1559, %v1732
        %v1765 = vadd.bf16 %v1560, %v1733
        %v1766 = vadd.bf16 %v1561, %v1734
        %v1767 = vadd.bf16 %v1562, %v1735
        %v1768 = vadd.bf16 %v1563, %v1736
        %v1769 = vadd.bf16 %v1564, %v1737
        %v1770 = vadd.bf16 %v1565, %v1738
        %v1771 = vadd.bf16 %v1566, %v1739
        %v1772 = vadd.bf16 %v1567, %v1740
        %v1773 = vadd.bf16 %v1568, %v1741
        %v1774 = vadd.bf16 %v1569, %v1742
        %v1775 = vadd.bf16 %v1570, %v1743
        %v1776 = vadd.s32 %v1370, 1
        %v1777 = vmul.u32 %v1776, 10
        %v1778 = vadd.s32 %v1777, %v1371
        %v1779 = vcvt.s32.f32 %v1778
        %v1781 = vlaneseq
        %v1782 = vshrl.u32 %v1781, 7
        %v1783 = vsub.s32 0, %v1782
        %v1784 = vrot.slane %v1779, %v1783
        %v1785 = vlaneseq
        %v1786 = vshrl.u32 %v1785, 7
        %v1787 = vsub.s32 1, %v1786
        %v1788 = vrot.slane %v1779, %v1787
        %v1789 = vlaneseq
        %v1790 = vshrl.u32 %v1789, 7
        %v1791 = vsub.s32 2, %v1790
        %v1792 = vrot.slane %v1779, %v1791
        %v1793 = vlaneseq
        %v1794 = vshrl.u32 %v1793, 7
        %v1795 = vsub.s32 3, %v1794
        %v1796 = vrot.slane %v1779, %v1795
        %v1801 = vpack.c.bf16 %v1784, %v1784
        %v1802 = vpack.c.bf16 %v1788, %v1788
        %v1803 = vpack.c.bf16 %v1792, %v1792
        %v1804 = vpack.c.bf16 %v1796, %v1796
        %v1806 = vpack.i.b16 %v1801, %v1801
        %v1808 = vlaneseq
        %v1809 = vshrl.u32 %v1808, 7
        %v1810 = vsub.s32 0, %v1809
        %v1811 = vrot.slane %v1806, %v1810
        %v1813 = vpack.i.b16 %v1802, %v1802
        %v1815 = vlaneseq
        %v1816 = vshrl.u32 %v1815, 7
        %v1817 = vsub.s32 0, %v1816
        %v1818 = vrot.slane %v1813, %v1817
        %v1820 = vpack.i.b16 %v1803, %v1803
        %v1822 = vlaneseq
        %v1823 = vshrl.u32 %v1822, 7
        %v1824 = vsub.s32 0, %v1823
        %v1825 = vrot.slane %v1820, %v1824
        %v1827 = vpack.i.b16 %v1804, %v1804
        %v1829 = vlaneseq
        %v1830 = vshrl.u32 %v1829, 7
        %v1831 = vsub.s32 0, %v1830
        %v1832 = vrot.slane %v1827, %v1831
        %vm1833 = vcmp.eq.bf16.partialorder %v202, %v1811
        %vm1834 = vcmp.eq.bf16.partialorder %v202, %v1818
        %vm1835 = vcmp.eq.bf16.partialorder %v202, %v1825
        %vm1836 = vcmp.eq.bf16.partialorder %v202, %v1832
        %vm1837 = vcmp.eq.bf16.partialorder %v203, %v1811
        %vm1838 = vcmp.eq.bf16.partialorder %v203, %v1818
        %vm1839 = vcmp.eq.bf16.partialorder %v203, %v1825
        %vm1840 = vcmp.eq.bf16.partialorder %v203, %v1832
        %vm1841 = vcmp.eq.bf16.partialorder %v750, %v1811
        %vm1842 = vcmp.eq.bf16.partialorder %v750, %v1818
        %vm1843 = vcmp.eq.bf16.partialorder %v750, %v1825
        %vm1844 = vcmp.eq.bf16.partialorder %v750, %v1832
        %vm1845 = vcmp.eq.bf16.partialorder %v751, %v1811
        %vm1846 = vcmp.eq.bf16.partialorder %v751, %v1818
        %vm1847 = vcmp.eq.bf16.partialorder %v751, %v1825
        %vm1848 = vcmp.eq.bf16.partialorder %v751, %v1832
        %vm1849 = vcmp.eq.bf16.partialorder %v1394, %v1811
        %vm1850 = vcmp.eq.bf16.partialorder %v1394, %v1818
        %vm1851 = vcmp.eq.bf16.partialorder %v1394, %v1825
        %vm1852 = vcmp.eq.bf16.partialorder %v1394, %v1832
        %vm1853 = vcmp.eq.bf16.partialorder %v1395, %v1811
        %vm1854 = vcmp.eq.bf16.partialorder %v1395, %v1818
        %vm1855 = vcmp.eq.bf16.partialorder %v1395, %v1825
        %vm1856 = vcmp.eq.bf16.partialorder %v1395, %v1832
        %vm1857 = vcmp.eq.bf16.partialorder %v1396, %v1811
        %vm1858 = vcmp.eq.bf16.partialorder %v1396, %v1818
        %vm1859 = vcmp.eq.bf16.partialorder %v1396, %v1825
        %vm1860 = vcmp.eq.bf16.partialorder %v1396, %v1832
        %vm1861 = vcmp.eq.bf16.partialorder %v1397, %v1811
        %vm1862 = vcmp.eq.bf16.partialorder %v1397, %v1818
        %vm1863 = vcmp.eq.bf16.partialorder %v1397, %v1825
        %vm1864 = vcmp.eq.bf16.partialorder %v1397, %v1832
        %v1866 = vlaneseq
        %v1867 = vshrl.u32 %v1866, 7
        %v1868 = vsub.s32 0, %v1867
        %v1869 = vrot.slane %v1376, %v1868
        %v1870 = vlaneseq
        %v1871 = vshrl.u32 %v1870, 7
        %v1872 = vsub.s32 1, %v1871
        %v1873 = vrot.slane %v1376, %v1872
        %v1874 = vlaneseq
        %v1875 = vshrl.u32 %v1874, 7
        %v1876 = vsub.s32 2, %v1875
        %v1877 = vrot.slane %v1376, %v1876
        %v1878 = vlaneseq
        %v1879 = vshrl.u32 %v1878, 7
        %v1880 = vsub.s32 3, %v1879
        %v1881 = vrot.slane %v1376, %v1880
        %v1886 = vpack.c.bf16 %v1869, %v1869
        %v1887 = vpack.c.bf16 %v1873, %v1873
        %v1888 = vpack.c.bf16 %v1877, %v1877
        %v1889 = vpack.c.bf16 %v1881, %v1881
        %v1891 = vpack.i.b16 %v1886, %v1886
        %v1893 = vlaneseq
        %v1894 = vshrl.u32 %v1893, 7
        %v1895 = vsub.s32 0, %v1894
        %v1896 = vrot.slane %v1891, %v1895
        %v1898 = vpack.i.b16 %v1887, %v1887
        %v1900 = vlaneseq
        %v1901 = vshrl.u32 %v1900, 7
        %v1902 = vsub.s32 0, %v1901
        %v1903 = vrot.slane %v1898, %v1902
        %v1905 = vpack.i.b16 %v1888, %v1888
        %v1907 = vlaneseq
        %v1908 = vshrl.u32 %v1907, 7
        %v1909 = vsub.s32 0, %v1908
        %v1910 = vrot.slane %v1905, %v1909
        %v1912 = vpack.i.b16 %v1889, %v1889
        %v1914 = vlaneseq
        %v1915 = vshrl.u32 %v1914, 7
        %v1916 = vsub.s32 0, %v1915
        %v1917 = vrot.slane %v1912, %v1916
        %v1918 = vsel %vm1833, %v1896, 0
        %v1919 = vsel %vm1834, %v1903, 0
        %v1920 = vsel %vm1835, %v1910, 0
        %v1921 = vsel %vm1836, %v1917, 0
        %v1922 = vsel %vm1837, %v1896, 0
        %v1923 = vsel %vm1838, %v1903, 0
        %v1924 = vsel %vm1839, %v1910, 0
        %v1925 = vsel %vm1840, %v1917, 0
        %v1926 = vsel %vm1841, %v1896, 0
        %v1927 = vsel %vm1842, %v1903, 0
        %v1928 = vsel %vm1843, %v1910, 0
        %v1929 = vsel %vm1844, %v1917, 0
        %v1930 = vsel %vm1845, %v1896, 0
        %v1931 = vsel %vm1846, %v1903, 0
        %v1932 = vsel %vm1847, %v1910, 0
        %v1933 = vsel %vm1848, %v1917, 0
        %v1934 = vsel %vm1849, %v1896, 0
        %v1935 = vsel %vm1850, %v1903, 0
        %v1936 = vsel %vm1851, %v1910, 0
        %v1937 = vsel %vm1852, %v1917, 0
        %v1938 = vsel %vm1853, %v1896, 0
        %v1939 = vsel %vm1854, %v1903, 0
        %v1940 = vsel %vm1855, %v1910, 0
        %v1941 = vsel %vm1856, %v1917, 0
        %v1942 = vsel %vm1857, %v1896, 0
        %v1943 = vsel %vm1858, %v1903, 0
        %v1944 = vsel %vm1859, %v1910, 0
        %v1945 = vsel %vm1860, %v1917, 0
        %v1946 = vsel %vm1861, %v1896, 0
        %v1947 = vsel %vm1862, %v1903, 0
        %v1948 = vsel %vm1863, %v1910, 0
        %v1949 = vsel %vm1864, %v1917, 0
        %v1950 = vadd.bf16 %v1744, %v1918
        %v1951 = vadd.bf16 %v1745, %v1919
        %v1952 = vadd.bf16 %v1746, %v1920
        %v1953 = vadd.bf16 %v1747, %v1921
        %v1954 = vadd.bf16 %v1748, %v1922
        %v1955 = vadd.bf16 %v1749, %v1923
        %v1956 = vadd.bf16 %v1750, %v1924
        %v1957 = vadd.bf16 %v1751, %v1925
        %v1958 = vadd.bf16 %v1752, %v1926
        %v1959 = vadd.bf16 %v1753, %v1927
        %v1960 = vadd.bf16 %v1754, %v1928
        %v1961 = vadd.bf16 %v1755, %v1929
        %v1962 = vadd.bf16 %v1756, %v1930
        %v1963 = vadd.bf16 %v1757, %v1931
        %v1964 = vadd.bf16 %v1758, %v1932
        %v1965 = vadd.bf16 %v1759, %v1933
        %v1966 = vadd.bf16 %v1760, %v1934
        %v1967 = vadd.bf16 %v1761, %v1935
        %v1968 = vadd.bf16 %v1762, %v1936
        %v1969 = vadd.bf16 %v1763, %v1937
        %v1970 = vadd.bf16 %v1764, %v1938
        %v1971 = vadd.bf16 %v1765, %v1939
        %v1972 = vadd.bf16 %v1766, %v1940
        %v1973 = vadd.bf16 %v1767, %v1941
        %v1974 = vadd.bf16 %v1768, %v1942
        %v1975 = vadd.bf16 %v1769, %v1943
        %v1976 = vadd.bf16 %v1770, %v1944
        %v1977 = vadd.bf16 %v1771, %v1945
        %v1978 = vadd.bf16 %v1772, %v1946
        %v1979 = vadd.bf16 %v1773, %v1947
        %v1980 = vadd.bf16 %v1774, %v1948
        %v1981 = vadd.bf16 %v1775, %v1949
        %v1982 = vadd.s32 %v1777, %v1571
        %v1983 = vcvt.s32.f32 %v1982
        %v1985 = vlaneseq
        %v1986 = vshrl.u32 %v1985, 7
        %v1987 = vsub.s32 0, %v1986
        %v1988 = vrot.slane %v1983, %v1987
        %v1989 = vlaneseq
        %v1990 = vshrl.u32 %v1989, 7
        %v1991 = vsub.s32 1, %v1990
        %v1992 = vrot.slane %v1983, %v1991
        %v1993 = vlaneseq
        %v1994 = vshrl.u32 %v1993, 7
        %v1995 = vsub.s32 2, %v1994
        %v1996 = vrot.slane %v1983, %v1995
        %v1997 = vlaneseq
        %v1998 = vshrl.u32 %v1997, 7
        %v1999 = vsub.s32 3, %v1998
        %v2000 = vrot.slane %v1983, %v1999
        %v2005 = vpack.c.bf16 %v1988, %v1988
        %v2006 = vpack.c.bf16 %v1992, %v1992
        %v2007 = vpack.c.bf16 %v1996, %v1996
        %v2008 = vpack.c.bf16 %v2000, %v2000
        %v2010 = vpack.i.b16 %v2005, %v2005
        %v2012 = vlaneseq
        %v2013 = vshrl.u32 %v2012, 7
        %v2014 = vsub.s32 0, %v2013
        %v2015 = vrot.slane %v2010, %v2014
        %v2017 = vpack.i.b16 %v2006, %v2006
        %v2019 = vlaneseq
        %v2020 = vshrl.u32 %v2019, 7
        %v2021 = vsub.s32 0, %v2020
        %v2022 = vrot.slane %v2017, %v2021
        %v2024 = vpack.i.b16 %v2007, %v2007
        %v2026 = vlaneseq
        %v2027 = vshrl.u32 %v2026, 7
        %v2028 = vsub.s32 0, %v2027
        %v2029 = vrot.slane %v2024, %v2028
        %v2031 = vpack.i.b16 %v2008, %v2008
        %v2033 = vlaneseq
        %v2034 = vshrl.u32 %v2033, 7
        %v2035 = vsub.s32 0, %v2034
        %v2036 = vrot.slane %v2031, %v2035
        %vm2037 = vcmp.eq.bf16.partialorder %v202, %v2015
        %vm2038 = vcmp.eq.bf16.partialorder %v202, %v2022
        %vm2039 = vcmp.eq.bf16.partialorder %v202, %v2029
        %vm2040 = vcmp.eq.bf16.partialorder %v202, %v2036
        %vm2041 = vcmp.eq.bf16.partialorder %v203, %v2015
        %vm2042 = vcmp.eq.bf16.partialorder %v203, %v2022
        %vm2043 = vcmp.eq.bf16.partialorder %v203, %v2029
        %vm2044 = vcmp.eq.bf16.partialorder %v203, %v2036
        %vm2045 = vcmp.eq.bf16.partialorder %v750, %v2015
        %vm2046 = vcmp.eq.bf16.partialorder %v750, %v2022
        %vm2047 = vcmp.eq.bf16.partialorder %v750, %v2029
        %vm2048 = vcmp.eq.bf16.partialorder %v750, %v2036
        %vm2049 = vcmp.eq.bf16.partialorder %v751, %v2015
        %vm2050 = vcmp.eq.bf16.partialorder %v751, %v2022
        %vm2051 = vcmp.eq.bf16.partialorder %v751, %v2029
        %vm2052 = vcmp.eq.bf16.partialorder %v751, %v2036
        %vm2053 = vcmp.eq.bf16.partialorder %v1394, %v2015
        %vm2054 = vcmp.eq.bf16.partialorder %v1394, %v2022
        %vm2055 = vcmp.eq.bf16.partialorder %v1394, %v2029
        %vm2056 = vcmp.eq.bf16.partialorder %v1394, %v2036
        %vm2057 = vcmp.eq.bf16.partialorder %v1395, %v2015
        %vm2058 = vcmp.eq.bf16.partialorder %v1395, %v2022
        %vm2059 = vcmp.eq.bf16.partialorder %v1395, %v2029
        %vm2060 = vcmp.eq.bf16.partialorder %v1395, %v2036
        %vm2061 = vcmp.eq.bf16.partialorder %v1396, %v2015
        %vm2062 = vcmp.eq.bf16.partialorder %v1396, %v2022
        %vm2063 = vcmp.eq.bf16.partialorder %v1396, %v2029
        %vm2064 = vcmp.eq.bf16.partialorder %v1396, %v2036
        %vm2065 = vcmp.eq.bf16.partialorder %v1397, %v2015
        %vm2066 = vcmp.eq.bf16.partialorder %v1397, %v2022
        %vm2067 = vcmp.eq.bf16.partialorder %v1397, %v2029
        %vm2068 = vcmp.eq.bf16.partialorder %v1397, %v2036
        %v2070 = vlaneseq
        %v2071 = vshrl.u32 %v2070, 7
        %v2072 = vsub.s32 0, %v2071
        %v2073 = vrot.slane %v1377, %v2072
        %v2074 = vlaneseq
        %v2075 = vshrl.u32 %v2074, 7
        %v2076 = vsub.s32 1, %v2075
        %v2077 = vrot.slane %v1377, %v2076
        %v2078 = vlaneseq
        %v2079 = vshrl.u32 %v2078, 7
        %v2080 = vsub.s32 2, %v2079
        %v2081 = vrot.slane %v1377, %v2080
        %v2082 = vlaneseq
        %v2083 = vshrl.u32 %v2082, 7
        %v2084 = vsub.s32 3, %v2083
        %v2085 = vrot.slane %v1377, %v2084
        %v2090 = vpack.c.bf16 %v2073, %v2073
        %v2091 = vpack.c.bf16 %v2077, %v2077
        %v2092 = vpack.c.bf16 %v2081, %v2081
        %v2093 = vpack.c.bf16 %v2085, %v2085
        %v2095 = vpack.i.b16 %v2090, %v2090
        %v2097 = vlaneseq
        %v2098 = vshrl.u32 %v2097, 7
        %v2099 = vsub.s32 0, %v2098
        %v2100 = vrot.slane %v2095, %v2099
        %v2102 = vpack.i.b16 %v2091, %v2091
        %v2104 = vlaneseq
        %v2105 = vshrl.u32 %v2104, 7
        %v2106 = vsub.s32 0, %v2105
        %v2107 = vrot.slane %v2102, %v2106
        %v2109 = vpack.i.b16 %v2092, %v2092
        %v2111 = vlaneseq
        %v2112 = vshrl.u32 %v2111, 7
        %v2113 = vsub.s32 0, %v2112
        %v2114 = vrot.slane %v2109, %v2113
        %v2116 = vpack.i.b16 %v2093, %v2093
        %v2118 = vlaneseq
        %v2119 = vshrl.u32 %v2118, 7
        %v2120 = vsub.s32 0, %v2119
        %v2121 = vrot.slane %v2116, %v2120
        %v2122 = vsel %vm2037, %v2100, 0
        %v2123 = vsel %vm2038, %v2107, 0
        %v2124 = vsel %vm2039, %v2114, 0
        %v2125 = vsel %vm2040, %v2121, 0
        %v2126 = vsel %vm2041, %v2100, 0
        %v2127 = vsel %vm2042, %v2107, 0
        %v2128 = vsel %vm2043, %v2114, 0
        %v2129 = vsel %vm2044, %v2121, 0
        %v2130 = vsel %vm2045, %v2100, 0
        %v2131 = vsel %vm2046, %v2107, 0
        %v2132 = vsel %vm2047, %v2114, 0
        %v2133 = vsel %vm2048, %v2121, 0
        %v2134 = vsel %vm2049, %v2100, 0
        %v2135 = vsel %vm2050, %v2107, 0
        %v2136 = vsel %vm2051, %v2114, 0
        %v2137 = vsel %vm2052, %v2121, 0
        %v2138 = vsel %vm2053, %v2100, 0
        %v2139 = vsel %vm2054, %v2107, 0
        %v2140 = vsel %vm2055, %v2114, 0
        %v2141 = vsel %vm2056, %v2121, 0
        %v2142 = vsel %vm2057, %v2100, 0
        %v2143 = vsel %vm2058, %v2107, 0
        %v2144 = vsel %vm2059, %v2114, 0
        %v2145 = vsel %vm2060, %v2121, 0
        %v2146 = vsel %vm2061, %v2100, 0
        %v2147 = vsel %vm2062, %v2107, 0
        %v2148 = vsel %vm2063, %v2114, 0
        %v2149 = vsel %vm2064, %v2121, 0
        %v2150 = vsel %vm2065, %v2100, 0
        %v2151 = vsel %vm2066, %v2107, 0
        %v2152 = vsel %vm2067, %v2114, 0
        %v2153 = vsel %vm2068, %v2121, 0
        %v2154 = vadd.bf16 %v1950, %v2122
        %v2155 = vadd.bf16 %v1951, %v2123
        %v2156 = vadd.bf16 %v1952, %v2124
        %v2157 = vadd.bf16 %v1953, %v2125
        %v2158 = vadd.bf16 %v1954, %v2126
        %v2159 = vadd.bf16 %v1955, %v2127
        %v2160 = vadd.bf16 %v1956, %v2128
        %v2161 = vadd.bf16 %v1957, %v2129
        %v2162 = vadd.bf16 %v1958, %v2130
        %v2163 = vadd.bf16 %v1959, %v2131
        %v2164 = vadd.bf16 %v1960, %v2132
        %v2165 = vadd.bf16 %v1961, %v2133
        %v2166 = vadd.bf16 %v1962, %v2134
        %v2167 = vadd.bf16 %v1963, %v2135
        %v2168 = vadd.bf16 %v1964, %v2136
        %v2169 = vadd.bf16 %v1965, %v2137
        %v2170 = vadd.bf16 %v1966, %v2138
        %v2171 = vadd.bf16 %v1967, %v2139
        %v2172 = vadd.bf16 %v1968, %v2140
        %v2173 = vadd.bf16 %v1969, %v2141
        %v2174 = vadd.bf16 %v1970, %v2142
        %v2175 = vadd.bf16 %v1971, %v2143
        %v2176 = vadd.bf16 %v1972, %v2144
        %v2177 = vadd.bf16 %v1973, %v2145
        %v2178 = vadd.bf16 %v1974, %v2146
        %v2179 = vadd.bf16 %v1975, %v2147
        %v2180 = vadd.bf16 %v1976, %v2148
        %v2181 = vadd.bf16 %v1977, %v2149
        %v2182 = vadd.bf16 %v1978, %v2150
        %v2183 = vadd.bf16 %v1979, %v2151
        %v2184 = vadd.bf16 %v1980, %v2152
        %v2185 = vadd.bf16 %v1981, %v2153
        %v2186 = vmul.f32 %v176, 0.93749994
        %v2187 = vmul.f32 %v178, 0.93749994
        %v2188 = vfloor.f32 %v2186
        %v2189 = vfloor.f32 %v2187
        %v2190 = vsub.f32 %v2186, %v2188
        %v2191 = vsub.f32 %v2187, %v2189
        %v2192 = vcvt.f32.s32.to.zero.pseudo %v2188
        %v2193 = vcvt.f32.s32.to.zero.pseudo %v2189
        %v2194 = vsub.f32 1.0, %v2190
        %v2195 = vsub.f32 1.0, %v2191
        %v2196 = vmul.f32 %v2194, %v2195
        %v2197 = vmul.f32 %v2194, %v2191
        %v2198 = vmul.f32 %v2190, %v2195
        %v2199 = vmul.f32 %v2190, %v2191
        %v2200 = vmul.u32 %v2193, 2654435761
        %v2201 = vxor.u32 %v2192, %v2200
        %v2202 = vand.u32 %v2201, 127
        %v2203 = vcvt.s32.f32 %v2202
        %v2205 = vlaneseq
        %v2206 = vshrl.u32 %v2205, 7
        %v2207 = vsub.s32 0, %v2206
        %v2208 = vrot.slane %v2203, %v2207
        %v2209 = vlaneseq
        %v2210 = vshrl.u32 %v2209, 7
        %v2211 = vsub.s32 1, %v2210
        %v2212 = vrot.slane %v2203, %v2211
        %v2213 = vlaneseq
        %v2214 = vshrl.u32 %v2213, 7
        %v2215 = vsub.s32 2, %v2214
        %v2216 = vrot.slane %v2203, %v2215
        %v2217 = vlaneseq
        %v2218 = vshrl.u32 %v2217, 7
        %v2219 = vsub.s32 3, %v2218
        %v2220 = vrot.slane %v2203, %v2219
        %v2225 = vpack.c.bf16 %v2208, %v2208
        %v2226 = vpack.c.bf16 %v2212, %v2212
        %v2227 = vpack.c.bf16 %v2216, %v2216
        %v2228 = vpack.c.bf16 %v2220, %v2220
        %v2230 = vpack.i.b16 %v2225, %v2225
        %v2232 = vlaneseq
        %v2233 = vshrl.u32 %v2232, 7
        %v2234 = vsub.s32 0, %v2233
        %v2235 = vrot.slane %v2230, %v2234
        %v2237 = vpack.i.b16 %v2226, %v2226
        %v2239 = vlaneseq
        %v2240 = vshrl.u32 %v2239, 7
        %v2241 = vsub.s32 0, %v2240
        %v2242 = vrot.slane %v2237, %v2241
        %v2244 = vpack.i.b16 %v2227, %v2227
        %v2246 = vlaneseq
        %v2247 = vshrl.u32 %v2246, 7
        %v2248 = vsub.s32 0, %v2247
        %v2249 = vrot.slane %v2244, %v2248
        %v2251 = vpack.i.b16 %v2228, %v2228
        %v2253 = vlaneseq
        %v2254 = vshrl.u32 %v2253, 7
        %v2255 = vsub.s32 0, %v2254
        %v2256 = vrot.slane %v2251, %v2255
        %vm2257 = vcmp.eq.bf16.partialorder %v202, %v2235
        %vm2258 = vcmp.eq.bf16.partialorder %v202, %v2242
        %vm2259 = vcmp.eq.bf16.partialorder %v202, %v2249
        %vm2260 = vcmp.eq.bf16.partialorder %v202, %v2256
        %vm2261 = vcmp.eq.bf16.partialorder %v203, %v2235
        %vm2262 = vcmp.eq.bf16.partialorder %v203, %v2242
        %vm2263 = vcmp.eq.bf16.partialorder %v203, %v2249
        %vm2264 = vcmp.eq.bf16.partialorder %v203, %v2256
        %vm2265 = vcmp.eq.bf16.partialorder %v750, %v2235
        %vm2266 = vcmp.eq.bf16.partialorder %v750, %v2242
        %vm2267 = vcmp.eq.bf16.partialorder %v750, %v2249
        %vm2268 = vcmp.eq.bf16.partialorder %v750, %v2256
        %vm2269 = vcmp.eq.bf16.partialorder %v751, %v2235
        %vm2270 = vcmp.eq.bf16.partialorder %v751, %v2242
        %vm2271 = vcmp.eq.bf16.partialorder %v751, %v2249
        %vm2272 = vcmp.eq.bf16.partialorder %v751, %v2256
        %vm2273 = vcmp.eq.bf16.partialorder %v1394, %v2235
        %vm2274 = vcmp.eq.bf16.partialorder %v1394, %v2242
        %vm2275 = vcmp.eq.bf16.partialorder %v1394, %v2249
        %vm2276 = vcmp.eq.bf16.partialorder %v1394, %v2256
        %vm2277 = vcmp.eq.bf16.partialorder %v1395, %v2235
        %vm2278 = vcmp.eq.bf16.partialorder %v1395, %v2242
        %vm2279 = vcmp.eq.bf16.partialorder %v1395, %v2249
        %vm2280 = vcmp.eq.bf16.partialorder %v1395, %v2256
        %vm2281 = vcmp.eq.bf16.partialorder %v1396, %v2235
        %vm2282 = vcmp.eq.bf16.partialorder %v1396, %v2242
        %vm2283 = vcmp.eq.bf16.partialorder %v1396, %v2249
        %vm2284 = vcmp.eq.bf16.partialorder %v1396, %v2256
        %vm2285 = vcmp.eq.bf16.partialorder %v1397, %v2235
        %vm2286 = vcmp.eq.bf16.partialorder %v1397, %v2242
        %vm2287 = vcmp.eq.bf16.partialorder %v1397, %v2249
        %vm2288 = vcmp.eq.bf16.partialorder %v1397, %v2256
        %v2290 = vlaneseq
        %v2291 = vshrl.u32 %v2290, 7
        %v2292 = vsub.s32 0, %v2291
        %v2293 = vrot.slane %v2196, %v2292
        %v2294 = vlaneseq
        %v2295 = vshrl.u32 %v2294, 7
        %v2296 = vsub.s32 1, %v2295
        %v2297 = vrot.slane %v2196, %v2296
        %v2298 = vlaneseq
        %v2299 = vshrl.u32 %v2298, 7
        %v2300 = vsub.s32 2, %v2299
        %v2301 = vrot.slane %v2196, %v2300
        %v2302 = vlaneseq
        %v2303 = vshrl.u32 %v2302, 7
        %v2304 = vsub.s32 3, %v2303
        %v2305 = vrot.slane %v2196, %v2304
        %v2310 = vpack.c.bf16 %v2293, %v2293
        %v2311 = vpack.c.bf16 %v2297, %v2297
        %v2312 = vpack.c.bf16 %v2301, %v2301
        %v2313 = vpack.c.bf16 %v2305, %v2305
        %v2315 = vpack.i.b16 %v2310, %v2310
        %v2317 = vlaneseq
        %v2318 = vshrl.u32 %v2317, 7
        %v2319 = vsub.s32 0, %v2318
        %v2320 = vrot.slane %v2315, %v2319
        %v2322 = vpack.i.b16 %v2311, %v2311
        %v2324 = vlaneseq
        %v2325 = vshrl.u32 %v2324, 7
        %v2326 = vsub.s32 0, %v2325
        %v2327 = vrot.slane %v2322, %v2326
        %v2329 = vpack.i.b16 %v2312, %v2312
        %v2331 = vlaneseq
        %v2332 = vshrl.u32 %v2331, 7
        %v2333 = vsub.s32 0, %v2332
        %v2334 = vrot.slane %v2329, %v2333
        %v2336 = vpack.i.b16 %v2313, %v2313
        %v2338 = vlaneseq
        %v2339 = vshrl.u32 %v2338, 7
        %v2340 = vsub.s32 0, %v2339
        %v2341 = vrot.slane %v2336, %v2340
        %v2342 = vsel %vm2257, %v2320, 0
        %v2343 = vsel %vm2258, %v2327, 0
        %v2344 = vsel %vm2259, %v2334, 0
        %v2345 = vsel %vm2260, %v2341, 0
        %v2346 = vsel %vm2261, %v2320, 0
        %v2347 = vsel %vm2262, %v2327, 0
        %v2348 = vsel %vm2263, %v2334, 0
        %v2349 = vsel %vm2264, %v2341, 0
        %v2350 = vsel %vm2265, %v2320, 0
        %v2351 = vsel %vm2266, %v2327, 0
        %v2352 = vsel %vm2267, %v2334, 0
        %v2353 = vsel %vm2268, %v2341, 0
        %v2354 = vsel %vm2269, %v2320, 0
        %v2355 = vsel %vm2270, %v2327, 0
        %v2356 = vsel %vm2271, %v2334, 0
        %v2357 = vsel %vm2272, %v2341, 0
        %v2358 = vsel %vm2273, %v2320, 0
        %v2359 = vsel %vm2274, %v2327, 0
        %v2360 = vsel %vm2275, %v2334, 0
        %v2361 = vsel %vm2276, %v2341, 0
        %v2362 = vsel %vm2277, %v2320, 0
        %v2363 = vsel %vm2278, %v2327, 0
        %v2364 = vsel %vm2279, %v2334, 0
        %v2365 = vsel %vm2280, %v2341, 0
        %v2366 = vsel %vm2281, %v2320, 0
        %v2367 = vsel %vm2282, %v2327, 0
        %v2368 = vsel %vm2283, %v2334, 0
        %v2369 = vsel %vm2284, %v2341, 0
        %v2370 = vsel %vm2285, %v2320, 0
        %v2371 = vsel %vm2286, %v2327, 0
        %v2372 = vsel %vm2287, %v2334, 0
        %v2373 = vsel %vm2288, %v2341, 0
        %v2374 = vadd.s32 %v2193, 1
        %v2375 = vmul.u32 %v2374, 2654435761
        %v2376 = vxor.u32 %v2192, %v2375
        %v2377 = vand.u32 %v2376, 127
        %v2378 = vcvt.s32.f32 %v2377
        %v2380 = vlaneseq
        %v2381 = vshrl.u32 %v2380, 7
        %v2382 = vsub.s32 0, %v2381
        %v2383 = vrot.slane %v2378, %v2382
        %v2384 = vlaneseq
        %v2385 = vshrl.u32 %v2384, 7
        %v2386 = vsub.s32 1, %v2385
        %v2387 = vrot.slane %v2378, %v2386
        %v2388 = vlaneseq
        %v2389 = vshrl.u32 %v2388, 7
        %v2390 = vsub.s32 2, %v2389
        %v2391 = vrot.slane %v2378, %v2390
        %v2392 = vlaneseq
        %v2393 = vshrl.u32 %v2392, 7
        %v2394 = vsub.s32 3, %v2393
        %v2395 = vrot.slane %v2378, %v2394
        %v2400 = vpack.c.bf16 %v2383, %v2383
        %v2401 = vpack.c.bf16 %v2387, %v2387
        %v2402 = vpack.c.bf16 %v2391, %v2391
        %v2403 = vpack.c.bf16 %v2395, %v2395
        %v2405 = vpack.i.b16 %v2400, %v2400
        %v2407 = vlaneseq
        %v2408 = vshrl.u32 %v2407, 7
        %v2409 = vsub.s32 0, %v2408
        %v2410 = vrot.slane %v2405, %v2409
        %v2412 = vpack.i.b16 %v2401, %v2401
        %v2414 = vlaneseq
        %v2415 = vshrl.u32 %v2414, 7
        %v2416 = vsub.s32 0, %v2415
        %v2417 = vrot.slane %v2412, %v2416
        %v2419 = vpack.i.b16 %v2402, %v2402
        %v2421 = vlaneseq
        %v2422 = vshrl.u32 %v2421, 7
        %v2423 = vsub.s32 0, %v2422
        %v2424 = vrot.slane %v2419, %v2423
        %v2426 = vpack.i.b16 %v2403, %v2403
        %v2428 = vlaneseq
        %v2429 = vshrl.u32 %v2428, 7
        %v2430 = vsub.s32 0, %v2429
        %v2431 = vrot.slane %v2426, %v2430
        %vm2432 = vcmp.eq.bf16.partialorder %v202, %v2410
        %vm2433 = vcmp.eq.bf16.partialorder %v202, %v2417
        %vm2434 = vcmp.eq.bf16.partialorder %v202, %v2424
        %vm2435 = vcmp.eq.bf16.partialorder %v202, %v2431
        %vm2436 = vcmp.eq.bf16.partialorder %v203, %v2410
        %vm2437 = vcmp.eq.bf16.partialorder %v203, %v2417
        %vm2438 = vcmp.eq.bf16.partialorder %v203, %v2424
        %vm2439 = vcmp.eq.bf16.partialorder %v203, %v2431
        %vm2440 = vcmp.eq.bf16.partialorder %v750, %v2410
        %vm2441 = vcmp.eq.bf16.partialorder %v750, %v2417
        %vm2442 = vcmp.eq.bf16.partialorder %v750, %v2424
        %vm2443 = vcmp.eq.bf16.partialorder %v750, %v2431
        %vm2444 = vcmp.eq.bf16.partialorder %v751, %v2410
        %vm2445 = vcmp.eq.bf16.partialorder %v751, %v2417
        %vm2446 = vcmp.eq.bf16.partialorder %v751, %v2424
        %vm2447 = vcmp.eq.bf16.partialorder %v751, %v2431
        %vm2448 = vcmp.eq.bf16.partialorder %v1394, %v2410
        %vm2449 = vcmp.eq.bf16.partialorder %v1394, %v2417
        %vm2450 = vcmp.eq.bf16.partialorder %v1394, %v2424
        %vm2451 = vcmp.eq.bf16.partialorder %v1394, %v2431
        %vm2452 = vcmp.eq.bf16.partialorder %v1395, %v2410
        %vm2453 = vcmp.eq.bf16.partialorder %v1395, %v2417
        %vm2454 = vcmp.eq.bf16.partialorder %v1395, %v2424
        %vm2455 = vcmp.eq.bf16.partialorder %v1395, %v2431
        %vm2456 = vcmp.eq.bf16.partialorder %v1396, %v2410
        %vm2457 = vcmp.eq.bf16.partialorder %v1396, %v2417
        %vm2458 = vcmp.eq.bf16.partialorder %v1396, %v2424
        %vm2459 = vcmp.eq.bf16.partialorder %v1396, %v2431
        %vm2460 = vcmp.eq.bf16.partialorder %v1397, %v2410
        %vm2461 = vcmp.eq.bf16.partialorder %v1397, %v2417
        %vm2462 = vcmp.eq.bf16.partialorder %v1397, %v2424
        %vm2463 = vcmp.eq.bf16.partialorder %v1397, %v2431
        %v2465 = vlaneseq
        %v2466 = vshrl.u32 %v2465, 7
        %v2467 = vsub.s32 0, %v2466
        %v2468 = vrot.slane %v2197, %v2467
        %v2469 = vlaneseq
        %v2470 = vshrl.u32 %v2469, 7
        %v2471 = vsub.s32 1, %v2470
        %v2472 = vrot.slane %v2197, %v2471
        %v2473 = vlaneseq
        %v2474 = vshrl.u32 %v2473, 7
        %v2475 = vsub.s32 2, %v2474
        %v2476 = vrot.slane %v2197, %v2475
        %v2477 = vlaneseq
        %v2478 = vshrl.u32 %v2477, 7
        %v2479 = vsub.s32 3, %v2478
        %v2480 = vrot.slane %v2197, %v2479
        %v2485 = vpack.c.bf16 %v2468, %v2468
        %v2486 = vpack.c.bf16 %v2472, %v2472
        %v2487 = vpack.c.bf16 %v2476, %v2476
        %v2488 = vpack.c.bf16 %v2480, %v2480
        %v2490 = vpack.i.b16 %v2485, %v2485
        %v2492 = vlaneseq
        %v2493 = vshrl.u32 %v2492, 7
        %v2494 = vsub.s32 0, %v2493
        %v2495 = vrot.slane %v2490, %v2494
        %v2497 = vpack.i.b16 %v2486, %v2486
        %v2499 = vlaneseq
        %v2500 = vshrl.u32 %v2499, 7
        %v2501 = vsub.s32 0, %v2500
        %v2502 = vrot.slane %v2497, %v2501
        %v2504 = vpack.i.b16 %v2487, %v2487
        %v2506 = vlaneseq
        %v2507 = vshrl.u32 %v2506, 7
        %v2508 = vsub.s32 0, %v2507
        %v2509 = vrot.slane %v2504, %v2508
        %v2511 = vpack.i.b16 %v2488, %v2488
        %v2513 = vlaneseq
        %v2514 = vshrl.u32 %v2513, 7
        %v2515 = vsub.s32 0, %v2514
        %v2516 = vrot.slane %v2511, %v2515
        %v2517 = vsel %vm2432, %v2495, 0
        %v2518 = vsel %vm2433, %v2502, 0
        %v2519 = vsel %vm2434, %v2509, 0
        %v2520 = vsel %vm2435, %v2516, 0
        %v2521 = vsel %vm2436, %v2495, 0
        %v2522 = vsel %vm2437, %v2502, 0
        %v2523 = vsel %vm2438, %v2509, 0
        %v2524 = vsel %vm2439, %v2516, 0
        %v2525 = vsel %vm2440, %v2495, 0
        %v2526 = vsel %vm2441, %v2502, 0
        %v2527 = vsel %vm2442, %v2509, 0
        %v2528 = vsel %vm2443, %v2516, 0
        %v2529 = vsel %vm2444, %v2495, 0
        %v2530 = vsel %vm2445, %v2502, 0
        %v2531 = vsel %vm2446, %v2509, 0
        %v2532 = vsel %vm2447, %v2516, 0
        %v2533 = vsel %vm2448, %v2495, 0
        %v2534 = vsel %vm2449, %v2502, 0
        %v2535 = vsel %vm2450, %v2509, 0
        %v2536 = vsel %vm2451, %v2516, 0
        %v2537 = vsel %vm2452, %v2495, 0
        %v2538 = vsel %vm2453, %v2502, 0
        %v2539 = vsel %vm2454, %v2509, 0
        %v2540 = vsel %vm2455, %v2516, 0
        %v2541 = vsel %vm2456, %v2495, 0
        %v2542 = vsel %vm2457, %v2502, 0
        %v2543 = vsel %vm2458, %v2509, 0
        %v2544 = vsel %vm2459, %v2516, 0
        %v2545 = vsel %vm2460, %v2495, 0
        %v2546 = vsel %vm2461, %v2502, 0
        %v2547 = vsel %vm2462, %v2509, 0
        %v2548 = vsel %vm2463, %v2516, 0
        %v2549 = vadd.bf16 %v2342, %v2517
        %v2550 = vadd.bf16 %v2343, %v2518
        %v2551 = vadd.bf16 %v2344, %v2519
        %v2552 = vadd.bf16 %v2345, %v2520
        %v2553 = vadd.bf16 %v2346, %v2521
        %v2554 = vadd.bf16 %v2347, %v2522
        %v2555 = vadd.bf16 %v2348, %v2523
        %v2556 = vadd.bf16 %v2349, %v2524
        %v2557 = vadd.bf16 %v2350, %v2525
        %v2558 = vadd.bf16 %v2351, %v2526
        %v2559 = vadd.bf16 %v2352, %v2527
        %v2560 = vadd.bf16 %v2353, %v2528
        %v2561 = vadd.bf16 %v2354, %v2529
        %v2562 = vadd.bf16 %v2355, %v2530
        %v2563 = vadd.bf16 %v2356, %v2531
        %v2564 = vadd.bf16 %v2357, %v2532
        %v2565 = vadd.bf16 %v2358, %v2533
        %v2566 = vadd.bf16 %v2359, %v2534
        %v2567 = vadd.bf16 %v2360, %v2535
        %v2568 = vadd.bf16 %v2361, %v2536
        %v2569 = vadd.bf16 %v2362, %v2537
        %v2570 = vadd.bf16 %v2363, %v2538
        %v2571 = vadd.bf16 %v2364, %v2539
        %v2572 = vadd.bf16 %v2365, %v2540
        %v2573 = vadd.bf16 %v2366, %v2541
        %v2574 = vadd.bf16 %v2367, %v2542
        %v2575 = vadd.bf16 %v2368, %v2543
        %v2576 = vadd.bf16 %v2369, %v2544
        %v2577 = vadd.bf16 %v2370, %v2545
        %v2578 = vadd.bf16 %v2371, %v2546
        %v2579 = vadd.bf16 %v2372, %v2547
        %v2580 = vadd.bf16 %v2373, %v2548
        %v2581 = vadd.s32 %v2192, 1
        %v2582 = vxor.u32 %v2581, %v2200
        %v2583 = vand.u32 %v2582, 127
        %v2584 = vcvt.s32.f32 %v2583
        %v2586 = vlaneseq
        %v2587 = vshrl.u32 %v2586, 7
        %v2588 = vsub.s32 0, %v2587
        %v2589 = vrot.slane %v2584, %v2588
        %v2590 = vlaneseq
        %v2591 = vshrl.u32 %v2590, 7
        %v2592 = vsub.s32 1, %v2591
        %v2593 = vrot.slane %v2584, %v2592
        %v2594 = vlaneseq
        %v2595 = vshrl.u32 %v2594, 7
        %v2596 = vsub.s32 2, %v2595
        %v2597 = vrot.slane %v2584, %v2596
        %v2598 = vlaneseq
        %v2599 = vshrl.u32 %v2598, 7
        %v2600 = vsub.s32 3, %v2599
        %v2601 = vrot.slane %v2584, %v2600
        %v2606 = vpack.c.bf16 %v2589, %v2589
        %v2607 = vpack.c.bf16 %v2593, %v2593
        %v2608 = vpack.c.bf16 %v2597, %v2597
        %v2609 = vpack.c.bf16 %v2601, %v2601
        %v2611 = vpack.i.b16 %v2606, %v2606
        %v2613 = vlaneseq
        %v2614 = vshrl.u32 %v2613, 7
        %v2615 = vsub.s32 0, %v2614
        %v2616 = vrot.slane %v2611, %v2615
        %v2618 = vpack.i.b16 %v2607, %v2607
        %v2620 = vlaneseq
        %v2621 = vshrl.u32 %v2620, 7
        %v2622 = vsub.s32 0, %v2621
        %v2623 = vrot.slane %v2618, %v2622
        %v2625 = vpack.i.b16 %v2608, %v2608
        %v2627 = vlaneseq
        %v2628 = vshrl.u32 %v2627, 7
        %v2629 = vsub.s32 0, %v2628
        %v2630 = vrot.slane %v2625, %v2629
        %v2632 = vpack.i.b16 %v2609, %v2609
        %v2634 = vlaneseq
        %v2635 = vshrl.u32 %v2634, 7
        %v2636 = vsub.s32 0, %v2635
        %v2637 = vrot.slane %v2632, %v2636
        %vm2638 = vcmp.eq.bf16.partialorder %v202, %v2616
        %vm2639 = vcmp.eq.bf16.partialorder %v202, %v2623
        %vm2640 = vcmp.eq.bf16.partialorder %v202, %v2630
        %vm2641 = vcmp.eq.bf16.partialorder %v202, %v2637
        %vm2642 = vcmp.eq.bf16.partialorder %v203, %v2616
        %vm2643 = vcmp.eq.bf16.partialorder %v203, %v2623
        %vm2644 = vcmp.eq.bf16.partialorder %v203, %v2630
        %vm2645 = vcmp.eq.bf16.partialorder %v203, %v2637
        %vm2646 = vcmp.eq.bf16.partialorder %v750, %v2616
        %vm2647 = vcmp.eq.bf16.partialorder %v750, %v2623
        %vm2648 = vcmp.eq.bf16.partialorder %v750, %v2630
        %vm2649 = vcmp.eq.bf16.partialorder %v750, %v2637
        %vm2650 = vcmp.eq.bf16.partialorder %v751, %v2616
        %vm2651 = vcmp.eq.bf16.partialorder %v751, %v2623
        %vm2652 = vcmp.eq.bf16.partialorder %v751, %v2630
        %vm2653 = vcmp.eq.bf16.partialorder %v751, %v2637
        %vm2654 = vcmp.eq.bf16.partialorder %v1394, %v2616
        %vm2655 = vcmp.eq.bf16.partialorder %v1394, %v2623
        %vm2656 = vcmp.eq.bf16.partialorder %v1394, %v2630
        %vm2657 = vcmp.eq.bf16.partialorder %v1394, %v2637
        %vm2658 = vcmp.eq.bf16.partialorder %v1395, %v2616
        %vm2659 = vcmp.eq.bf16.partialorder %v1395, %v2623
        %vm2660 = vcmp.eq.bf16.partialorder %v1395, %v2630
        %vm2661 = vcmp.eq.bf16.partialorder %v1395, %v2637
        %vm2662 = vcmp.eq.bf16.partialorder %v1396, %v2616
        %vm2663 = vcmp.eq.bf16.partialorder %v1396, %v2623
        %vm2664 = vcmp.eq.bf16.partialorder %v1396, %v2630
        %vm2665 = vcmp.eq.bf16.partialorder %v1396, %v2637
        %vm2666 = vcmp.eq.bf16.partialorder %v1397, %v2616
        %vm2667 = vcmp.eq.bf16.partialorder %v1397, %v2623
        %vm2668 = vcmp.eq.bf16.partialorder %v1397, %v2630
        %vm2669 = vcmp.eq.bf16.partialorder %v1397, %v2637
        %v2671 = vlaneseq
        %v2672 = vshrl.u32 %v2671, 7
        %v2673 = vsub.s32 0, %v2672
        %v2674 = vrot.slane %v2198, %v2673
        %v2675 = vlaneseq
        %v2676 = vshrl.u32 %v2675, 7
        %v2677 = vsub.s32 1, %v2676
        %v2678 = vrot.slane %v2198, %v2677
        %v2679 = vlaneseq
        %v2680 = vshrl.u32 %v2679, 7
        %v2681 = vsub.s32 2, %v2680
        %v2682 = vrot.slane %v2198, %v2681
        %v2683 = vlaneseq
        %v2684 = vshrl.u32 %v2683, 7
        %v2685 = vsub.s32 3, %v2684
        %v2686 = vrot.slane %v2198, %v2685
        %v2691 = vpack.c.bf16 %v2674, %v2674
        %v2692 = vpack.c.bf16 %v2678, %v2678
        %v2693 = vpack.c.bf16 %v2682, %v2682
        %v2694 = vpack.c.bf16 %v2686, %v2686
        %v2696 = vpack.i.b16 %v2691, %v2691
        %v2698 = vlaneseq
        %v2699 = vshrl.u32 %v2698, 7
        %v2700 = vsub.s32 0, %v2699
        %v2701 = vrot.slane %v2696, %v2700
        %v2703 = vpack.i.b16 %v2692, %v2692
        %v2705 = vlaneseq
        %v2706 = vshrl.u32 %v2705, 7
        %v2707 = vsub.s32 0, %v2706
        %v2708 = vrot.slane %v2703, %v2707
        %v2710 = vpack.i.b16 %v2693, %v2693
        %v2712 = vlaneseq
        %v2713 = vshrl.u32 %v2712, 7
        %v2714 = vsub.s32 0, %v2713
        %v2715 = vrot.slane %v2710, %v2714
        %v2717 = vpack.i.b16 %v2694, %v2694
        %v2719 = vlaneseq
        %v2720 = vshrl.u32 %v2719, 7
        %v2721 = vsub.s32 0, %v2720
        %v2722 = vrot.slane %v2717, %v2721
        %v2723 = vsel %vm2638, %v2701, 0
        %v2724 = vsel %vm2639, %v2708, 0
        %v2725 = vsel %vm2640, %v2715, 0
        %v2726 = vsel %vm2641, %v2722, 0
        %v2727 = vsel %vm2642, %v2701, 0
        %v2728 = vsel %vm2643, %v2708, 0
        %v2729 = vsel %vm2644, %v2715, 0
        %v2730 = vsel %vm2645, %v2722, 0
        %v2731 = vsel %vm2646, %v2701, 0
        %v2732 = vsel %vm2647, %v2708, 0
        %v2733 = vsel %vm2648, %v2715, 0
        %v2734 = vsel %vm2649, %v2722, 0
        %v2735 = vsel %vm2650, %v2701, 0
        %v2736 = vsel %vm2651, %v2708, 0
        %v2737 = vsel %vm2652, %v2715, 0
        %v2738 = vsel %vm2653, %v2722, 0
        %v2739 = vsel %vm2654, %v2701, 0
        %v2740 = vsel %vm2655, %v2708, 0
        %v2741 = vsel %vm2656, %v2715, 0
        %v2742 = vsel %vm2657, %v2722, 0
        %v2743 = vsel %vm2658, %v2701, 0
        %v2744 = vsel %vm2659, %v2708, 0
        %v2745 = vsel %vm2660, %v2715, 0
        %v2746 = vsel %vm2661, %v2722, 0
        %v2747 = vsel %vm2662, %v2701, 0
        %v2748 = vsel %vm2663, %v2708, 0
        %v2749 = vsel %vm2664, %v2715, 0
        %v2750 = vsel %vm2665, %v2722, 0
        %v2751 = vsel %vm2666, %v2701, 0
        %v2752 = vsel %vm2667, %v2708, 0
        %v2753 = vsel %vm2668, %v2715, 0
        %v2754 = vsel %vm2669, %v2722, 0
        %v2755 = vadd.bf16 %v2549, %v2723
        %v2756 = vadd.bf16 %v2550, %v2724
        %v2757 = vadd.bf16 %v2551, %v2725
        %v2758 = vadd.bf16 %v2552, %v2726
        %v2759 = vadd.bf16 %v2553, %v2727
        %v2760 = vadd.bf16 %v2554, %v2728
        %v2761 = vadd.bf16 %v2555, %v2729
        %v2762 = vadd.bf16 %v2556, %v2730
        %v2763 = vadd.bf16 %v2557, %v2731
        %v2764 = vadd.bf16 %v2558, %v2732
        %v2765 = vadd.bf16 %v2559, %v2733
        %v2766 = vadd.bf16 %v2560, %v2734
        %v2767 = vadd.bf16 %v2561, %v2735
        %v2768 = vadd.bf16 %v2562, %v2736
        %v2769 = vadd.bf16 %v2563, %v2737
        %v2770 = vadd.bf16 %v2564, %v2738
        %v2771 = vadd.bf16 %v2565, %v2739
        %v2772 = vadd.bf16 %v2566, %v2740
        %v2773 = vadd.bf16 %v2567, %v2741
        %v2774 = vadd.bf16 %v2568, %v2742
        %v2775 = vadd.bf16 %v2569, %v2743
        %v2776 = vadd.bf16 %v2570, %v2744
        %v2777 = vadd.bf16 %v2571, %v2745
        %v2778 = vadd.bf16 %v2572, %v2746
        %v2779 = vadd.bf16 %v2573, %v2747
        %v2780 = vadd.bf16 %v2574, %v2748
        %v2781 = vadd.bf16 %v2575, %v2749
        %v2782 = vadd.bf16 %v2576, %v2750
        %v2783 = vadd.bf16 %v2577, %v2751
        %v2784 = vadd.bf16 %v2578, %v2752
        %v2785 = vadd.bf16 %v2579, %v2753
        %v2786 = vadd.bf16 %v2580, %v2754
        %v2787 = vxor.u32 %v2581, %v2375
        %v2788 = vand.u32 %v2787, 127
        %v2789 = vcvt.s32.f32 %v2788
        %v2791 = vlaneseq
        %v2792 = vshrl.u32 %v2791, 7
        %v2793 = vsub.s32 0, %v2792
        %v2794 = vrot.slane %v2789, %v2793
        %v2795 = vlaneseq
        %v2796 = vshrl.u32 %v2795, 7
        %v2797 = vsub.s32 1, %v2796
        %v2798 = vrot.slane %v2789, %v2797
        %v2799 = vlaneseq
        %v2800 = vshrl.u32 %v2799, 7
        %v2801 = vsub.s32 2, %v2800
        %v2802 = vrot.slane %v2789, %v2801
        %v2803 = vlaneseq
        %v2804 = vshrl.u32 %v2803, 7
        %v2805 = vsub.s32 3, %v2804
        %v2806 = vrot.slane %v2789, %v2805
        %v2811 = vpack.c.bf16 %v2794, %v2794
        %v2812 = vpack.c.bf16 %v2798, %v2798
        %v2813 = vpack.c.bf16 %v2802, %v2802
        %v2814 = vpack.c.bf16 %v2806, %v2806
        %v2816 = vpack.i.b16 %v2811, %v2811
        %v2818 = vlaneseq
        %v2819 = vshrl.u32 %v2818, 7
        %v2820 = vsub.s32 0, %v2819
        %v2821 = vrot.slane %v2816, %v2820
        %v2823 = vpack.i.b16 %v2812, %v2812
        %v2825 = vlaneseq
        %v2826 = vshrl.u32 %v2825, 7
        %v2827 = vsub.s32 0, %v2826
        %v2828 = vrot.slane %v2823, %v2827
        %v2830 = vpack.i.b16 %v2813, %v2813
        %v2832 = vlaneseq
        %v2833 = vshrl.u32 %v2832, 7
        %v2834 = vsub.s32 0, %v2833
        %v2835 = vrot.slane %v2830, %v2834
        %v2837 = vpack.i.b16 %v2814, %v2814
        %v2839 = vlaneseq
        %v2840 = vshrl.u32 %v2839, 7
        %v2841 = vsub.s32 0, %v2840
        %v2842 = vrot.slane %v2837, %v2841
        %vm2843 = vcmp.eq.bf16.partialorder %v202, %v2821
        %vm2844 = vcmp.eq.bf16.partialorder %v202, %v2828
        %vm2845 = vcmp.eq.bf16.partialorder %v202, %v2835
        %vm2846 = vcmp.eq.bf16.partialorder %v202, %v2842
        %vm2847 = vcmp.eq.bf16.partialorder %v203, %v2821
        %vm2848 = vcmp.eq.bf16.partialorder %v203, %v2828
        %vm2849 = vcmp.eq.bf16.partialorder %v203, %v2835
        %vm2850 = vcmp.eq.bf16.partialorder %v203, %v2842
        %vm2851 = vcmp.eq.bf16.partialorder %v750, %v2821
        %vm2852 = vcmp.eq.bf16.partialorder %v750, %v2828
        %vm2853 = vcmp.eq.bf16.partialorder %v750, %v2835
        %vm2854 = vcmp.eq.bf16.partialorder %v750, %v2842
        %vm2855 = vcmp.eq.bf16.partialorder %v751, %v2821
        %vm2856 = vcmp.eq.bf16.partialorder %v751, %v2828
        %vm2857 = vcmp.eq.bf16.partialorder %v751, %v2835
        %vm2858 = vcmp.eq.bf16.partialorder %v751, %v2842
        %vm2859 = vcmp.eq.bf16.partialorder %v1394, %v2821
        %vm2860 = vcmp.eq.bf16.partialorder %v1394, %v2828
        %vm2861 = vcmp.eq.bf16.partialorder %v1394, %v2835
        %vm2862 = vcmp.eq.bf16.partialorder %v1394, %v2842
        %vm2863 = vcmp.eq.bf16.partialorder %v1395, %v2821
        %vm2864 = vcmp.eq.bf16.partialorder %v1395, %v2828
        %vm2865 = vcmp.eq.bf16.partialorder %v1395, %v2835
        %vm2866 = vcmp.eq.bf16.partialorder %v1395, %v2842
        %vm2867 = vcmp.eq.bf16.partialorder %v1396, %v2821
        %vm2868 = vcmp.eq.bf16.partialorder %v1396, %v2828
        %vm2869 = vcmp.eq.bf16.partialorder %v1396, %v2835
        %vm2870 = vcmp.eq.bf16.partialorder %v1396, %v2842
        %vm2871 = vcmp.eq.bf16.partialorder %v1397, %v2821
        %vm2872 = vcmp.eq.bf16.partialorder %v1397, %v2828
        %vm2873 = vcmp.eq.bf16.partialorder %v1397, %v2835
        %vm2874 = vcmp.eq.bf16.partialorder %v1397, %v2842
        %v2876 = vlaneseq
        %v2877 = vshrl.u32 %v2876, 7
        %v2878 = vsub.s32 0, %v2877
        %v2879 = vrot.slane %v2199, %v2878
        %v2880 = vlaneseq
        %v2881 = vshrl.u32 %v2880, 7
        %v2882 = vsub.s32 1, %v2881
        %v2883 = vrot.slane %v2199, %v2882
        %v2884 = vlaneseq
        %v2885 = vshrl.u32 %v2884, 7
        %v2886 = vsub.s32 2, %v2885
        %v2887 = vrot.slane %v2199, %v2886
        %v2888 = vlaneseq
        %v2889 = vshrl.u32 %v2888, 7
        %v2890 = vsub.s32 3, %v2889
        %v2891 = vrot.slane %v2199, %v2890
        %v2896 = vpack.c.bf16 %v2879, %v2879
        %v2897 = vpack.c.bf16 %v2883, %v2883
        %v2898 = vpack.c.bf16 %v2887, %v2887
        %v2899 = vpack.c.bf16 %v2891, %v2891
        %v2901 = vpack.i.b16 %v2896, %v2896
        %v2903 = vlaneseq
        %v2904 = vshrl.u32 %v2903, 7
        %v2905 = vsub.s32 0, %v2904
        %v2906 = vrot.slane %v2901, %v2905
        %v2908 = vpack.i.b16 %v2897, %v2897
        %v2910 = vlaneseq
        %v2911 = vshrl.u32 %v2910, 7
        %v2912 = vsub.s32 0, %v2911
        %v2913 = vrot.slane %v2908, %v2912
        %v2915 = vpack.i.b16 %v2898, %v2898
        %v2917 = vlaneseq
        %v2918 = vshrl.u32 %v2917, 7
        %v2919 = vsub.s32 0, %v2918
        %v2920 = vrot.slane %v2915, %v2919
        %v2922 = vpack.i.b16 %v2899, %v2899
        %v2924 = vlaneseq
        %v2925 = vshrl.u32 %v2924, 7
        %v2926 = vsub.s32 0, %v2925
        %v2927 = vrot.slane %v2922, %v2926
        %v2928 = vsel %vm2843, %v2906, 0
        %v2929 = vsel %vm2844, %v2913, 0
        %v2930 = vsel %vm2845, %v2920, 0
        %v2931 = vsel %vm2846, %v2927, 0
        %v2932 = vsel %vm2847, %v2906, 0
        %v2933 = vsel %vm2848, %v2913, 0
        %v2934 = vsel %vm2849, %v2920, 0
        %v2935 = vsel %vm2850, %v2927, 0
        %v2936 = vsel %vm2851, %v2906, 0
        %v2937 = vsel %vm2852, %v2913, 0
        %v2938 = vsel %vm2853, %v2920, 0
        %v2939 = vsel %vm2854, %v2927, 0
        %v2940 = vsel %vm2855, %v2906, 0
        %v2941 = vsel %vm2856, %v2913, 0
        %v2942 = vsel %vm2857, %v2920, 0
        %v2943 = vsel %vm2858, %v2927, 0
        %v2944 = vsel %vm2859, %v2906, 0
        %v2945 = vsel %vm2860, %v2913, 0
        %v2946 = vsel %vm2861, %v2920, 0
        %v2947 = vsel %vm2862, %v2927, 0
        %v2948 = vsel %vm2863, %v2906, 0
        %v2949 = vsel %vm2864, %v2913, 0
        %v2950 = vsel %vm2865, %v2920, 0
        %v2951 = vsel %vm2866, %v2927, 0
        %v2952 = vsel %vm2867, %v2906, 0
        %v2953 = vsel %vm2868, %v2913, 0
        %v2954 = vsel %vm2869, %v2920, 0
        %v2955 = vsel %vm2870, %v2927, 0
        %v2956 = vsel %vm2871, %v2906, 0
        %v2957 = vsel %vm2872, %v2913, 0
        %v2958 = vsel %vm2873, %v2920, 0
        %v2959 = vsel %vm2874, %v2927, 0
        %v2960 = vadd.bf16 %v2755, %v2928
        %v2961 = vadd.bf16 %v2756, %v2929
        %v2962 = vadd.bf16 %v2757, %v2930
        %v2963 = vadd.bf16 %v2758, %v2931
        %v2964 = vadd.bf16 %v2759, %v2932
        %v2965 = vadd.bf16 %v2760, %v2933
        %v2966 = vadd.bf16 %v2761, %v2934
        %v2967 = vadd.bf16 %v2762, %v2935
        %v2968 = vadd.bf16 %v2763, %v2936
        %v2969 = vadd.bf16 %v2764, %v2937
        %v2970 = vadd.bf16 %v2765, %v2938
        %v2971 = vadd.bf16 %v2766, %v2939
        %v2972 = vadd.bf16 %v2767, %v2940
        %v2973 = vadd.bf16 %v2768, %v2941
        %v2974 = vadd.bf16 %v2769, %v2942
        %v2975 = vadd.bf16 %v2770, %v2943
        %v2976 = vadd.bf16 %v2771, %v2944
        %v2977 = vadd.bf16 %v2772, %v2945
        %v2978 = vadd.bf16 %v2773, %v2946
        %v2979 = vadd.bf16 %v2774, %v2947
        %v2980 = vadd.bf16 %v2775, %v2948
        %v2981 = vadd.bf16 %v2776, %v2949
        %v2982 = vadd.bf16 %v2777, %v2950
        %v2983 = vadd.bf16 %v2778, %v2951
        %v2984 = vadd.bf16 %v2779, %v2952
        %v2985 = vadd.bf16 %v2780, %v2953
        %v2986 = vadd.bf16 %v2781, %v2954
        %v2987 = vadd.bf16 %v2782, %v2955
        %v2988 = vadd.bf16 %v2783, %v2956
        %v2989 = vadd.bf16 %v2784, %v2957
        %v2990 = vadd.bf16 %v2785, %v2958
        %v2991 = vadd.bf16 %v2786, %v2959
        %v2992 = vld [vmem:[#allocation5] sm:$0xff]
        %v2993 = vld [vmem:[#allocation5 + $0x8] sm:$0xf]
        %v2996 = vunpack.c.l.b16 %v2992
        %v2997 = vunpack.c.h.b16 %v2992
        %v2998 = vunpack.c.l.b16 %v2993
        %v2999 = vpack.c.b16 %v2996, %v2996
        %v3000 = vpack.c.b16 %v2997, %v2997
        %v3001 = vpack.c.b16 %v2998, %v2998
        %vm3004 = vcmask 785408
        %v3006 = vsel %vm3004, %v3001, 0
        %3008 = vmatprep.subr.bf16.mxu0 %v721
        %3009 = vmatpush1.bf16.msra.mxu0 %v720
        %3010 = vmatprep.subr.bf16.mxu0 %v725
        %3011 = vmatpush1.bf16.msra.mxu0 %v724
        %3012 = vmatprep.subr.bf16.mxu0 %v1349
        %3013 = vmatpush1.bf16.msra.mxu0 %v1348
        %3014 = vmatprep.subr.bf16.mxu0 %v1353
        %3015 = vmatpush1.bf16.msra.mxu0 %v1352
        %3016 = vmatprep.subr.bf16.mxu0 %v1357
        %3017 = vmatpush1.bf16.msra.mxu0 %v1356
        %3018 = vmatprep.subr.bf16.mxu0 %v1361
        %3019 = vmatpush1.bf16.msra.mxu0 %v1360
        %3020 = vmatprep.subr.bf16.mxu0 %v2155
        %3021 = vmatpush1.bf16.msra.mxu0 %v2154
        %3022 = vmatprep.subr.bf16.mxu0 %v2159
        %3023 = vmatpush1.bf16.msra.mxu0 %v2158
        %3024 = vmatprep.subr.bf16.mxu0 %v2163
        %3025 = vmatpush1.bf16.msra.mxu0 %v2162
        %3026 = vmatprep.subr.bf16.mxu0 %v2167
        %3027 = vmatpush1.bf16.msra.mxu0 %v2166
        %3028 = vmatprep.subr.bf16.mxu0 %v2171
        %3029 = vmatpush1.bf16.msra.mxu0 %v2170
        %3030 = vmatprep.subr.bf16.mxu0 %v2175
        %3031 = vmatpush1.bf16.msra.mxu0 %v2174
        %3032 = vmatprep.subr.bf16.mxu0 %v2179
        %3033 = vmatpush1.bf16.msra.mxu0 %v2178
        %3034 = vmatprep.subr.bf16.mxu0 %v2183
        %3035 = vmatpush1.bf16.msra.mxu0 %v2182
        %3036 = vmatprep.subr.bf16.mxu0 %v2961
        %3037 = vmatpush1.bf16.msra.mxu0 %v2960
        %3038 = vmatprep.subr.bf16.mxu0 %v2965
        %3039 = vmatpush1.bf16.msra.mxu0 %v2964
        %3040 = vmatprep.mubr.bf16.mxu0 %v3000
        %3041 = vmatmul.mubr.bf16.gmra.mrb[0].mxu0 %v2999
        %v3042 = vpop.f32.mrb[0].mxu0
        %v3043 = vadd.f32 0.0, %v3042
        %v3044 = vpop.f32.mrb[0].mxu0
        %v3045 = vadd.f32 0.0, %v3044
        %v3046 = vpop.f32.mrb[0].mxu0
        %v3047 = vpop.f32.mrb[0].mxu0
        %3048 = vdwg.mxu0
        %3049 = vmatprep.subr.bf16.mxu0 %v2969
        %3050 = vmatpush1.bf16.msra.mxu0 %v2968
        %3051 = vmatprep.subr.bf16.mxu0 %v2973
        %3052 = vmatpush1.bf16.msra.mxu0 %v2972
        %3053 = vmatprep.subr.bf16.mxu0 %v2977
        %3054 = vmatpush1.bf16.msra.mxu0 %v2976
        %3055 = vmatprep.subr.bf16.mxu0 %v2981
        %3056 = vmatpush1.bf16.msra.mxu0 %v2980
        %3057 = vmatprep.subr.bf16.mxu0 %v2985
        %3058 = vmatpush1.bf16.msra.mxu0 %v2984
        %3059 = vmatprep.subr.bf16.mxu0 %v2989
        %3060 = vmatpush1.bf16.msra.mxu0 %v2988
        %3061 = vmatprep.subr.bf16.mxu0 0
        %3062 = vmatpush1.bf16.msra.mxu0 0
        %3063 = vmatprep.subr.bf16.mxu0 0
        %3064 = vmatpush1.bf16.msra.mxu0 0
        %3065 = vmatprep.subr.bf16.mxu0 0
        %3066 = vmatpush1.bf16.msra.mxu0 0
        %3067 = vmatprep.subr.bf16.mxu0 0
        %3068 = vmatpush1.bf16.msra.mxu0 0
        %3069 = vmatprep.subr.bf16.mxu0 0
        %3070 = vmatpush1.bf16.msra.mxu0 0
        %3071 = vmatprep.subr.bf16.mxu0 0
        %3072 = vmatpush1.bf16.msra.mxu0 0
        %3073 = vmatprep.subr.bf16.mxu0 0
        %3074 = vmatpush1.bf16.msra.mxu0 0
        %3075 = vmatprep.subr.bf16.mxu0 0
        %3076 = vmatpush1.bf16.msra.mxu0 0
        %3077 = vmatprep.subr.bf16.mxu0 0
        %3078 = vmatpush1.bf16.msra.mxu0 0
        %3079 = vmatprep.subr.bf16.mxu0 0
        %3080 = vmatpush1.bf16.msra.mxu0 0
        %3081 = vmatprep.mubr.bf16.mxu0 0
        %3082 = vmatmul.mubr.bf16.gmra.mrb[0].mxu0 %v3006
        %v3083 = vpop.f32.mrb[0].mxu0
        %v3084 = vadd.f32 %v3043, %v3083
        %v3085 = vpop.f32.mrb[0].mxu0
        %v3086 = vadd.f32 %v3045, %v3085
        %v3087 = vpop.f32.mrb[0].mxu0
        %v3088 = vpop.f32.mrb[0].mxu0
        %3089 = vdwg.mxu0
        %3090 = vmatprep.subr.bf16.mxu0 %v723
        %3091 = vmatpush1.bf16.msra.mxu0 %v722
        %3092 = vmatprep.subr.bf16.mxu0 %v727
        %3093 = vmatpush1.bf16.msra.mxu0 %v726
        %3094 = vmatprep.subr.bf16.mxu0 %v1351
        %3095 = vmatpush1.bf16.msra.mxu0 %v1350
        %3096 = vmatprep.subr.bf16.mxu0 %v1355
        %3097 = vmatpush1.bf16.msra.mxu0 %v1354
        %3098 = vmatprep.subr.bf16.mxu0 %v1359
        %3099 = vmatpush1.bf16.msra.mxu0 %v1358
        %3100 = vmatprep.subr.bf16.mxu0 %v1363
        %3101 = vmatpush1.bf16.msra.mxu0 %v1362
        %3102 = vmatprep.subr.bf16.mxu0 %v2157
        %3103 = vmatpush1.bf16.msra.mxu0 %v2156
        %3104 = vmatprep.subr.bf16.mxu0 %v2161
        %3105 = vmatpush1.bf16.msra.mxu0 %v2160
        %3106 = vmatprep.subr.bf16.mxu0 %v2165
        %3107 = vmatpush1.bf16.msra.mxu0 %v2164
        %3108 = vmatprep.subr.bf16.mxu0 %v2169
        %3109 = vmatpush1.bf16.msra.mxu0 %v2168
        %3110 = vmatprep.subr.bf16.mxu0 %v2173
        %3111 = vmatpush1.bf16.msra.mxu0 %v2172
        %3112 = vmatprep.subr.bf16.mxu0 %v2177
        %3113 = vmatpush1.bf16.msra.mxu0 %v2176
        %3114 = vmatprep.subr.bf16.mxu0 %v2181
        %3115 = vmatpush1.bf16.msra.mxu0 %v2180
        %3116 = vmatprep.subr.bf16.mxu0 %v2185
        %3117 = vmatpush1.bf16.msra.mxu0 %v2184
        %3118 = vmatprep.subr.bf16.mxu0 %v2963
        %3119 = vmatpush1.bf16.msra.mxu0 %v2962
        %3120 = vmatprep.subr.bf16.mxu0 %v2967
        %3121 = vmatpush1.bf16.msra.mxu0 %v2966
        %3122 = vmatprep.mubr.bf16.mxu0 %v3000
        %3123 = vmatmul.mubr.bf16.gmra.mrb[0].mxu0 %v2999
        %v3124 = vpop.f32.mrb[0].mxu0
        %v3125 = vadd.f32 0.0, %v3124
        %v3126 = vpop.f32.mrb[0].mxu0
        %v3127 = vadd.f32 0.0, %v3126
        %v3128 = vpop.f32.mrb[0].mxu0
        %v3129 = vpop.f32.mrb[0].mxu0
        %3130 = vdwg.mxu0
        %3131 = vmatprep.subr.bf16.mxu0 %v2971
        %3132 = vmatpush1.bf16.msra.mxu0 %v2970
        %3133 = vmatprep.subr.bf16.mxu0 %v2975
        %3134 = vmatpush1.bf16.msra.mxu0 %v2974
        %3135 = vmatprep.subr.bf16.mxu0 %v2979
        %3136 = vmatpush1.bf16.msra.mxu0 %v2978
        %3137 = vmatprep.subr.bf16.mxu0 %v2983
        %3138 = vmatpush1.bf16.msra.mxu0 %v2982
        %3139 = vmatprep.subr.bf16.mxu0 %v2987
        %3140 = vmatpush1.bf16.msra.mxu0 %v2986
        %3141 = vmatprep.subr.bf16.mxu0 %v2991
        %3142 = vmatpush1.bf16.msra.mxu0 %v2990
        %3143 = vmatprep.subr.bf16.mxu0 0
        %3144 = vmatpush1.bf16.msra.mxu0 0
        %3145 = vmatprep.subr.bf16.mxu0 0
        %3146 = vmatpush1.bf16.msra.mxu0 0
        %3147 = vmatprep.subr.bf16.mxu0 0
        %3148 = vmatpush1.bf16.msra.mxu0 0
        %3149 = vmatprep.subr.bf16.mxu0 0
        %3150 = vmatpush1.bf16.msra.mxu0 0
        %3151 = vmatprep.subr.bf16.mxu0 0
        %3152 = vmatpush1.bf16.msra.mxu0 0
        %3153 = vmatprep.subr.bf16.mxu0 0
        %3154 = vmatpush1.bf16.msra.mxu0 0
        %3155 = vmatprep.subr.bf16.mxu0 0
        %3156 = vmatpush1.bf16.msra.mxu0 0
        %3157 = vmatprep.subr.bf16.mxu0 0
        %3158 = vmatpush1.bf16.msra.mxu0 0
        %3159 = vmatprep.subr.bf16.mxu0 0
        %3160 = vmatpush1.bf16.msra.mxu0 0
        %3161 = vmatprep.subr.bf16.mxu0 0
        %3162 = vmatpush1.bf16.msra.mxu0 0
        %3163 = vmatprep.mubr.bf16.mxu0 0
        %3164 = vmatmul.mubr.bf16.gmra.mrb[0].mxu0 %v3006
        %v3165 = vpop.f32.mrb[0].mxu0
        %v3166 = vadd.f32 %v3125, %v3165
        %v3167 = vpop.f32.mrb[0].mxu0
        %v3168 = vadd.f32 %v3127, %v3167
        %v3169 = vpop.f32.mrb[0].mxu0
        %v3170 = vpop.f32.mrb[0].mxu0
        %3171 = vdwg.mxu0
        %3172 = vst [vmem:[%s172] sm:$0xff] %v3084
        %3173 = vst [vmem:[%s172 + $0x8] sm:$0xff] %v3086
        %3174 = vst [vmem:[%s172 + $0x10] sm:$0xff] %v3166
        %3175 = vst [vmem:[%s172 + $0x18] sm:$0xff] %v3168
        %s3176 = sand.u32 %s75, 1
        %s3177 = scalar_lea.sflag [#allocation4], %s3176
        %s3178 = sand.u32 %s75, 1
        %s3179 = smul.addr %s3178, 32
        %s3180 = scalar_lea.vmem [#allocation7], %s3179
        // Predicated region
        $region37: #{tpu_custom_call.1} parent=27 // pred_check
          %p3181 = pneg %p85
        $region38: #{tpu_custom_call.1} parent=27 // pred_check_branch
          %3183 = sbr.rel (%p3181) target = $region40
        $region39: #{tpu_custom_call.1} parent=27 // pred_region
          %s3184 = smul.u32 4, %s20
          %s3186 = ssub.s32 512, 512
          %3187 = vsyncadd %s3177, %s3186
          %s3188 = smul.addr %s3184, 128
          %s3189 = scalar_lea.hbm %s2, %s3188
          %s3191 = sshll.u32 %s3180, 4
          %s3192 = int_to_ptr.vmem [resolvable:$true] %s3191
          %3194 = dma.vmem_to_hbm [thread:$0]  %s3192, 512, %s3189, %s3177
        $region40: #{tpu_custom_call.1} parent=27 // pred_fallthru
          _
      $region28: #{tpu_custom_call.1} parent=5 // pred_fallthru
        _
      %p3195 = scmp.le.s32.totalorder 2, %s15
      // Predicated region
      $region41: #{tpu_custom_call.1} parent=5 // pred_check
        %p3196 = pneg %p3195
      $region42: #{tpu_custom_call.1} parent=5 // pred_check_branch
        %3198 = sbr.rel (%p3196) target = $region44
      $region43: #{tpu_custom_call.1} parent=5 // pred_region
        %s3199 = ssub.s32 %s15, 2
        // Predicated region
        $region45: #{tpu_custom_call.1} parent=43 // pred_check
          %p3200 = pneg %p91
        $region46: #{tpu_custom_call.1} parent=43 // pred_check_branch
          %3202 = sbr.rel (%p3200) target = $region48
        $region47: #{tpu_custom_call.1} parent=43 // pred_region
          %s3203 = sand.u32 %s76, 1
          %s3204 = scalar_lea.sflag [#allocation4], %s3203
          %s3205 = sand.u32 %s76, 1
          %s3206 = smul.addr %s3205, 32
          %s3207 = scalar_lea.vmem [#allocation7], %s3206
          %3208 = dma.done %s3204, 512
        $region48: #{tpu_custom_call.1} parent=43 // pred_fallthru
          _
      $region44: #{tpu_custom_call.1} parent=5 // pred_fallthru
        _
    $region6: #{tpu_custom_call.1} parent=1 // loop_footer
      %s19 = sadd.s32 1, %s15
    $region7: #{tpu_custom_call.1} parent=1 // loop_footer_branch
      %14 = sbr.rel target = $region3
    $region8: #{tpu_custom_call.1} parent=1 // loop_exit
      _
    %3209 = vsyncpa [#allocation3], 1
    %s3210 = scalar_lea.sflag [#allocation3], 1
    %3211 = vsyncpa %s3210, 1
    %3212 = vsyncpa [#allocation6], 1
    %3213 = vsyncpa [#allocation4], 1
    %s3214 = scalar_lea.sflag [#allocation4], 1
    %3215 = vsyncpa %s3214, 1

// kernel: tpu_custom_call.1
$region0: #{tpu_custom_call.1}
  #allocation0 [shape = 'u32[]', space=smem, size = 0x4, offset = 0x4, fixed_abs, tag = 'smem constant byte address 0x4 - core index']
  #allocation1 [shape = 'u32[144,128]{1,0:T(1,128)}', space=vmem, size = 0x12000, scoped, tag = 'internal scratch']
  %s0 = inlined_call_operand.hbm [shape: f32[2,1024], index: 0, kind: input, shape index: {}]
  %s1 = inlined_call_operand.hbm [shape: bf16[8,352], index: 1, kind: input, shape index: {}]
  %s2 = inlined_call_operand.hbm [shape: f32[8,1024], index: 2, kind: output, shape index: {}]
  %s3 = sld [smem:[#allocation0]]
  $region49: #{tpu_custom_call.1} parent=0
    _
  %s5 = ssub.s32 1, %s3
  %s6 = scalar_select 0, %s5, %s3
  $region1: #{tpu_custom_call.1} parent=0
    #allocation2 [shape = 'u8[8192]{0}', space=vmem, size = 0x2000, scoped, tag = 'input window, operand 0']
    #allocation3 [shape = 's32[2]{0}', space=sflag, size = 0x8, scoped, tag = 'scoped memory for tpu_custom_call.1']
    #allocation4 [shape = 's32[2]{0}', space=sflag, size = 0x8, scoped, tag = 'scoped memory for tpu_custom_call.1']
    #allocation5 [shape = 'u8[6144]{0}', space=vmem, size = 0x1800, scoped, tag = 'input window, operand 1, single buffered']
    #allocation6 [shape = 's32[1]{0}', space=sflag, size = 0x4, scoped, tag = 'scoped memory for tpu_custom_call.1']
    #allocation7 [shape = 'u8[32768]{0}', space=vmem, size = 0x8000, scoped, tag = 'output window, operand 0']
    %7 = vsyncpa [#allocation3], 0
    %s8 = scalar_lea.sflag [#allocation3], 1
    %9 = vsyncpa %s8, 0
    %10 = vsyncpa [#allocation6], 0
    %11 = vsyncpa [#allocation4], 0
    %s12 = scalar_lea.sflag [#allocation4], 1
    %13 = vsyncpa %s12, 0
    loop: start=0, step=1, limit=4
    $region2: #{tpu_custom_call.1} parent=1 // loop_pre_header
      _
    $region3: #{tpu_custom_call.1} parent=1 // loop_header
      %s15 = sphi 0, %s19
      %p16 = scmp.ge.s32.totalorder %s15, 4
      %s25 = sphi 0, %s27
      %s28 = sphi 0, %s25
      %s29 = sphi 0, %s28
      %s45 = sphi 0, %s29
      %s49 = sphi 0, %s49
      %s51 = sphi 0, %s49
      %s52 = sphi 0, %s51
      %s66 = sphi 0, %s52
      %s72 = sphi 0, %s74
      %s75 = sphi 0, %s72
      %s76 = sphi 0, %s75
      %s92 = sphi 0, %s76
    $region4: #{tpu_custom_call.1} parent=1 // loop_header_branch
      %18 = sbr.rel (%p16) target = $region8
    $region5: #{tpu_custom_call.1} parent=1 // loop_body
      %s20 = ssub.s32 %s15, 1
      %s21 = ssub.s32 %s15, 2
      %s22 = sadd.s32 %s15, 1
      %s23 = ssub.s32 %s15, %s22
      %p24 = scmp.eq.s32.totalorder %s23, 0
      %s26 = sadd.s32 %s25, 1
      %s27 = scalar_select %p24, %s25, %s26
      %p30 = pneg %p24
      %p31 = scmp.eq.s32.totalorder %s15, 1
      %p32 = por %p30, %p31
      %p33 = scmp.ne.s32.totalorder %s25, %s28
      %p34 = scmp.eq.s32.totalorder %s15, 0
      %p35 = por %p33, %p34
      %p36 = scmp.ne.s32.totalorder %s25, %s28
      %p37 = scmp.eq.s32.totalorder %s20, 1
      %p38 = por %p36, %p37
      %p39 = scmp.ne.s32.totalorder %s28, %s29
      %p40 = scmp.eq.s32.totalorder %s20, 0
      %p41 = por %p39, %p40
      %p42 = scmp.ne.s32.totalorder %s28, %s29
      %p43 = scmp.eq.s32.totalorder %s21, 1
      %p44 = por %p42, %p43
      %p46 = scmp.ne.s32.totalorder %s29, %s45
      %p47 = scmp.eq.s32.totalorder %s21, 0
      %p48 = por %p46, %p47
      %s50 = sadd.s32 %s49, 1
      %p53 = scmp.eq.s32.totalorder %s15, 1
      %p54 = scmp.ne.s32.totalorder %s49, %s51
      %p55 = scmp.eq.s32.totalorder %s15, 0
      %p56 = por %p54, %p55
      %p57 = scmp.ne.s32.totalorder %s49, %s51
      %p58 = scmp.eq.s32.totalorder %s20, 1
      %p59 = por %p57, %p58
      %p60 = scmp.ne.s32.totalorder %s51, %s52
      %p61 = scmp.eq.s32.totalorder %s20, 0
      %p62 = por %p60, %p61
      %p63 = scmp.ne.s32.totalorder %s51, %s52
      %p64 = scmp.eq.s32.totalorder %s21, 1
      %p65 = por %p63, %p64
      %p67 = scmp.ne.s32.totalorder %s52, %s66
      %p68 = scmp.eq.s32.totalorder %s21, 0
      %p69 = por %p67, %p68
      %s70 = ssub.s32 %s15, %s22
      %p71 = scmp.eq.s32.totalorder %s70, 0
      %s73 = sadd.s32 %s72, 1
      %s74 = scalar_select %p71, %s72, %s73
      %p77 = pneg %p71
      %p78 = scmp.eq.s32.totalorder %s15, 1
      %p79 = por %p77, %p78
      %p80 = scmp.ne.s32.totalorder %s72, %s75
      %p81 = scmp.eq.s32.totalorder %s15, 0
      %p82 = por %p80, %p81
      %p83 = scmp.ne.s32.totalorder %s72, %s75
      %p84 = scmp.eq.s32.totalorder %s20, 1
      %p85 = por %p83, %p84
      %p86 = scmp.ne.s32.totalorder %s75, %s76
      %p87 = scmp.eq.s32.totalorder %s20, 0
      %p88 = por %p86, %p87
      %p89 = scmp.ne.s32.totalorder %s75, %s76
      %p90 = scmp.eq.s32.totalorder %s21, 1
      %p91 = por %p89, %p90
      %p93 = scmp.ne.s32.totalorder %s76, %s92
      %p94 = scmp.eq.s32.totalorder %s21, 0
      %p95 = por %p93, %p94
      %p96 = scmp.le.s32.totalorder 1, %s15
      %p97 = scmp.lt.s32.totalorder %s15, 3
      %p98 = pnand %p96, %p97
      %p99 = pneg %p98
      // Predicated region
      $region9: #{tpu_custom_call.1} parent=5 // pred_check
        _
      $region10: #{tpu_custom_call.1} parent=5 // pred_check_branch
        %101 = sbr.rel (%p98) target = $region12
      $region11: #{tpu_custom_call.1} parent=5 // pred_region
        %s102 = ssub.s32 %s15, 1
        // Predicated region
        $region13: #{tpu_custom_call.1} parent=11 // pred_check
          %p103 = pneg %p62
        $region14: #{tpu_custom_call.1} parent=11 // pred_check_branch
          %105 = sbr.rel (%p103) target = $region16
        $region15: #{tpu_custom_call.1} parent=11 // pred_region
          %s107 = ssub.s32 192, 192
          %108 = vsyncadd [#allocation6], %s107
          %s110 = sshll.u32 [#allocation5], 4
          %s111 = int_to_ptr.vmem [resolvable:$true] %s110
          %113 = dma.hbm_to_vmem [thread:$0]  %s1, 192, %s111, [#allocation6]
        $region16: #{tpu_custom_call.1} parent=11 // pred_fallthru
          _
      $region12: #{tpu_custom_call.1} parent=5 // pred_fallthru
        _
      %p114 = scmp.lt.s32.totalorder %s15, 2
      // Predicated region
      $region17: #{tpu_custom_call.1} parent=5 // pred_check
        %p115 = pneg %p114
      $region18: #{tpu_custom_call.1} parent=5 // pred_check_branch
        %117 = sbr.rel (%p115) target = $region20
      $region19: #{tpu_custom_call.1} parent=5 // pred_region
        // Predicated region
        $region21: #{tpu_custom_call.1} parent=19 // pred_check
          %p118 = pneg %p35
        $region22: #{tpu_custom_call.1} parent=19 // pred_check_branch
          %120 = sbr.rel (%p118) target = $region24
        $region23: #{tpu_custom_call.1} parent=19 // pred_region
          %s121 = sand.u32 %s25, 1
          %s122 = scalar_lea.sflag [#allocation3], %s121
          %s123 = sand.u32 %s25, 1
          %s124 = smul.addr %s123, 8
          %s125 = scalar_lea.vmem [#allocation2], %s124
          %s126 = smul.u32 4, %s15
          %s128 = ssub.s32 128, 128
          %129 = vsyncadd %s122, %s128
          %s130 = smul.addr %s126, 32
          %s131 = scalar_lea.hbm %s0, %s130
          %s133 = sshll.u32 %s125, 4
          %s134 = int_to_ptr.vmem [resolvable:$true] %s133
          %136 = dma.hbm_to_vmem [thread:$0]  %s131, 128, %s134, %s122
        $region24: #{tpu_custom_call.1} parent=19 // pred_fallthru
          _
      $region20: #{tpu_custom_call.1} parent=5 // pred_fallthru
        _
      %p137 = scmp.le.s32.totalorder 1, %s15
      %p138 = scmp.lt.s32.totalorder %s15, 3
      %p139 = pnand %p137, %p138
      %p140 = pneg %p139
      // Predicated region
      $region25: #{tpu_custom_call.1} parent=5 // pred_check
        _
      $region26: #{tpu_custom_call.1} parent=5 // pred_check_branch
        %142 = sbr.rel (%p139) target = $region28
      $region27: #{tpu_custom_call.1} parent=5 // pred_region
        %s143 = ssub.s32 %s15, 1
        %s144 = sand.u32 %s28, 1
        %s145 = scalar_lea.sflag [#allocation3], %s144
        %s146 = sand.u32 %s28, 1
        %s147 = smul.addr %s146, 8
        %s148 = scalar_lea.vmem [#allocation2], %s147
        // Predicated region
        $region29: #{tpu_custom_call.1} parent=27 // pred_check
          %p149 = pneg %p41
        $region30: #{tpu_custom_call.1} parent=27 // pred_check_branch
          %151 = sbr.rel (%p149) target = $region32
        $region31: #{tpu_custom_call.1} parent=27 // pred_region
          %152 = dma.done %s145, 128
        $region32: #{tpu_custom_call.1} parent=27 // pred_fallthru
          _
        // Predicated region
        $region33: #{tpu_custom_call.1} parent=27 // pred_check
          %p153 = pneg %p62
        $region34: #{tpu_custom_call.1} parent=27 // pred_check_branch
          %155 = sbr.rel (%p153) target = $region36
        $region35: #{tpu_custom_call.1} parent=27 // pred_region
          %156 = dma.done [#allocation6], 192
        $region36: #{tpu_custom_call.1} parent=27 // pred_fallthru
          _
        %s157 = sand.u32 %s28, 1
        %s158 = scalar_lea.sflag [#allocation3], %s157
        %s159 = sand.u32 %s28, 1
        %s160 = smul.addr %s159, 8
        %s161 = scalar_lea.vmem [#allocation2], %s160
        %p162 = pneg %p41
        %p163 = pneg %p38
        %p164 = pneg %p62
        %p165 = pneg %p59
        %p166 = pneg %p88
        %p167 = pneg %p85
        %s168 = sand.u32 %s75, 1
        %s169 = scalar_lea.sflag [#allocation4], %s168
        %s170 = sand.u32 %s75, 1
        %s171 = smul.addr %s170, 32
        %s172 = scalar_lea.vmem [#allocation7], %s171
        %s173 = smul.u32 4, %s20
        %s174 = smul.u32 4, %s20
        %v176 = vld [vmem:[%s148] ss:$2 sm:$0xf]
        %s177 = scalar_lea.vmem %s148, 1 [#allocation2]
        %v178 = vld [vmem:[%s177] ss:$2 sm:$0xf]
        %v179 = vmul.f32 %v176, 0.25
        %v180 = vmul.f32 %v178, 0.25
        %v181 = vfloor.f32 %v179
        %v182 = vfloor.f32 %v180
        %v183 = vsub.f32 %v179, %v181
        %v184 = vsub.f32 %v180, %v182
        %v185 = vcvt.f32.s32.to.zero.pseudo %v181
        %v186 = vcvt.f32.s32.to.zero.pseudo %v182
        %v187 = vsub.f32 1.0, %v183
        %v188 = vsub.f32 1.0, %v184
        %v189 = vmul.f32 %v187, %v188
        %v190 = vmul.f32 %v187, %v184
        %v191 = vmul.f32 %v183, %v188
        %v192 = vmul.f32 %v183, %v184
        %v193 = vlaneseq
        %v194 = vshrl.u32 %v193, 7
        %v195 = vadd.s32 %v194, 8
        %v196 = vadd.s32 %v194, 16
        %v197 = vadd.s32 %v194, 24
        %v198 = vcvt.s32.f32 %v194
        %v199 = vcvt.s32.f32 %v195
        %v200 = vcvt.s32.f32 %v196
        %v201 = vcvt.s32.f32 %v197
        %v202 = vpack.c.bf16 %v199, %v198
        %v203 = vpack.c.bf16 %v201, %v200
        %v204 = vmul.u32 %v185, 4
        %v205 = vadd.s32 %v204, %v186
        %v206 = vcvt.s32.f32 %v205
        %v208 = vlaneseq
        %v209 = vshrl.u32 %v208, 7
        %v210 = vsub.s32 0, %v209
        %v211 = vrot.slane %v206, %v210
        %v212 = vlaneseq
        %v213 = vshrl.u32 %v212, 7
        %v214 = vsub.s32 1, %v213
        %v215 = vrot.slane %v206, %v214
        %v216 = vlaneseq
        %v217 = vshrl.u32 %v216, 7
        %v218 = vsub.s32 2, %v217
        %v219 = vrot.slane %v206, %v218
        %v220 = vlaneseq
        %v221 = vshrl.u32 %v220, 7
        %v222 = vsub.s32 3, %v221
        %v223 = vrot.slane %v206, %v222
        %v228 = vpack.c.bf16 %v211, %v211
        %v229 = vpack.c.bf16 %v215, %v215
        %v230 = vpack.c.bf16 %v219, %v219
        %v231 = vpack.c.bf16 %v223, %v223
        %v233 = vpack.i.b16 %v228, %v228
        %v235 = vlaneseq
        %v236 = vshrl.u32 %v235, 7
        %v237 = vsub.s32 0, %v236
        %v238 = vrot.slane %v233, %v237
        %v240 = vpack.i.b16 %v229, %v229
        %v242 = vlaneseq
        %v243 = vshrl.u32 %v242, 7
        %v244 = vsub.s32 0, %v243
        %v245 = vrot.slane %v240, %v244
        %v247 = vpack.i.b16 %v230, %v230
        %v249 = vlaneseq
        %v250 = vshrl.u32 %v249, 7
        %v251 = vsub.s32 0, %v250
        %v252 = vrot.slane %v247, %v251
        %v254 = vpack.i.b16 %v231, %v231
        %v256 = vlaneseq
        %v257 = vshrl.u32 %v256, 7
        %v258 = vsub.s32 0, %v257
        %v259 = vrot.slane %v254, %v258
        %vm260 = vcmp.eq.bf16.partialorder %v202, %v238
        %vm261 = vcmp.eq.bf16.partialorder %v202, %v245
        %vm262 = vcmp.eq.bf16.partialorder %v202, %v252
        %vm263 = vcmp.eq.bf16.partialorder %v202, %v259
        %vm264 = vcmp.eq.bf16.partialorder %v203, %v238
        %vm265 = vcmp.eq.bf16.partialorder %v203, %v245
        %vm266 = vcmp.eq.bf16.partialorder %v203, %v252
        %vm267 = vcmp.eq.bf16.partialorder %v203, %v259
        %v269 = vlaneseq
        %v270 = vshrl.u32 %v269, 7
        %v271 = vsub.s32 0, %v270
        %v272 = vrot.slane %v189, %v271
        %v273 = vlaneseq
        %v274 = vshrl.u32 %v273, 7
        %v275 = vsub.s32 1, %v274
        %v276 = vrot.slane %v189, %v275
        %v277 = vlaneseq
        %v278 = vshrl.u32 %v277, 7
        %v279 = vsub.s32 2, %v278
        %v280 = vrot.slane %v189, %v279
        %v281 = vlaneseq
        %v282 = vshrl.u32 %v281, 7
        %v283 = vsub.s32 3, %v282
        %v284 = vrot.slane %v189, %v283
        %v289 = vpack.c.bf16 %v272, %v272
        %v290 = vpack.c.bf16 %v276, %v276
        %v291 = vpack.c.bf16 %v280, %v280
        %v292 = vpack.c.bf16 %v284, %v284
        %v294 = vpack.i.b16 %v289, %v289
        %v296 = vlaneseq
        %v297 = vshrl.u32 %v296, 7
        %v298 = vsub.s32 0, %v297
        %v299 = vrot.slane %v294, %v298
        %v301 = vpack.i.b16 %v290, %v290
        %v303 = vlaneseq
        %v304 = vshrl.u32 %v303, 7
        %v305 = vsub.s32 0, %v304
        %v306 = vrot.slane %v301, %v305
        %v308 = vpack.i.b16 %v291, %v291
        %v310 = vlaneseq
        %v311 = vshrl.u32 %v310, 7
        %v312 = vsub.s32 0, %v311
        %v313 = vrot.slane %v308, %v312
        %v315 = vpack.i.b16 %v292, %v292
        %v317 = vlaneseq
        %v318 = vshrl.u32 %v317, 7
        %v319 = vsub.s32 0, %v318
        %v320 = vrot.slane %v315, %v319
        %v321 = vsel %vm260, %v299, 0
        %v322 = vsel %vm261, %v306, 0
        %v323 = vsel %vm262, %v313, 0
        %v324 = vsel %vm263, %v320, 0
        %v325 = vsel %vm264, %v299, 0
        %v326 = vsel %vm265, %v306, 0
        %v327 = vsel %vm266, %v313, 0
        %v328 = vsel %vm267, %v320, 0
        %v329 = vadd.s32 %v186, 1
        %v330 = vadd.s32 %v204, %v329
        %v331 = vcvt.s32.f32 %v330
        %v333 = vlaneseq
        %v334 = vshrl.u32 %v333, 7
        %v335 = vsub.s32 0, %v334
        %v336 = vrot.slane %v331, %v335
        %v337 = vlaneseq
        %v338 = vshrl.u32 %v337, 7
        %v339 = vsub.s32 1, %v338
        %v340 = vrot.slane %v331, %v339
        %v341 = vlaneseq
        %v342 = vshrl.u32 %v341, 7
        %v343 = vsub.s32 2, %v342
        %v344 = vrot.slane %v331, %v343
        %v345 = vlaneseq
        %v346 = vshrl.u32 %v345, 7
        %v347 = vsub.s32 3, %v346
        %v348 = vrot.slane %v331, %v347
        %v353 = vpack.c.bf16 %v336, %v336
        %v354 = vpack.c.bf16 %v340, %v340
        %v355 = vpack.c.bf16 %v344, %v344
        %v356 = vpack.c.bf16 %v348, %v348
        %v358 = vpack.i.b16 %v353, %v353
        %v360 = vlaneseq
        %v361 = vshrl.u32 %v360, 7
        %v362 = vsub.s32 0, %v361
        %v363 = vrot.slane %v358, %v362
        %v365 = vpack.i.b16 %v354, %v354
        %v367 = vlaneseq
        %v368 = vshrl.u32 %v367, 7
        %v369 = vsub.s32 0, %v368
        %v370 = vrot.slane %v365, %v369
        %v372 = vpack.i.b16 %v355, %v355
        %v374 = vlaneseq
        %v375 = vshrl.u32 %v374, 7
        %v376 = vsub.s32 0, %v375
        %v377 = vrot.slane %v372, %v376
        %v379 = vpack.i.b16 %v356, %v356
        %v381 = vlaneseq
        %v382 = vshrl.u32 %v381, 7
        %v383 = vsub.s32 0, %v382
        %v384 = vrot.slane %v379, %v383
        %vm385 = vcmp.eq.bf16.partialorder %v202, %v363
        %vm386 = vcmp.eq.bf16.partialorder %v202, %v370
        %vm387 = vcmp.eq.bf16.partialorder %v202, %v377
        %vm388 = vcmp.eq.bf16.partialorder %v202, %v384
        %vm389 = vcmp.eq.bf16.partialorder %v203, %v363
        %vm390 = vcmp.eq.bf16.partialorder %v203, %v370
        %vm391 = vcmp.eq.bf16.partialorder %v203, %v377
        %vm392 = vcmp.eq.bf16.partialorder %v203, %v384
        %v394 = vlaneseq
        %v395 = vshrl.u32 %v394, 7
        %v396 = vsub.s32 0, %v395
        %v397 = vrot.slane %v190, %v396
        %v398 = vlaneseq
        %v399 = vshrl.u32 %v398, 7
        %v400 = vsub.s32 1, %v399
        %v401 = vrot.slane %v190, %v400
        %v402 = vlaneseq
        %v403 = vshrl.u32 %v402, 7
        %v404 = vsub.s32 2, %v403
        %v405 = vrot.slane %v190, %v404
        %v406 = vlaneseq
        %v407 = vshrl.u32 %v406, 7
        %v408 = vsub.s32 3, %v407
        %v409 = vrot.slane %v190, %v408
        %v414 = vpack.c.bf16 %v397, %v397
        %v415 = vpack.c.bf16 %v401, %v401
        %v416 = vpack.c.bf16 %v405, %v405
        %v417 = vpack.c.bf16 %v409, %v409
        %v419 = vpack.i.b16 %v414, %v414
        %v421 = vlaneseq
        %v422 = vshrl.u32 %v421, 7
        %v423 = vsub.s32 0, %v422
        %v424 = vrot.slane %v419, %v423
        %v426 = vpack.i.b16 %v415, %v415
        %v428 = vlaneseq
        %v429 = vshrl.u32 %v428, 7
        %v430 = vsub.s32 0, %v429
        %v431 = vrot.slane %v426, %v430
        %v433 = vpack.i.b16 %v416, %v416
        %v435 = vlaneseq
        %v436 = vshrl.u32 %v435, 7
        %v437 = vsub.s32 0, %v436
        %v438 = vrot.slane %v433, %v437
        %v440 = vpack.i.b16 %v417, %v417
        %v442 = vlaneseq
        %v443 = vshrl.u32 %v442, 7
        %v444 = vsub.s32 0, %v443
        %v445 = vrot.slane %v440, %v444
        %v446 = vsel %vm385, %v424, 0
        %v447 = vsel %vm386, %v431, 0
        %v448 = vsel %vm387, %v438, 0
        %v449 = vsel %vm388, %v445, 0
        %v450 = vsel %vm389, %v424, 0
        %v451 = vsel %vm390, %v431, 0
        %v452 = vsel %vm391, %v438, 0
        %v453 = vsel %vm392, %v445, 0
        %v454 = vadd.bf16 %v321, %v446
        %v455 = vadd.bf16 %v322, %v447
        %v456 = vadd.bf16 %v323, %v448
        %v457 = vadd.bf16 %v324, %v449
        %v458 = vadd.bf16 %v325, %v450
        %v459 = vadd.bf16 %v326, %v451
        %v460 = vadd.bf16 %v327, %v452
        %v461 = vadd.bf16 %v328, %v453
        %v462 = vadd.s32 %v185, 1
        %v463 = vmul.u32 %v462, 4
        %v464 = vadd.s32 %v463, %v186
        %v465 = vcvt.s32.f32 %v464
        %v467 = vlaneseq
        %v468 = vshrl.u32 %v467, 7
        %v469 = vsub.s32 0, %v468
        %v470 = vrot.slane %v465, %v469
        %v471 = vlaneseq
        %v472 = vshrl.u32 %v471, 7
        %v473 = vsub.s32 1, %v472
        %v474 = vrot.slane %v465, %v473
        %v475 = vlaneseq
        %v476 = vshrl.u32 %v475, 7
        %v477 = vsub.s32 2, %v476
        %v478 = vrot.slane %v465, %v477
        %v479 = vlaneseq
        %v480 = vshrl.u32 %v479, 7
        %v481 = vsub.s32 3, %v480
        %v482 = vrot.slane %v465, %v481
        %v487 = vpack.c.bf16 %v470, %v470
        %v488 = vpack.c.bf16 %v474, %v474
        %v489 = vpack.c.bf16 %v478, %v478
        %v490 = vpack.c.bf16 %v482, %v482
        %v492 = vpack.i.b16 %v487, %v487
        %v494 = vlaneseq
        %v495 = vshrl.u32 %v494, 7
        %v496 = vsub.s32 0, %v495
        %v497 = vrot.slane %v492, %v496
        %v499 = vpack.i.b16 %v488, %v488
        %v501 = vlaneseq
        %v502 = vshrl.u32 %v501, 7
        %v503 = vsub.s32 0, %v502
        %v504 = vrot.slane %v499, %v503
        %v506 = vpack.i.b16 %v489, %v489
        %v508 = vlaneseq
        %v509 = vshrl.u32 %v508, 7
        %v510 = vsub.s32 0, %v509
        %v511 = vrot.slane %v506, %v510
        %v513 = vpack.i.b16 %v490, %v490
        %v515 = vlaneseq
        %v516 = vshrl.u32 %v515, 7
        %v517 = vsub.s32 0, %v516
        %v518 = vrot.slane %v513, %v517
        %vm519 = vcmp.eq.bf16.partialorder %v202, %v497
        %vm520 = vcmp.eq.bf16.partialorder %v202, %v504
        %vm521 = vcmp.eq.bf16.partialorder %v202, %v511
        %vm522 = vcmp.eq.bf16.partialorder %v202, %v518
        %vm523 = vcmp.eq.bf16.partialorder %v203, %v497
        %vm524 = vcmp.eq.bf16.partialorder %v203, %v504
        %vm525 = vcmp.eq.bf16.partialorder %v203, %v511
        %vm526 = vcmp.eq.bf16.partialorder %v203, %v518
        %v528 = vlaneseq
        %v529 = vshrl.u32 %v528, 7
        %v530 = vsub.s32 0, %v529
        %v531 = vrot.slane %v191, %v530
        %v532 = vlaneseq
        %v533 = vshrl.u32 %v532, 7
        %v534 = vsub.s32 1, %v533
        %v535 = vrot.slane %v191, %v534
        %v536 = vlaneseq
        %v537 = vshrl.u32 %v536, 7
        %v538 = vsub.s32 2, %v537
        %v539 = vrot.slane %v191, %v538
        %v540 = vlaneseq
        %v541 = vshrl.u32 %v540, 7
        %v542 = vsub.s32 3, %v541
        %v543 = vrot.slane %v191, %v542
        %v548 = vpack.c.bf16 %v531, %v531
        %v549 = vpack.c.bf16 %v535, %v535
        %v550 = vpack.c.bf16 %v539, %v539
        %v551 = vpack.c.bf16 %v543, %v543
        %v553 = vpack.i.b16 %v548, %v548
        %v555 = vlaneseq
        %v556 = vshrl.u32 %v555, 7
        %v557 = vsub.s32 0, %v556
        %v558 = vrot.slane %v553, %v557
        %v560 = vpack.i.b16 %v549, %v549
        %v562 = vlaneseq
        %v563 = vshrl.u32 %v562, 7
        %v564 = vsub.s32 0, %v563
        %v565 = vrot.slane %v560, %v564
        %v567 = vpack.i.b16 %v550, %v550
        %v569 = vlaneseq
        %v570 = vshrl.u32 %v569, 7
        %v571 = vsub.s32 0, %v570
        %v572 = vrot.slane %v567, %v571
        %v574 = vpack.i.b16 %v551, %v551
        %v576 = vlaneseq
        %v577 = vshrl.u32 %v576, 7
        %v578 = vsub.s32 0, %v577
        %v579 = vrot.slane %v574, %v578
        %v580 = vsel %vm519, %v558, 0
        %v581 = vsel %vm520, %v565, 0
        %v582 = vsel %vm521, %v572, 0
        %v583 = vsel %vm522, %v579, 0
        %v584 = vsel %vm523, %v558, 0
        %v585 = vsel %vm524, %v565, 0
        %v586 = vsel %vm525, %v572, 0
        %v587 = vsel %vm526, %v579, 0
        %v588 = vadd.bf16 %v454, %v580
        %v589 = vadd.bf16 %v455, %v581
        %v590 = vadd.bf16 %v456, %v582
        %v591 = vadd.bf16 %v457, %v583
        %v592 = vadd.bf16 %v458, %v584
        %v593 = vadd.bf16 %v459, %v585
        %v594 = vadd.bf16 %v460, %v586
        %v595 = vadd.bf16 %v461, %v587
        %v596 = vadd.s32 %v463, %v329
        %v597 = vcvt.s32.f32 %v596
        %v599 = vlaneseq
        %v600 = vshrl.u32 %v599, 7
        %v601 = vsub.s32 0, %v600
        %v602 = vrot.slane %v597, %v601
        %v603 = vlaneseq
        %v604 = vshrl.u32 %v603, 7
        %v605 = vsub.s32 1, %v604
        %v606 = vrot.slane %v597, %v605
        %v607 = vlaneseq
        %v608 = vshrl.u32 %v607, 7
        %v609 = vsub.s32 2, %v608
        %v610 = vrot.slane %v597, %v609
        %v611 = vlaneseq
        %v612 = vshrl.u32 %v611, 7
        %v613 = vsub.s32 3, %v612
        %v614 = vrot.slane %v597, %v613
        %v619 = vpack.c.bf16 %v602, %v602
        %v620 = vpack.c.bf16 %v606, %v606
        %v621 = vpack.c.bf16 %v610, %v610
        %v622 = vpack.c.bf16 %v614, %v614
        %v624 = vpack.i.b16 %v619, %v619
        %v626 = vlaneseq
        %v627 = vshrl.u32 %v626, 7
        %v628 = vsub.s32 0, %v627
        %v629 = vrot.slane %v624, %v628
        %v631 = vpack.i.b16 %v620, %v620
        %v633 = vlaneseq
        %v634 = vshrl.u32 %v633, 7
        %v635 = vsub.s32 0, %v634
        %v636 = vrot.slane %v631, %v635
        %v638 = vpack.i.b16 %v621, %v621
        %v640 = vlaneseq
        %v641 = vshrl.u32 %v640, 7
        %v642 = vsub.s32 0, %v641
        %v643 = vrot.slane %v638, %v642
        %v645 = vpack.i.b16 %v622, %v622
        %v647 = vlaneseq
        %v648 = vshrl.u32 %v647, 7
        %v649 = vsub.s32 0, %v648
        %v650 = vrot.slane %v645, %v649
        %vm651 = vcmp.eq.bf16.partialorder %v202, %v629
        %vm652 = vcmp.eq.bf16.partialorder %v202, %v636
        %vm653 = vcmp.eq.bf16.partialorder %v202, %v643
        %vm654 = vcmp.eq.bf16.partialorder %v202, %v650
        %vm655 = vcmp.eq.bf16.partialorder %v203, %v629
        %vm656 = vcmp.eq.bf16.partialorder %v203, %v636
        %vm657 = vcmp.eq.bf16.partialorder %v203, %v643
        %vm658 = vcmp.eq.bf16.partialorder %v203, %v650
        %v660 = vlaneseq
        %v661 = vshrl.u32 %v660, 7
        %v662 = vsub.s32 0, %v661
        %v663 = vrot.slane %v192, %v662
        %v664 = vlaneseq
        %v665 = vshrl.u32 %v664, 7
        %v666 = vsub.s32 1, %v665
        %v667 = vrot.slane %v192, %v666
        %v668 = vlaneseq
        %v669 = vshrl.u32 %v668, 7
        %v670 = vsub.s32 2, %v669
        %v671 = vrot.slane %v192, %v670
        %v672 = vlaneseq
        %v673 = vshrl.u32 %v672, 7
        %v674 = vsub.s32 3, %v673
        %v675 = vrot.slane %v192, %v674
        %v680 = vpack.c.bf16 %v663, %v663
        %v681 = vpack.c.bf16 %v667, %v667
        %v682 = vpack.c.bf16 %v671, %v671
        %v683 = vpack.c.bf16 %v675, %v675
        %v685 = vpack.i.b16 %v680, %v680
        %v687 = vlaneseq
        %v688 = vshrl.u32 %v687, 7
        %v689 = vsub.s32 0, %v688
        %v690 = vrot.slane %v685, %v689
        %v692 = vpack.i.b16 %v681, %v681
        %v694 = vlaneseq
        %v695 = vshrl.u32 %v694, 7
        %v696 = vsub.s32 0, %v695
        %v697 = vrot.slane %v692, %v696
        %v699 = vpack.i.b16 %v682, %v682
        %v701 = vlaneseq
        %v702 = vshrl.u32 %v701, 7
        %v703 = vsub.s32 0, %v702
        %v704 = vrot.slane %v699, %v703
        %v706 = vpack.i.b16 %v683, %v683
        %v708 = vlaneseq
        %v709 = vshrl.u32 %v708, 7
        %v710 = vsub.s32 0, %v709
        %v711 = vrot.slane %v706, %v710
        %v712 = vsel %vm651, %v690, 0
        %v713 = vsel %vm652, %v697, 0
        %v714 = vsel %vm653, %v704, 0
        %v715 = vsel %vm654, %v711, 0
        %v716 = vsel %vm655, %v690, 0
        %v717 = vsel %vm656, %v697, 0
        %v718 = vsel %vm657, %v704, 0
        %v719 = vsel %vm658, %v711, 0
        %v720 = vadd.bf16 %v588, %v712
        %v721 = vadd.bf16 %v589, %v713
        %v722 = vadd.bf16 %v590, %v714
        %v723 = vadd.bf16 %v591, %v715
        %v724 = vadd.bf16 %v592, %v716
        %v725 = vadd.bf16 %v593, %v717
        %v726 = vadd.bf16 %v594, %v718
        %v727 = vadd.bf16 %v595, %v719
        %v728 = vmul.f32 %v176, 0.375
        %v729 = vmul.f32 %v178, 0.375
        %v730 = vfloor.f32 %v728
        %v731 = vfloor.f32 %v729
        %v732 = vsub.f32 %v728, %v730
        %v733 = vsub.f32 %v729, %v731
        %v734 = vcvt.f32.s32.to.zero.pseudo %v730
        %v735 = vcvt.f32.s32.to.zero.pseudo %v731
        %v736 = vsub.f32 1.0, %v732
        %v737 = vsub.f32 1.0, %v733
        %v738 = vmul.f32 %v736, %v737
        %v739 = vmul.f32 %v736, %v733
        %v740 = vmul.f32 %v732, %v737
        %v741 = vmul.f32 %v732, %v733
        %v742 = vadd.s32 %v194, 32
        %v743 = vadd.s32 %v194, 40
        %v744 = vadd.s32 %v194, 48
        %v745 = vadd.s32 %v194, 56
        %v746 = vcvt.s32.f32 %v742
        %v747 = vcvt.s32.f32 %v743
        %v748 = vcvt.s32.f32 %v744
        %v749 = vcvt.s32.f32 %v745
        %v750 = vpack.c.bf16 %v747, %v746
        %v751 = vpack.c.bf16 %v749, %v748
        %v752 = vmul.u32 %v734, 6
        %v753 = vadd.s32 %v752, %v735
        %v754 = vcvt.s32.f32 %v753
        %v756 = vlaneseq
        %v757 = vshrl.u32 %v756, 7
        %v758 = vsub.s32 0, %v757
        %v759 = vrot.slane %v754, %v758
        %v760 = vlaneseq
        %v761 = vshrl.u32 %v760, 7
        %v762 = vsub.s32 1, %v761
        %v763 = vrot.slane %v754, %v762
        %v764 = vlaneseq
        %v765 = vshrl.u32 %v764, 7
        %v766 = vsub.s32 2, %v765
        %v767 = vrot.slane %v754, %v766
        %v768 = vlaneseq
        %v769 = vshrl.u32 %v768, 7
        %v770 = vsub.s32 3, %v769
        %v771 = vrot.slane %v754, %v770
        %v776 = vpack.c.bf16 %v759, %v759
        %v777 = vpack.c.bf16 %v763, %v763
        %v778 = vpack.c.bf16 %v767, %v767
        %v779 = vpack.c.bf16 %v771, %v771
        %v781 = vpack.i.b16 %v776, %v776
        %v783 = vlaneseq
        %v784 = vshrl.u32 %v783, 7
        %v785 = vsub.s32 0, %v784
        %v786 = vrot.slane %v781, %v785
        %v788 = vpack.i.b16 %v777, %v777
        %v790 = vlaneseq
        %v791 = vshrl.u32 %v790, 7
        %v792 = vsub.s32 0, %v791
        %v793 = vrot.slane %v788, %v792
        %v795 = vpack.i.b16 %v778, %v778
        %v797 = vlaneseq
        %v798 = vshrl.u32 %v797, 7
        %v799 = vsub.s32 0, %v798
        %v800 = vrot.slane %v795, %v799
        %v802 = vpack.i.b16 %v779, %v779
        %v804 = vlaneseq
        %v805 = vshrl.u32 %v804, 7
        %v806 = vsub.s32 0, %v805
        %v807 = vrot.slane %v802, %v806
        %vm808 = vcmp.eq.bf16.partialorder %v202, %v786
        %vm809 = vcmp.eq.bf16.partialorder %v202, %v793
        %vm810 = vcmp.eq.bf16.partialorder %v202, %v800
        %vm811 = vcmp.eq.bf16.partialorder %v202, %v807
        %vm812 = vcmp.eq.bf16.partialorder %v203, %v786
        %vm813 = vcmp.eq.bf16.partialorder %v203, %v793
        %vm814 = vcmp.eq.bf16.partialorder %v203, %v800
        %vm815 = vcmp.eq.bf16.partialorder %v203, %v807
        %vm816 = vcmp.eq.bf16.partialorder %v750, %v786
        %vm817 = vcmp.eq.bf16.partialorder %v750, %v793
        %vm818 = vcmp.eq.bf16.partialorder %v750, %v800
        %vm819 = vcmp.eq.bf16.partialorder %v750, %v807
        %vm820 = vcmp.eq.bf16.partialorder %v751, %v786
        %vm821 = vcmp.eq.bf16.partialorder %v751, %v793
        %vm822 = vcmp.eq.bf16.partialorder %v751, %v800
        %vm823 = vcmp.eq.bf16.partialorder %v751, %v807
        %v825 = vlaneseq
        %v826 = vshrl.u32 %v825, 7
        %v827 = vsub.s32 0, %v826
        %v828 = vrot.slane %v738, %v827
        %v829 = vlaneseq
        %v830 = vshrl.u32 %v829, 7
        %v831 = vsub.s32 1, %v830
        %v832 = vrot.slane %v738, %v831
        %v833 = vlaneseq
        %v834 = vshrl.u32 %v833, 7
        %v835 = vsub.s32 2, %v834
        %v836 = vrot.slane %v738, %v835
        %v837 = vlaneseq
        %v838 = vshrl.u32 %v837, 7
        %v839 = vsub.s32 3, %v838
        %v840 = vrot.slane %v738, %v839
        %v845 = vpack.c.bf16 %v828, %v828
        %v846 = vpack.c.bf16 %v832, %v832
        %v847 = vpack.c.bf16 %v836, %v836
        %v848 = vpack.c.bf16 %v840, %v840
        %v850 = vpack.i.b16 %v845, %v845
        %v852 = vlaneseq
        %v853 = vshrl.u32 %v852, 7
        %v854 = vsub.s32 0, %v853
        %v855 = vrot.slane %v850, %v854
        %v857 = vpack.i.b16 %v846, %v846
        %v859 = vlaneseq
        %v860 = vshrl.u32 %v859, 7
        %v861 = vsub.s32 0, %v860
        %v862 = vrot.slane %v857, %v861
        %v864 = vpack.i.b16 %v847, %v847
        %v866 = vlaneseq
        %v867 = vshrl.u32 %v866, 7
        %v868 = vsub.s32 0, %v867
        %v869 = vrot.slane %v864, %v868
        %v871 = vpack.i.b16 %v848, %v848
        %v873 = vlaneseq
        %v874 = vshrl.u32 %v873, 7
        %v875 = vsub.s32 0, %v874
        %v876 = vrot.slane %v871, %v875
        %v877 = vsel %vm808, %v855, 0
        %v878 = vsel %vm809, %v862, 0
        %v879 = vsel %vm810, %v869, 0
        %v880 = vsel %vm811, %v876, 0
        %v881 = vsel %vm812, %v855, 0
        %v882 = vsel %vm813, %v862, 0
        %v883 = vsel %vm814, %v869, 0
        %v884 = vsel %vm815, %v876, 0
        %v885 = vsel %vm816, %v855, 0
        %v886 = vsel %vm817, %v862, 0
        %v887 = vsel %vm818, %v869, 0
        %v888 = vsel %vm819, %v876, 0
        %v889 = vsel %vm820, %v855, 0
        %v890 = vsel %vm821, %v862, 0
        %v891 = vsel %vm822, %v869, 0
        %v892 = vsel %vm823, %v876, 0
        %v893 = vadd.s32 %v735, 1
        %v894 = vadd.s32 %v752, %v893
        %v895 = vcvt.s32.f32 %v894
        %v897 = vlaneseq
        %v898 = vshrl.u32 %v897, 7
        %v899 = vsub.s32 0, %v898
        %v900 = vrot.slane %v895, %v899
        %v901 = vlaneseq
        %v902 = vshrl.u32 %v901, 7
        %v903 = vsub.s32 1, %v902
        %v904 = vrot.slane %v895, %v903
        %v905 = vlaneseq
        %v906 = vshrl.u32 %v905, 7
        %v907 = vsub.s32 2, %v906
        %v908 = vrot.slane %v895, %v907
        %v909 = vlaneseq
        %v910 = vshrl.u32 %v909, 7
        %v911 = vsub.s32 3, %v910
        %v912 = vrot.slane %v895, %v911
        %v917 = vpack.c.bf16 %v900, %v900
        %v918 = vpack.c.bf16 %v904, %v904
        %v919 = vpack.c.bf16 %v908, %v908
        %v920 = vpack.c.bf16 %v912, %v912
        %v922 = vpack.i.b16 %v917, %v917
        %v924 = vlaneseq
        %v925 = vshrl.u32 %v924, 7
        %v926 = vsub.s32 0, %v925
        %v927 = vrot.slane %v922, %v926
        %v929 = vpack.i.b16 %v918, %v918
        %v931 = vlaneseq
        %v932 = vshrl.u32 %v931, 7
        %v933 = vsub.s32 0, %v932
        %v934 = vrot.slane %v929, %v933
        %v936 = vpack.i.b16 %v919, %v919
        %v938 = vlaneseq
        %v939 = vshrl.u32 %v938, 7
        %v940 = vsub.s32 0, %v939
        %v941 = vrot.slane %v936, %v940
        %v943 = vpack.i.b16 %v920, %v920
        %v945 = vlaneseq
        %v946 = vshrl.u32 %v945, 7
        %v947 = vsub.s32 0, %v946
        %v948 = vrot.slane %v943, %v947
        %vm949 = vcmp.eq.bf16.partialorder %v202, %v927
        %vm950 = vcmp.eq.bf16.partialorder %v202, %v934
        %vm951 = vcmp.eq.bf16.partialorder %v202, %v941
        %vm952 = vcmp.eq.bf16.partialorder %v202, %v948
        %vm953 = vcmp.eq.bf16.partialorder %v203, %v927
        %vm954 = vcmp.eq.bf16.partialorder %v203, %v934
        %vm955 = vcmp.eq.bf16.partialorder %v203, %v941
        %vm956 = vcmp.eq.bf16.partialorder %v203, %v948
        %vm957 = vcmp.eq.bf16.partialorder %v750, %v927
        %vm958 = vcmp.eq.bf16.partialorder %v750, %v934
        %vm959 = vcmp.eq.bf16.partialorder %v750, %v941
        %vm960 = vcmp.eq.bf16.partialorder %v750, %v948
        %vm961 = vcmp.eq.bf16.partialorder %v751, %v927
        %vm962 = vcmp.eq.bf16.partialorder %v751, %v934
        %vm963 = vcmp.eq.bf16.partialorder %v751, %v941
        %vm964 = vcmp.eq.bf16.partialorder %v751, %v948
        %v966 = vlaneseq
        %v967 = vshrl.u32 %v966, 7
        %v968 = vsub.s32 0, %v967
        %v969 = vrot.slane %v739, %v968
        %v970 = vlaneseq
        %v971 = vshrl.u32 %v970, 7
        %v972 = vsub.s32 1, %v971
        %v973 = vrot.slane %v739, %v972
        %v974 = vlaneseq
        %v975 = vshrl.u32 %v974, 7
        %v976 = vsub.s32 2, %v975
        %v977 = vrot.slane %v739, %v976
        %v978 = vlaneseq
        %v979 = vshrl.u32 %v978, 7
        %v980 = vsub.s32 3, %v979
        %v981 = vrot.slane %v739, %v980
        %v986 = vpack.c.bf16 %v969, %v969
        %v987 = vpack.c.bf16 %v973, %v973
        %v988 = vpack.c.bf16 %v977, %v977
        %v989 = vpack.c.bf16 %v981, %v981
        %v991 = vpack.i.b16 %v986, %v986
        %v993 = vlaneseq
        %v994 = vshrl.u32 %v993, 7
        %v995 = vsub.s32 0, %v994
        %v996 = vrot.slane %v991, %v995
        %v998 = vpack.i.b16 %v987, %v987
        %v1000 = vlaneseq
        %v1001 = vshrl.u32 %v1000, 7
        %v1002 = vsub.s32 0, %v1001
        %v1003 = vrot.slane %v998, %v1002
        %v1005 = vpack.i.b16 %v988, %v988
        %v1007 = vlaneseq
        %v1008 = vshrl.u32 %v1007, 7
        %v1009 = vsub.s32 0, %v1008
        %v1010 = vrot.slane %v1005, %v1009
        %v1012 = vpack.i.b16 %v989, %v989
        %v1014 = vlaneseq
        %v1015 = vshrl.u32 %v1014, 7
        %v1016 = vsub.s32 0, %v1015
        %v1017 = vrot.slane %v1012, %v1016
        %v1018 = vsel %vm949, %v996, 0
        %v1019 = vsel %vm950, %v1003, 0
        %v1020 = vsel %vm951, %v1010, 0
        %v1021 = vsel %vm952, %v1017, 0
        %v1022 = vsel %vm953, %v996, 0
        %v1023 = vsel %vm954, %v1003, 0
        %v1024 = vsel %vm955, %v1010, 0
        %v1025 = vsel %vm956, %v1017, 0
        %v1026 = vsel %vm957, %v996, 0
        %v1027 = vsel %vm958, %v1003, 0
        %v1028 = vsel %vm959, %v1010, 0
        %v1029 = vsel %vm960, %v1017, 0
        %v1030 = vsel %vm961, %v996, 0
        %v1031 = vsel %vm962, %v1003, 0
        %v1032 = vsel %vm963, %v1010, 0
        %v1033 = vsel %vm964, %v1017, 0
        %v1034 = vadd.bf16 %v877, %v1018
        %v1035 = vadd.bf16 %v878, %v1019
        %v1036 = vadd.bf16 %v879, %v1020
        %v1037 = vadd.bf16 %v880, %v1021
        %v1038 = vadd.bf16 %v881, %v1022
        %v1039 = vadd.bf16 %v882, %v1023
        %v1040 = vadd.bf16 %v883, %v1024
        %v1041 = vadd.bf16 %v884, %v1025
        %v1042 = vadd.bf16 %v885, %v1026
        %v1043 = vadd.bf16 %v886, %v1027
        %v1044 = vadd.bf16 %v887, %v1028
        %v1045 = vadd.bf16 %v888, %v1029
        %v1046 = vadd.bf16 %v889, %v1030
        %v1047 = vadd.bf16 %v890, %v1031
        %v1048 = vadd.bf16 %v891, %v1032
        %v1049 = vadd.bf16 %v892, %v1033
        %v1050 = vadd.s32 %v734, 1
        %v1051 = vmul.u32 %v1050, 6
        %v1052 = vadd.s32 %v1051, %v735
        %v1053 = vcvt.s32.f32 %v1052
        %v1055 = vlaneseq
        %v1056 = vshrl.u32 %v1055, 7
        %v1057 = vsub.s32 0, %v1056
        %v1058 = vrot.slane %v1053, %v1057
        %v1059 = vlaneseq
        %v1060 = vshrl.u32 %v1059, 7
        %v1061 = vsub.s32 1, %v1060
        %v1062 = vrot.slane %v1053, %v1061
        %v1063 = vlaneseq
        %v1064 = vshrl.u32 %v1063, 7
        %v1065 = vsub.s32 2, %v1064
        %v1066 = vrot.slane %v1053, %v1065
        %v1067 = vlaneseq
        %v1068 = vshrl.u32 %v1067, 7
        %v1069 = vsub.s32 3, %v1068
        %v1070 = vrot.slane %v1053, %v1069
        %v1075 = vpack.c.bf16 %v1058, %v1058
        %v1076 = vpack.c.bf16 %v1062, %v1062
        %v1077 = vpack.c.bf16 %v1066, %v1066
        %v1078 = vpack.c.bf16 %v1070, %v1070
        %v1080 = vpack.i.b16 %v1075, %v1075
        %v1082 = vlaneseq
        %v1083 = vshrl.u32 %v1082, 7
        %v1084 = vsub.s32 0, %v1083
        %v1085 = vrot.slane %v1080, %v1084
        %v1087 = vpack.i.b16 %v1076, %v1076
        %v1089 = vlaneseq
        %v1090 = vshrl.u32 %v1089, 7
        %v1091 = vsub.s32 0, %v1090
        %v1092 = vrot.slane %v1087, %v1091
        %v1094 = vpack.i.b16 %v1077, %v1077
        %v1096 = vlaneseq
        %v1097 = vshrl.u32 %v1096, 7
        %v1098 = vsub.s32 0, %v1097
        %v1099 = vrot.slane %v1094, %v1098
        %v1101 = vpack.i.b16 %v1078, %v1078
        %v1103 = vlaneseq
        %v1104 = vshrl.u32 %v1103, 7
        %v1105 = vsub.s32 0, %v1104
        %v1106 = vrot.slane %v1101, %v1105
        %vm1107 = vcmp.eq.bf16.partialorder %v202, %v1085
        %vm1108 = vcmp.eq.bf16.partialorder %v202, %v1092
        %vm1109 = vcmp.eq.bf16.partialorder %v202, %v1099
        %vm1110 = vcmp.eq.bf16.partialorder %v202, %v1106
        %vm1111 = vcmp.eq.bf16.partialorder %v203, %v1085
        %vm1112 = vcmp.eq.bf16.partialorder %v203, %v1092
        %vm1113 = vcmp.eq.bf16.partialorder %v203, %v1099
        %vm1114 = vcmp.eq.bf16.partialorder %v203, %v1106
        %vm1115 = vcmp.eq.bf16.partialorder %v750, %v1085
        %vm1116 = vcmp.eq.bf16.partialorder %v750, %v1092
        %vm1117 = vcmp.eq.bf16.partialorder %v750, %v1099
        %vm1118 = vcmp.eq.bf16.partialorder %v750, %v1106
        %vm1119 = vcmp.eq.bf16.partialorder %v751, %v1085
        %vm1120 = vcmp.eq.bf16.partialorder %v751, %v1092
        %vm1121 = vcmp.eq.bf16.partialorder %v751, %v1099
        %vm1122 = vcmp.eq.bf16.partialorder %v751, %v1106
        %v1124 = vlaneseq
        %v1125 = vshrl.u32 %v1124, 7
        %v1126 = vsub.s32 0, %v1125
        %v1127 = vrot.slane %v740, %v1126
        %v1128 = vlaneseq
        %v1129 = vshrl.u32 %v1128, 7
        %v1130 = vsub.s32 1, %v1129
        %v1131 = vrot.slane %v740, %v1130
        %v1132 = vlaneseq
        %v1133 = vshrl.u32 %v1132, 7
        %v1134 = vsub.s32 2, %v1133
        %v1135 = vrot.slane %v740, %v1134
        %v1136 = vlaneseq
        %v1137 = vshrl.u32 %v1136, 7
        %v1138 = vsub.s32 3, %v1137
        %v1139 = vrot.slane %v740, %v1138
        %v1144 = vpack.c.bf16 %v1127, %v1127
        %v1145 = vpack.c.bf16 %v1131, %v1131
        %v1146 = vpack.c.bf16 %v1135, %v1135
        %v1147 = vpack.c.bf16 %v1139, %v1139
        %v1149 = vpack.i.b16 %v1144, %v1144
        %v1151 = vlaneseq
        %v1152 = vshrl.u32 %v1151, 7
        %v1153 = vsub.s32 0, %v1152
        %v1154 = vrot.slane %v1149, %v1153
        %v1156 = vpack.i.b16 %v1145, %v1145
        %v1158 = vlaneseq
        %v1159 = vshrl.u32 %v1158, 7
        %v1160 = vsub.s32 0, %v1159
        %v1161 = vrot.slane %v1156, %v1160
        %v1163 = vpack.i.b16 %v1146, %v1146
        %v1165 = vlaneseq
        %v1166 = vshrl.u32 %v1165, 7
        %v1167 = vsub.s32 0, %v1166
        %v1168 = vrot.slane %v1163, %v1167
        %v1170 = vpack.i.b16 %v1147, %v1147
        %v1172 = vlaneseq
        %v1173 = vshrl.u32 %v1172, 7
        %v1174 = vsub.s32 0, %v1173
        %v1175 = vrot.slane %v1170, %v1174
        %v1176 = vsel %vm1107, %v1154, 0
        %v1177 = vsel %vm1108, %v1161, 0
        %v1178 = vsel %vm1109, %v1168, 0
        %v1179 = vsel %vm1110, %v1175, 0
        %v1180 = vsel %vm1111, %v1154, 0
        %v1181 = vsel %vm1112, %v1161, 0
        %v1182 = vsel %vm1113, %v1168, 0
        %v1183 = vsel %vm1114, %v1175, 0
        %v1184 = vsel %vm1115, %v1154, 0
        %v1185 = vsel %vm1116, %v1161, 0
        %v1186 = vsel %vm1117, %v1168, 0
        %v1187 = vsel %vm1118, %v1175, 0
        %v1188 = vsel %vm1119, %v1154, 0
        %v1189 = vsel %vm1120, %v1161, 0
        %v1190 = vsel %vm1121, %v1168, 0
        %v1191 = vsel %vm1122, %v1175, 0
        %v1192 = vadd.bf16 %v1034, %v1176
        %v1193 = vadd.bf16 %v1035, %v1177
        %v1194 = vadd.bf16 %v1036, %v1178
        %v1195 = vadd.bf16 %v1037, %v1179
        %v1196 = vadd.bf16 %v1038, %v1180
        %v1197 = vadd.bf16 %v1039, %v1181
        %v1198 = vadd.bf16 %v1040, %v1182
        %v1199 = vadd.bf16 %v1041, %v1183
        %v1200 = vadd.bf16 %v1042, %v1184
        %v1201 = vadd.bf16 %v1043, %v1185
        %v1202 = vadd.bf16 %v1044, %v1186
        %v1203 = vadd.bf16 %v1045, %v1187
        %v1204 = vadd.bf16 %v1046, %v1188
        %v1205 = vadd.bf16 %v1047, %v1189
        %v1206 = vadd.bf16 %v1048, %v1190
        %v1207 = vadd.bf16 %v1049, %v1191
        %v1208 = vadd.s32 %v1051, %v893
        %v1209 = vcvt.s32.f32 %v1208
        %v1211 = vlaneseq
        %v1212 = vshrl.u32 %v1211, 7
        %v1213 = vsub.s32 0, %v1212
        %v1214 = vrot.slane %v1209, %v1213
        %v1215 = vlaneseq
        %v1216 = vshrl.u32 %v1215, 7
        %v1217 = vsub.s32 1, %v1216
        %v1218 = vrot.slane %v1209, %v1217
        %v1219 = vlaneseq
        %v1220 = vshrl.u32 %v1219, 7
        %v1221 = vsub.s32 2, %v1220
        %v1222 = vrot.slane %v1209, %v1221
        %v1223 = vlaneseq
        %v1224 = vshrl.u32 %v1223, 7
        %v1225 = vsub.s32 3, %v1224
        %v1226 = vrot.slane %v1209, %v1225
        %v1231 = vpack.c.bf16 %v1214, %v1214
        %v1232 = vpack.c.bf16 %v1218, %v1218
        %v1233 = vpack.c.bf16 %v1222, %v1222
        %v1234 = vpack.c.bf16 %v1226, %v1226
        %v1236 = vpack.i.b16 %v1231, %v1231
        %v1238 = vlaneseq
        %v1239 = vshrl.u32 %v1238, 7
        %v1240 = vsub.s32 0, %v1239
        %v1241 = vrot.slane %v1236, %v1240
        %v1243 = vpack.i.b16 %v1232, %v1232
        %v1245 = vlaneseq
        %v1246 = vshrl.u32 %v1245, 7
        %v1247 = vsub.s32 0, %v1246
        %v1248 = vrot.slane %v1243, %v1247
        %v1250 = vpack.i.b16 %v1233, %v1233
        %v1252 = vlaneseq
        %v1253 = vshrl.u32 %v1252, 7
        %v1254 = vsub.s32 0, %v1253
        %v1255 = vrot.slane %v1250, %v1254
        %v1257 = vpack.i.b16 %v1234, %v1234
        %v1259 = vlaneseq
        %v1260 = vshrl.u32 %v1259, 7
        %v1261 = vsub.s32 0, %v1260
        %v1262 = vrot.slane %v1257, %v1261
        %vm1263 = vcmp.eq.bf16.partialorder %v202, %v1241
        %vm1264 = vcmp.eq.bf16.partialorder %v202, %v1248
        %vm1265 = vcmp.eq.bf16.partialorder %v202, %v1255
        %vm1266 = vcmp.eq.bf16.partialorder %v202, %v1262
        %vm1267 = vcmp.eq.bf16.partialorder %v203, %v1241
        %vm1268 = vcmp.eq.bf16.partialorder %v203, %v1248
        %vm1269 = vcmp.eq.bf16.partialorder %v203, %v1255
        %vm1270 = vcmp.eq.bf16.partialorder %v203, %v1262
        %vm1271 = vcmp.eq.bf16.partialorder %v750, %v1241
        %vm1272 = vcmp.eq.bf16.partialorder %v750, %v1248
        %vm1273 = vcmp.eq.bf16.partialorder %v750, %v1255
        %vm1274 = vcmp.eq.bf16.partialorder %v750, %v1262
        %vm1275 = vcmp.eq.bf16.partialorder %v751, %v1241
        %vm1276 = vcmp.eq.bf16.partialorder %v751, %v1248
        %vm1277 = vcmp.eq.bf16.partialorder %v751, %v1255
        %vm1278 = vcmp.eq.bf16.partialorder %v751, %v1262
        %v1280 = vlaneseq
        %v1281 = vshrl.u32 %v1280, 7
        %v1282 = vsub.s32 0, %v1281
        %v1283 = vrot.slane %v741, %v1282
        %v1284 = vlaneseq
        %v1285 = vshrl.u32 %v1284, 7
        %v1286 = vsub.s32 1, %v1285
        %v1287 = vrot.slane %v741, %v1286
        %v1288 = vlaneseq
        %v1289 = vshrl.u32 %v1288, 7
        %v1290 = vsub.s32 2, %v1289
        %v1291 = vrot.slane %v741, %v1290
        %v1292 = vlaneseq
        %v1293 = vshrl.u32 %v1292, 7
        %v1294 = vsub.s32 3, %v1293
        %v1295 = vrot.slane %v741, %v1294
        %v1300 = vpack.c.bf16 %v1283, %v1283
        %v1301 = vpack.c.bf16 %v1287, %v1287
        %v1302 = vpack.c.bf16 %v1291, %v1291
        %v1303 = vpack.c.bf16 %v1295, %v1295
        %v1305 = vpack.i.b16 %v1300, %v1300
        %v1307 = vlaneseq
        %v1308 = vshrl.u32 %v1307, 7
        %v1309 = vsub.s32 0, %v1308
        %v1310 = vrot.slane %v1305, %v1309
        %v1312 = vpack.i.b16 %v1301, %v1301
        %v1314 = vlaneseq
        %v1315 = vshrl.u32 %v1314, 7
        %v1316 = vsub.s32 0, %v1315
        %v1317 = vrot.slane %v1312, %v1316
        %v1319 = vpack.i.b16 %v1302, %v1302
        %v1321 = vlaneseq
        %v1322 = vshrl.u32 %v1321, 7
        %v1323 = vsub.s32 0, %v1322
        %v1324 = vrot.slane %v1319, %v1323
        %v1326 = vpack.i.b16 %v1303, %v1303
        %v1328 = vlaneseq
        %v1329 = vshrl.u32 %v1328, 7
        %v1330 = vsub.s32 0, %v1329
        %v1331 = vrot.slane %v1326, %v1330
        %v1332 = vsel %vm1263, %v1310, 0
        %v1333 = vsel %vm1264, %v1317, 0
        %v1334 = vsel %vm1265, %v1324, 0
        %v1335 = vsel %vm1266, %v1331, 0
        %v1336 = vsel %vm1267, %v1310, 0
        %v1337 = vsel %vm1268, %v1317, 0
        %v1338 = vsel %vm1269, %v1324, 0
        %v1339 = vsel %vm1270, %v1331, 0
        %v1340 = vsel %vm1271, %v1310, 0
        %v1341 = vsel %vm1272, %v1317, 0
        %v1342 = vsel %vm1273, %v1324, 0
        %v1343 = vsel %vm1274, %v1331, 0
        %v1344 = vsel %vm1275, %v1310, 0
        %v1345 = vsel %vm1276, %v1317, 0
        %v1346 = vsel %vm1277, %v1324, 0
        %v1347 = vsel %vm1278, %v1331, 0
        %v1348 = vadd.bf16 %v1192, %v1332
        %v1349 = vadd.bf16 %v1193, %v1333
        %v1350 = vadd.bf16 %v1194, %v1334
        %v1351 = vadd.bf16 %v1195, %v1335
        %v1352 = vadd.bf16 %v1196, %v1336
        %v1353 = vadd.bf16 %v1197, %v1337
        %v1354 = vadd.bf16 %v1198, %v1338
        %v1355 = vadd.bf16 %v1199, %v1339
        %v1356 = vadd.bf16 %v1200, %v1340
        %v1357 = vadd.bf16 %v1201, %v1341
        %v1358 = vadd.bf16 %v1202, %v1342
        %v1359 = vadd.bf16 %v1203, %v1343
        %v1360 = vadd.bf16 %v1204, %v1344
        %v1361 = vadd.bf16 %v1205, %v1345
        %v1362 = vadd.bf16 %v1206, %v1346
        %v1363 = vadd.bf16 %v1207, %v1347
        %v1364 = vmul.f32 %v176, 0.625
        %v1365 = vmul.f32 %v178, 0.625
        %v1366 = vfloor.f32 %v1364
        %v1367 = vfloor.f32 %v1365
        %v1368 = vsub.f32 %v1364, %v1366
        %v1369 = vsub.f32 %v1365, %v1367
        %v1370 = vcvt.f32.s32.to.zero.pseudo %v1366
        %v1371 = vcvt.f32.s32.to.zero.pseudo %v1367
        %v1372 = vsub.f32 1.0, %v1368
        %v1373 = vsub.f32 1.0, %v1369
        %v1374 = vmul.f32 %v1372, %v1373
        %v1375 = vmul.f32 %v1372, %v1369
        %v1376 = vmul.f32 %v1368, %v1373
        %v1377 = vmul.f32 %v1368, %v1369
        %v1378 = vadd.s32 %v194, 64
        %v1379 = vadd.s32 %v194, 72
        %v1380 = vadd.s32 %v194, 80
        %v1381 = vadd.s32 %v194, 88
        %v1382 = vadd.s32 %v194, 96
        %v1383 = vadd.s32 %v194, 104
        %v1384 = vadd.s32 %v194, 112
        %v1385 = vadd.s32 %v194, 120
        %v1386 = vcvt.s32.f32 %v1378
        %v1387 = vcvt.s32.f32 %v1379
        %v1388 = vcvt.s32.f32 %v1380
        %v1389 = vcvt.s32.f32 %v1381
        %v1390 = vcvt.s32.f32 %v1382
        %v1391 = vcvt.s32.f32 %v1383
        %v1392 = vcvt.s32.f32 %v1384
        %v1393 = vcvt.s32.f32 %v1385
        %v1394 = vpack.c.bf16 %v1387, %v1386
        %v1395 = vpack.c.bf16 %v1389, %v1388
        %v1396 = vpack.c.bf16 %v1391, %v1390
        %v1397 = vpack.c.bf16 %v1393, %v1392
        %v1398 = vmul.u32 %v1370, 10
        %v1399 = vadd.s32 %v1398, %v1371
        %v1400 = vcvt.s32.f32 %v1399
        %v1402 = vlaneseq
        %v1403 = vshrl.u32 %v1402, 7
        %v1404 = vsub.s32 0, %v1403
        %v1405 = vrot.slane %v1400, %v1404
        %v1406 = vlaneseq
        %v1407 = vshrl.u32 %v1406, 7
        %v1408 = vsub.s32 1, %v1407
        %v1409 = vrot.slane %v1400, %v1408
        %v1410 = vlaneseq
        %v1411 = vshrl.u32 %v1410, 7
        %v1412 = vsub.s32 2, %v1411
        %v1413 = vrot.slane %v1400, %v1412
        %v1414 = vlaneseq
        %v1415 = vshrl.u32 %v1414, 7
        %v1416 = vsub.s32 3, %v1415
        %v1417 = vrot.slane %v1400, %v1416
        %v1422 = vpack.c.bf16 %v1405, %v1405
        %v1423 = vpack.c.bf16 %v1409, %v1409
        %v1424 = vpack.c.bf16 %v1413, %v1413
        %v1425 = vpack.c.bf16 %v1417, %v1417
        %v1427 = vpack.i.b16 %v1422, %v1422
        %v1429 = vlaneseq
        %v1430 = vshrl.u32 %v1429, 7
        %v1431 = vsub.s32 0, %v1430
        %v1432 = vrot.slane %v1427, %v1431
        %v1434 = vpack.i.b16 %v1423, %v1423
        %v1436 = vlaneseq
        %v1437 = vshrl.u32 %v1436, 7
        %v1438 = vsub.s32 0, %v1437
        %v1439 = vrot.slane %v1434, %v1438
        %v1441 = vpack.i.b16 %v1424, %v1424
        %v1443 = vlaneseq
        %v1444 = vshrl.u32 %v1443, 7
        %v1445 = vsub.s32 0, %v1444
        %v1446 = vrot.slane %v1441, %v1445
        %v1448 = vpack.i.b16 %v1425, %v1425
        %v1450 = vlaneseq
        %v1451 = vshrl.u32 %v1450, 7
        %v1452 = vsub.s32 0, %v1451
        %v1453 = vrot.slane %v1448, %v1452
        %vm1454 = vcmp.eq.bf16.partialorder %v202, %v1432
        %vm1455 = vcmp.eq.bf16.partialorder %v202, %v1439
        %vm1456 = vcmp.eq.bf16.partialorder %v202, %v1446
        %vm1457 = vcmp.eq.bf16.partialorder %v202, %v1453
        %vm1458 = vcmp.eq.bf16.partialorder %v203, %v1432
        %vm1459 = vcmp.eq.bf16.partialorder %v203, %v1439
        %vm1460 = vcmp.eq.bf16.partialorder %v203, %v1446
        %vm1461 = vcmp.eq.bf16.partialorder %v203, %v1453
        %vm1462 = vcmp.eq.bf16.partialorder %v750, %v1432
        %vm1463 = vcmp.eq.bf16.partialorder %v750, %v1439
        %vm1464 = vcmp.eq.bf16.partialorder %v750, %v1446
        %vm1465 = vcmp.eq.bf16.partialorder %v750, %v1453
        %vm1466 = vcmp.eq.bf16.partialorder %v751, %v1432
        %vm1467 = vcmp.eq.bf16.partialorder %v751, %v1439
        %vm1468 = vcmp.eq.bf16.partialorder %v751, %v1446
        %vm1469 = vcmp.eq.bf16.partialorder %v751, %v1453
        %vm1470 = vcmp.eq.bf16.partialorder %v1394, %v1432
        %vm1471 = vcmp.eq.bf16.partialorder %v1394, %v1439
        %vm1472 = vcmp.eq.bf16.partialorder %v1394, %v1446
        %vm1473 = vcmp.eq.bf16.partialorder %v1394, %v1453
        %vm1474 = vcmp.eq.bf16.partialorder %v1395, %v1432
        %vm1475 = vcmp.eq.bf16.partialorder %v1395, %v1439
        %vm1476 = vcmp.eq.bf16.partialorder %v1395, %v1446
        %vm1477 = vcmp.eq.bf16.partialorder %v1395, %v1453
        %vm1478 = vcmp.eq.bf16.partialorder %v1396, %v1432
        %vm1479 = vcmp.eq.bf16.partialorder %v1396, %v1439
        %vm1480 = vcmp.eq.bf16.partialorder %v1396, %v1446
        %vm1481 = vcmp.eq.bf16.partialorder %v1396, %v1453
        %vm1482 = vcmp.eq.bf16.partialorder %v1397, %v1432
        %vm1483 = vcmp.eq.bf16.partialorder %v1397, %v1439
        %vm1484 = vcmp.eq.bf16.partialorder %v1397, %v1446
        %vm1485 = vcmp.eq.bf16.partialorder %v1397, %v1453
        %v1487 = vlaneseq
        %v1488 = vshrl.u32 %v1487, 7
        %v1489 = vsub.s32 0, %v1488
        %v1490 = vrot.slane %v1374, %v1489
        %v1491 = vlaneseq
        %v1492 = vshrl.u32 %v1491, 7
        %v1493 = vsub.s32 1, %v1492
        %v1494 = vrot.slane %v1374, %v1493
        %v1495 = vlaneseq
        %v1496 = vshrl.u32 %v1495, 7
        %v1497 = vsub.s32 2, %v1496
        %v1498 = vrot.slane %v1374, %v1497
        %v1499 = vlaneseq
        %v1500 = vshrl.u32 %v1499, 7
        %v1501 = vsub.s32 3, %v1500
        %v1502 = vrot.slane %v1374, %v1501
        %v1507 = vpack.c.bf16 %v1490, %v1490
        %v1508 = vpack.c.bf16 %v1494, %v1494
        %v1509 = vpack.c.bf16 %v1498, %v1498
        %v1510 = vpack.c.bf16 %v1502, %v1502
        %v1512 = vpack.i.b16 %v1507, %v1507
        %v1514 = vlaneseq
        %v1515 = vshrl.u32 %v1514, 7
        %v1516 = vsub.s32 0, %v1515
        %v1517 = vrot.slane %v1512, %v1516
        %v1519 = vpack.i.b16 %v1508, %v1508
        %v1521 = vlaneseq
        %v1522 = vshrl.u32 %v1521, 7
        %v1523 = vsub.s32 0, %v1522
        %v1524 = vrot.slane %v1519, %v1523
        %v1526 = vpack.i.b16 %v1509, %v1509
        %v1528 = vlaneseq
        %v1529 = vshrl.u32 %v1528, 7
        %v1530 = vsub.s32 0, %v1529
        %v1531 = vrot.slane %v1526, %v1530
        %v1533 = vpack.i.b16 %v1510, %v1510
        %v1535 = vlaneseq
        %v1536 = vshrl.u32 %v1535, 7
        %v1537 = vsub.s32 0, %v1536
        %v1538 = vrot.slane %v1533, %v1537
        %v1539 = vsel %vm1454, %v1517, 0
        %v1540 = vsel %vm1455, %v1524, 0
        %v1541 = vsel %vm1456, %v1531, 0
        %v1542 = vsel %vm1457, %v1538, 0
        %v1543 = vsel %vm1458, %v1517, 0
        %v1544 = vsel %vm1459, %v1524, 0
        %v1545 = vsel %vm1460, %v1531, 0
        %v1546 = vsel %vm1461, %v1538, 0
        %v1547 = vsel %vm1462, %v1517, 0
        %v1548 = vsel %vm1463, %v1524, 0
        %v1549 = vsel %vm1464, %v1531, 0
        %v1550 = vsel %vm1465, %v1538, 0
        %v1551 = vsel %vm1466, %v1517, 0
        %v1552 = vsel %vm1467, %v1524, 0
        %v1553 = vsel %vm1468, %v1531, 0
        %v1554 = vsel %vm1469, %v1538, 0
        %v1555 = vsel %vm1470, %v1517, 0
        %v1556 = vsel %vm1471, %v1524, 0
        %v1557 = vsel %vm1472, %v1531, 0
        %v1558 = vsel %vm1473, %v1538, 0
        %v1559 = vsel %vm1474, %v1517, 0
        %v1560 = vsel %vm1475, %v1524, 0
        %v1561 = vsel %vm1476, %v1531, 0
        %v1562 = vsel %vm1477, %v1538, 0
        %v1563 = vsel %vm1478, %v1517, 0
        %v1564 = vsel %vm1479, %v1524, 0
        %v1565 = vsel %vm1480, %v1531, 0
        %v1566 = vsel %vm1481, %v1538, 0
        %v1567 = vsel %vm1482, %v1517, 0
        %v1568 = vsel %vm1483, %v1524, 0
        %v1569 = vsel %vm1484, %v1531, 0
        %v1570 = vsel %vm1485, %v1538, 0
        %v1571 = vadd.s32 %v1371, 1
        %v1572 = vadd.s32 %v1398, %v1571
        %v1573 = vcvt.s32.f32 %v1572
        %v1575 = vlaneseq
        %v1576 = vshrl.u32 %v1575, 7
        %v1577 = vsub.s32 0, %v1576
        %v1578 = vrot.slane %v1573, %v1577
        %v1579 = vlaneseq
        %v1580 = vshrl.u32 %v1579, 7
        %v1581 = vsub.s32 1, %v1580
        %v1582 = vrot.slane %v1573, %v1581
        %v1583 = vlaneseq
        %v1584 = vshrl.u32 %v1583, 7
        %v1585 = vsub.s32 2, %v1584
        %v1586 = vrot.slane %v1573, %v1585
        %v1587 = vlaneseq
        %v1588 = vshrl.u32 %v1587, 7
        %v1589 = vsub.s32 3, %v1588
        %v1590 = vrot.slane %v1573, %v1589
        %v1595 = vpack.c.bf16 %v1578, %v1578
        %v1596 = vpack.c.bf16 %v1582, %v1582
        %v1597 = vpack.c.bf16 %v1586, %v1586
        %v1598 = vpack.c.bf16 %v1590, %v1590
        %v1600 = vpack.i.b16 %v1595, %v1595
        %v1602 = vlaneseq
        %v1603 = vshrl.u32 %v1602, 7
        %v1604 = vsub.s32 0, %v1603
        %v1605 = vrot.slane %v1600, %v1604
        %v1607 = vpack.i.b16 %v1596, %v1596
        %v1609 = vlaneseq
        %v1610 = vshrl.u32 %v1609, 7
        %v1611 = vsub.s32 0, %v1610
        %v1612 = vrot.slane %v1607, %v1611
        %v1614 = vpack.i.b16 %v1597, %v1597
        %v1616 = vlaneseq
        %v1617 = vshrl.u32 %v1616, 7
        %v1618 = vsub.s32 0, %v1617
        %v1619 = vrot.slane %v1614, %v1618
        %v1621 = vpack.i.b16 %v1598, %v1598
        %v1623 = vlaneseq
        %v1624 = vshrl.u32 %v1623, 7
        %v1625 = vsub.s32 0, %v1624
        %v1626 = vrot.slane %v1621, %v1625
        %vm1627 = vcmp.eq.bf16.partialorder %v202, %v1605
        %vm1628 = vcmp.eq.bf16.partialorder %v202, %v1612
        %vm1629 = vcmp.eq.bf16.partialorder %v202, %v1619
        %vm1630 = vcmp.eq.bf16.partialorder %v202, %v1626
        %vm1631 = vcmp.eq.bf16.partialorder %v203, %v1605
        %vm1632 = vcmp.eq.bf16.partialorder %v203, %v1612
        %vm1633 = vcmp.eq.bf16.partialorder %v203, %v1619
        %vm1634 = vcmp.eq.bf16.partialorder %v203, %v1626
        %vm1635 = vcmp.eq.bf16.partialorder %v750, %v1605
        %vm1636 = vcmp.eq.bf16.partialorder %v750, %v1612
        %vm1637 = vcmp.eq.bf16.partialorder %v750, %v1619
        %vm1638 = vcmp.eq.bf16.partialorder %v750, %v1626
        %vm1639 = vcmp.eq.bf16.partialorder %v751, %v1605
        %vm1640 = vcmp.eq.bf16.partialorder %v751, %v1612
        %vm1641 = vcmp.eq.bf16.partialorder %v751, %v1619
        %vm1642 = vcmp.eq.bf16.partialorder %v751, %v1626
        %vm1643 = vcmp.eq.bf16.partialorder %v1394, %v1605
        %vm1644 = vcmp.eq.bf16.partialorder %v1394, %v1612
        %vm1645 = vcmp.eq.bf16.partialorder %v1394, %v1619
        %vm1646 = vcmp.eq.bf16.partialorder %v1394, %v1626
        %vm1647 = vcmp.eq.bf16.partialorder %v1395, %v1605
        %vm1648 = vcmp.eq.bf16.partialorder %v1395, %v1612
        %vm1649 = vcmp.eq.bf16.partialorder %v1395, %v1619
        %vm1650 = vcmp.eq.bf16.partialorder %v1395, %v1626
        %vm1651 = vcmp.eq.bf16.partialorder %v1396, %v1605
        %vm1652 = vcmp.eq.bf16.partialorder %v1396, %v1612
        %vm1653 = vcmp.eq.bf16.partialorder %v1396, %v1619
        %vm1654 = vcmp.eq.bf16.partialorder %v1396, %v1626
        %vm1655 = vcmp.eq.bf16.partialorder %v1397, %v1605
        %vm1656 = vcmp.eq.bf16.partialorder %v1397, %v1612
        %vm1657 = vcmp.eq.bf16.partialorder %v1397, %v1619
        %vm1658 = vcmp.eq.bf16.partialorder %v1397, %v1626
        %v1660 = vlaneseq
        %v1661 = vshrl.u32 %v1660, 7
        %v1662 = vsub.s32 0, %v1661
        %v1663 = vrot.slane %v1375, %v1662
        %v1664 = vlaneseq
        %v1665 = vshrl.u32 %v1664, 7
        %v1666 = vsub.s32 1, %v1665
        %v1667 = vrot.slane %v1375, %v1666
        %v1668 = vlaneseq
        %v1669 = vshrl.u32 %v1668, 7
        %v1670 = vsub.s32 2, %v1669
        %v1671 = vrot.slane %v1375, %v1670
        %v1672 = vlaneseq
        %v1673 = vshrl.u32 %v1672, 7
        %v1674 = vsub.s32 3, %v1673
        %v1675 = vrot.slane %v1375, %v1674
        %v1680 = vpack.c.bf16 %v1663, %v1663
        %v1681 = vpack.c.bf16 %v1667, %v1667
        %v1682 = vpack.c.bf16 %v1671, %v1671
        %v1683 = vpack.c.bf16 %v1675, %v1675
        %v1685 = vpack.i.b16 %v1680, %v1680
        %v1687 = vlaneseq
        %v1688 = vshrl.u32 %v1687, 7
        %v1689 = vsub.s32 0, %v1688
        %v1690 = vrot.slane %v1685, %v1689
        %v1692 = vpack.i.b16 %v1681, %v1681
        %v1694 = vlaneseq
        %v1695 = vshrl.u32 %v1694, 7
        %v1696 = vsub.s32 0, %v1695
        %v1697 = vrot.slane %v1692, %v1696
        %v1699 = vpack.i.b16 %v1682, %v1682
        %v1701 = vlaneseq
        %v1702 = vshrl.u32 %v1701, 7
        %v1703 = vsub.s32 0, %v1702
        %v1704 = vrot.slane %v1699, %v1703
        %v1706 = vpack.i.b16 %v1683, %v1683
        %v1708 = vlaneseq
        %v1709 = vshrl.u32 %v1708, 7
        %v1710 = vsub.s32 0, %v1709
        %v1711 = vrot.slane %v1706, %v1710
        %v1712 = vsel %vm1627, %v1690, 0
        %v1713 = vsel %vm1628, %v1697, 0
        %v1714 = vsel %vm1629, %v1704, 0
        %v1715 = vsel %vm1630, %v1711, 0
        %v1716 = vsel %vm1631, %v1690, 0
        %v1717 = vsel %vm1632, %v1697, 0
        %v1718 = vsel %vm1633, %v1704, 0
        %v1719 = vsel %vm1634, %v1711, 0
        %v1720 = vsel %vm1635, %v1690, 0
        %v1721 = vsel %vm1636, %v1697, 0
        %v1722 = vsel %vm1637, %v1704, 0
        %v1723 = vsel %vm1638, %v1711, 0
        %v1724 = vsel %vm1639, %v1690, 0
        %v1725 = vsel %vm1640, %v1697, 0
        %v1726 = vsel %vm1641, %v1704, 0
        %v1727 = vsel %vm1642, %v1711, 0
        %v1728 = vsel %vm1643, %v1690, 0
        %v1729 = vsel %vm1644, %v1697, 0
        %v1730 = vsel %vm1645, %v1704, 0
        %v1731 = vsel %vm1646, %v1711, 0
        %v1732 = vsel %vm1647, %v1690, 0
        %v1733 = vsel %vm1648, %v1697, 0
        %v1734 = vsel %vm1649, %v1704, 0
        %v1735 = vsel %vm1650, %v1711, 0
        %v1736 = vsel %vm1651, %v1690, 0
        %v1737 = vsel %vm1652, %v1697, 0
        %v1738 = vsel %vm1653, %v1704, 0
        %v1739 = vsel %vm1654, %v1711, 0
        %v1740 = vsel %vm1655, %v1690, 0
        %v1741 = vsel %vm1656, %v1697, 0
        %v1742 = vsel %vm1657, %v1704, 0
        %v1743 = vsel %vm1658, %v1711, 0
        %v1744 = vadd.bf16 %v1539, %v1712
        %v1745 = vadd.bf16 %v1540, %v1713
        %v1746 = vadd.bf16 %v1541, %v1714
        %v1747 = vadd.bf16 %v1542, %v1715
        %v1748 = vadd.bf16 %v1543, %v1716
        %v1749 = vadd.bf16 %v1544, %v1717
        %v1750 = vadd.bf16 %v1545, %v1718
        %v1751 = vadd.bf16 %v1546, %v1719
        %v1752 = vadd.bf16 %v1547, %v1720
        %v1753 = vadd.bf16 %v1548, %v1721
        %v1754 = vadd.bf16 %v1549, %v1722
        %v1755 = vadd.bf16 %v1550, %v1723
        %v1756 = vadd.bf16 %v1551, %v1724
        %v1757 = vadd.bf16 %v1552, %v1725
        %v1758 = vadd.bf16 %v1553, %v1726
        %v1759 = vadd.bf16 %v1554, %v1727
        %v1760 = vadd.bf16 %v1555, %v1728
        %v1761 = vadd.bf16 %v1556, %v1729
        %v1762 = vadd.bf16 %v1557, %v1730
        %v1763 = vadd.bf16 %v1558, %v1731
        %v1764 = vadd.bf16 %v1559, %v1732
        %v1765 = vadd.bf16 %v1560, %v1733
        %v1766 = vadd.bf16 %v1561, %v1734
        %v1767 = vadd.bf16 %v1562, %v1735
        %v1768 = vadd.bf16 %v1563, %v1736
        %v1769 = vadd.bf16 %v1564, %v1737
        %v1770 = vadd.bf16 %v1565, %v1738
        %v1771 = vadd.bf16 %v1566, %v1739
        %v1772 = vadd.bf16 %v1567, %v1740
        %v1773 = vadd.bf16 %v1568, %v1741
        %v1774 = vadd.bf16 %v1569, %v1742
        %v1775 = vadd.bf16 %v1570, %v1743
        %v1776 = vadd.s32 %v1370, 1
        %v1777 = vmul.u32 %v1776, 10
        %v1778 = vadd.s32 %v1777, %v1371
        %v1779 = vcvt.s32.f32 %v1778
        %v1781 = vlaneseq
        %v1782 = vshrl.u32 %v1781, 7
        %v1783 = vsub.s32 0, %v1782
        %v1784 = vrot.slane %v1779, %v1783
        %v1785 = vlaneseq
        %v1786 = vshrl.u32 %v1785, 7
        %v1787 = vsub.s32 1, %v1786
        %v1788 = vrot.slane %v1779, %v1787
        %v1789 = vlaneseq
        %v1790 = vshrl.u32 %v1789, 7
        %v1791 = vsub.s32 2, %v1790
        %v1792 = vrot.slane %v1779, %v1791
        %v1793 = vlaneseq
        %v1794 = vshrl.u32 %v1793, 7
        %v1795 = vsub.s32 3, %v1794
        %v1796 = vrot.slane %v1779, %v1795
        %v1801 = vpack.c.bf16 %v1784, %v1784
        %v1802 = vpack.c.bf16 %v1788, %v1788
        %v1803 = vpack.c.bf16 %v1792, %v1792
        %v1804 = vpack.c.bf16 %v1796, %v1796
        %v1806 = vpack.i.b16 %v1801, %v1801
        %v1808 = vlaneseq
        %v1809 = vshrl.u32 %v1808, 7
        %v1810 = vsub.s32 0, %v1809
        %v1811 = vrot.slane %v1806, %v1810
        %v1813 = vpack.i.b16 %v1802, %v1802
        %v1815 = vlaneseq
        %v1816 = vshrl.u32 %v1815, 7
        %v1817 = vsub.s32 0, %v1816
        %v1818 = vrot.slane %v1813, %v1817
        %v1820 = vpack.i.b16 %v1803, %v1803
        %v1822 = vlaneseq
        %v1823 = vshrl.u32 %v1822, 7
        %v1824 = vsub.s32 0, %v1823
        %v1825 = vrot.slane %v1820, %v1824
        %v1827 = vpack.i.b16 %v1804, %v1804
        %v1829 = vlaneseq
        %v1830 = vshrl.u32 %v1829, 7
        %v1831 = vsub.s32 0, %v1830
        %v1832 = vrot.slane %v1827, %v1831
        %vm1833 = vcmp.eq.bf16.partialorder %v202, %v1811
        %vm1834 = vcmp.eq.bf16.partialorder %v202, %v1818
        %vm1835 = vcmp.eq.bf16.partialorder %v202, %v1825
        %vm1836 = vcmp.eq.bf16.partialorder %v202, %v1832
        %vm1837 = vcmp.eq.bf16.partialorder %v203, %v1811
        %vm1838 = vcmp.eq.bf16.partialorder %v203, %v1818
        %vm1839 = vcmp.eq.bf16.partialorder %v203, %v1825
        %vm1840 = vcmp.eq.bf16.partialorder %v203, %v1832
        %vm1841 = vcmp.eq.bf16.partialorder %v750, %v1811
        %vm1842 = vcmp.eq.bf16.partialorder %v750, %v1818
        %vm1843 = vcmp.eq.bf16.partialorder %v750, %v1825
        %vm1844 = vcmp.eq.bf16.partialorder %v750, %v1832
        %vm1845 = vcmp.eq.bf16.partialorder %v751, %v1811
        %vm1846 = vcmp.eq.bf16.partialorder %v751, %v1818
        %vm1847 = vcmp.eq.bf16.partialorder %v751, %v1825
        %vm1848 = vcmp.eq.bf16.partialorder %v751, %v1832
        %vm1849 = vcmp.eq.bf16.partialorder %v1394, %v1811
        %vm1850 = vcmp.eq.bf16.partialorder %v1394, %v1818
        %vm1851 = vcmp.eq.bf16.partialorder %v1394, %v1825
        %vm1852 = vcmp.eq.bf16.partialorder %v1394, %v1832
        %vm1853 = vcmp.eq.bf16.partialorder %v1395, %v1811
        %vm1854 = vcmp.eq.bf16.partialorder %v1395, %v1818
        %vm1855 = vcmp.eq.bf16.partialorder %v1395, %v1825
        %vm1856 = vcmp.eq.bf16.partialorder %v1395, %v1832
        %vm1857 = vcmp.eq.bf16.partialorder %v1396, %v1811
        %vm1858 = vcmp.eq.bf16.partialorder %v1396, %v1818
        %vm1859 = vcmp.eq.bf16.partialorder %v1396, %v1825
        %vm1860 = vcmp.eq.bf16.partialorder %v1396, %v1832
        %vm1861 = vcmp.eq.bf16.partialorder %v1397, %v1811
        %vm1862 = vcmp.eq.bf16.partialorder %v1397, %v1818
        %vm1863 = vcmp.eq.bf16.partialorder %v1397, %v1825
        %vm1864 = vcmp.eq.bf16.partialorder %v1397, %v1832
        %v1866 = vlaneseq
        %v1867 = vshrl.u32 %v1866, 7
        %v1868 = vsub.s32 0, %v1867
        %v1869 = vrot.slane %v1376, %v1868
        %v1870 = vlaneseq
        %v1871 = vshrl.u32 %v1870, 7
        %v1872 = vsub.s32 1, %v1871
        %v1873 = vrot.slane %v1376, %v1872
        %v1874 = vlaneseq
        %v1875 = vshrl.u32 %v1874, 7
        %v1876 = vsub.s32 2, %v1875
        %v1877 = vrot.slane %v1376, %v1876
        %v1878 = vlaneseq
        %v1879 = vshrl.u32 %v1878, 7
        %v1880 = vsub.s32 3, %v1879
        %v1881 = vrot.slane %v1376, %v1880
        %v1886 = vpack.c.bf16 %v1869, %v1869
        %v1887 = vpack.c.bf16 %v1873, %v1873
        %v1888 = vpack.c.bf16 %v1877, %v1877
        %v1889 = vpack.c.bf16 %v1881, %v1881
        %v1891 = vpack.i.b16 %v1886, %v1886
        %v1893 = vlaneseq
        %v1894 = vshrl.u32 %v1893, 7
        %v1895 = vsub.s32 0, %v1894
        %v1896 = vrot.slane %v1891, %v1895
        %v1898 = vpack.i.b16 %v1887, %v1887
        %v1900 = vlaneseq
        %v1901 = vshrl.u32 %v1900, 7
        %v1902 = vsub.s32 0, %v1901
        %v1903 = vrot.slane %v1898, %v1902
        %v1905 = vpack.i.b16 %v1888, %v1888
        %v1907 = vlaneseq
        %v1908 = vshrl.u32 %v1907, 7
        %v1909 = vsub.s32 0, %v1908
        %v1910 = vrot.slane %v1905, %v1909
        %v1912 = vpack.i.b16 %v1889, %v1889
        %v1914 = vlaneseq
        %v1915 = vshrl.u32 %v1914, 7
        %v1916 = vsub.s32 0, %v1915
        %v1917 = vrot.slane %v1912, %v1916
        %v1918 = vsel %vm1833, %v1896, 0
        %v1919 = vsel %vm1834, %v1903, 0
        %v1920 = vsel %vm1835, %v1910, 0
        %v1921 = vsel %vm1836, %v1917, 0
        %v1922 = vsel %vm1837, %v1896, 0
        %v1923 = vsel %vm1838, %v1903, 0
        %v1924 = vsel %vm1839, %v1910, 0
        %v1925 = vsel %vm1840, %v1917, 0
        %v1926 = vsel %vm1841, %v1896, 0
        %v1927 = vsel %vm1842, %v1903, 0
        %v1928 = vsel %vm1843, %v1910, 0
        %v1929 = vsel %vm1844, %v1917, 0
        %v1930 = vsel %vm1845, %v1896, 0
        %v1931 = vsel %vm1846, %v1903, 0
        %v1932 = vsel %vm1847, %v1910, 0
        %v1933 = vsel %vm1848, %v1917, 0
        %v1934 = vsel %vm1849, %v1896, 0
        %v1935 = vsel %vm1850, %v1903, 0
        %v1936 = vsel %vm1851, %v1910, 0
        %v1937 = vsel %vm1852, %v1917, 0
        %v1938 = vsel %vm1853, %v1896, 0
        %v1939 = vsel %vm1854, %v1903, 0
        %v1940 = vsel %vm1855, %v1910, 0
        %v1941 = vsel %vm1856, %v1917, 0
        %v1942 = vsel %vm1857, %v1896, 0
        %v1943 = vsel %vm1858, %v1903, 0
        %v1944 = vsel %vm1859, %v1910, 0
        %v1945 = vsel %vm1860, %v1917, 0
        %v1946 = vsel %vm1861, %v1896, 0
        %v1947 = vsel %vm1862, %v1903, 0
        %v1948 = vsel %vm1863, %v1910, 0
        %v1949 = vsel %vm1864, %v1917, 0
        %v1950 = vadd.bf16 %v1744, %v1918
        %v1951 = vadd.bf16 %v1745, %v1919
        %v1952 = vadd.bf16 %v1746, %v1920
        %v1953 = vadd.bf16 %v1747, %v1921
        %v1954 = vadd.bf16 %v1748, %v1922
        %v1955 = vadd.bf16 %v1749, %v1923
        %v1956 = vadd.bf16 %v1750, %v1924
        %v1957 = vadd.bf16 %v1751, %v1925
        %v1958 = vadd.bf16 %v1752, %v1926
        %v1959 = vadd.bf16 %v1753, %v1927
        %v1960 = vadd.bf16 %v1754, %v1928
        %v1961 = vadd.bf16 %v1755, %v1929
        %v1962 = vadd.bf16 %v1756, %v1930
        %v1963 = vadd.bf16 %v1757, %v1931
        %v1964 = vadd.bf16 %v1758, %v1932
        %v1965 = vadd.bf16 %v1759, %v1933
        %v1966 = vadd.bf16 %v1760, %v1934
        %v1967 = vadd.bf16 %v1761, %v1935
        %v1968 = vadd.bf16 %v1762, %v1936
        %v1969 = vadd.bf16 %v1763, %v1937
        %v1970 = vadd.bf16 %v1764, %v1938
        %v1971 = vadd.bf16 %v1765, %v1939
        %v1972 = vadd.bf16 %v1766, %v1940
        %v1973 = vadd.bf16 %v1767, %v1941
        %v1974 = vadd.bf16 %v1768, %v1942
        %v1975 = vadd.bf16 %v1769, %v1943
        %v1976 = vadd.bf16 %v1770, %v1944
        %v1977 = vadd.bf16 %v1771, %v1945
        %v1978 = vadd.bf16 %v1772, %v1946
        %v1979 = vadd.bf16 %v1773, %v1947
        %v1980 = vadd.bf16 %v1774, %v1948
        %v1981 = vadd.bf16 %v1775, %v1949
        %v1982 = vadd.s32 %v1777, %v1571
        %v1983 = vcvt.s32.f32 %v1982
        %v1985 = vlaneseq
        %v1986 = vshrl.u32 %v1985, 7
        %v1987 = vsub.s32 0, %v1986
        %v1988 = vrot.slane %v1983, %v1987
        %v1989 = vlaneseq
        %v1990 = vshrl.u32 %v1989, 7
        %v1991 = vsub.s32 1, %v1990
        %v1992 = vrot.slane %v1983, %v1991
        %v1993 = vlaneseq
        %v1994 = vshrl.u32 %v1993, 7
        %v1995 = vsub.s32 2, %v1994
        %v1996 = vrot.slane %v1983, %v1995
        %v1997 = vlaneseq
        %v1998 = vshrl.u32 %v1997, 7
        %v1999 = vsub.s32 3, %v1998
        %v2000 = vrot.slane %v1983, %v1999
        %v2005 = vpack.c.bf16 %v1988, %v1988
        %v2006 = vpack.c.bf16 %v1992, %v1992
        %v2007 = vpack.c.bf16 %v1996, %v1996
        %v2008 = vpack.c.bf16 %v2000, %v2000
        %v2010 = vpack.i.b16 %v2005, %v2005
        %v2012 = vlaneseq
        %v2013 = vshrl.u32 %v2012, 7
        %v2014 = vsub.s32 0, %v2013
        %v2015 = vrot.slane %v2010, %v2014
        %v2017 = vpack.i.b16 %v2006, %v2006
        %v2019 = vlaneseq
        %v2020 = vshrl.u32 %v2019, 7
        %v2021 = vsub.s32 0, %v2020
        %v2022 = vrot.slane %v2017, %v2021
        %v2024 = vpack.i.b16 %v2007, %v2007
        %v2026 = vlaneseq
        %v2027 = vshrl.u32 %v2026, 7
        %v2028 = vsub.s32 0, %v2027
        %v2029 = vrot.slane %v2024, %v2028
        %v2031 = vpack.i.b16 %v2008, %v2008
        %v2033 = vlaneseq
        %v2034 = vshrl.u32 %v2033, 7
        %v2035 = vsub.s32 0, %v2034
        %v2036 = vrot.slane %v2031, %v2035
        %vm2037 = vcmp.eq.bf16.partialorder %v202, %v2015
        %vm2038 = vcmp.eq.bf16.partialorder %v202, %v2022
        %vm2039 = vcmp.eq.bf16.partialorder %v202, %v2029
        %vm2040 = vcmp.eq.bf16.partialorder %v202, %v2036
        %vm2041 = vcmp.eq.bf16.partialorder %v203, %v2015
        %vm2042 = vcmp.eq.bf16.partialorder %v203, %v2022
        %vm2043 = vcmp.eq.bf16.partialorder %v203, %v2029
        %vm2044 = vcmp.eq.bf16.partialorder %v203, %v2036
        %vm2045 = vcmp.eq.bf16.partialorder %v750, %v2015
        %vm2046 = vcmp.eq.bf16.partialorder %v750, %v2022
        %vm2047 = vcmp.eq.bf16.partialorder %v750, %v2029
        %vm2048 = vcmp.eq.bf16.partialorder %v750, %v2036
        %vm2049 = vcmp.eq.bf16.partialorder %v751, %v2015
        %vm2050 = vcmp.eq.bf16.partialorder %v751, %v2022
        %vm2051 = vcmp.eq.bf16.partialorder %v751, %v2029
        %vm2052 = vcmp.eq.bf16.partialorder %v751, %v2036
        %vm2053 = vcmp.eq.bf16.partialorder %v1394, %v2015
        %vm2054 = vcmp.eq.bf16.partialorder %v1394, %v2022
        %vm2055 = vcmp.eq.bf16.partialorder %v1394, %v2029
        %vm2056 = vcmp.eq.bf16.partialorder %v1394, %v2036
        %vm2057 = vcmp.eq.bf16.partialorder %v1395, %v2015
        %vm2058 = vcmp.eq.bf16.partialorder %v1395, %v2022
        %vm2059 = vcmp.eq.bf16.partialorder %v1395, %v2029
        %vm2060 = vcmp.eq.bf16.partialorder %v1395, %v2036
        %vm2061 = vcmp.eq.bf16.partialorder %v1396, %v2015
        %vm2062 = vcmp.eq.bf16.partialorder %v1396, %v2022
        %vm2063 = vcmp.eq.bf16.partialorder %v1396, %v2029
        %vm2064 = vcmp.eq.bf16.partialorder %v1396, %v2036
        %vm2065 = vcmp.eq.bf16.partialorder %v1397, %v2015
        %vm2066 = vcmp.eq.bf16.partialorder %v1397, %v2022
        %vm2067 = vcmp.eq.bf16.partialorder %v1397, %v2029
        %vm2068 = vcmp.eq.bf16.partialorder %v1397, %v2036
        %v2070 = vlaneseq
        %v2071 = vshrl.u32 %v2070, 7
        %v2072 = vsub.s32 0, %v2071
        %v2073 = vrot.slane %v1377, %v2072
        %v2074 = vlaneseq
        %v2075 = vshrl.u32 %v2074, 7
        %v2076 = vsub.s32 1, %v2075
        %v2077 = vrot.slane %v1377, %v2076
        %v2078 = vlaneseq
        %v2079 = vshrl.u32 %v2078, 7
        %v2080 = vsub.s32 2, %v2079
        %v2081 = vrot.slane %v1377, %v2080
        %v2082 = vlaneseq
        %v2083 = vshrl.u32 %v2082, 7
        %v2084 = vsub.s32 3, %v2083
        %v2085 = vrot.slane %v1377, %v2084
        %v2090 = vpack.c.bf16 %v2073, %v2073
        %v2091 = vpack.c.bf16 %v2077, %v2077
        %v2092 = vpack.c.bf16 %v2081, %v2081
        %v2093 = vpack.c.bf16 %v2085, %v2085
        %v2095 = vpack.i.b16 %v2090, %v2090
        %v2097 = vlaneseq
        %v2098 = vshrl.u32 %v2097, 7
        %v2099 = vsub.s32 0, %v2098
        %v2100 = vrot.slane %v2095, %v2099
        %v2102 = vpack.i.b16 %v2091, %v2091
        %v2104 = vlaneseq
        %v2105 = vshrl.u32 %v2104, 7
        %v2106 = vsub.s32 0, %v2105
        %v2107 = vrot.slane %v2102, %v2106
        %v2109 = vpack.i.b16 %v2092, %v2092
        %v2111 = vlaneseq
        %v2112 = vshrl.u32 %v2111, 7
        %v2113 = vsub.s32 0, %v2112
        %v2114 = vrot.slane %v2109, %v2113
        %v2116 = vpack.i.b16 %v2093, %v2093
        %v2118 = vlaneseq
        %v2119 = vshrl.u32 %v2118, 7
        %v2120 = vsub.s32 0, %v2119
        %v2121 = vrot.slane %v2116, %v2120
        %v2122 = vsel %vm2037, %v2100, 0
        %v2123 = vsel %vm2038, %v2107, 0
        %v2124 = vsel %vm2039, %v2114, 0
        %v2125 = vsel %vm2040, %v2121, 0
        %v2126 = vsel %vm2041, %v2100, 0
        %v2127 = vsel %vm2042, %v2107, 0
        %v2128 = vsel %vm2043, %v2114, 0
        %v2129 = vsel %vm2044, %v2121, 0
        %v2130 = vsel %vm2045, %v2100, 0
        %v2131 = vsel %vm2046, %v2107, 0
        %v2132 = vsel %vm2047, %v2114, 0
        %v2133 = vsel %vm2048, %v2121, 0
        %v2134 = vsel %vm2049, %v2100, 0
        %v2135 = vsel %vm2050, %v2107, 0
        %v2136 = vsel %vm2051, %v2114, 0
        %v2137 = vsel %vm2052, %v2121, 0
        %v2138 = vsel %vm2053, %v2100, 0
        %v2139 = vsel %vm2054, %v2107, 0
        %v2140 = vsel %vm2055, %v2114, 0
        %v2141 = vsel %vm2056, %v2121, 0
        %v2142 = vsel %vm2057, %v2100, 0
        %v2143 = vsel %vm2058, %v2107, 0
        %v2144 = vsel %vm2059, %v2114, 0
        %v2145 = vsel %vm2060, %v2121, 0
        %v2146 = vsel %vm2061, %v2100, 0
        %v2147 = vsel %vm2062, %v2107, 0
        %v2148 = vsel %vm2063, %v2114, 0
        %v2149 = vsel %vm2064, %v2121, 0
        %v2150 = vsel %vm2065, %v2100, 0
        %v2151 = vsel %vm2066, %v2107, 0
        %v2152 = vsel %vm2067, %v2114, 0
        %v2153 = vsel %vm2068, %v2121, 0
        %v2154 = vadd.bf16 %v1950, %v2122
        %v2155 = vadd.bf16 %v1951, %v2123
        %v2156 = vadd.bf16 %v1952, %v2124
        %v2157 = vadd.bf16 %v1953, %v2125
        %v2158 = vadd.bf16 %v1954, %v2126
        %v2159 = vadd.bf16 %v1955, %v2127
        %v2160 = vadd.bf16 %v1956, %v2128
        %v2161 = vadd.bf16 %v1957, %v2129
        %v2162 = vadd.bf16 %v1958, %v2130
        %v2163 = vadd.bf16 %v1959, %v2131
        %v2164 = vadd.bf16 %v1960, %v2132
        %v2165 = vadd.bf16 %v1961, %v2133
        %v2166 = vadd.bf16 %v1962, %v2134
        %v2167 = vadd.bf16 %v1963, %v2135
        %v2168 = vadd.bf16 %v1964, %v2136
        %v2169 = vadd.bf16 %v1965, %v2137
        %v2170 = vadd.bf16 %v1966, %v2138
        %v2171 = vadd.bf16 %v1967, %v2139
        %v2172 = vadd.bf16 %v1968, %v2140
        %v2173 = vadd.bf16 %v1969, %v2141
        %v2174 = vadd.bf16 %v1970, %v2142
        %v2175 = vadd.bf16 %v1971, %v2143
        %v2176 = vadd.bf16 %v1972, %v2144
        %v2177 = vadd.bf16 %v1973, %v2145
        %v2178 = vadd.bf16 %v1974, %v2146
        %v2179 = vadd.bf16 %v1975, %v2147
        %v2180 = vadd.bf16 %v1976, %v2148
        %v2181 = vadd.bf16 %v1977, %v2149
        %v2182 = vadd.bf16 %v1978, %v2150
        %v2183 = vadd.bf16 %v1979, %v2151
        %v2184 = vadd.bf16 %v1980, %v2152
        %v2185 = vadd.bf16 %v1981, %v2153
        %v2186 = vmul.f32 %v176, 0.93749994
        %v2187 = vmul.f32 %v178, 0.93749994
        %v2188 = vfloor.f32 %v2186
        %v2189 = vfloor.f32 %v2187
        %v2190 = vsub.f32 %v2186, %v2188
        %v2191 = vsub.f32 %v2187, %v2189
        %v2192 = vcvt.f32.s32.to.zero.pseudo %v2188
        %v2193 = vcvt.f32.s32.to.zero.pseudo %v2189
        %v2194 = vsub.f32 1.0, %v2190
        %v2195 = vsub.f32 1.0, %v2191
        %v2196 = vmul.f32 %v2194, %v2195
        %v2197 = vmul.f32 %v2194, %v2191
        %v2198 = vmul.f32 %v2190, %v2195
        %v2199 = vmul.f32 %v2190, %v2191
        %v2200 = vmul.u32 %v2193, 2654435761
        %v2201 = vxor.u32 %v2192, %v2200
        %v2202 = vand.u32 %v2201, 127
        %v2203 = vcvt.s32.f32 %v2202
        %v2205 = vlaneseq
        %v2206 = vshrl.u32 %v2205, 7
        %v2207 = vsub.s32 0, %v2206
        %v2208 = vrot.slane %v2203, %v2207
        %v2209 = vlaneseq
        %v2210 = vshrl.u32 %v2209, 7
        %v2211 = vsub.s32 1, %v2210
        %v2212 = vrot.slane %v2203, %v2211
        %v2213 = vlaneseq
        %v2214 = vshrl.u32 %v2213, 7
        %v2215 = vsub.s32 2, %v2214
        %v2216 = vrot.slane %v2203, %v2215
        %v2217 = vlaneseq
        %v2218 = vshrl.u32 %v2217, 7
        %v2219 = vsub.s32 3, %v2218
        %v2220 = vrot.slane %v2203, %v2219
        %v2225 = vpack.c.bf16 %v2208, %v2208
        %v2226 = vpack.c.bf16 %v2212, %v2212
        %v2227 = vpack.c.bf16 %v2216, %v2216
        %v2228 = vpack.c.bf16 %v2220, %v2220
        %v2230 = vpack.i.b16 %v2225, %v2225
        %v2232 = vlaneseq
        %v2233 = vshrl.u32 %v2232, 7
        %v2234 = vsub.s32 0, %v2233
        %v2235 = vrot.slane %v2230, %v2234
        %v2237 = vpack.i.b16 %v2226, %v2226
        %v2239 = vlaneseq
        %v2240 = vshrl.u32 %v2239, 7
        %v2241 = vsub.s32 0, %v2240
        %v2242 = vrot.slane %v2237, %v2241
        %v2244 = vpack.i.b16 %v2227, %v2227
        %v2246 = vlaneseq
        %v2247 = vshrl.u32 %v2246, 7
        %v2248 = vsub.s32 0, %v2247
        %v2249 = vrot.slane %v2244, %v2248
        %v2251 = vpack.i.b16 %v2228, %v2228
        %v2253 = vlaneseq
        %v2254 = vshrl.u32 %v2253, 7
        %v2255 = vsub.s32 0, %v2254
        %v2256 = vrot.slane %v2251, %v2255
        %vm2257 = vcmp.eq.bf16.partialorder %v202, %v2235
        %vm2258 = vcmp.eq.bf16.partialorder %v202, %v2242
        %vm2259 = vcmp.eq.bf16.partialorder %v202, %v2249
        %vm2260 = vcmp.eq.bf16.partialorder %v202, %v2256
        %vm2261 = vcmp.eq.bf16.partialorder %v203, %v2235
        %vm2262 = vcmp.eq.bf16.partialorder %v203, %v2242
        %vm2263 = vcmp.eq.bf16.partialorder %v203, %v2249
        %vm2264 = vcmp.eq.bf16.partialorder %v203, %v2256
        %vm2265 = vcmp.eq.bf16.partialorder %v750, %v2235
        %vm2266 = vcmp.eq.bf16.partialorder %v750, %v2242
        %vm2267 = vcmp.eq.bf16.partialorder %v750, %v2249
        %vm2268 = vcmp.eq.bf16.partialorder %v750, %v2256
        %vm2269 = vcmp.eq.bf16.partialorder %v751, %v2235
        %vm2270 = vcmp.eq.bf16.partialorder %v751, %v2242
        %vm2271 = vcmp.eq.bf16.partialorder %v751, %v2249
        %vm2272 = vcmp.eq.bf16.partialorder %v751, %v2256
        %vm2273 = vcmp.eq.bf16.partialorder %v1394, %v2235
        %vm2274 = vcmp.eq.bf16.partialorder %v1394, %v2242
        %vm2275 = vcmp.eq.bf16.partialorder %v1394, %v2249
        %vm2276 = vcmp.eq.bf16.partialorder %v1394, %v2256
        %vm2277 = vcmp.eq.bf16.partialorder %v1395, %v2235
        %vm2278 = vcmp.eq.bf16.partialorder %v1395, %v2242
        %vm2279 = vcmp.eq.bf16.partialorder %v1395, %v2249
        %vm2280 = vcmp.eq.bf16.partialorder %v1395, %v2256
        %vm2281 = vcmp.eq.bf16.partialorder %v1396, %v2235
        %vm2282 = vcmp.eq.bf16.partialorder %v1396, %v2242
        %vm2283 = vcmp.eq.bf16.partialorder %v1396, %v2249
        %vm2284 = vcmp.eq.bf16.partialorder %v1396, %v2256
        %vm2285 = vcmp.eq.bf16.partialorder %v1397, %v2235
        %vm2286 = vcmp.eq.bf16.partialorder %v1397, %v2242
        %vm2287 = vcmp.eq.bf16.partialorder %v1397, %v2249
        %vm2288 = vcmp.eq.bf16.partialorder %v1397, %v2256
        %v2290 = vlaneseq
        %v2291 = vshrl.u32 %v2290, 7
        %v2292 = vsub.s32 0, %v2291
        %v2293 = vrot.slane %v2196, %v2292
        %v2294 = vlaneseq
        %v2295 = vshrl.u32 %v2294, 7
        %v2296 = vsub.s32 1, %v2295
        %v2297 = vrot.slane %v2196, %v2296
        %v2298 = vlaneseq
        %v2299 = vshrl.u32 %v2298, 7
        %v2300 = vsub.s32 2, %v2299
        %v2301 = vrot.slane %v2196, %v2300
        %v2302 = vlaneseq
        %v2303 = vshrl.u32 %v2302, 7
        %v2304 = vsub.s32 3, %v2303
        %v2305 = vrot.slane %v2196, %v2304
        %v2310 = vpack.c.bf16 %v2293, %v2293
        %v2311 = vpack.c.bf16 %v2297, %v2297
        %v2312 = vpack.c.bf16 %v2301, %v2301
        %v2313 = vpack.c.bf16 %v2305, %v2305
        %v2315 = vpack.i.b16 %v2310, %v2310
        %v2317 = vlaneseq
        %v2318 = vshrl.u32 %v2317, 7
        %v2319 = vsub.s32 0, %v2318
        %v2320 = vrot.slane %v2315, %v2319
        %v2322 = vpack.i.b16 %v2311, %v2311
        %v2324 = vlaneseq
        %v2325 = vshrl.u32 %v2324, 7
        %v2326 = vsub.s32 0, %v2325
        %v2327 = vrot.slane %v2322, %v2326
        %v2329 = vpack.i.b16 %v2312, %v2312
        %v2331 = vlaneseq
        %v2332 = vshrl.u32 %v2331, 7
        %v2333 = vsub.s32 0, %v2332
        %v2334 = vrot.slane %v2329, %v2333
        %v2336 = vpack.i.b16 %v2313, %v2313
        %v2338 = vlaneseq
        %v2339 = vshrl.u32 %v2338, 7
        %v2340 = vsub.s32 0, %v2339
        %v2341 = vrot.slane %v2336, %v2340
        %v2342 = vsel %vm2257, %v2320, 0
        %v2343 = vsel %vm2258, %v2327, 0
        %v2344 = vsel %vm2259, %v2334, 0
        %v2345 = vsel %vm2260, %v2341, 0
        %v2346 = vsel %vm2261, %v2320, 0
        %v2347 = vsel %vm2262, %v2327, 0
        %v2348 = vsel %vm2263, %v2334, 0
        %v2349 = vsel %vm2264, %v2341, 0
        %v2350 = vsel %vm2265, %v2320, 0
        %v2351 = vsel %vm2266, %v2327, 0
        %v2352 = vsel %vm2267, %v2334, 0
        %v2353 = vsel %vm2268, %v2341, 0
        %v2354 = vsel %vm2269, %v2320, 0
        %v2355 = vsel %vm2270, %v2327, 0
        %v2356 = vsel %vm2271, %v2334, 0
        %v2357 = vsel %vm2272, %v2341, 0
        %v2358 = vsel %vm2273, %v2320, 0
        %v2359 = vsel %vm2274, %v2327, 0
        %v2360 = vsel %vm2275, %v2334, 0
        %v2361 = vsel %vm2276, %v2341, 0
        %v2362 = vsel %vm2277, %v2320, 0
        %v2363 = vsel %vm2278, %v2327, 0
        %v2364 = vsel %vm2279, %v2334, 0
        %v2365 = vsel %vm2280, %v2341, 0
        %v2366 = vsel %vm2281, %v2320, 0
        %v2367 = vsel %vm2282, %v2327, 0
        %v2368 = vsel %vm2283, %v2334, 0
        %v2369 = vsel %vm2284, %v2341, 0
        %v2370 = vsel %vm2285, %v2320, 0
        %v2371 = vsel %vm2286, %v2327, 0
        %v2372 = vsel %vm2287, %v2334, 0
        %v2373 = vsel %vm2288, %v2341, 0
        %v2374 = vadd.s32 %v2193, 1
        %v2375 = vmul.u32 %v2374, 2654435761
        %v2376 = vxor.u32 %v2192, %v2375
        %v2377 = vand.u32 %v2376, 127
        %v2378 = vcvt.s32.f32 %v2377
        %v2380 = vlaneseq
        %v2381 = vshrl.u32 %v2380, 7
        %v2382 = vsub.s32 0, %v2381
        %v2383 = vrot.slane %v2378, %v2382
        %v2384 = vlaneseq
        %v2385 = vshrl.u32 %v2384, 7
        %v2386 = vsub.s32 1, %v2385
        %v2387 = vrot.slane %v2378, %v2386
        %v2388 = vlaneseq
        %v2389 = vshrl.u32 %v2388, 7
        %v2390 = vsub.s32 2, %v2389
        %v2391 = vrot.slane %v2378, %v2390
        %v2392 = vlaneseq
        %v2393 = vshrl.u32 %v2392, 7
        %v2394 = vsub.s32 3, %v2393
        %v2395 = vrot.slane %v2378, %v2394
        %v2400 = vpack.c.bf16 %v2383, %v2383
        %v2401 = vpack.c.bf16 %v2387, %v2387
        %v2402 = vpack.c.bf16 %v2391, %v2391
        %v2403 = vpack.c.bf16 %v2395, %v2395
        %v2405 = vpack.i.b16 %v2400, %v2400
        %v2407 = vlaneseq
        %v2408 = vshrl.u32 %v2407, 7
        %v2409 = vsub.s32 0, %v2408
        %v2410 = vrot.slane %v2405, %v2409
        %v2412 = vpack.i.b16 %v2401, %v2401
        %v2414 = vlaneseq
        %v2415 = vshrl.u32 %v2414, 7
        %v2416 = vsub.s32 0, %v2415
        %v2417 = vrot.slane %v2412, %v2416
        %v2419 = vpack.i.b16 %v2402, %v2402
        %v2421 = vlaneseq
        %v2422 = vshrl.u32 %v2421, 7
        %v2423 = vsub.s32 0, %v2422
        %v2424 = vrot.slane %v2419, %v2423
        %v2426 = vpack.i.b16 %v2403, %v2403
        %v2428 = vlaneseq
        %v2429 = vshrl.u32 %v2428, 7
        %v2430 = vsub.s32 0, %v2429
        %v2431 = vrot.slane %v2426, %v2430
        %vm2432 = vcmp.eq.bf16.partialorder %v202, %v2410
        %vm2433 = vcmp.eq.bf16.partialorder %v202, %v2417
        %vm2434 = vcmp.eq.bf16.partialorder %v202, %v2424
        %vm2435 = vcmp.eq.bf16.partialorder %v202, %v2431
        %vm2436 = vcmp.eq.bf16.partialorder %v203, %v2410
        %vm2437 = vcmp.eq.bf16.partialorder %v203, %v2417
        %vm2438 = vcmp.eq.bf16.partialorder %v203, %v2424
        %vm2439 = vcmp.eq.bf16.partialorder %v203, %v2431
        %vm2440 = vcmp.eq.bf16.partialorder %v750, %v2410
        %vm2441 = vcmp.eq.bf16.partialorder %v750, %v2417
        %vm2442 = vcmp.eq.bf16.partialorder %v750, %v2424
        %vm2443 = vcmp.eq.bf16.partialorder %v750, %v2431
        %vm2444 = vcmp.eq.bf16.partialorder %v751, %v2410
        %vm2445 = vcmp.eq.bf16.partialorder %v751, %v2417
        %vm2446 = vcmp.eq.bf16.partialorder %v751, %v2424
        %vm2447 = vcmp.eq.bf16.partialorder %v751, %v2431
        %vm2448 = vcmp.eq.bf16.partialorder %v1394, %v2410
        %vm2449 = vcmp.eq.bf16.partialorder %v1394, %v2417
        %vm2450 = vcmp.eq.bf16.partialorder %v1394, %v2424
        %vm2451 = vcmp.eq.bf16.partialorder %v1394, %v2431
        %vm2452 = vcmp.eq.bf16.partialorder %v1395, %v2410
        %vm2453 = vcmp.eq.bf16.partialorder %v1395, %v2417
        %vm2454 = vcmp.eq.bf16.partialorder %v1395, %v2424
        %vm2455 = vcmp.eq.bf16.partialorder %v1395, %v2431
        %vm2456 = vcmp.eq.bf16.partialorder %v1396, %v2410
        %vm2457 = vcmp.eq.bf16.partialorder %v1396, %v2417
        %vm2458 = vcmp.eq.bf16.partialorder %v1396, %v2424
        %vm2459 = vcmp.eq.bf16.partialorder %v1396, %v2431
        %vm2460 = vcmp.eq.bf16.partialorder %v1397, %v2410
        %vm2461 = vcmp.eq.bf16.partialorder %v1397, %v2417
        %vm2462 = vcmp.eq.bf16.partialorder %v1397, %v2424
        %vm2463 = vcmp.eq.bf16.partialorder %v1397, %v2431
        %v2465 = vlaneseq
        %v2466 = vshrl.u32 %v2465, 7
        %v2467 = vsub.s32 0, %v2466
        %v2468 = vrot.slane %v2197, %v2467
        %v2469 = vlaneseq
        %v2470 = vshrl.u32 %v2469, 7
        %v2471 = vsub.s32 1, %v2470
        %v2472 = vrot.slane %v2197, %v2471
        %v2473 = vlaneseq
        %v2474 = vshrl.u32 %v2473, 7
        %v2475 = vsub.s32 2, %v2474
        %v2476 = vrot.slane %v2197, %v2475
        %v2477 = vlaneseq
        %v2478 = vshrl.u32 %v2477, 7
        %v2479 = vsub.s32 3, %v2478
        %v2480 = vrot.slane %v2197, %v2479
        %v2485 = vpack.c.bf16 %v2468, %v2468
        %v2486 = vpack.c.bf16 %v2472, %v2472
        %v2487 = vpack.c.bf16 %v2476, %v2476
        %v2488 = vpack.c.bf16 %v2480, %v2480
        %v2490 = vpack.i.b16 %v2485, %v2485
        %v2492 = vlaneseq
        %v2493 = vshrl.u32 %v2492, 7
        %v2494 = vsub.s32 0, %v2493
        %v2495 = vrot.slane %v2490, %v2494
        %v2497 = vpack.i.b16 %v2486, %v2486
        %v2499 = vlaneseq
        %v2500 = vshrl.u32 %v2499, 7
        %v2501 = vsub.s32 0, %v2500
        %v2502 = vrot.slane %v2497, %v2501
        %v2504 = vpack.i.b16 %v2487, %v2487
        %v2506 = vlaneseq
        %v2507 = vshrl.u32 %v2506, 7
        %v2508 = vsub.s32 0, %v2507
        %v2509 = vrot.slane %v2504, %v2508
        %v2511 = vpack.i.b16 %v2488, %v2488
        %v2513 = vlaneseq
        %v2514 = vshrl.u32 %v2513, 7
        %v2515 = vsub.s32 0, %v2514
        %v2516 = vrot.slane %v2511, %v2515
        %v2517 = vsel %vm2432, %v2495, 0
        %v2518 = vsel %vm2433, %v2502, 0
        %v2519 = vsel %vm2434, %v2509, 0
        %v2520 = vsel %vm2435, %v2516, 0
        %v2521 = vsel %vm2436, %v2495, 0
        %v2522 = vsel %vm2437, %v2502, 0
        %v2523 = vsel %vm2438, %v2509, 0
        %v2524 = vsel %vm2439, %v2516, 0
        %v2525 = vsel %vm2440, %v2495, 0
        %v2526 = vsel %vm2441, %v2502, 0
        %v2527 = vsel %vm2442, %v2509, 0
        %v2528 = vsel %vm2443, %v2516, 0
        %v2529 = vsel %vm2444, %v2495, 0
        %v2530 = vsel %vm2445, %v2502, 0
        %v2531 = vsel %vm2446, %v2509, 0
        %v2532 = vsel %vm2447, %v2516, 0
        %v2533 = vsel %vm2448, %v2495, 0
        %v2534 = vsel %vm2449, %v2502, 0
        %v2535 = vsel %vm2450, %v2509, 0
        %v2536 = vsel %vm2451, %v2516, 0
        %v2537 = vsel %vm2452, %v2495, 0
        %v2538 = vsel %vm2453, %v2502, 0
        %v2539 = vsel %vm2454, %v2509, 0
        %v2540 = vsel %vm2455, %v2516, 0
        %v2541 = vsel %vm2456, %v2495, 0
        %v2542 = vsel %vm2457, %v2502, 0
        %v2543 = vsel %vm2458, %v2509, 0
        %v2544 = vsel %vm2459, %v2516, 0
        %v2545 = vsel %vm2460, %v2495, 0
        %v2546 = vsel %vm2461, %v2502, 0
        %v2547 = vsel %vm2462, %v2509, 0
        %v2548 = vsel %vm2463, %v2516, 0
        %v2549 = vadd.bf16 %v2342, %v2517
        %v2550 = vadd.bf16 %v2343, %v2518
        %v2551 = vadd.bf16 %v2344, %v2519
        %v2552 = vadd.bf16 %v2345, %v2520
        %v2553 = vadd.bf16 %v2346, %v2521
        %v2554 = vadd.bf16 %v2347, %v2522
        %v2555 = vadd.bf16 %v2348, %v2523
        %v2556 = vadd.bf16 %v2349, %v2524
        %v2557 = vadd.bf16 %v2350, %v2525
        %v2558 = vadd.bf16 %v2351, %v2526
        %v2559 = vadd.bf16 %v2352, %v2527
        %v2560 = vadd.bf16 %v2353, %v2528
        %v2561 = vadd.bf16 %v2354, %v2529
        %v2562 = vadd.bf16 %v2355, %v2530
        %v2563 = vadd.bf16 %v2356, %v2531
        %v2564 = vadd.bf16 %v2357, %v2532
        %v2565 = vadd.bf16 %v2358, %v2533
        %v2566 = vadd.bf16 %v2359, %v2534
        %v2567 = vadd.bf16 %v2360, %v2535
        %v2568 = vadd.bf16 %v2361, %v2536
        %v2569 = vadd.bf16 %v2362, %v2537
        %v2570 = vadd.bf16 %v2363, %v2538
        %v2571 = vadd.bf16 %v2364, %v2539
        %v2572 = vadd.bf16 %v2365, %v2540
        %v2573 = vadd.bf16 %v2366, %v2541
        %v2574 = vadd.bf16 %v2367, %v2542
        %v2575 = vadd.bf16 %v2368, %v2543
        %v2576 = vadd.bf16 %v2369, %v2544
        %v2577 = vadd.bf16 %v2370, %v2545
        %v2578 = vadd.bf16 %v2371, %v2546
        %v2579 = vadd.bf16 %v2372, %v2547
        %v2580 = vadd.bf16 %v2373, %v2548
        %v2581 = vadd.s32 %v2192, 1
        %v2582 = vxor.u32 %v2581, %v2200
        %v2583 = vand.u32 %v2582, 127
        %v2584 = vcvt.s32.f32 %v2583
        %v2586 = vlaneseq
        %v2587 = vshrl.u32 %v2586, 7
        %v2588 = vsub.s32 0, %v2587
        %v2589 = vrot.slane %v2584, %v2588
        %v2590 = vlaneseq
        %v2591 = vshrl.u32 %v2590, 7
        %v2592 = vsub.s32 1, %v2591
        %v2593 = vrot.slane %v2584, %v2592
        %v2594 = vlaneseq
        %v2595 = vshrl.u32 %v2594, 7
        %v2596 = vsub.s32 2, %v2595
        %v2597 = vrot.slane %v2584, %v2596
        %v2598 = vlaneseq
        %v2599 = vshrl.u32 %v2598, 7
        %v2600 = vsub.s32 3, %v2599
        %v2601 = vrot.slane %v2584, %v2600
        %v2606 = vpack.c.bf16 %v2589, %v2589
        %v2607 = vpack.c.bf16 %v2593, %v2593
        %v2608 = vpack.c.bf16 %v2597, %v2597
        %v2609 = vpack.c.bf16 %v2601, %v2601
        %v2611 = vpack.i.b16 %v2606, %v2606
        %v2613 = vlaneseq
        %v2614 = vshrl.u32 %v2613, 7
        %v2615 = vsub.s32 0, %v2614
        %v2616 = vrot.slane %v2611, %v2615
        %v2618 = vpack.i.b16 %v2607, %v2607
        %v2620 = vlaneseq
        %v2621 = vshrl.u32 %v2620, 7
        %v2622 = vsub.s32 0, %v2621
        %v2623 = vrot.slane %v2618, %v2622
        %v2625 = vpack.i.b16 %v2608, %v2608
        %v2627 = vlaneseq
        %v2628 = vshrl.u32 %v2627, 7
        %v2629 = vsub.s32 0, %v2628
        %v2630 = vrot.slane %v2625, %v2629
        %v2632 = vpack.i.b16 %v2609, %v2609
        %v2634 = vlaneseq
        %v2635 = vshrl.u32 %v2634, 7
        %v2636 = vsub.s32 0, %v2635
        %v2637 = vrot.slane %v2632, %v2636
        %vm2638 = vcmp.eq.bf16.partialorder %v202, %v2616
        %vm2639 = vcmp.eq.bf16.partialorder %v202, %v2623
        %vm2640 = vcmp.eq.bf16.partialorder %v202, %v2630
        %vm2641 = vcmp.eq.bf16.partialorder %v202, %v2637
        %vm2642 = vcmp.eq.bf16.partialorder %v203, %v2616
        %vm2643 = vcmp.eq.bf16.partialorder %v203, %v2623
        %vm2644 = vcmp.eq.bf16.partialorder %v203, %v2630
        %vm2645 = vcmp.eq.bf16.partialorder %v203, %v2637
        %vm2646 = vcmp.eq.bf16.partialorder %v750, %v2616
        %vm2647 = vcmp.eq.bf16.partialorder %v750, %v2623
        %vm2648 = vcmp.eq.bf16.partialorder %v750, %v2630
        %vm2649 = vcmp.eq.bf16.partialorder %v750, %v2637
        %vm2650 = vcmp.eq.bf16.partialorder %v751, %v2616
        %vm2651 = vcmp.eq.bf16.partialorder %v751, %v2623
        %vm2652 = vcmp.eq.bf16.partialorder %v751, %v2630
        %vm2653 = vcmp.eq.bf16.partialorder %v751, %v2637
        %vm2654 = vcmp.eq.bf16.partialorder %v1394, %v2616
        %vm2655 = vcmp.eq.bf16.partialorder %v1394, %v2623
        %vm2656 = vcmp.eq.bf16.partialorder %v1394, %v2630
        %vm2657 = vcmp.eq.bf16.partialorder %v1394, %v2637
        %vm2658 = vcmp.eq.bf16.partialorder %v1395, %v2616
        %vm2659 = vcmp.eq.bf16.partialorder %v1395, %v2623
        %vm2660 = vcmp.eq.bf16.partialorder %v1395, %v2630
        %vm2661 = vcmp.eq.bf16.partialorder %v1395, %v2637
        %vm2662 = vcmp.eq.bf16.partialorder %v1396, %v2616
        %vm2663 = vcmp.eq.bf16.partialorder %v1396, %v2623
        %vm2664 = vcmp.eq.bf16.partialorder %v1396, %v2630
        %vm2665 = vcmp.eq.bf16.partialorder %v1396, %v2637
        %vm2666 = vcmp.eq.bf16.partialorder %v1397, %v2616
        %vm2667 = vcmp.eq.bf16.partialorder %v1397, %v2623
        %vm2668 = vcmp.eq.bf16.partialorder %v1397, %v2630
        %vm2669 = vcmp.eq.bf16.partialorder %v1397, %v2637
        %v2671 = vlaneseq
        %v2672 = vshrl.u32 %v2671, 7
        %v2673 = vsub.s32 0, %v2672
        %v2674 = vrot.slane %v2198, %v2673
        %v2675 = vlaneseq
        %v2676 = vshrl.u32 %v2675, 7
        %v2677 = vsub.s32 1, %v2676
        %v2678 = vrot.slane %v2198, %v2677
        %v2679 = vlaneseq
        %v2680 = vshrl.u32 %v2679, 7
        %v2681 = vsub.s32 2, %v2680
        %v2682 = vrot.slane %v2198, %v2681
        %v2683 = vlaneseq
        %v2684 = vshrl.u32 %v2683, 7
        %v2685 = vsub.s32 3, %v2684
        %v2686 = vrot.slane %v2198, %v2685
        %v2691 = vpack.c.bf16 %v2674, %v2674
        %v2692 = vpack.c.bf16 %v2678, %v2678
        %v2693 = vpack.c.bf16 %v2682, %v2682
        %v2694 = vpack.c.bf16 %v2686, %v2686
        %v2696 = vpack.i.b16 %v2691, %v2691
        %v2698 = vlaneseq
        %v2699 = vshrl.u32 %v2698, 7
        %v2700 = vsub.s32 0, %v2699
        %v2701 = vrot.slane %v2696, %v2700
        %v2703 = vpack.i.b16 %v2692, %v2692
        %v2705 = vlaneseq
        %v2706 = vshrl.u32 %v2705, 7
        %v2707 = vsub.s32 0, %v2706
        %v2708 = vrot.slane %v2703, %v2707
        %v2710 = vpack.i.b16 %v2693, %v2693
        %v2712 = vlaneseq
        %v2713 = vshrl.u32 %v2712, 7
        %v2714 = vsub.s32 0, %v2713
        %v2715 = vrot.slane %v2710, %v2714
        %v2717 = vpack.i.b16 %v2694, %v2694
        %v2719 = vlaneseq
        %v2720 = vshrl.u32 %v2719, 7
        %v2721 = vsub.s32 0, %v2720
        %v2722 = vrot.slane %v2717, %v2721
        %v2723 = vsel %vm2638, %v2701, 0
        %v2724 = vsel %vm2639, %v2708, 0
        %v2725 = vsel %vm2640, %v2715, 0
        %v2726 = vsel %vm2641, %v2722, 0
        %v2727 = vsel %vm2642, %v2701, 0
        %v2728 = vsel %vm2643, %v2708, 0
        %v2729 = vsel %vm2644, %v2715, 0
        %v2730 = vsel %vm2645, %v2722, 0
        %v2731 = vsel %vm2646, %v2701, 0
        %v2732 = vsel %vm2647, %v2708, 0
        %v2733 = vsel %vm2648, %v2715, 0
        %v2734 = vsel %vm2649, %v2722, 0
        %v2735 = vsel %vm2650, %v2701, 0
        %v2736 = vsel %vm2651, %v2708, 0
        %v2737 = vsel %vm2652, %v2715, 0
        %v2738 = vsel %vm2653, %v2722, 0
        %v2739 = vsel %vm2654, %v2701, 0
        %v2740 = vsel %vm2655, %v2708, 0
        %v2741 = vsel %vm2656, %v2715, 0
        %v2742 = vsel %vm2657, %v2722, 0
        %v2743 = vsel %vm2658, %v2701, 0
        %v2744 = vsel %vm2659, %v2708, 0
        %v2745 = vsel %vm2660, %v2715, 0
        %v2746 = vsel %vm2661, %v2722, 0
        %v2747 = vsel %vm2662, %v2701, 0
        %v2748 = vsel %vm2663, %v2708, 0
        %v2749 = vsel %vm2664, %v2715, 0
        %v2750 = vsel %vm2665, %v2722, 0
        %v2751 = vsel %vm2666, %v2701, 0
        %v2752 = vsel %vm2667, %v2708, 0
        %v2753 = vsel %vm2668, %v2715, 0
        %v2754 = vsel %vm2669, %v2722, 0
        %v2755 = vadd.bf16 %v2549, %v2723
        %v2756 = vadd.bf16 %v2550, %v2724
        %v2757 = vadd.bf16 %v2551, %v2725
        %v2758 = vadd.bf16 %v2552, %v2726
        %v2759 = vadd.bf16 %v2553, %v2727
        %v2760 = vadd.bf16 %v2554, %v2728
        %v2761 = vadd.bf16 %v2555, %v2729
        %v2762 = vadd.bf16 %v2556, %v2730
        %v2763 = vadd.bf16 %v2557, %v2731
        %v2764 = vadd.bf16 %v2558, %v2732
        %v2765 = vadd.bf16 %v2559, %v2733
        %v2766 = vadd.bf16 %v2560, %v2734
        %v2767 = vadd.bf16 %v2561, %v2735
        %v2768 = vadd.bf16 %v2562, %v2736
        %v2769 = vadd.bf16 %v2563, %v2737
        %v2770 = vadd.bf16 %v2564, %v2738
        %v2771 = vadd.bf16 %v2565, %v2739
        %v2772 = vadd.bf16 %v2566, %v2740
        %v2773 = vadd.bf16 %v2567, %v2741
        %v2774 = vadd.bf16 %v2568, %v2742
        %v2775 = vadd.bf16 %v2569, %v2743
        %v2776 = vadd.bf16 %v2570, %v2744
        %v2777 = vadd.bf16 %v2571, %v2745
        %v2778 = vadd.bf16 %v2572, %v2746
        %v2779 = vadd.bf16 %v2573, %v2747
        %v2780 = vadd.bf16 %v2574, %v2748
        %v2781 = vadd.bf16 %v2575, %v2749
        %v2782 = vadd.bf16 %v2576, %v2750
        %v2783 = vadd.bf16 %v2577, %v2751
        %v2784 = vadd.bf16 %v2578, %v2752
        %v2785 = vadd.bf16 %v2579, %v2753
        %v2786 = vadd.bf16 %v2580, %v2754
        %v2787 = vxor.u32 %v2581, %v2375
        %v2788 = vand.u32 %v2787, 127
        %v2789 = vcvt.s32.f32 %v2788
        %v2791 = vlaneseq
        %v2792 = vshrl.u32 %v2791, 7
        %v2793 = vsub.s32 0, %v2792
        %v2794 = vrot.slane %v2789, %v2793
        %v2795 = vlaneseq
        %v2796 = vshrl.u32 %v2795, 7
        %v2797 = vsub.s32 1, %v2796
        %v2798 = vrot.slane %v2789, %v2797
        %v2799 = vlaneseq
        %v2800 = vshrl.u32 %v2799, 7
        %v2801 = vsub.s32 2, %v2800
        %v2802 = vrot.slane %v2789, %v2801
        %v2803 = vlaneseq
        %v2804 = vshrl.u32 %v2803, 7
        %v2805 = vsub.s32 3, %v2804
        %v2806 = vrot.slane %v2789, %v2805
        %v2811 = vpack.c.bf16 %v2794, %v2794
        %v2812 = vpack.c.bf16 %v2798, %v2798
        %v2813 = vpack.c.bf16 %v2802, %v2802
        %v2814 = vpack.c.bf16 %v2806, %v2806
        %v2816 = vpack.i.b16 %v2811, %v2811
        %v2818 = vlaneseq
        %v2819 = vshrl.u32 %v2818, 7
        %v2820 = vsub.s32 0, %v2819
        %v2821 = vrot.slane %v2816, %v2820
        %v2823 = vpack.i.b16 %v2812, %v2812
        %v2825 = vlaneseq
        %v2826 = vshrl.u32 %v2825, 7
        %v2827 = vsub.s32 0, %v2826
        %v2828 = vrot.slane %v2823, %v2827
        %v2830 = vpack.i.b16 %v2813, %v2813
        %v2832 = vlaneseq
        %v2833 = vshrl.u32 %v2832, 7
        %v2834 = vsub.s32 0, %v2833
        %v2835 = vrot.slane %v2830, %v2834
        %v2837 = vpack.i.b16 %v2814, %v2814
        %v2839 = vlaneseq
        %v2840 = vshrl.u32 %v2839, 7
        %v2841 = vsub.s32 0, %v2840
        %v2842 = vrot.slane %v2837, %v2841
        %vm2843 = vcmp.eq.bf16.partialorder %v202, %v2821
        %vm2844 = vcmp.eq.bf16.partialorder %v202, %v2828
        %vm2845 = vcmp.eq.bf16.partialorder %v202, %v2835
        %vm2846 = vcmp.eq.bf16.partialorder %v202, %v2842
        %vm2847 = vcmp.eq.bf16.partialorder %v203, %v2821
        %vm2848 = vcmp.eq.bf16.partialorder %v203, %v2828
        %vm2849 = vcmp.eq.bf16.partialorder %v203, %v2835
        %vm2850 = vcmp.eq.bf16.partialorder %v203, %v2842
        %vm2851 = vcmp.eq.bf16.partialorder %v750, %v2821
        %vm2852 = vcmp.eq.bf16.partialorder %v750, %v2828
        %vm2853 = vcmp.eq.bf16.partialorder %v750, %v2835
        %vm2854 = vcmp.eq.bf16.partialorder %v750, %v2842
        %vm2855 = vcmp.eq.bf16.partialorder %v751, %v2821
        %vm2856 = vcmp.eq.bf16.partialorder %v751, %v2828
        %vm2857 = vcmp.eq.bf16.partialorder %v751, %v2835
        %vm2858 = vcmp.eq.bf16.partialorder %v751, %v2842
        %vm2859 = vcmp.eq.bf16.partialorder %v1394, %v2821
        %vm2860 = vcmp.eq.bf16.partialorder %v1394, %v2828
        %vm2861 = vcmp.eq.bf16.partialorder %v1394, %v2835
        %vm2862 = vcmp.eq.bf16.partialorder %v1394, %v2842
        %vm2863 = vcmp.eq.bf16.partialorder %v1395, %v2821
        %vm2864 = vcmp.eq.bf16.partialorder %v1395, %v2828
        %vm2865 = vcmp.eq.bf16.partialorder %v1395, %v2835
        %vm2866 = vcmp.eq.bf16.partialorder %v1395, %v2842
        %vm2867 = vcmp.eq.bf16.partialorder %v1396, %v2821
        %vm2868 = vcmp.eq.bf16.partialorder %v1396, %v2828
        %vm2869 = vcmp.eq.bf16.partialorder %v1396, %v2835
        %vm2870 = vcmp.eq.bf16.partialorder %v1396, %v2842
        %vm2871 = vcmp.eq.bf16.partialorder %v1397, %v2821
        %vm2872 = vcmp.eq.bf16.partialorder %v1397, %v2828
        %vm2873 = vcmp.eq.bf16.partialorder %v1397, %v2835
        %vm2874 = vcmp.eq.bf16.partialorder %v1397, %v2842
        %v2876 = vlaneseq
        %v2877 = vshrl.u32 %v2876, 7
        %v2878 = vsub.s32 0, %v2877
        %v2879 = vrot.slane %v2199, %v2878
        %v2880 = vlaneseq
        %v2881 = vshrl.u32 %v2880, 7
        %v2882 = vsub.s32 1, %v2881
        %v2883 = vrot.slane %v2199, %v2882
        %v2884 = vlaneseq
        %v2885 = vshrl.u32 %v2884, 7
        %v2886 = vsub.s32 2, %v2885
        %v2887 = vrot.slane %v2199, %v2886
        %v2888 = vlaneseq
        %v2889 = vshrl.u32 %v2888, 7
        %v2890 = vsub.s32 3, %v2889
        %v2891 = vrot.slane %v2199, %v2890
        %v2896 = vpack.c.bf16 %v2879, %v2879
        %v2897 = vpack.c.bf16 %v2883, %v2883
        %v2898 = vpack.c.bf16 %v2887, %v2887
        %v2899 = vpack.c.bf16 %v2891, %v2891
        %v2901 = vpack.i.b16 %v2896, %v2896
        %v2903 = vlaneseq
        %v2904 = vshrl.u32 %v2903, 7
        %v2905 = vsub.s32 0, %v2904
        %v2906 = vrot.slane %v2901, %v2905
        %v2908 = vpack.i.b16 %v2897, %v2897
        %v2910 = vlaneseq
        %v2911 = vshrl.u32 %v2910, 7
        %v2912 = vsub.s32 0, %v2911
        %v2913 = vrot.slane %v2908, %v2912
        %v2915 = vpack.i.b16 %v2898, %v2898
        %v2917 = vlaneseq
        %v2918 = vshrl.u32 %v2917, 7
        %v2919 = vsub.s32 0, %v2918
        %v2920 = vrot.slane %v2915, %v2919
        %v2922 = vpack.i.b16 %v2899, %v2899
        %v2924 = vlaneseq
        %v2925 = vshrl.u32 %v2924, 7
        %v2926 = vsub.s32 0, %v2925
        %v2927 = vrot.slane %v2922, %v2926
        %v2928 = vsel %vm2843, %v2906, 0
        %v2929 = vsel %vm2844, %v2913, 0
        %v2930 = vsel %vm2845, %v2920, 0
        %v2931 = vsel %vm2846, %v2927, 0
        %v2932 = vsel %vm2847, %v2906, 0
        %v2933 = vsel %vm2848, %v2913, 0
        %v2934 = vsel %vm2849, %v2920, 0
        %v2935 = vsel %vm2850, %v2927, 0
        %v2936 = vsel %vm2851, %v2906, 0
        %v2937 = vsel %vm2852, %v2913, 0
        %v2938 = vsel %vm2853, %v2920, 0
        %v2939 = vsel %vm2854, %v2927, 0
        %v2940 = vsel %vm2855, %v2906, 0
        %v2941 = vsel %vm2856, %v2913, 0
        %v2942 = vsel %vm2857, %v2920, 0
        %v2943 = vsel %vm2858, %v2927, 0
        %v2944 = vsel %vm2859, %v2906, 0
        %v2945 = vsel %vm2860, %v2913, 0
        %v2946 = vsel %vm2861, %v2920, 0
        %v2947 = vsel %vm2862, %v2927, 0
        %v2948 = vsel %vm2863, %v2906, 0
        %v2949 = vsel %vm2864, %v2913, 0
        %v2950 = vsel %vm2865, %v2920, 0
        %v2951 = vsel %vm2866, %v2927, 0
        %v2952 = vsel %vm2867, %v2906, 0
        %v2953 = vsel %vm2868, %v2913, 0
        %v2954 = vsel %vm2869, %v2920, 0
        %v2955 = vsel %vm2870, %v2927, 0
        %v2956 = vsel %vm2871, %v2906, 0
        %v2957 = vsel %vm2872, %v2913, 0
        %v2958 = vsel %vm2873, %v2920, 0
        %v2959 = vsel %vm2874, %v2927, 0
        %v2960 = vadd.bf16 %v2755, %v2928
        %v2961 = vadd.bf16 %v2756, %v2929
        %v2962 = vadd.bf16 %v2757, %v2930
        %v2963 = vadd.bf16 %v2758, %v2931
        %v2964 = vadd.bf16 %v2759, %v2932
        %v2965 = vadd.bf16 %v2760, %v2933
        %v2966 = vadd.bf16 %v2761, %v2934
        %v2967 = vadd.bf16 %v2762, %v2935
        %v2968 = vadd.bf16 %v2763, %v2936
        %v2969 = vadd.bf16 %v2764, %v2937
        %v2970 = vadd.bf16 %v2765, %v2938
        %v2971 = vadd.bf16 %v2766, %v2939
        %v2972 = vadd.bf16 %v2767, %v2940
        %v2973 = vadd.bf16 %v2768, %v2941
        %v2974 = vadd.bf16 %v2769, %v2942
        %v2975 = vadd.bf16 %v2770, %v2943
        %v2976 = vadd.bf16 %v2771, %v2944
        %v2977 = vadd.bf16 %v2772, %v2945
        %v2978 = vadd.bf16 %v2773, %v2946
        %v2979 = vadd.bf16 %v2774, %v2947
        %v2980 = vadd.bf16 %v2775, %v2948
        %v2981 = vadd.bf16 %v2776, %v2949
        %v2982 = vadd.bf16 %v2777, %v2950
        %v2983 = vadd.bf16 %v2778, %v2951
        %v2984 = vadd.bf16 %v2779, %v2952
        %v2985 = vadd.bf16 %v2780, %v2953
        %v2986 = vadd.bf16 %v2781, %v2954
        %v2987 = vadd.bf16 %v2782, %v2955
        %v2988 = vadd.bf16 %v2783, %v2956
        %v2989 = vadd.bf16 %v2784, %v2957
        %v2990 = vadd.bf16 %v2785, %v2958
        %v2991 = vadd.bf16 %v2786, %v2959
        %v2992 = vld [vmem:[#allocation5] sm:$0xff]
        %v2993 = vld [vmem:[#allocation5 + $0x8] sm:$0xf]
        %v2996 = vunpack.c.l.b16 %v2992
        %v2997 = vunpack.c.h.b16 %v2992
        %v2998 = vunpack.c.l.b16 %v2993
        %v2999 = vpack.c.b16 %v2996, %v2996
        %v3000 = vpack.c.b16 %v2997, %v2997
        %v3001 = vpack.c.b16 %v2998, %v2998
        %vm3004 = vcmask 785408
        %v3006 = vsel %vm3004, %v3001, 0
        %3008 = vmatprep.subr.bf16.mxu0 %v721
        %3009 = vmatpush1.bf16.msra.mxu0 %v720
        %3010 = vmatprep.subr.bf16.mxu0 %v725
        %3011 = vmatpush1.bf16.msra.mxu0 %v724
        %3012 = vmatprep.subr.bf16.mxu0 %v1349
        %3013 = vmatpush1.bf16.msra.mxu0 %v1348
        %3014 = vmatprep.subr.bf16.mxu0 %v1353
        %3015 = vmatpush1.bf16.msra.mxu0 %v1352
        %3016 = vmatprep.subr.bf16.mxu0 %v1357
        %3017 = vmatpush1.bf16.msra.mxu0 %v1356
        %3018 = vmatprep.subr.bf16.mxu0 %v1361
        %3019 = vmatpush1.bf16.msra.mxu0 %v1360
        %3020 = vmatprep.subr.bf16.mxu0 %v2155
        %3021 = vmatpush1.bf16.msra.mxu0 %v2154
        %3022 = vmatprep.subr.bf16.mxu0 %v2159
        %3023 = vmatpush1.bf16.msra.mxu0 %v2158
        %3024 = vmatprep.subr.bf16.mxu0 %v2163
        %3025 = vmatpush1.bf16.msra.mxu0 %v2162
        %3026 = vmatprep.subr.bf16.mxu0 %v2167
        %3027 = vmatpush1.bf16.msra.mxu0 %v2166
        %3028 = vmatprep.subr.bf16.mxu0 %v2171
        %3029 = vmatpush1.bf16.msra.mxu0 %v2170
        %3030 = vmatprep.subr.bf16.mxu0 %v2175
        %3031 = vmatpush1.bf16.msra.mxu0 %v2174
        %3032 = vmatprep.subr.bf16.mxu0 %v2179
        %3033 = vmatpush1.bf16.msra.mxu0 %v2178
        %3034 = vmatprep.subr.bf16.mxu0 %v2183
        %3035 = vmatpush1.bf16.msra.mxu0 %v2182
        %3036 = vmatprep.subr.bf16.mxu0 %v2961
        %3037 = vmatpush1.bf16.msra.mxu0 %v2960
        %3038 = vmatprep.subr.bf16.mxu0 %v2965
        %3039 = vmatpush1.bf16.msra.mxu0 %v2964
        %3040 = vmatprep.mubr.bf16.mxu0 %v3000
        %3041 = vmatmul.mubr.bf16.gmra.mrb[0].mxu0 %v2999
        %v3042 = vpop.f32.mrb[0].mxu0
        %v3043 = vadd.f32 0.0, %v3042
        %v3044 = vpop.f32.mrb[0].mxu0
        %v3045 = vadd.f32 0.0, %v3044
        %v3046 = vpop.f32.mrb[0].mxu0
        %v3047 = vpop.f32.mrb[0].mxu0
        %3048 = vdwg.mxu0
        %3049 = vmatprep.subr.bf16.mxu0 %v2969
        %3050 = vmatpush1.bf16.msra.mxu0 %v2968
        %3051 = vmatprep.subr.bf16.mxu0 %v2973
        %3052 = vmatpush1.bf16.msra.mxu0 %v2972
        %3053 = vmatprep.subr.bf16.mxu0 %v2977
        %3054 = vmatpush1.bf16.msra.mxu0 %v2976
        %3055 = vmatprep.subr.bf16.mxu0 %v2981
        %3056 = vmatpush1.bf16.msra.mxu0 %v2980
        %3057 = vmatprep.subr.bf16.mxu0 %v2985
        %3058 = vmatpush1.bf16.msra.mxu0 %v2984
        %3059 = vmatprep.subr.bf16.mxu0 %v2989
        %3060 = vmatpush1.bf16.msra.mxu0 %v2988
        %3061 = vmatprep.subr.bf16.mxu0 0
        %3062 = vmatpush1.bf16.msra.mxu0 0
        %3063 = vmatprep.subr.bf16.mxu0 0
        %3064 = vmatpush1.bf16.msra.mxu0 0
        %3065 = vmatprep.subr.bf16.mxu0 0
        %3066 = vmatpush1.bf16.msra.mxu0 0
        %3067 = vmatprep.subr.bf16.mxu0 0
        %3068 = vmatpush1.bf16.msra.mxu0 0
        %3069 = vmatprep.subr.bf16.mxu0 0
        %3070 = vmatpush1.bf16.msra.mxu0 0
        %3071 = vmatprep.subr.bf16.mxu0 0
        %3072 = vmatpush1.bf16.msra.mxu0 0
        %3073 = vmatprep.subr.bf16.mxu0 0
        %3074 = vmatpush1.bf16.msra.mxu0 0
        %3075 = vmatprep.subr.bf16.mxu0 0
        %3076 = vmatpush1.bf16.msra.mxu0 0
        %3077 = vmatprep.subr.bf16.mxu0 0
        %3078 = vmatpush1.bf16.msra.mxu0 0
        %3079 = vmatprep.subr.bf16.mxu0 0
        %3080 = vmatpush1.bf16.msra.mxu0 0
        %3081 = vmatprep.mubr.bf16.mxu0 0
        %3082 = vmatmul.mubr.bf16.gmra.mrb[0].mxu0 %v3006
        %v3083 = vpop.f32.mrb[0].mxu0
        %v3084 = vadd.f32 %v3043, %v3083
        %v3085 = vpop.f32.mrb[0].mxu0
        %v3086 = vadd.f32 %v3045, %v3085
        %v3087 = vpop.f32.mrb[0].mxu0
        %v3088 = vpop.f32.mrb[0].mxu0
        %3089 = vdwg.mxu0
        %3090 = vmatprep.subr.bf16.mxu0 %v723
        %3091 = vmatpush1.bf16.msra.mxu0 %v722
        %3092 = vmatprep.subr.bf16.mxu0 %v727
        %3093 = vmatpush1.bf16.msra.mxu0 %v726
        %3094 = vmatprep.subr.bf16.mxu0 %v1351
        %3095 = vmatpush1.bf16.msra.mxu0 %v1350
        %3096 = vmatprep.subr.bf16.mxu0 %v1355
        %3097 = vmatpush1.bf16.msra.mxu0 %v1354
        %3098 = vmatprep.subr.bf16.mxu0 %v1359
        %3099 = vmatpush1.bf16.msra.mxu0 %v1358
        %3100 = vmatprep.subr.bf16.mxu0 %v1363
        %3101 = vmatpush1.bf16.msra.mxu0 %v1362
        %3102 = vmatprep.subr.bf16.mxu0 %v2157
        %3103 = vmatpush1.bf16.msra.mxu0 %v2156
        %3104 = vmatprep.subr.bf16.mxu0 %v2161
        %3105 = vmatpush1.bf16.msra.mxu0 %v2160
        %3106 = vmatprep.subr.bf16.mxu0 %v2165
        %3107 = vmatpush1.bf16.msra.mxu0 %v2164
        %3108 = vmatprep.subr.bf16.mxu0 %v2169
        %3109 = vmatpush1.bf16.msra.mxu0 %v2168
        %3110 = vmatprep.subr.bf16.mxu0 %v2173
        %3111 = vmatpush1.bf16.msra.mxu0 %v2172
        %3112 = vmatprep.subr.bf16.mxu0 %v2177
        %3113 = vmatpush1.bf16.msra.mxu0 %v2176
        %3114 = vmatprep.subr.bf16.mxu0 %v2181
        %3115 = vmatpush1.bf16.msra.mxu0 %v2180
        %3116 = vmatprep.subr.bf16.mxu0 %v2185
        %3117 = vmatpush1.bf16.msra.mxu0 %v2184
        %3118 = vmatprep.subr.bf16.mxu0 %v2963
        %3119 = vmatpush1.bf16.msra.mxu0 %v2962
        %3120 = vmatprep.subr.bf16.mxu0 %v2967
        %3121 = vmatpush1.bf16.msra.mxu0 %v2966
        %3122 = vmatprep.mubr.bf16.mxu0 %v3000
        %3123 = vmatmul.mubr.bf16.gmra.mrb[0].mxu0 %v2999
        %v3124 = vpop.f32.mrb[0].mxu0
        %v3125 = vadd.f32 0.0, %v3124
        %v3126 = vpop.f32.mrb[0].mxu0
        %v3127 = vadd.f32 0.0, %v3126
        %v3128 = vpop.f32.mrb[0].mxu0
        %v3129 = vpop.f32.mrb[0].mxu0
        %3130 = vdwg.mxu0
        %3131 = vmatprep.subr.bf16.mxu0 %v2971
        %3132 = vmatpush1.bf16.msra.mxu0 %v2970
        %3133 = vmatprep.subr.bf16.mxu0 %v2975
        %3134 = vmatpush1.bf16.msra.mxu0 %v2974
        %3135 = vmatprep.subr.bf16.mxu0 %v2979
        %3136 = vmatpush1.bf16.msra.mxu0 %v2978
        %3137 = vmatprep.subr.bf16.mxu0 %v2983
        %3138 = vmatpush1.bf16.msra.mxu0 %v2982
        %3139 = vmatprep.subr.bf16.mxu0 %v2987
        %3140 = vmatpush1.bf16.msra.mxu0 %v2986
        %3141 = vmatprep.subr.bf16.mxu0 %v2991
        %3142 = vmatpush1.bf16.msra.mxu0 %v2990
        %3143 = vmatprep.subr.bf16.mxu0 0
        %3144 = vmatpush1.bf16.msra.mxu0 0
        %3145 = vmatprep.subr.bf16.mxu0 0
        %3146 = vmatpush1.bf16.msra.mxu0 0
        %3147 = vmatprep.subr.bf16.mxu0 0
        %3148 = vmatpush1.bf16.msra.mxu0 0
        %3149 = vmatprep.subr.bf16.mxu0 0
        %3150 = vmatpush1.bf16.msra.mxu0 0
        %3151 = vmatprep.subr.bf16.mxu0 0
        %3152 = vmatpush1.bf16.msra.mxu0 0
        %3153 = vmatprep.subr.bf16.mxu0 0
        %3154 = vmatpush1.bf16.msra.mxu0 0
        %3155 = vmatprep.subr.bf16.mxu0 0
        %3156 = vmatpush1.bf16.msra.mxu0 0
        %3157 = vmatprep.subr.bf16.mxu0 0
        %3158 = vmatpush1.bf16.msra.mxu0 0
        %3159 = vmatprep.subr.bf16.mxu0 0
        %3160 = vmatpush1.bf16.msra.mxu0 0
        %3161 = vmatprep.subr.bf16.mxu0 0
        %3162 = vmatpush1.bf16.msra.mxu0 0
        %3163 = vmatprep.mubr.bf16.mxu0 0
        %3164 = vmatmul.mubr.bf16.gmra.mrb[0].mxu0 %v3006
        %v3165 = vpop.f32.mrb[0].mxu0
        %v3166 = vadd.f32 %v3125, %v3165
        %v3167 = vpop.f32.mrb[0].mxu0
        %v3168 = vadd.f32 %v3127, %v3167
        %v3169 = vpop.f32.mrb[0].mxu0
        %v3170 = vpop.f32.mrb[0].mxu0
        %3171 = vdwg.mxu0
        %3172 = vst [vmem:[%s172] sm:$0xff] %v3084
        %3173 = vst [vmem:[%s172 + $0x8] sm:$0xff] %v3086
        %3174 = vst [vmem:[%s172 + $0x10] sm:$0xff] %v3166
        %3175 = vst [vmem:[%s172 + $0x18] sm:$0xff] %v3168
        %s3176 = sand.u32 %s75, 1
        %s3177 = scalar_lea.sflag [#allocation4], %s3176
        %s3178 = sand.u32 %s75, 1
        %s3179 = smul.addr %s3178, 32
        %s3180 = scalar_lea.vmem [#allocation7], %s3179
        // Predicated region
        $region37: #{tpu_custom_call.1} parent=27 // pred_check
          %p3181 = pneg %p85
        $region38: #{tpu_custom_call.1} parent=27 // pred_check_branch
          %3183 = sbr.rel (%p3181) target = $region40
        $region39: #{tpu_custom_call.1} parent=27 // pred_region
          %s3184 = smul.u32 4, %s20
          %s3186 = ssub.s32 512, 512
          %3187 = vsyncadd %s3177, %s3186
          %s3188 = smul.addr %s3184, 128
          %s3189 = scalar_lea.hbm %s2, %s3188
          %s3191 = sshll.u32 %s3180, 4
          %s3192 = int_to_ptr.vmem [resolvable:$true] %s3191
          %3194 = dma.vmem_to_hbm [thread:$0]  %s3192, 512, %s3189, %s3177
        $region40: #{tpu_custom_call.1} parent=27 // pred_fallthru
          _
      $region28: #{tpu_custom_call.1} parent=5 // pred_fallthru
        _
      %p3195 = scmp.le.s32.totalorder 2, %s15
      // Predicated region
      $region41: #{tpu_custom_call.1} parent=5 // pred_check
        %p3196 = pneg %p3195
      $region42: #{tpu_custom_call.1} parent=5 // pred_check_branch
        %3198 = sbr.rel (%p3196) target = $region44
      $region43: #{tpu_custom_call.1} parent=5 // pred_region
        %s3199 = ssub.s32 %s15, 2
        // Predicated region
        $region45: #{tpu_custom_call.1} parent=43 // pred_check
          %p3200 = pneg %p91
        $region46: #{tpu_custom_call.1} parent=43 // pred_check_branch
          %3202 = sbr.rel (%p3200) target = $region48
        $region47: #{tpu_custom_call.1} parent=43 // pred_region
          %s3203 = sand.u32 %s76, 1
          %s3204 = scalar_lea.sflag [#allocation4], %s3203
          %s3205 = sand.u32 %s76, 1
          %s3206 = smul.addr %s3205, 32
          %s3207 = scalar_lea.vmem [#allocation7], %s3206
          %3208 = dma.done %s3204, 512
        $region48: #{tpu_custom_call.1} parent=43 // pred_fallthru
          _
      $region44: #{tpu_custom_call.1} parent=5 // pred_fallthru
        _
    $region6: #{tpu_custom_call.1} parent=1 // loop_footer
      %s19 = sadd.s32 1, %s15
    $region7: #{tpu_custom_call.1} parent=1 // loop_footer_branch
      %14 = sbr.rel target = $region3
    $region8: #{tpu_custom_call.1} parent=1 // loop_exit
      _
    %3209 = vsyncpa [#allocation3], 1
    %s3210 = scalar_lea.sflag [#allocation3], 1
    %3211 = vsyncpa %s3210, 1
    %3212 = vsyncpa [#allocation6], 1
    %3213 = vsyncpa [#allocation4], 1
    %s3214 = scalar_lea.sflag [#allocation4], 1
    %3215 = vsyncpa %s3214, 1

</llo_original>
